<compile_context>
chip_gen: v6e
topology: v6e:2x2x1
jax: 0.10.0
libtpu: 0.0.40
codegen_flags: <defaults>
</compile_context>

<pallas_src>
import numpy as np
import jax
import jax.numpy as jnp
from jax import lax
from jax.experimental import pallas as pl
from jax.experimental.pallas import tpu as pltpu

NUM_CLASSES = 26
BN_EPS = 1e-5
LOGIT_PAD = 128                      # lane-dense padded width of the logits

_CONV_CHANNELS = [1, 32, 64, 128, 256, 512, 1024]
_FC_DIMS = [(1024, 512), (512, 512), (512, NUM_CLASSES)]


def _round_up(x, m):
    return (x + m - 1) // m * m


# ----------------------------------------------------------------------------
# The fused whole-network kernel
# ----------------------------------------------------------------------------
def _fused_forward_kernel(cols1_ref, w1_ref, h1_ref,
                          p2_ref, w2_ref, h2_ref,
                          p3_ref, w3_ref, h3_ref,
                          p4_ref, w4_ref, h4_ref,
                          w5_ref, h5_ref,
                          w6_hbm_ref, h6_ref,
                          w7_hbm_ref, b7_ref,
                          w8_ref, b8_ref,
                          w9_ref, b9_ref,
                          o_ref,
                          w6_vmem, w7_vmem, dma_sem):
    """conv1..conv4 (+pool), conv5/conv6 (centre tap), fc1..fc3 in one body."""
    f32, bf16 = jnp.float32, jnp.bfloat16

    # Start the DMA of the two 1 MB head weights right away so their HBM->VMEM
    # transfer overlaps the conv-block compute (the head is otherwise pure,
    # fully exposed weight-DMA latency).
    cp6 = pltpu.make_async_copy(w6_hbm_ref, w6_vmem, dma_sem.at[0])
    cp7 = pltpu.make_async_copy(w7_hbm_ref, w7_vmem, dma_sem.at[1])
    cp6.start()
    cp7.start()

    def pool_shift_relu(y_full, shift):
        # y_full rows are ordered (pool-group g, b, ho, wo); the 4 group slabs
        # are contiguous and 8-row aligned, so pooling is 3 elementwise maxes.
        mp = y_full.shape[0] // 4
        top = jnp.maximum(y_full[0 * mp:1 * mp], y_full[1 * mp:2 * mp])
        bot = jnp.maximum(y_full[2 * mp:3 * mp], y_full[3 * mp:4 * mp])
        # BN scale is folded into the weights; "+shift, ReLU" commutes with max.
        return jnp.maximum(jnp.maximum(top, bot) + shift, 0.0)

    # ---- Block 1: single (4*Mp1, 9) x (9, 32) matmul (im2col built outside).
    y1 = jnp.dot(cols1_ref[...], w1_ref[...], preferred_element_type=f32)
    a = pool_shift_relu(y1, h1_ref[...])                       # (Mp1, 32) f32

    # ---- Blocks 2-4: padded im2col + pool grouping as exact 0/1 selection
    # matmuls; pooled activations never leave VMEM between blocks.
    for p_ref, w_ref, h_ref in ((p2_ref, w2_ref, h2_ref),
                                (p3_ref, w3_ref, h3_ref),
                                (p4_ref, w4_ref, h4_ref)):
        a_bf = a.astype(bf16)
        y = None
        for t in range(9):                                     # static unroll
            sel = jnp.dot(p_ref[t], a_bf, preferred_element_type=f32)
            d = jnp.dot(sel.astype(bf16), w_ref[t], preferred_element_type=f32)
            y = d if y is None else y + d
        a = pool_shift_relu(y, h_ref[...])

    # ---- Head: conv5/conv6 reduced to their centre tap (1x1 spatial, pad=1
    # means the other 8 taps multiply zeros), then fc1 -> fc2 -> fc3.
    # Dropout(0.5) layers are identity in eval mode.
    h = jnp.dot(a.astype(bf16), w5_ref[...], preferred_element_type=f32)
    h = jnp.maximum(h + h5_ref[...], 0.0)
    cp6.wait()
    h = jnp.dot(h.astype(bf16), w6_vmem[...], preferred_element_type=f32)
    h = jnp.maximum(h + h6_ref[...], 0.0)
    cp7.wait()
    h = jnp.dot(h.astype(bf16), w7_vmem[...], preferred_element_type=f32)
    h = jnp.maximum(h + b7_ref[...], 0.0)
    h = jnp.dot(h.astype(bf16), w8_ref[...], preferred_element_type=f32)
    h = jnp.maximum(h + b8_ref[...], 0.0)
    h = jnp.dot(h.astype(bf16), w9_ref[...], preferred_element_type=f32)
    o_ref[...] = h + b9_ref[...]


# ----------------------------------------------------------------------------
# Host-side glue (block-1 im2col only) and the forward pass
# ----------------------------------------------------------------------------
def _block1_im2col(x_nchw):
    """Grouped im2col for the first conv block (Cin=1, 16x16, pad=1)."""
    B = x_nchw.shape[0]
    x = jnp.transpose(x_nchw, (0, 2, 3, 1))                    # NHWC
    H = W = x.shape[1]
    Ho, Wo = H // 2, W // 2
    xp = jnp.pad(x, ((0, 0), (1, 1), (1, 1), (0, 0)))
    taps = [xp[:, i:i + H, j:j + W, :] for i in range(3) for j in range(3)]
    cols = jnp.concatenate(taps, axis=-1)                      # (B, H, W, 9)
    mq = B * Ho * Wo
    mp = _round_up(mq, 8)
    groups = []
    for di in (0, 1):
        for dj in (0, 1):
            g = cols[:, di::2, dj::2, :].reshape(mq, 9)
            if mp != mq:
                g = jnp.pad(g, ((0, mp - mq), (0, 0)))
            groups.append(g)
    return jnp.concatenate(groups, axis=0).astype(jnp.bfloat16)   # (4*mp, 9)


def character_recognition_forward(x_nchw, prepped):
    """x_nchw: (B, 1, 16, 16) float32 -> logits (B, 26) float32 (eval mode)."""
    B = x_nchw.shape[0]
    mp1 = _round_up(B * 64, 8)
    assert prepped["p2"].shape[2] == mp1, \
        "prepare_params() was built for a different batch size"
    cols1 = _block1_im2col(x_nchw)                             # (4*mp1, 9)
    mp4 = prepped["p4"].shape[1] // 4                          # padded batch rows

    order = ("w1", "h1", "p2", "w2", "h2", "p3", "w3", "h3",
             "p4", "w4", "h4", "w5", "h5", "w6", "h6",
             "w7", "b7", "w8", "b8", "w9", "b9")
    hbm_names = ("w6", "w7")         # kept in HBM, prefetched by manual DMA
    args = (cols1,) + tuple(prepped[k] for k in order)

    vmem_spec = pl.BlockSpec(memory_space=pltpu.MemorySpace.VMEM)
    hbm_spec = pl.BlockSpec(memory_space=pl.ANY)
    in_specs = [vmem_spec] + [hbm_spec if k in hbm_names else vmem_spec
                              for k in order]

    logits_pad = pl.pallas_call(
        _fused_forward_kernel,
        out_shape=jax.ShapeDtypeStruct((mp4, LOGIT_PAD), jnp.float32),
        in_specs=in_specs,
        out_specs=vmem_spec,
        scratch_shapes=[pltpu.VMEM(prepped["w6"].shape, jnp.bfloat16),
                        pltpu.VMEM(prepped["w7"].shape, jnp.bfloat16),
                        pltpu.SemaphoreType.DMA((2,))],
    )(*args)
    return logits_pad[:B, :NUM_CLASSES]


# ----------------------------------------------------------------------------
# Parameters: deterministic init (PyTorch layout) + one-time preparation
# ----------------------------------------------------------------------------
def init_params(key):
    params = {"convs": [], "fcs": []}
    for cin, cout in zip(_CONV_CHANNELS[:-1], _CONV_CHANNELS[1:]):
        key, k1, k2, k3, k4, k5, k6 = jax.random.split(key, 7)
        fan_in = cin * 9
        params["convs"].append({
            "w": jax.random.normal(k1, (cout, cin, 3, 3), jnp.float32)
                 * jnp.sqrt(2.0 / fan_in),
            "b": 0.01 * jax.random.normal(k2, (cout,), jnp.float32),
            "gamma": 1.0 + 0.1 * jax.random.normal(k3, (cout,), jnp.float32),
            "beta": 0.1 * jax.random.normal(k4, (cout,), jnp.float32),
            "mean": 0.1 * jax.random.normal(k5, (cout,), jnp.float32),
            "var": 0.5 + jnp.abs(jax.random.normal(k6, (cout,), jnp.float32)),
        })
    for din, dout in _FC_DIMS:
        key, k1, k2 = jax.random.split(key, 3)
        params["fcs"].append({
            "w": jax.random.normal(k1, (dout, din), jnp.float32)
                 * jnp.sqrt(2.0 / din),
            "b": 0.01 * jax.random.normal(k2, (dout,), jnp.float32),
        })
    return params


def _fold_bn(p):
    """scale = gamma/sqrt(var+eps); shift = (conv_bias - mean)*scale + beta."""
    inv_std = 1.0 / jnp.sqrt(p["var"] + BN_EPS)
    scale = (p["gamma"] * inv_std).reshape(1, -1).astype(jnp.float32)
    shift = ((p["b"] - p["mean"]) * p["gamma"] * inv_std + p["beta"]
             ).reshape(1, -1).astype(jnp.float32)
    return scale, shift


def _pool_im2col_selector(batch, hw, m_in_pad):
    """0/1 matrices mapping the previous pooled activation (m_in_pad rows,
    valid rows ordered (b, h, w)) to the pool-grouped im2col operand of a
    3x3/pad=1 conv followed by 2x2/stride-2 max pooling.

    Returns P of shape (9, 4*m_out_pad, m_in_pad) bf16 and m_out_pad.
    Row R = g*m_out_pad + b*Ho*Wo + ho*Wo + wo; zero rows give zero-padding.
    """
    H = W = hw
    Ho, Wo = H // 2, W // 2
    mq = batch * Ho * Wo
    mp = _round_up(mq, 8)
    P = np.zeros((9, 4 * mp, m_in_pad), np.float32)
    for g, (di, dj) in enumerate(((0, 0), (0, 1), (1, 0), (1, 1))):
        for b in range(batch):
            for ho in range(Ho):
                for wo in range(Wo):
                    row = g * mp + b * Ho * Wo + ho * Wo + wo
                    for t in range(9):
                        yy = 2 * ho + di + t // 3 - 1
                        xx = 2 * wo + dj + t % 3 - 1
                        if 0 <= yy < H and 0 <= xx < W:
                            P[t, row, b * H * W + yy * W + xx] = 1.0
    return jnp.asarray(P, jnp.bfloat16), mp


def prepare_params(params, batch_size):
    """One-time re-layout: BN folding into bf16 weights, tap-major conv
    weights, im2col/pool selection matrices (batch-size dependent), centre-tap
    pruning for conv5/conv6 and lane-padding of the final classifier."""
    prepped = {}

    # Block 1 (Cin=1): weight as (9, 32), BN scale folded into the columns.
    p = params["convs"][0]
    scale, shift = _fold_bn(p)
    w1 = jnp.transpose(p["w"], (2, 3, 1, 0)).reshape(9, -1)
    prepped["w1"] = (w1 * scale).astype(jnp.bfloat16)
    prepped["h1"] = shift

    # Blocks 2-4: tap-major weights (9, Cin, Cout) with folded BN scale plus
    # the selection matrices implementing padded im2col + pool grouping.
    m_in = _round_up(batch_size * 64, 8)          # rows of block-1 pooled output
    for n, hw in ((2, 8), (3, 4), (4, 2)):        # block index, input spatial
        p = params["convs"][n - 1]
        cout, cin = p["w"].shape[:2]
        scale, shift = _fold_bn(p)
        w = jnp.transpose(p["w"], (2, 3, 1, 0)).reshape(9, cin, cout)
        prepped["w%d" % n] = (w * scale.reshape(1, 1, cout)).astype(jnp.bfloat16)
        prepped["h%d" % n] = shift
        sel, m_in = _pool_im2col_selector(batch_size, hw, m_in)
        prepped["p%d" % n] = sel

    # conv5 / conv6: 1x1 spatial with pad=1 -> only the centre tap is nonzero.
    for n in (5, 6):
        p = params["convs"][n - 1]
        scale, shift = _fold_bn(p)
        wc = jnp.transpose(p["w"][:, :, 1, 1], (1, 0))
        prepped["w%d" % n] = (wc * scale).astype(jnp.bfloat16)
        prepped["h%d" % n] = shift

    # fc1 / fc2: (in, out) layout, f32 bias as (1, out).
    for name, p in zip(("7", "8"), params["fcs"][:2]):
        prepped["w" + name] = jnp.transpose(p["w"]).astype(jnp.bfloat16)
        prepped["b" + name] = p["b"].reshape(1, -1).astype(jnp.float32)

    # fc3: zero-pad 26 -> 128 output columns for lane-dense stores.
    w9 = jnp.zeros((_FC_DIMS[2][0], LOGIT_PAD), jnp.float32)
    w9 = w9.at[:, :NUM_CLASSES].set(jnp.transpose(params["fcs"][2]["w"]))
    b9 = jnp.zeros((1, LOGIT_PAD), jnp.float32)
    b9 = b9.at[:, :NUM_CLASSES].set(params["fcs"][2]["b"].reshape(1, -1))
    prepped["w9"] = w9.astype(jnp.bfloat16)
    prepped["b9"] = b9
    return prepped


# ----------------------------------------------------------------------------
# Pure-JAX f32 reference of the original PyTorch module (eval mode)
# ----------------------------------------------------------------------------
def reference_forward(x, params):
    def bn(y, p):
        inv = (p["gamma"] / jnp.sqrt(p["var"] + BN_EPS)).reshape(1, -1, 1, 1)
        return ((y - p["mean"].reshape(1, -1, 1, 1)) * inv
                + p["beta"].reshape(1, -1, 1, 1))

    h = x
    for idx, p in enumerate(params["convs"]):
        h = lax.conv_general_dilated(h, p["w"], (1, 1), ((1, 1), (1, 1)),
                                     dimension_numbers=("NCHW", "OIHW", "NCHW"),
                                     precision=lax.Precision.HIGHEST)
        h = h + p["b"].reshape(1, -1, 1, 1)
        h = jnp.maximum(bn(h, p), 0.0)
        if idx < 4:
            h = lax.reduce_window(h, -jnp.inf, lax.max,
                                  (1, 1, 2, 2), (1, 1, 2, 2), "VALID")
    h = h.reshape(h.shape[0], -1)
    for i, p in enumerate(params["fcs"]):
        h = jnp.dot(h, p["w"].T, precision=lax.Precision.HIGHEST) + p["b"]
        if i < 2:
            h = jnp.maximum(h, 0.0)
    return h


if __name__ == "__main__":
    key = jax.random.PRNGKey(0)
    key, pkey, xkey = jax.random.split(key, 3)
    params = init_params(pkey)
    batch = 2
    prepped = prepare_params(params, batch)        # one-time, outside the jit
    # Flatten to 1024*1*1 implies 16x16 single-channel inputs.
    x = jax.random.normal(xkey, (batch, 1, 16, 16), jnp.float32)

    fwd = jax.jit(character_recognition_forward)
    logits = fwd(x, prepped)
    jax.block_until_ready(logits)
    assert logits.shape == (batch, NUM_CLASSES) and logits.dtype == jnp.float32

    ref = jax.jit(reference_forward)(x, params)
    rel_err = float(jnp.linalg.norm(logits - ref)
                    / (jnp.linalg.norm(ref) + 1e-6))
    assert rel_err < 0.1, "kernel deviates from f32 reference: %.4f" % rel_err
    print("KERNEL_OK")
</pallas_src>

<mosaic_0001>
module attributes {stable_mosaic.version = 11 : i64} {
  func.func @_fused_forward_kernel(%arg0: memref<512x9xbf16, #tpu.memory_space<vmem>>, %arg1: memref<9x32xbf16, #tpu.memory_space<vmem>>, %arg2: memref<1x32xf32, #tpu.memory_space<vmem>>, %arg3: memref<9x128x128xbf16, #tpu.memory_space<vmem>>, %arg4: memref<9x32x64xbf16, #tpu.memory_space<vmem>>, %arg5: memref<1x64xf32, #tpu.memory_space<vmem>>, %arg6: memref<9x32x32xbf16, #tpu.memory_space<vmem>>, %arg7: memref<9x64x128xbf16, #tpu.memory_space<vmem>>, %arg8: memref<1x128xf32, #tpu.memory_space<vmem>>, %arg9: memref<9x32x8xbf16, #tpu.memory_space<vmem>>, %arg10: memref<9x128x256xbf16, #tpu.memory_space<vmem>>, %arg11: memref<1x256xf32, #tpu.memory_space<vmem>>, %arg12: memref<256x512xbf16, #tpu.memory_space<vmem>>, %arg13: memref<1x512xf32, #tpu.memory_space<vmem>>, %arg14: memref<512x1024xbf16, #tpu.memory_space<any>>, %arg15: memref<1x1024xf32, #tpu.memory_space<vmem>>, %arg16: memref<1024x512xbf16, #tpu.memory_space<any>>, %arg17: memref<1x512xf32, #tpu.memory_space<vmem>>, %arg18: memref<512x512xbf16, #tpu.memory_space<vmem>>, %arg19: memref<1x512xf32, #tpu.memory_space<vmem>>, %arg20: memref<512x128xbf16, #tpu.memory_space<vmem>>, %arg21: memref<1x128xf32, #tpu.memory_space<vmem>>, %arg22: memref<8x128xf32, #tpu.memory_space<vmem>>, %arg23: memref<512x1024xbf16, #tpu.memory_space<vmem>>, %arg24: memref<1024x512xbf16, #tpu.memory_space<vmem>>, %arg25: memref<2x!tpu.dma_semaphore, #tpu.memory_space<semaphore_mem>>) attributes {dimension_semantics = [], scalar_prefetch = 0 : i64, scratch_operands = 3 : i64, tpu.core_type = #tpu.core_type<tc>} {
    %c0_i32 = arith.constant 0 : i32
    %0 = tpu.memref_slice %arg25[%c0_i32] : memref<2x!tpu.dma_semaphore, #tpu.memory_space<semaphore_mem>> -> memref<1x!tpu.dma_semaphore, #tpu.memory_space<semaphore_mem>>
    %1 = tpu.memref_squeeze %0 : memref<1x!tpu.dma_semaphore, #tpu.memory_space<semaphore_mem>> -> memref<!tpu.dma_semaphore, #tpu.memory_space<semaphore_mem>>
    tpu.enqueue_dma source(%arg14 : memref<512x1024xbf16, #tpu.memory_space<any>>) target(%arg23 : memref<512x1024xbf16, #tpu.memory_space<vmem>>) target_semaphore(%1 : memref<!tpu.dma_semaphore, #tpu.memory_space<semaphore_mem>>)
    %c1_i32 = arith.constant 1 : i32
    %2 = tpu.memref_slice %arg25[%c1_i32] : memref<2x!tpu.dma_semaphore, #tpu.memory_space<semaphore_mem>> -> memref<1x!tpu.dma_semaphore, #tpu.memory_space<semaphore_mem>>
    %3 = tpu.memref_squeeze %2 : memref<1x!tpu.dma_semaphore, #tpu.memory_space<semaphore_mem>> -> memref<!tpu.dma_semaphore, #tpu.memory_space<semaphore_mem>>
    tpu.enqueue_dma source(%arg16 : memref<1024x512xbf16, #tpu.memory_space<any>>) target(%arg24 : memref<1024x512xbf16, #tpu.memory_space<vmem>>) target_semaphore(%3 : memref<!tpu.dma_semaphore, #tpu.memory_space<semaphore_mem>>)
    %c0 = arith.constant 0 : index
    %c0_0 = arith.constant 0 : index
    %4 = vector.load %arg0[%c0, %c0_0] : memref<512x9xbf16, #tpu.memory_space<vmem>>, vector<512x9xbf16>
    %c0_1 = arith.constant 0 : index
    %c0_2 = arith.constant 0 : index
    %5 = vector.load %arg1[%c0_1, %c0_2] : memref<9x32xbf16, #tpu.memory_space<vmem>>, vector<9x32xbf16>
    %cst = arith.constant dense<0.000000e+00> : vector<512x32xf32>
    %6 = tpu.matmul %4, %5, %cst {dimension_numbers = #tpu.dot_dimension_numbers<[1], [0], [0], [1], [0, 0, 1, 1], [], []>} : vector<512x9xbf16>, vector<9x32xbf16>, vector<512x32xf32> -> vector<512x32xf32>
    %c0_3 = arith.constant 0 : index
    %c0_4 = arith.constant 0 : index
    %7 = vector.load %arg2[%c0_3, %c0_4] : memref<1x32xf32, #tpu.memory_space<vmem>>, vector<1x32xf32>
    %8 = vector.extract_strided_slice %6 {offsets = [0, 0], sizes = [128, 32], strides = [1, 1]} : vector<512x32xf32> to vector<128x32xf32>
    %9 = vector.extract_strided_slice %6 {offsets = [128, 0], sizes = [128, 32], strides = [1, 1]} : vector<512x32xf32> to vector<128x32xf32>
    %10 = arith.maximumf %8, %9 : vector<128x32xf32>
    %11 = vector.extract_strided_slice %6 {offsets = [256, 0], sizes = [128, 32], strides = [1, 1]} : vector<512x32xf32> to vector<128x32xf32>
    %12 = vector.extract_strided_slice %6 {offsets = [384, 0], sizes = [128, 32], strides = [1, 1]} : vector<512x32xf32> to vector<128x32xf32>
    %13 = arith.maximumf %11, %12 : vector<128x32xf32>
    %14 = arith.maximumf %10, %13 : vector<128x32xf32>
    %15 = vector.broadcast %7 : vector<1x32xf32> to vector<128x32xf32>
    %16 = arith.addf %14, %15 : vector<128x32xf32>
    %cst_5 = arith.constant 0.000000e+00 : f32
    %17 = vector.broadcast %cst_5 : f32 to vector<128x32xf32>
    %18 = arith.maximumf %16, %17 : vector<128x32xf32>
    %19 = arith.truncf %18 : vector<128x32xf32> to vector<128x32xbf16>
    %c0_6 = arith.constant 0 : index
    %c0_7 = arith.constant 0 : index
    %c0_8 = arith.constant 0 : index
    %20 = vector.load %arg3[%c0_6, %c0_7, %c0_8] : memref<9x128x128xbf16, #tpu.memory_space<vmem>>, vector<1x128x128xbf16>
    %21 = vector.shape_cast %20 : vector<1x128x128xbf16> to vector<128x128xbf16>
    %cst_9 = arith.constant dense<0.000000e+00> : vector<128x32xf32>
    %22 = tpu.matmul %21, %19, %cst_9 {dimension_numbers = #tpu.dot_dimension_numbers<[1], [0], [0], [1], [0, 0, 1, 1], [], []>} : vector<128x128xbf16>, vector<128x32xbf16>, vector<128x32xf32> -> vector<128x32xf32>
    %23 = arith.truncf %22 : vector<128x32xf32> to vector<128x32xbf16>
    %c0_10 = arith.constant 0 : index
    %c0_11 = arith.constant 0 : index
    %c0_12 = arith.constant 0 : index
    %24 = vector.load %arg4[%c0_10, %c0_11, %c0_12] : memref<9x32x64xbf16, #tpu.memory_space<vmem>>, vector<1x32x64xbf16>
    %25 = vector.shape_cast %24 : vector<1x32x64xbf16> to vector<32x64xbf16>
    %cst_13 = arith.constant dense<0.000000e+00> : vector<128x64xf32>
    %26 = tpu.matmul %23, %25, %cst_13 {dimension_numbers = #tpu.dot_dimension_numbers<[1], [0], [0], [1], [0, 0, 1, 1], [], []>} : vector<128x32xbf16>, vector<32x64xbf16>, vector<128x64xf32> -> vector<128x64xf32>
    %c1 = arith.constant 1 : index
    %c0_14 = arith.constant 0 : index
    %c0_15 = arith.constant 0 : index
    %27 = vector.load %arg3[%c1, %c0_14, %c0_15] : memref<9x128x128xbf16, #tpu.memory_space<vmem>>, vector<1x128x128xbf16>
    %28 = vector.shape_cast %27 : vector<1x128x128xbf16> to vector<128x128xbf16>
    %cst_16 = arith.constant dense<0.000000e+00> : vector<128x32xf32>
    %29 = tpu.matmul %28, %19, %cst_16 {dimension_numbers = #tpu.dot_dimension_numbers<[1], [0], [0], [1], [0, 0, 1, 1], [], []>} : vector<128x128xbf16>, vector<128x32xbf16>, vector<128x32xf32> -> vector<128x32xf32>
    %30 = arith.truncf %29 : vector<128x32xf32> to vector<128x32xbf16>
    %c1_17 = arith.constant 1 : index
    %c0_18 = arith.constant 0 : index
    %c0_19 = arith.constant 0 : index
    %31 = vector.load %arg4[%c1_17, %c0_18, %c0_19] : memref<9x32x64xbf16, #tpu.memory_space<vmem>>, vector<1x32x64xbf16>
    %32 = vector.shape_cast %31 : vector<1x32x64xbf16> to vector<32x64xbf16>
    %cst_20 = arith.constant dense<0.000000e+00> : vector<128x64xf32>
    %33 = tpu.matmul %30, %32, %cst_20 {dimension_numbers = #tpu.dot_dimension_numbers<[1], [0], [0], [1], [0, 0, 1, 1], [], []>} : vector<128x32xbf16>, vector<32x64xbf16>, vector<128x64xf32> -> vector<128x64xf32>
    %34 = arith.addf %26, %33 : vector<128x64xf32>
    %c2 = arith.constant 2 : index
    %c0_21 = arith.constant 0 : index
    %c0_22 = arith.constant 0 : index
    %35 = vector.load %arg3[%c2, %c0_21, %c0_22] : memref<9x128x128xbf16, #tpu.memory_space<vmem>>, vector<1x128x128xbf16>
    %36 = vector.shape_cast %35 : vector<1x128x128xbf16> to vector<128x128xbf16>
    %cst_23 = arith.constant dense<0.000000e+00> : vector<128x32xf32>
    %37 = tpu.matmul %36, %19, %cst_23 {dimension_numbers = #tpu.dot_dimension_numbers<[1], [0], [0], [1], [0, 0, 1, 1], [], []>} : vector<128x128xbf16>, vector<128x32xbf16>, vector<128x32xf32> -> vector<128x32xf32>
    %38 = arith.truncf %37 : vector<128x32xf32> to vector<128x32xbf16>
    %c2_24 = arith.constant 2 : index
    %c0_25 = arith.constant 0 : index
    %c0_26 = arith.constant 0 : index
    %39 = vector.load %arg4[%c2_24, %c0_25, %c0_26] : memref<9x32x64xbf16, #tpu.memory_space<vmem>>, vector<1x32x64xbf16>
    %40 = vector.shape_cast %39 : vector<1x32x64xbf16> to vector<32x64xbf16>
    %cst_27 = arith.constant dense<0.000000e+00> : vector<128x64xf32>
    %41 = tpu.matmul %38, %40, %cst_27 {dimension_numbers = #tpu.dot_dimension_numbers<[1], [0], [0], [1], [0, 0, 1, 1], [], []>} : vector<128x32xbf16>, vector<32x64xbf16>, vector<128x64xf32> -> vector<128x64xf32>
    %42 = arith.addf %34, %41 : vector<128x64xf32>
    %c3 = arith.constant 3 : index
    %c0_28 = arith.constant 0 : index
    %c0_29 = arith.constant 0 : index
    %43 = vector.load %arg3[%c3, %c0_28, %c0_29] : memref<9x128x128xbf16, #tpu.memory_space<vmem>>, vector<1x128x128xbf16>
    %44 = vector.shape_cast %43 : vector<1x128x128xbf16> to vector<128x128xbf16>
    %cst_30 = arith.constant dense<0.000000e+00> : vector<128x32xf32>
    %45 = tpu.matmul %44, %19, %cst_30 {dimension_numbers = #tpu.dot_dimension_numbers<[1], [0], [0], [1], [0, 0, 1, 1], [], []>} : vector<128x128xbf16>, vector<128x32xbf16>, vector<128x32xf32> -> vector<128x32xf32>
    %46 = arith.truncf %45 : vector<128x32xf32> to vector<128x32xbf16>
    %c3_31 = arith.constant 3 : index
    %c0_32 = arith.constant 0 : index
    %c0_33 = arith.constant 0 : index
    %47 = vector.load %arg4[%c3_31, %c0_32, %c0_33] : memref<9x32x64xbf16, #tpu.memory_space<vmem>>, vector<1x32x64xbf16>
    %48 = vector.shape_cast %47 : vector<1x32x64xbf16> to vector<32x64xbf16>
    %cst_34 = arith.constant dense<0.000000e+00> : vector<128x64xf32>
    %49 = tpu.matmul %46, %48, %cst_34 {dimension_numbers = #tpu.dot_dimension_numbers<[1], [0], [0], [1], [0, 0, 1, 1], [], []>} : vector<128x32xbf16>, vector<32x64xbf16>, vector<128x64xf32> -> vector<128x64xf32>
    %50 = arith.addf %42, %49 : vector<128x64xf32>
    %c4 = arith.constant 4 : index
    %c0_35 = arith.constant 0 : index
    %c0_36 = arith.constant 0 : index
    %51 = vector.load %arg3[%c4, %c0_35, %c0_36] : memref<9x128x128xbf16, #tpu.memory_space<vmem>>, vector<1x128x128xbf16>
    %52 = vector.shape_cast %51 : vector<1x128x128xbf16> to vector<128x128xbf16>
    %cst_37 = arith.constant dense<0.000000e+00> : vector<128x32xf32>
    %53 = tpu.matmul %52, %19, %cst_37 {dimension_numbers = #tpu.dot_dimension_numbers<[1], [0], [0], [1], [0, 0, 1, 1], [], []>} : vector<128x128xbf16>, vector<128x32xbf16>, vector<128x32xf32> -> vector<128x32xf32>
    %54 = arith.truncf %53 : vector<128x32xf32> to vector<128x32xbf16>
    %c4_38 = arith.constant 4 : index
    %c0_39 = arith.constant 0 : index
    %c0_40 = arith.constant 0 : index
    %55 = vector.load %arg4[%c4_38, %c0_39, %c0_40] : memref<9x32x64xbf16, #tpu.memory_space<vmem>>, vector<1x32x64xbf16>
    %56 = vector.shape_cast %55 : vector<1x32x64xbf16> to vector<32x64xbf16>
    %cst_41 = arith.constant dense<0.000000e+00> : vector<128x64xf32>
    %57 = tpu.matmul %54, %56, %cst_41 {dimension_numbers = #tpu.dot_dimension_numbers<[1], [0], [0], [1], [0, 0, 1, 1], [], []>} : vector<128x32xbf16>, vector<32x64xbf16>, vector<128x64xf32> -> vector<128x64xf32>
    %58 = arith.addf %50, %57 : vector<128x64xf32>
    %c5 = arith.constant 5 : index
    %c0_42 = arith.constant 0 : index
    %c0_43 = arith.constant 0 : index
    %59 = vector.load %arg3[%c5, %c0_42, %c0_43] : memref<9x128x128xbf16, #tpu.memory_space<vmem>>, vector<1x128x128xbf16>
    %60 = vector.shape_cast %59 : vector<1x128x128xbf16> to vector<128x128xbf16>
    %cst_44 = arith.constant dense<0.000000e+00> : vector<128x32xf32>
    %61 = tpu.matmul %60, %19, %cst_44 {dimension_numbers = #tpu.dot_dimension_numbers<[1], [0], [0], [1], [0, 0, 1, 1], [], []>} : vector<128x128xbf16>, vector<128x32xbf16>, vector<128x32xf32> -> vector<128x32xf32>
    %62 = arith.truncf %61 : vector<128x32xf32> to vector<128x32xbf16>
    %c5_45 = arith.constant 5 : index
    %c0_46 = arith.constant 0 : index
    %c0_47 = arith.constant 0 : index
    %63 = vector.load %arg4[%c5_45, %c0_46, %c0_47] : memref<9x32x64xbf16, #tpu.memory_space<vmem>>, vector<1x32x64xbf16>
    %64 = vector.shape_cast %63 : vector<1x32x64xbf16> to vector<32x64xbf16>
    %cst_48 = arith.constant dense<0.000000e+00> : vector<128x64xf32>
    %65 = tpu.matmul %62, %64, %cst_48 {dimension_numbers = #tpu.dot_dimension_numbers<[1], [0], [0], [1], [0, 0, 1, 1], [], []>} : vector<128x32xbf16>, vector<32x64xbf16>, vector<128x64xf32> -> vector<128x64xf32>
    %66 = arith.addf %58, %65 : vector<128x64xf32>
    %c6 = arith.constant 6 : index
    %c0_49 = arith.constant 0 : index
    %c0_50 = arith.constant 0 : index
    %67 = vector.load %arg3[%c6, %c0_49, %c0_50] : memref<9x128x128xbf16, #tpu.memory_space<vmem>>, vector<1x128x128xbf16>
    %68 = vector.shape_cast %67 : vector<1x128x128xbf16> to vector<128x128xbf16>
    %cst_51 = arith.constant dense<0.000000e+00> : vector<128x32xf32>
    %69 = tpu.matmul %68, %19, %cst_51 {dimension_numbers = #tpu.dot_dimension_numbers<[1], [0], [0], [1], [0, 0, 1, 1], [], []>} : vector<128x128xbf16>, vector<128x32xbf16>, vector<128x32xf32> -> vector<128x32xf32>
    %70 = arith.truncf %69 : vector<128x32xf32> to vector<128x32xbf16>
    %c6_52 = arith.constant 6 : index
    %c0_53 = arith.constant 0 : index
    %c0_54 = arith.constant 0 : index
    %71 = vector.load %arg4[%c6_52, %c0_53, %c0_54] : memref<9x32x64xbf16, #tpu.memory_space<vmem>>, vector<1x32x64xbf16>
    %72 = vector.shape_cast %71 : vector<1x32x64xbf16> to vector<32x64xbf16>
    %cst_55 = arith.constant dense<0.000000e+00> : vector<128x64xf32>
    %73 = tpu.matmul %70, %72, %cst_55 {dimension_numbers = #tpu.dot_dimension_numbers<[1], [0], [0], [1], [0, 0, 1, 1], [], []>} : vector<128x32xbf16>, vector<32x64xbf16>, vector<128x64xf32> -> vector<128x64xf32>
    %74 = arith.addf %66, %73 : vector<128x64xf32>
    %c7 = arith.constant 7 : index
    %c0_56 = arith.constant 0 : index
    %c0_57 = arith.constant 0 : index
    %75 = vector.load %arg3[%c7, %c0_56, %c0_57] : memref<9x128x128xbf16, #tpu.memory_space<vmem>>, vector<1x128x128xbf16>
    %76 = vector.shape_cast %75 : vector<1x128x128xbf16> to vector<128x128xbf16>
    %cst_58 = arith.constant dense<0.000000e+00> : vector<128x32xf32>
    %77 = tpu.matmul %76, %19, %cst_58 {dimension_numbers = #tpu.dot_dimension_numbers<[1], [0], [0], [1], [0, 0, 1, 1], [], []>} : vector<128x128xbf16>, vector<128x32xbf16>, vector<128x32xf32> -> vector<128x32xf32>
    %78 = arith.truncf %77 : vector<128x32xf32> to vector<128x32xbf16>
    %c7_59 = arith.constant 7 : index
    %c0_60 = arith.constant 0 : index
    %c0_61 = arith.constant 0 : index
    %79 = vector.load %arg4[%c7_59, %c0_60, %c0_61] : memref<9x32x64xbf16, #tpu.memory_space<vmem>>, vector<1x32x64xbf16>
    %80 = vector.shape_cast %79 : vector<1x32x64xbf16> to vector<32x64xbf16>
    %cst_62 = arith.constant dense<0.000000e+00> : vector<128x64xf32>
    %81 = tpu.matmul %78, %80, %cst_62 {dimension_numbers = #tpu.dot_dimension_numbers<[1], [0], [0], [1], [0, 0, 1, 1], [], []>} : vector<128x32xbf16>, vector<32x64xbf16>, vector<128x64xf32> -> vector<128x64xf32>
    %82 = arith.addf %74, %81 : vector<128x64xf32>
    %c8 = arith.constant 8 : index
    %c0_63 = arith.constant 0 : index
    %c0_64 = arith.constant 0 : index
    %83 = vector.load %arg3[%c8, %c0_63, %c0_64] : memref<9x128x128xbf16, #tpu.memory_space<vmem>>, vector<1x128x128xbf16>
    %84 = vector.shape_cast %83 : vector<1x128x128xbf16> to vector<128x128xbf16>
    %cst_65 = arith.constant dense<0.000000e+00> : vector<128x32xf32>
    %85 = tpu.matmul %84, %19, %cst_65 {dimension_numbers = #tpu.dot_dimension_numbers<[1], [0], [0], [1], [0, 0, 1, 1], [], []>} : vector<128x128xbf16>, vector<128x32xbf16>, vector<128x32xf32> -> vector<128x32xf32>
    %86 = arith.truncf %85 : vector<128x32xf32> to vector<128x32xbf16>
    %c8_66 = arith.constant 8 : index
    %c0_67 = arith.constant 0 : index
    %c0_68 = arith.constant 0 : index
    %87 = vector.load %arg4[%c8_66, %c0_67, %c0_68] : memref<9x32x64xbf16, #tpu.memory_space<vmem>>, vector<1x32x64xbf16>
    %88 = vector.shape_cast %87 : vector<1x32x64xbf16> to vector<32x64xbf16>
    %cst_69 = arith.constant dense<0.000000e+00> : vector<128x64xf32>
    %89 = tpu.matmul %86, %88, %cst_69 {dimension_numbers = #tpu.dot_dimension_numbers<[1], [0], [0], [1], [0, 0, 1, 1], [], []>} : vector<128x32xbf16>, vector<32x64xbf16>, vector<128x64xf32> -> vector<128x64xf32>
    %90 = arith.addf %82, %89 : vector<128x64xf32>
    %c0_70 = arith.constant 0 : index
    %c0_71 = arith.constant 0 : index
    %91 = vector.load %arg5[%c0_70, %c0_71] : memref<1x64xf32, #tpu.memory_space<vmem>>, vector<1x64xf32>
    %92 = vector.extract_strided_slice %90 {offsets = [0, 0], sizes = [32, 64], strides = [1, 1]} : vector<128x64xf32> to vector<32x64xf32>
    %93 = vector.extract_strided_slice %90 {offsets = [32, 0], sizes = [32, 64], strides = [1, 1]} : vector<128x64xf32> to vector<32x64xf32>
    %94 = arith.maximumf %92, %93 : vector<32x64xf32>
    %95 = vector.extract_strided_slice %90 {offsets = [64, 0], sizes = [32, 64], strides = [1, 1]} : vector<128x64xf32> to vector<32x64xf32>
    %96 = vector.extract_strided_slice %90 {offsets = [96, 0], sizes = [32, 64], strides = [1, 1]} : vector<128x64xf32> to vector<32x64xf32>
    %97 = arith.maximumf %95, %96 : vector<32x64xf32>
    %98 = arith.maximumf %94, %97 : vector<32x64xf32>
    %99 = vector.broadcast %91 : vector<1x64xf32> to vector<32x64xf32>
    %100 = arith.addf %98, %99 : vector<32x64xf32>
    %cst_72 = arith.constant 0.000000e+00 : f32
    %101 = vector.broadcast %cst_72 : f32 to vector<32x64xf32>
    %102 = arith.maximumf %100, %101 : vector<32x64xf32>
    %103 = arith.truncf %102 : vector<32x64xf32> to vector<32x64xbf16>
    %c0_73 = arith.constant 0 : index
    %c0_74 = arith.constant 0 : index
    %c0_75 = arith.constant 0 : index
    %104 = vector.load %arg6[%c0_73, %c0_74, %c0_75] : memref<9x32x32xbf16, #tpu.memory_space<vmem>>, vector<1x32x32xbf16>
    %105 = vector.shape_cast %104 : vector<1x32x32xbf16> to vector<32x32xbf16>
    %cst_76 = arith.constant dense<0.000000e+00> : vector<32x64xf32>
    %106 = tpu.matmul %105, %103, %cst_76 {dimension_numbers = #tpu.dot_dimension_numbers<[1], [0], [0], [1], [0, 0, 1, 1], [], []>} : vector<32x32xbf16>, vector<32x64xbf16>, vector<32x64xf32> -> vector<32x64xf32>
    %107 = arith.truncf %106 : vector<32x64xf32> to vector<32x64xbf16>
    %c0_77 = arith.constant 0 : index
    %c0_78 = arith.constant 0 : index
    %c0_79 = arith.constant 0 : index
    %108 = vector.load %arg7[%c0_77, %c0_78, %c0_79] : memref<9x64x128xbf16, #tpu.memory_space<vmem>>, vector<1x64x128xbf16>
    %109 = vector.shape_cast %108 : vector<1x64x128xbf16> to vector<64x128xbf16>
    %cst_80 = arith.constant dense<0.000000e+00> : vector<32x128xf32>
    %110 = tpu.matmul %107, %109, %cst_80 {dimension_numbers = #tpu.dot_dimension_numbers<[1], [0], [0], [1], [0, 0, 1, 1], [], []>} : vector<32x64xbf16>, vector<64x128xbf16>, vector<32x128xf32> -> vector<32x128xf32>
    %c1_81 = arith.constant 1 : index
    %c0_82 = arith.constant 0 : index
    %c0_83 = arith.constant 0 : index
    %111 = vector.load %arg6[%c1_81, %c0_82, %c0_83] : memref<9x32x32xbf16, #tpu.memory_space<vmem>>, vector<1x32x32xbf16>
    %112 = vector.shape_cast %111 : vector<1x32x32xbf16> to vector<32x32xbf16>
    %cst_84 = arith.constant dense<0.000000e+00> : vector<32x64xf32>
    %113 = tpu.matmul %112, %103, %cst_84 {dimension_numbers = #tpu.dot_dimension_numbers<[1], [0], [0], [1], [0, 0, 1, 1], [], []>} : vector<32x32xbf16>, vector<32x64xbf16>, vector<32x64xf32> -> vector<32x64xf32>
    %114 = arith.truncf %113 : vector<32x64xf32> to vector<32x64xbf16>
    %c1_85 = arith.constant 1 : index
    %c0_86 = arith.constant 0 : index
    %c0_87 = arith.constant 0 : index
    %115 = vector.load %arg7[%c1_85, %c0_86, %c0_87] : memref<9x64x128xbf16, #tpu.memory_space<vmem>>, vector<1x64x128xbf16>
    %116 = vector.shape_cast %115 : vector<1x64x128xbf16> to vector<64x128xbf16>
    %cst_88 = arith.constant dense<0.000000e+00> : vector<32x128xf32>
    %117 = tpu.matmul %114, %116, %cst_88 {dimension_numbers = #tpu.dot_dimension_numbers<[1], [0], [0], [1], [0, 0, 1, 1], [], []>} : vector<32x64xbf16>, vector<64x128xbf16>, vector<32x128xf32> -> vector<32x128xf32>
    %118 = arith.addf %110, %117 : vector<32x128xf32>
    %c2_89 = arith.constant 2 : index
    %c0_90 = arith.constant 0 : index
    %c0_91 = arith.constant 0 : index
    %119 = vector.load %arg6[%c2_89, %c0_90, %c0_91] : memref<9x32x32xbf16, #tpu.memory_space<vmem>>, vector<1x32x32xbf16>
    %120 = vector.shape_cast %119 : vector<1x32x32xbf16> to vector<32x32xbf16>
    %cst_92 = arith.constant dense<0.000000e+00> : vector<32x64xf32>
    %121 = tpu.matmul %120, %103, %cst_92 {dimension_numbers = #tpu.dot_dimension_numbers<[1], [0], [0], [1], [0, 0, 1, 1], [], []>} : vector<32x32xbf16>, vector<32x64xbf16>, vector<32x64xf32> -> vector<32x64xf32>
    %122 = arith.truncf %121 : vector<32x64xf32> to vector<32x64xbf16>
    %c2_93 = arith.constant 2 : index
    %c0_94 = arith.constant 0 : index
    %c0_95 = arith.constant 0 : index
    %123 = vector.load %arg7[%c2_93, %c0_94, %c0_95] : memref<9x64x128xbf16, #tpu.memory_space<vmem>>, vector<1x64x128xbf16>
    %124 = vector.shape_cast %123 : vector<1x64x128xbf16> to vector<64x128xbf16>
    %cst_96 = arith.constant dense<0.000000e+00> : vector<32x128xf32>
    %125 = tpu.matmul %122, %124, %cst_96 {dimension_numbers = #tpu.dot_dimension_numbers<[1], [0], [0], [1], [0, 0, 1, 1], [], []>} : vector<32x64xbf16>, vector<64x128xbf16>, vector<32x128xf32> -> vector<32x128xf32>
    %126 = arith.addf %118, %125 : vector<32x128xf32>
    %c3_97 = arith.constant 3 : index
    %c0_98 = arith.constant 0 : index
    %c0_99 = arith.constant 0 : index
    %127 = vector.load %arg6[%c3_97, %c0_98, %c0_99] : memref<9x32x32xbf16, #tpu.memory_space<vmem>>, vector<1x32x32xbf16>
    %128 = vector.shape_cast %127 : vector<1x32x32xbf16> to vector<32x32xbf16>
    %cst_100 = arith.constant dense<0.000000e+00> : vector<32x64xf32>
    %129 = tpu.matmul %128, %103, %cst_100 {dimension_numbers = #tpu.dot_dimension_numbers<[1], [0], [0], [1], [0, 0, 1, 1], [], []>} : vector<32x32xbf16>, vector<32x64xbf16>, vector<32x64xf32> -> vector<32x64xf32>
    %130 = arith.truncf %129 : vector<32x64xf32> to vector<32x64xbf16>
    %c3_101 = arith.constant 3 : index
    %c0_102 = arith.constant 0 : index
    %c0_103 = arith.constant 0 : index
    %131 = vector.load %arg7[%c3_101, %c0_102, %c0_103] : memref<9x64x128xbf16, #tpu.memory_space<vmem>>, vector<1x64x128xbf16>
    %132 = vector.shape_cast %131 : vector<1x64x128xbf16> to vector<64x128xbf16>
    %cst_104 = arith.constant dense<0.000000e+00> : vector<32x128xf32>
    %133 = tpu.matmul %130, %132, %cst_104 {dimension_numbers = #tpu.dot_dimension_numbers<[1], [0], [0], [1], [0, 0, 1, 1], [], []>} : vector<32x64xbf16>, vector<64x128xbf16>, vector<32x128xf32> -> vector<32x128xf32>
    %134 = arith.addf %126, %133 : vector<32x128xf32>
    %c4_105 = arith.constant 4 : index
    %c0_106 = arith.constant 0 : index
    %c0_107 = arith.constant 0 : index
    %135 = vector.load %arg6[%c4_105, %c0_106, %c0_107] : memref<9x32x32xbf16, #tpu.memory_space<vmem>>, vector<1x32x32xbf16>
    %136 = vector.shape_cast %135 : vector<1x32x32xbf16> to vector<32x32xbf16>
    %cst_108 = arith.constant dense<0.000000e+00> : vector<32x64xf32>
    %137 = tpu.matmul %136, %103, %cst_108 {dimension_numbers = #tpu.dot_dimension_numbers<[1], [0], [0], [1], [0, 0, 1, 1], [], []>} : vector<32x32xbf16>, vector<32x64xbf16>, vector<32x64xf32> -> vector<32x64xf32>
    %138 = arith.truncf %137 : vector<32x64xf32> to vector<32x64xbf16>
    %c4_109 = arith.constant 4 : index
    %c0_110 = arith.constant 0 : index
    %c0_111 = arith.constant 0 : index
    %139 = vector.load %arg7[%c4_109, %c0_110, %c0_111] : memref<9x64x128xbf16, #tpu.memory_space<vmem>>, vector<1x64x128xbf16>
    %140 = vector.shape_cast %139 : vector<1x64x128xbf16> to vector<64x128xbf16>
    %cst_112 = arith.constant dense<0.000000e+00> : vector<32x128xf32>
    %141 = tpu.matmul %138, %140, %cst_112 {dimension_numbers = #tpu.dot_dimension_numbers<[1], [0], [0], [1], [0, 0, 1, 1], [], []>} : vector<32x64xbf16>, vector<64x128xbf16>, vector<32x128xf32> -> vector<32x128xf32>
    %142 = arith.addf %134, %141 : vector<32x128xf32>
    %c5_113 = arith.constant 5 : index
    %c0_114 = arith.constant 0 : index
    %c0_115 = arith.constant 0 : index
    %143 = vector.load %arg6[%c5_113, %c0_114, %c0_115] : memref<9x32x32xbf16, #tpu.memory_space<vmem>>, vector<1x32x32xbf16>
    %144 = vector.shape_cast %143 : vector<1x32x32xbf16> to vector<32x32xbf16>
    %cst_116 = arith.constant dense<0.000000e+00> : vector<32x64xf32>
    %145 = tpu.matmul %144, %103, %cst_116 {dimension_numbers = #tpu.dot_dimension_numbers<[1], [0], [0], [1], [0, 0, 1, 1], [], []>} : vector<32x32xbf16>, vector<32x64xbf16>, vector<32x64xf32> -> vector<32x64xf32>
    %146 = arith.truncf %145 : vector<32x64xf32> to vector<32x64xbf16>
    %c5_117 = arith.constant 5 : index
    %c0_118 = arith.constant 0 : index
    %c0_119 = arith.constant 0 : index
    %147 = vector.load %arg7[%c5_117, %c0_118, %c0_119] : memref<9x64x128xbf16, #tpu.memory_space<vmem>>, vector<1x64x128xbf16>
    %148 = vector.shape_cast %147 : vector<1x64x128xbf16> to vector<64x128xbf16>
    %cst_120 = arith.constant dense<0.000000e+00> : vector<32x128xf32>
    %149 = tpu.matmul %146, %148, %cst_120 {dimension_numbers = #tpu.dot_dimension_numbers<[1], [0], [0], [1], [0, 0, 1, 1], [], []>} : vector<32x64xbf16>, vector<64x128xbf16>, vector<32x128xf32> -> vector<32x128xf32>
    %150 = arith.addf %142, %149 : vector<32x128xf32>
    %c6_121 = arith.constant 6 : index
    %c0_122 = arith.constant 0 : index
    %c0_123 = arith.constant 0 : index
    %151 = vector.load %arg6[%c6_121, %c0_122, %c0_123] : memref<9x32x32xbf16, #tpu.memory_space<vmem>>, vector<1x32x32xbf16>
    %152 = vector.shape_cast %151 : vector<1x32x32xbf16> to vector<32x32xbf16>
    %cst_124 = arith.constant dense<0.000000e+00> : vector<32x64xf32>
    %153 = tpu.matmul %152, %103, %cst_124 {dimension_numbers = #tpu.dot_dimension_numbers<[1], [0], [0], [1], [0, 0, 1, 1], [], []>} : vector<32x32xbf16>, vector<32x64xbf16>, vector<32x64xf32> -> vector<32x64xf32>
    %154 = arith.truncf %153 : vector<32x64xf32> to vector<32x64xbf16>
    %c6_125 = arith.constant 6 : index
    %c0_126 = arith.constant 0 : index
    %c0_127 = arith.constant 0 : index
    %155 = vector.load %arg7[%c6_125, %c0_126, %c0_127] : memref<9x64x128xbf16, #tpu.memory_space<vmem>>, vector<1x64x128xbf16>
    %156 = vector.shape_cast %155 : vector<1x64x128xbf16> to vector<64x128xbf16>
    %cst_128 = arith.constant dense<0.000000e+00> : vector<32x128xf32>
    %157 = tpu.matmul %154, %156, %cst_128 {dimension_numbers = #tpu.dot_dimension_numbers<[1], [0], [0], [1], [0, 0, 1, 1], [], []>} : vector<32x64xbf16>, vector<64x128xbf16>, vector<32x128xf32> -> vector<32x128xf32>
    %158 = arith.addf %150, %157 : vector<32x128xf32>
    %c7_129 = arith.constant 7 : index
    %c0_130 = arith.constant 0 : index
    %c0_131 = arith.constant 0 : index
    %159 = vector.load %arg6[%c7_129, %c0_130, %c0_131] : memref<9x32x32xbf16, #tpu.memory_space<vmem>>, vector<1x32x32xbf16>
    %160 = vector.shape_cast %159 : vector<1x32x32xbf16> to vector<32x32xbf16>
    %cst_132 = arith.constant dense<0.000000e+00> : vector<32x64xf32>
    %161 = tpu.matmul %160, %103, %cst_132 {dimension_numbers = #tpu.dot_dimension_numbers<[1], [0], [0], [1], [0, 0, 1, 1], [], []>} : vector<32x32xbf16>, vector<32x64xbf16>, vector<32x64xf32> -> vector<32x64xf32>
    %162 = arith.truncf %161 : vector<32x64xf32> to vector<32x64xbf16>
    %c7_133 = arith.constant 7 : index
    %c0_134 = arith.constant 0 : index
    %c0_135 = arith.constant 0 : index
    %163 = vector.load %arg7[%c7_133, %c0_134, %c0_135] : memref<9x64x128xbf16, #tpu.memory_space<vmem>>, vector<1x64x128xbf16>
    %164 = vector.shape_cast %163 : vector<1x64x128xbf16> to vector<64x128xbf16>
    %cst_136 = arith.constant dense<0.000000e+00> : vector<32x128xf32>
    %165 = tpu.matmul %162, %164, %cst_136 {dimension_numbers = #tpu.dot_dimension_numbers<[1], [0], [0], [1], [0, 0, 1, 1], [], []>} : vector<32x64xbf16>, vector<64x128xbf16>, vector<32x128xf32> -> vector<32x128xf32>
    %166 = arith.addf %158, %165 : vector<32x128xf32>
    %c8_137 = arith.constant 8 : index
    %c0_138 = arith.constant 0 : index
    %c0_139 = arith.constant 0 : index
    %167 = vector.load %arg6[%c8_137, %c0_138, %c0_139] : memref<9x32x32xbf16, #tpu.memory_space<vmem>>, vector<1x32x32xbf16>
    %168 = vector.shape_cast %167 : vector<1x32x32xbf16> to vector<32x32xbf16>
    %cst_140 = arith.constant dense<0.000000e+00> : vector<32x64xf32>
    %169 = tpu.matmul %168, %103, %cst_140 {dimension_numbers = #tpu.dot_dimension_numbers<[1], [0], [0], [1], [0, 0, 1, 1], [], []>} : vector<32x32xbf16>, vector<32x64xbf16>, vector<32x64xf32> -> vector<32x64xf32>
    %170 = arith.truncf %169 : vector<32x64xf32> to vector<32x64xbf16>
    %c8_141 = arith.constant 8 : index
    %c0_142 = arith.constant 0 : index
    %c0_143 = arith.constant 0 : index
    %171 = vector.load %arg7[%c8_141, %c0_142, %c0_143] : memref<9x64x128xbf16, #tpu.memory_space<vmem>>, vector<1x64x128xbf16>
    %172 = vector.shape_cast %171 : vector<1x64x128xbf16> to vector<64x128xbf16>
    %cst_144 = arith.constant dense<0.000000e+00> : vector<32x128xf32>
    %173 = tpu.matmul %170, %172, %cst_144 {dimension_numbers = #tpu.dot_dimension_numbers<[1], [0], [0], [1], [0, 0, 1, 1], [], []>} : vector<32x64xbf16>, vector<64x128xbf16>, vector<32x128xf32> -> vector<32x128xf32>
    %174 = arith.addf %166, %173 : vector<32x128xf32>
    %c0_145 = arith.constant 0 : index
    %c0_146 = arith.constant 0 : index
    %175 = vector.load %arg8[%c0_145, %c0_146] : memref<1x128xf32, #tpu.memory_space<vmem>>, vector<1x128xf32>
    %176 = vector.extract_strided_slice %174 {offsets = [0, 0], sizes = [8, 128], strides = [1, 1]} : vector<32x128xf32> to vector<8x128xf32>
    %177 = vector.extract_strided_slice %174 {offsets = [8, 0], sizes = [8, 128], strides = [1, 1]} : vector<32x128xf32> to vector<8x128xf32>
    %178 = arith.maximumf %176, %177 : vector<8x128xf32>
    %179 = vector.extract_strided_slice %174 {offsets = [16, 0], sizes = [8, 128], strides = [1, 1]} : vector<32x128xf32> to vector<8x128xf32>
    %180 = vector.extract_strided_slice %174 {offsets = [24, 0], sizes = [8, 128], strides = [1, 1]} : vector<32x128xf32> to vector<8x128xf32>
    %181 = arith.maximumf %179, %180 : vector<8x128xf32>
    %182 = arith.maximumf %178, %181 : vector<8x128xf32>
    %183 = vector.broadcast %175 : vector<1x128xf32> to vector<8x128xf32>
    %184 = arith.addf %182, %183 : vector<8x128xf32>
    %cst_147 = arith.constant 0.000000e+00 : f32
    %185 = vector.broadcast %cst_147 : f32 to vector<8x128xf32>
    %186 = arith.maximumf %184, %185 : vector<8x128xf32>
    %187 = arith.truncf %186 : vector<8x128xf32> to vector<8x128xbf16>
    %c0_148 = arith.constant 0 : index
    %c0_149 = arith.constant 0 : index
    %c0_150 = arith.constant 0 : index
    %188 = vector.load %arg9[%c0_148, %c0_149, %c0_150] : memref<9x32x8xbf16, #tpu.memory_space<vmem>>, vector<1x32x8xbf16>
    %189 = vector.shape_cast %188 : vector<1x32x8xbf16> to vector<32x8xbf16>
    %cst_151 = arith.constant dense<0.000000e+00> : vector<32x128xf32>
    %190 = tpu.matmul %189, %187, %cst_151 {dimension_numbers = #tpu.dot_dimension_numbers<[1], [0], [0], [1], [0, 0, 1, 1], [], []>} : vector<32x8xbf16>, vector<8x128xbf16>, vector<32x128xf32> -> vector<32x128xf32>
    %191 = arith.truncf %190 : vector<32x128xf32> to vector<32x128xbf16>
    %c0_152 = arith.constant 0 : index
    %c0_153 = arith.constant 0 : index
    %c0_154 = arith.constant 0 : index
    %192 = vector.load %arg10[%c0_152, %c0_153, %c0_154] : memref<9x128x256xbf16, #tpu.memory_space<vmem>>, vector<1x128x256xbf16>
    %193 = vector.shape_cast %192 : vector<1x128x256xbf16> to vector<128x256xbf16>
    %cst_155 = arith.constant dense<0.000000e+00> : vector<32x256xf32>
    %194 = tpu.matmul %191, %193, %cst_155 {dimension_numbers = #tpu.dot_dimension_numbers<[1], [0], [0], [1], [0, 0, 1, 1], [], []>} : vector<32x128xbf16>, vector<128x256xbf16>, vector<32x256xf32> -> vector<32x256xf32>
    %c1_156 = arith.constant 1 : index
    %c0_157 = arith.constant 0 : index
    %c0_158 = arith.constant 0 : index
    %195 = vector.load %arg9[%c1_156, %c0_157, %c0_158] : memref<9x32x8xbf16, #tpu.memory_space<vmem>>, vector<1x32x8xbf16>
    %196 = vector.shape_cast %195 : vector<1x32x8xbf16> to vector<32x8xbf16>
    %cst_159 = arith.constant dense<0.000000e+00> : vector<32x128xf32>
    %197 = tpu.matmul %196, %187, %cst_159 {dimension_numbers = #tpu.dot_dimension_numbers<[1], [0], [0], [1], [0, 0, 1, 1], [], []>} : vector<32x8xbf16>, vector<8x128xbf16>, vector<32x128xf32> -> vector<32x128xf32>
    %198 = arith.truncf %197 : vector<32x128xf32> to vector<32x128xbf16>
    %c1_160 = arith.constant 1 : index
    %c0_161 = arith.constant 0 : index
    %c0_162 = arith.constant 0 : index
    %199 = vector.load %arg10[%c1_160, %c0_161, %c0_162] : memref<9x128x256xbf16, #tpu.memory_space<vmem>>, vector<1x128x256xbf16>
    %200 = vector.shape_cast %199 : vector<1x128x256xbf16> to vector<128x256xbf16>
    %cst_163 = arith.constant dense<0.000000e+00> : vector<32x256xf32>
    %201 = tpu.matmul %198, %200, %cst_163 {dimension_numbers = #tpu.dot_dimension_numbers<[1], [0], [0], [1], [0, 0, 1, 1], [], []>} : vector<32x128xbf16>, vector<128x256xbf16>, vector<32x256xf32> -> vector<32x256xf32>
    %202 = arith.addf %194, %201 : vector<32x256xf32>
    %c2_164 = arith.constant 2 : index
    %c0_165 = arith.constant 0 : index
    %c0_166 = arith.constant 0 : index
    %203 = vector.load %arg9[%c2_164, %c0_165, %c0_166] : memref<9x32x8xbf16, #tpu.memory_space<vmem>>, vector<1x32x8xbf16>
    %204 = vector.shape_cast %203 : vector<1x32x8xbf16> to vector<32x8xbf16>
    %cst_167 = arith.constant dense<0.000000e+00> : vector<32x128xf32>
    %205 = tpu.matmul %204, %187, %cst_167 {dimension_numbers = #tpu.dot_dimension_numbers<[1], [0], [0], [1], [0, 0, 1, 1], [], []>} : vector<32x8xbf16>, vector<8x128xbf16>, vector<32x128xf32> -> vector<32x128xf32>
    %206 = arith.truncf %205 : vector<32x128xf32> to vector<32x128xbf16>
    %c2_168 = arith.constant 2 : index
    %c0_169 = arith.constant 0 : index
    %c0_170 = arith.constant 0 : index
    %207 = vector.load %arg10[%c2_168, %c0_169, %c0_170] : memref<9x128x256xbf16, #tpu.memory_space<vmem>>, vector<1x128x256xbf16>
    %208 = vector.shape_cast %207 : vector<1x128x256xbf16> to vector<128x256xbf16>
    %cst_171 = arith.constant dense<0.000000e+00> : vector<32x256xf32>
    %209 = tpu.matmul %206, %208, %cst_171 {dimension_numbers = #tpu.dot_dimension_numbers<[1], [0], [0], [1], [0, 0, 1, 1], [], []>} : vector<32x128xbf16>, vector<128x256xbf16>, vector<32x256xf32> -> vector<32x256xf32>
    %210 = arith.addf %202, %209 : vector<32x256xf32>
    %c3_172 = arith.constant 3 : index
    %c0_173 = arith.constant 0 : index
    %c0_174 = arith.constant 0 : index
    %211 = vector.load %arg9[%c3_172, %c0_173, %c0_174] : memref<9x32x8xbf16, #tpu.memory_space<vmem>>, vector<1x32x8xbf16>
    %212 = vector.shape_cast %211 : vector<1x32x8xbf16> to vector<32x8xbf16>
    %cst_175 = arith.constant dense<0.000000e+00> : vector<32x128xf32>
    %213 = tpu.matmul %212, %187, %cst_175 {dimension_numbers = #tpu.dot_dimension_numbers<[1], [0], [0], [1], [0, 0, 1, 1], [], []>} : vector<32x8xbf16>, vector<8x128xbf16>, vector<32x128xf32> -> vector<32x128xf32>
    %214 = arith.truncf %213 : vector<32x128xf32> to vector<32x128xbf16>
    %c3_176 = arith.constant 3 : index
    %c0_177 = arith.constant 0 : index
    %c0_178 = arith.constant 0 : index
    %215 = vector.load %arg10[%c3_176, %c0_177, %c0_178] : memref<9x128x256xbf16, #tpu.memory_space<vmem>>, vector<1x128x256xbf16>
    %216 = vector.shape_cast %215 : vector<1x128x256xbf16> to vector<128x256xbf16>
    %cst_179 = arith.constant dense<0.000000e+00> : vector<32x256xf32>
    %217 = tpu.matmul %214, %216, %cst_179 {dimension_numbers = #tpu.dot_dimension_numbers<[1], [0], [0], [1], [0, 0, 1, 1], [], []>} : vector<32x128xbf16>, vector<128x256xbf16>, vector<32x256xf32> -> vector<32x256xf32>
    %218 = arith.addf %210, %217 : vector<32x256xf32>
    %c4_180 = arith.constant 4 : index
    %c0_181 = arith.constant 0 : index
    %c0_182 = arith.constant 0 : index
    %219 = vector.load %arg9[%c4_180, %c0_181, %c0_182] : memref<9x32x8xbf16, #tpu.memory_space<vmem>>, vector<1x32x8xbf16>
    %220 = vector.shape_cast %219 : vector<1x32x8xbf16> to vector<32x8xbf16>
    %cst_183 = arith.constant dense<0.000000e+00> : vector<32x128xf32>
    %221 = tpu.matmul %220, %187, %cst_183 {dimension_numbers = #tpu.dot_dimension_numbers<[1], [0], [0], [1], [0, 0, 1, 1], [], []>} : vector<32x8xbf16>, vector<8x128xbf16>, vector<32x128xf32> -> vector<32x128xf32>
    %222 = arith.truncf %221 : vector<32x128xf32> to vector<32x128xbf16>
    %c4_184 = arith.constant 4 : index
    %c0_185 = arith.constant 0 : index
    %c0_186 = arith.constant 0 : index
    %223 = vector.load %arg10[%c4_184, %c0_185, %c0_186] : memref<9x128x256xbf16, #tpu.memory_space<vmem>>, vector<1x128x256xbf16>
    %224 = vector.shape_cast %223 : vector<1x128x256xbf16> to vector<128x256xbf16>
    %cst_187 = arith.constant dense<0.000000e+00> : vector<32x256xf32>
    %225 = tpu.matmul %222, %224, %cst_187 {dimension_numbers = #tpu.dot_dimension_numbers<[1], [0], [0], [1], [0, 0, 1, 1], [], []>} : vector<32x128xbf16>, vector<128x256xbf16>, vector<32x256xf32> -> vector<32x256xf32>
    %226 = arith.addf %218, %225 : vector<32x256xf32>
    %c5_188 = arith.constant 5 : index
    %c0_189 = arith.constant 0 : index
    %c0_190 = arith.constant 0 : index
    %227 = vector.load %arg9[%c5_188, %c0_189, %c0_190] : memref<9x32x8xbf16, #tpu.memory_space<vmem>>, vector<1x32x8xbf16>
    %228 = vector.shape_cast %227 : vector<1x32x8xbf16> to vector<32x8xbf16>
    %cst_191 = arith.constant dense<0.000000e+00> : vector<32x128xf32>
    %229 = tpu.matmul %228, %187, %cst_191 {dimension_numbers = #tpu.dot_dimension_numbers<[1], [0], [0], [1], [0, 0, 1, 1], [], []>} : vector<32x8xbf16>, vector<8x128xbf16>, vector<32x128xf32> -> vector<32x128xf32>
    %230 = arith.truncf %229 : vector<32x128xf32> to vector<32x128xbf16>
    %c5_192 = arith.constant 5 : index
    %c0_193 = arith.constant 0 : index
    %c0_194 = arith.constant 0 : index
    %231 = vector.load %arg10[%c5_192, %c0_193, %c0_194] : memref<9x128x256xbf16, #tpu.memory_space<vmem>>, vector<1x128x256xbf16>
    %232 = vector.shape_cast %231 : vector<1x128x256xbf16> to vector<128x256xbf16>
    %cst_195 = arith.constant dense<0.000000e+00> : vector<32x256xf32>
    %233 = tpu.matmul %230, %232, %cst_195 {dimension_numbers = #tpu.dot_dimension_numbers<[1], [0], [0], [1], [0, 0, 1, 1], [], []>} : vector<32x128xbf16>, vector<128x256xbf16>, vector<32x256xf32> -> vector<32x256xf32>
    %234 = arith.addf %226, %233 : vector<32x256xf32>
    %c6_196 = arith.constant 6 : index
    %c0_197 = arith.constant 0 : index
    %c0_198 = arith.constant 0 : index
    %235 = vector.load %arg9[%c6_196, %c0_197, %c0_198] : memref<9x32x8xbf16, #tpu.memory_space<vmem>>, vector<1x32x8xbf16>
    %236 = vector.shape_cast %235 : vector<1x32x8xbf16> to vector<32x8xbf16>
    %cst_199 = arith.constant dense<0.000000e+00> : vector<32x128xf32>
    %237 = tpu.matmul %236, %187, %cst_199 {dimension_numbers = #tpu.dot_dimension_numbers<[1], [0], [0], [1], [0, 0, 1, 1], [], []>} : vector<32x8xbf16>, vector<8x128xbf16>, vector<32x128xf32> -> vector<32x128xf32>
    %238 = arith.truncf %237 : vector<32x128xf32> to vector<32x128xbf16>
    %c6_200 = arith.constant 6 : index
    %c0_201 = arith.constant 0 : index
    %c0_202 = arith.constant 0 : index
    %239 = vector.load %arg10[%c6_200, %c0_201, %c0_202] : memref<9x128x256xbf16, #tpu.memory_space<vmem>>, vector<1x128x256xbf16>
    %240 = vector.shape_cast %239 : vector<1x128x256xbf16> to vector<128x256xbf16>
    %cst_203 = arith.constant dense<0.000000e+00> : vector<32x256xf32>
    %241 = tpu.matmul %238, %240, %cst_203 {dimension_numbers = #tpu.dot_dimension_numbers<[1], [0], [0], [1], [0, 0, 1, 1], [], []>} : vector<32x128xbf16>, vector<128x256xbf16>, vector<32x256xf32> -> vector<32x256xf32>
    %242 = arith.addf %234, %241 : vector<32x256xf32>
    %c7_204 = arith.constant 7 : index
    %c0_205 = arith.constant 0 : index
    %c0_206 = arith.constant 0 : index
    %243 = vector.load %arg9[%c7_204, %c0_205, %c0_206] : memref<9x32x8xbf16, #tpu.memory_space<vmem>>, vector<1x32x8xbf16>
    %244 = vector.shape_cast %243 : vector<1x32x8xbf16> to vector<32x8xbf16>
    %cst_207 = arith.constant dense<0.000000e+00> : vector<32x128xf32>
    %245 = tpu.matmul %244, %187, %cst_207 {dimension_numbers = #tpu.dot_dimension_numbers<[1], [0], [0], [1], [0, 0, 1, 1], [], []>} : vector<32x8xbf16>, vector<8x128xbf16>, vector<32x128xf32> -> vector<32x128xf32>
    %246 = arith.truncf %245 : vector<32x128xf32> to vector<32x128xbf16>
    %c7_208 = arith.constant 7 : index
    %c0_209 = arith.constant 0 : index
    %c0_210 = arith.constant 0 : index
    %247 = vector.load %arg10[%c7_208, %c0_209, %c0_210] : memref<9x128x256xbf16, #tpu.memory_space<vmem>>, vector<1x128x256xbf16>
    %248 = vector.shape_cast %247 : vector<1x128x256xbf16> to vector<128x256xbf16>
    %cst_211 = arith.constant dense<0.000000e+00> : vector<32x256xf32>
    %249 = tpu.matmul %246, %248, %cst_211 {dimension_numbers = #tpu.dot_dimension_numbers<[1], [0], [0], [1], [0, 0, 1, 1], [], []>} : vector<32x128xbf16>, vector<128x256xbf16>, vector<32x256xf32> -> vector<32x256xf32>
    %250 = arith.addf %242, %249 : vector<32x256xf32>
    %c8_212 = arith.constant 8 : index
    %c0_213 = arith.constant 0 : index
    %c0_214 = arith.constant 0 : index
    %251 = vector.load %arg9[%c8_212, %c0_213, %c0_214] : memref<9x32x8xbf16, #tpu.memory_space<vmem>>, vector<1x32x8xbf16>
    %252 = vector.shape_cast %251 : vector<1x32x8xbf16> to vector<32x8xbf16>
    %cst_215 = arith.constant dense<0.000000e+00> : vector<32x128xf32>
    %253 = tpu.matmul %252, %187, %cst_215 {dimension_numbers = #tpu.dot_dimension_numbers<[1], [0], [0], [1], [0, 0, 1, 1], [], []>} : vector<32x8xbf16>, vector<8x128xbf16>, vector<32x128xf32> -> vector<32x128xf32>
    %254 = arith.truncf %253 : vector<32x128xf32> to vector<32x128xbf16>
    %c8_216 = arith.constant 8 : index
    %c0_217 = arith.constant 0 : index
    %c0_218 = arith.constant 0 : index
    %255 = vector.load %arg10[%c8_216, %c0_217, %c0_218] : memref<9x128x256xbf16, #tpu.memory_space<vmem>>, vector<1x128x256xbf16>
    %256 = vector.shape_cast %255 : vector<1x128x256xbf16> to vector<128x256xbf16>
    %cst_219 = arith.constant dense<0.000000e+00> : vector<32x256xf32>
    %257 = tpu.matmul %254, %256, %cst_219 {dimension_numbers = #tpu.dot_dimension_numbers<[1], [0], [0], [1], [0, 0, 1, 1], [], []>} : vector<32x128xbf16>, vector<128x256xbf16>, vector<32x256xf32> -> vector<32x256xf32>
    %258 = arith.addf %250, %257 : vector<32x256xf32>
    %c0_220 = arith.constant 0 : index
    %c0_221 = arith.constant 0 : index
    %259 = vector.load %arg11[%c0_220, %c0_221] : memref<1x256xf32, #tpu.memory_space<vmem>>, vector<1x256xf32>
    %260 = vector.extract_strided_slice %258 {offsets = [0, 0], sizes = [8, 256], strides = [1, 1]} : vector<32x256xf32> to vector<8x256xf32>
    %261 = vector.extract_strided_slice %258 {offsets = [8, 0], sizes = [8, 256], strides = [1, 1]} : vector<32x256xf32> to vector<8x256xf32>
    %262 = arith.maximumf %260, %261 : vector<8x256xf32>
    %263 = vector.extract_strided_slice %258 {offsets = [16, 0], sizes = [8, 256], strides = [1, 1]} : vector<32x256xf32> to vector<8x256xf32>
    %264 = vector.extract_strided_slice %258 {offsets = [24, 0], sizes = [8, 256], strides = [1, 1]} : vector<32x256xf32> to vector<8x256xf32>
    %265 = arith.maximumf %263, %264 : vector<8x256xf32>
    %266 = arith.maximumf %262, %265 : vector<8x256xf32>
    %267 = vector.broadcast %259 : vector<1x256xf32> to vector<8x256xf32>
    %268 = arith.addf %266, %267 : vector<8x256xf32>
    %cst_222 = arith.constant 0.000000e+00 : f32
    %269 = vector.broadcast %cst_222 : f32 to vector<8x256xf32>
    %270 = arith.maximumf %268, %269 : vector<8x256xf32>
    %271 = arith.truncf %270 : vector<8x256xf32> to vector<8x256xbf16>
    %c0_223 = arith.constant 0 : index
    %c0_224 = arith.constant 0 : index
    %272 = vector.load %arg12[%c0_223, %c0_224] : memref<256x512xbf16, #tpu.memory_space<vmem>>, vector<256x512xbf16>
    %cst_225 = arith.constant dense<0.000000e+00> : vector<8x512xf32>
    %273 = tpu.matmul %271, %272, %cst_225 {dimension_numbers = #tpu.dot_dimension_numbers<[1], [0], [0], [1], [0, 0, 1, 1], [], []>} : vector<8x256xbf16>, vector<256x512xbf16>, vector<8x512xf32> -> vector<8x512xf32>
    %c0_226 = arith.constant 0 : index
    %c0_227 = arith.constant 0 : index
    %274 = vector.load %arg13[%c0_226, %c0_227] : memref<1x512xf32, #tpu.memory_space<vmem>>, vector<1x512xf32>
    %275 = vector.broadcast %274 : vector<1x512xf32> to vector<8x512xf32>
    %276 = arith.addf %273, %275 : vector<8x512xf32>
    %cst_228 = arith.constant 0.000000e+00 : f32
    %277 = vector.broadcast %cst_228 : f32 to vector<8x512xf32>
    %278 = arith.maximumf %276, %277 : vector<8x512xf32>
    %c0_i32_229 = arith.constant 0 : i32
    %279 = tpu.memref_slice %arg25[%c0_i32_229] : memref<2x!tpu.dma_semaphore, #tpu.memory_space<semaphore_mem>> -> memref<1x!tpu.dma_semaphore, #tpu.memory_space<semaphore_mem>>
    %280 = tpu.memref_squeeze %279 : memref<1x!tpu.dma_semaphore, #tpu.memory_space<semaphore_mem>> -> memref<!tpu.dma_semaphore, #tpu.memory_space<semaphore_mem>>
    tpu.wait_dma2 semaphore(%280 : memref<!tpu.dma_semaphore, #tpu.memory_space<semaphore_mem>>) src(%arg14 : memref<512x1024xbf16, #tpu.memory_space<any>>) dst(%arg23 : memref<512x1024xbf16, #tpu.memory_space<vmem>>)
    %281 = arith.truncf %278 : vector<8x512xf32> to vector<8x512xbf16>
    %c0_230 = arith.constant 0 : index
    %c0_231 = arith.constant 0 : index
    %282 = vector.load %arg23[%c0_230, %c0_231] : memref<512x1024xbf16, #tpu.memory_space<vmem>>, vector<512x1024xbf16>
    %cst_232 = arith.constant dense<0.000000e+00> : vector<8x1024xf32>
    %283 = tpu.matmul %281, %282, %cst_232 {dimension_numbers = #tpu.dot_dimension_numbers<[1], [0], [0], [1], [0, 0, 1, 1], [], []>} : vector<8x512xbf16>, vector<512x1024xbf16>, vector<8x1024xf32> -> vector<8x1024xf32>
    %c0_233 = arith.constant 0 : index
    %c0_234 = arith.constant 0 : index
    %284 = vector.load %arg15[%c0_233, %c0_234] : memref<1x1024xf32, #tpu.memory_space<vmem>>, vector<1x1024xf32>
    %285 = vector.broadcast %284 : vector<1x1024xf32> to vector<8x1024xf32>
    %286 = arith.addf %283, %285 : vector<8x1024xf32>
    %cst_235 = arith.constant 0.000000e+00 : f32
    %287 = vector.broadcast %cst_235 : f32 to vector<8x1024xf32>
    %288 = arith.maximumf %286, %287 : vector<8x1024xf32>
    %c1_i32_236 = arith.constant 1 : i32
    %289 = tpu.memref_slice %arg25[%c1_i32_236] : memref<2x!tpu.dma_semaphore, #tpu.memory_space<semaphore_mem>> -> memref<1x!tpu.dma_semaphore, #tpu.memory_space<semaphore_mem>>
    %290 = tpu.memref_squeeze %289 : memref<1x!tpu.dma_semaphore, #tpu.memory_space<semaphore_mem>> -> memref<!tpu.dma_semaphore, #tpu.memory_space<semaphore_mem>>
    tpu.wait_dma2 semaphore(%290 : memref<!tpu.dma_semaphore, #tpu.memory_space<semaphore_mem>>) src(%arg16 : memref<1024x512xbf16, #tpu.memory_space<any>>) dst(%arg24 : memref<1024x512xbf16, #tpu.memory_space<vmem>>)
    %291 = arith.truncf %288 : vector<8x1024xf32> to vector<8x1024xbf16>
    %c0_237 = arith.constant 0 : index
    %c0_238 = arith.constant 0 : index
    %292 = vector.load %arg24[%c0_237, %c0_238] : memref<1024x512xbf16, #tpu.memory_space<vmem>>, vector<1024x512xbf16>
    %cst_239 = arith.constant dense<0.000000e+00> : vector<8x512xf32>
    %293 = tpu.matmul %291, %292, %cst_239 {dimension_numbers = #tpu.dot_dimension_numbers<[1], [0], [0], [1], [0, 0, 1, 1], [], []>} : vector<8x1024xbf16>, vector<1024x512xbf16>, vector<8x512xf32> -> vector<8x512xf32>
    %c0_240 = arith.constant 0 : index
    %c0_241 = arith.constant 0 : index
    %294 = vector.load %arg17[%c0_240, %c0_241] : memref<1x512xf32, #tpu.memory_space<vmem>>, vector<1x512xf32>
    %295 = vector.broadcast %294 : vector<1x512xf32> to vector<8x512xf32>
    %296 = arith.addf %293, %295 : vector<8x512xf32>
    %cst_242 = arith.constant 0.000000e+00 : f32
    %297 = vector.broadcast %cst_242 : f32 to vector<8x512xf32>
    %298 = arith.maximumf %296, %297 : vector<8x512xf32>
    %299 = arith.truncf %298 : vector<8x512xf32> to vector<8x512xbf16>
    %c0_243 = arith.constant 0 : index
    %c0_244 = arith.constant 0 : index
    %300 = vector.load %arg18[%c0_243, %c0_244] : memref<512x512xbf16, #tpu.memory_space<vmem>>, vector<512x512xbf16>
    %cst_245 = arith.constant dense<0.000000e+00> : vector<8x512xf32>
    %301 = tpu.matmul %299, %300, %cst_245 {dimension_numbers = #tpu.dot_dimension_numbers<[1], [0], [0], [1], [0, 0, 1, 1], [], []>} : vector<8x512xbf16>, vector<512x512xbf16>, vector<8x512xf32> -> vector<8x512xf32>
    %c0_246 = arith.constant 0 : index
    %c0_247 = arith.constant 0 : index
    %302 = vector.load %arg19[%c0_246, %c0_247] : memref<1x512xf32, #tpu.memory_space<vmem>>, vector<1x512xf32>
    %303 = vector.broadcast %302 : vector<1x512xf32> to vector<8x512xf32>
    %304 = arith.addf %301, %303 : vector<8x512xf32>
    %cst_248 = arith.constant 0.000000e+00 : f32
    %305 = vector.broadcast %cst_248 : f32 to vector<8x512xf32>
    %306 = arith.maximumf %304, %305 : vector<8x512xf32>
    %307 = arith.truncf %306 : vector<8x512xf32> to vector<8x512xbf16>
    %c0_249 = arith.constant 0 : index
    %c0_250 = arith.constant 0 : index
    %308 = vector.load %arg20[%c0_249, %c0_250] : memref<512x128xbf16, #tpu.memory_space<vmem>>, vector<512x128xbf16>
    %cst_251 = arith.constant dense<0.000000e+00> : vector<8x128xf32>
    %309 = tpu.matmul %307, %308, %cst_251 {dimension_numbers = #tpu.dot_dimension_numbers<[1], [0], [0], [1], [0, 0, 1, 1], [], []>} : vector<8x512xbf16>, vector<512x128xbf16>, vector<8x128xf32> -> vector<8x128xf32>
    %c0_252 = arith.constant 0 : index
    %c0_253 = arith.constant 0 : index
    %310 = vector.load %arg21[%c0_252, %c0_253] : memref<1x128xf32, #tpu.memory_space<vmem>>, vector<1x128xf32>
    %311 = vector.broadcast %310 : vector<1x128xf32> to vector<8x128xf32>
    %312 = arith.addf %309, %311 : vector<8x128xf32>
    %c0_254 = arith.constant 0 : index
    %c0_255 = arith.constant 0 : index
    %313 = vector.load %arg22[%c0_254, %c0_255] : memref<8x128xf32, #tpu.memory_space<vmem>>, vector<8x128xf32>
    tpu.vector_store %arg22[%c0_254, %c0_255], %312 {strides = array<i32>} : memref<8x128xf32, #tpu.memory_space<vmem>>, vector<8x128xf32>,
    return
  }
}

</mosaic_0001>

<llo_original>
// kernel: character_recognition_forward.1
$region0: #{character_recognition_forward.1}
  #allocation0 [shape = 'u32[]', space=smem, size = 0x4, offset = 0x4, fixed_abs, tag = 'smem constant byte address 0x4 - core index']
  #allocation1 [shape = 'u32[144,128]{1,0:T(1,128)}', space=vmem, size = 0x12000, scoped, tag = 'internal scratch']
  #allocation2 [shape = 'bf16[512,1024]{1,0:T(8,128)(2,1)}', space=vmem, size = 0x100000, scoped, tag = 'scratch operand']
  #allocation3 [shape = 'bf16[1024,512]{1,0:T(8,128)(2,1)}', space=vmem, size = 0x100000, scoped, tag = 'scratch operand']
  #allocation4 [shape = 's32[2]{0}', space=sflag, size = 0x8, scoped, tag = 'scratch operand']
  #allocation25 [shape = 's32[]', space=sflag, size = 0x4, offset = 0, fixed_abs, tag = 'sflag constant byte address 0x0 - dummy sync flag']
  #allocation26 [shape = 's32[]', space=sflag, size = 0x4, offset = 0, fixed_abs, tag = 'sflag constant byte address 0x0 - dummy sync flag']
  #allocation27 [shape = 'u32[]', space=smem, size = 0x4, offset = 0x44, fixed_abs, tag = 'smem constant byte address 0x44 - assertion arg 0']
  #allocation28 [shape = 'u32[]', space=smem, size = 0x4, offset = 0x48, fixed_abs, tag = 'smem constant byte address 0x48 - assertion arg 1']
  #allocation29 [shape = 's32[]', space=sflag, size = 0x4, offset = 0, fixed_abs, tag = 'sflag constant byte address 0x0 - dummy sync flag']
  #allocation30 [shape = 's32[]', space=sflag, size = 0x4, offset = 0, fixed_abs, tag = 'sflag constant byte address 0x0 - dummy sync flag']
  %s0 = inlined_call_operand.vmem [shape: bf16[512,9], index: 0, kind: input, shape index: {}]
  %s1 = inlined_call_operand.vmem [shape: bf16[9,32], index: 1, kind: input, shape index: {}]
  %s2 = inlined_call_operand.hbm [shape: f32[1,32], index: 2, kind: input, shape index: {}]
  %s3 = inlined_call_operand.vmem [shape: bf16[9,128,128], index: 3, kind: input, shape index: {}]
  %s4 = inlined_call_operand.vmem [shape: bf16[9,32,64], index: 4, kind: input, shape index: {}]
  %s5 = inlined_call_operand.hbm [shape: f32[1,64], index: 5, kind: input, shape index: {}]
  %s6 = inlined_call_operand.hbm [shape: bf16[9,32,32], index: 6, kind: input, shape index: {}]
  %s7 = inlined_call_operand.hbm [shape: bf16[9,64,128], index: 7, kind: input, shape index: {}]
  %s8 = inlined_call_operand.hbm [shape: f32[1,128], index: 8, kind: input, shape index: {}]
  %s9 = inlined_call_operand.vmem [shape: bf16[9,32,8], index: 9, kind: input, shape index: {}]
  %s10 = inlined_call_operand.vmem [shape: bf16[9,128,256], index: 10, kind: input, shape index: {}]
  %s11 = inlined_call_operand.hbm [shape: f32[1,256], index: 11, kind: input, shape index: {}]
  %s12 = inlined_call_operand.hbm [shape: bf16[256,512], index: 12, kind: input, shape index: {}]
  %s13 = inlined_call_operand.vmem [shape: f32[1,512], index: 13, kind: input, shape index: {}]
  %s14 = inlined_call_operand.hbm [shape: bf16[512,1024], index: 14, kind: input, shape index: {}]
  %s15 = inlined_call_operand.hbm [shape: f32[1,1024], index: 15, kind: input, shape index: {}]
  %s16 = inlined_call_operand.hbm [shape: bf16[1024,512], index: 16, kind: input, shape index: {}]
  %s17 = inlined_call_operand.hbm [shape: f32[1,512], index: 17, kind: input, shape index: {}]
  %s18 = inlined_call_operand.hbm [shape: bf16[512,512], index: 18, kind: input, shape index: {}]
  %s19 = inlined_call_operand.hbm [shape: f32[1,512], index: 19, kind: input, shape index: {}]
  %s20 = inlined_call_operand.hbm [shape: bf16[512,128], index: 20, kind: input, shape index: {}]
  %s21 = inlined_call_operand.hbm [shape: f32[1,128], index: 21, kind: input, shape index: {}]
  %s22 = inlined_call_operand.vmem [shape: f32[8,128], index: 22, kind: output, shape index: {}]
  %s23 = sld [smem:[#allocation0]]
  $region150: #{character_recognition_forward.1} parent=0
    _
  %s25 = ssub.s32 1, %s23
  %s26 = scalar_select 0, %s25, %s23
  $region1: #{character_recognition_forward.1} parent=0
    #allocation5 [shape = 'u8[512]{0}', space=vmem, size = 0x400, scoped, tag = 'input window, operand 2, single buffered']
    #allocation6 [shape = 's32[1]{0}', space=sflag, size = 0x4, scoped, tag = 'scoped memory for character_recognition_forward.1']
    #allocation7 [shape = 'u8[512]{0}', space=vmem, size = 0x400, scoped, tag = 'input window, operand 5, single buffered']
    #allocation8 [shape = 's32[1]{0}', space=sflag, size = 0x4, scoped, tag = 'scoped memory for character_recognition_forward.1']
    #allocation9 [shape = 'u8[73728]{0}', space=vmem, size = 0x12000, scoped, tag = 'input window, operand 6, single buffered']
    #allocation10 [shape = 'u8[147456]{0}', space=vmem, size = 0x24000, scoped, tag = 'input window, operand 7, single buffered']
    #allocation11 [shape = 's32[1]{0}', space=sflag, size = 0x4, scoped, tag = 'scoped memory for character_recognition_forward.1']
    #allocation12 [shape = 'u8[512]{0}', space=vmem, size = 0x400, scoped, tag = 'input window, operand 8, single buffered']
    #allocation13 [shape = 'u8[1024]{0}', space=vmem, size = 0x400, scoped, tag = 'input window, operand 11, single buffered']
    #allocation14 [shape = 's32[1]{0}', space=sflag, size = 0x4, scoped, tag = 'scoped memory for character_recognition_forward.1']
    #allocation15 [shape = 'u8[262144]{0}', space=vmem, size = 0x40000, scoped, tag = 'input window, operand 12, single buffered']
    #allocation16 [shape = 'u8[4096]{0}', space=vmem, size = 0x1000, scoped, tag = 'input window, operand 15, single buffered']
    #allocation17 [shape = 's32[1]{0}', space=sflag, size = 0x4, scoped, tag = 'scoped memory for character_recognition_forward.1']
    #allocation18 [shape = 'u8[2048]{0}', space=vmem, size = 0x800, scoped, tag = 'input window, operand 17, single buffered']
    #allocation19 [shape = 'u8[524288]{0}', space=vmem, size = 0x80000, scoped, tag = 'input window, operand 18, single buffered']
    #allocation20 [shape = 's32[1]{0}', space=sflag, size = 0x4, scoped, tag = 'scoped memory for character_recognition_forward.1']
    #allocation21 [shape = 'u8[2048]{0}', space=vmem, size = 0x800, scoped, tag = 'input window, operand 19, single buffered']
    #allocation22 [shape = 'u8[131072]{0}', space=vmem, size = 0x20000, scoped, tag = 'input window, operand 20, single buffered']
    #allocation23 [shape = 's32[1]{0}', space=sflag, size = 0x4, scoped, tag = 'scoped memory for character_recognition_forward.1']
    #allocation24 [shape = 'u8[512]{0}', space=vmem, size = 0x400, scoped, tag = 'input window, operand 21, single buffered']
    %27 = vsyncpa [#allocation6], 0
    %28 = vsyncpa [#allocation8], 0
    %29 = vsyncpa [#allocation11], 0
    %30 = vsyncpa [#allocation14], 0
    %31 = vsyncpa [#allocation17], 0
    %32 = vsyncpa [#allocation20], 0
    %33 = vsyncpa [#allocation23], 0
    // Predicated region
    $region2: #{character_recognition_forward.1} parent=1 // pred_check
      _
    $region3: #{character_recognition_forward.1} parent=1 // pred_check_branch
      %35 = sbr.rel (0) target = $region5
    $region4: #{character_recognition_forward.1} parent=1 // pred_region
      _
    $region5: #{character_recognition_forward.1} parent=1 // pred_fallthru
      _
    // Predicated region
    $region6: #{character_recognition_forward.1} parent=1 // pred_check
      _
    $region7: #{character_recognition_forward.1} parent=1 // pred_check_branch
      %37 = sbr.rel (0) target = $region9
    $region8: #{character_recognition_forward.1} parent=1 // pred_region
      _
    $region9: #{character_recognition_forward.1} parent=1 // pred_fallthru
      _
    // Predicated region
    $region10: #{character_recognition_forward.1} parent=1 // pred_check
      _
    $region11: #{character_recognition_forward.1} parent=1 // pred_check_branch
      %39 = sbr.rel (0) target = $region13
    $region12: #{character_recognition_forward.1} parent=1 // pred_region
      %s41 = ssub.s32 16, 16
      %42 = vsyncadd [#allocation6], %s41
      %s44 = sshll.u32 [#allocation5], 4
      %s45 = int_to_ptr.vmem [resolvable:$true] %s44
      %47 = dma.hbm_to_vmem [thread:$0]  %s2, 16, %s45, [#allocation6]
    $region13: #{character_recognition_forward.1} parent=1 // pred_fallthru
      _
    // Predicated region
    $region14: #{character_recognition_forward.1} parent=1 // pred_check
      _
    $region15: #{character_recognition_forward.1} parent=1 // pred_check_branch
      %49 = sbr.rel (0) target = $region17
    $region16: #{character_recognition_forward.1} parent=1 // pred_region
      _
    $region17: #{character_recognition_forward.1} parent=1 // pred_fallthru
      _
    // Predicated region
    $region18: #{character_recognition_forward.1} parent=1 // pred_check
      _
    $region19: #{character_recognition_forward.1} parent=1 // pred_check_branch
      %51 = sbr.rel (0) target = $region21
    $region20: #{character_recognition_forward.1} parent=1 // pred_region
      _
    $region21: #{character_recognition_forward.1} parent=1 // pred_fallthru
      _
    // Predicated region
    $region22: #{character_recognition_forward.1} parent=1 // pred_check
      _
    $region23: #{character_recognition_forward.1} parent=1 // pred_check_branch
      %53 = sbr.rel (0) target = $region25
    $region24: #{character_recognition_forward.1} parent=1 // pred_region
      %s55 = ssub.s32 16, 16
      %56 = vsyncadd [#allocation8], %s55
      %s58 = sshll.u32 [#allocation7], 4
      %s59 = int_to_ptr.vmem [resolvable:$true] %s58
      %61 = dma.hbm_to_vmem [thread:$0]  %s5, 16, %s59, [#allocation8]
    $region25: #{character_recognition_forward.1} parent=1 // pred_fallthru
      _
    // Predicated region
    $region26: #{character_recognition_forward.1} parent=1 // pred_check
      _
    $region27: #{character_recognition_forward.1} parent=1 // pred_check_branch
      %63 = sbr.rel (0) target = $region29
    $region28: #{character_recognition_forward.1} parent=1 // pred_region
      %s65 = ssub.s32 2304, 2304
      %66 = vsyncadd [#allocation8], %s65
      %s67 = sshll.u32 [#allocation9], 4
      %s68 = int_to_ptr.vmem [resolvable:$true] %s67
      %73 = dma.hbm_to_vmem [thread:$0]  %s6, 2304, %s68, [#allocation8], 64, 64, 4
    $region29: #{character_recognition_forward.1} parent=1 // pred_fallthru
      _
    // Predicated region
    $region30: #{character_recognition_forward.1} parent=1 // pred_check
      _
    $region31: #{character_recognition_forward.1} parent=1 // pred_check_branch
      %75 = sbr.rel (0) target = $region33
    $region32: #{character_recognition_forward.1} parent=1 // pred_region
      %s77 = ssub.s32 4608, 4608
      %78 = vsyncadd [#allocation11], %s77
      %s79 = sshll.u32 [#allocation10], 4
      %s80 = int_to_ptr.vmem [resolvable:$true] %s79
      %85 = dma.hbm_to_vmem [thread:$0]  %s7, 4608, %s80, [#allocation11], 64, 64, 4
    $region33: #{character_recognition_forward.1} parent=1 // pred_fallthru
      _
    // Predicated region
    $region34: #{character_recognition_forward.1} parent=1 // pred_check
      _
    $region35: #{character_recognition_forward.1} parent=1 // pred_check_branch
      %87 = sbr.rel (0) target = $region37
    $region36: #{character_recognition_forward.1} parent=1 // pred_region
      %s89 = ssub.s32 16, 16
      %90 = vsyncadd [#allocation11], %s89
      %s92 = sshll.u32 [#allocation12], 4
      %s93 = int_to_ptr.vmem [resolvable:$true] %s92
      %95 = dma.hbm_to_vmem [thread:$0]  %s8, 16, %s93, [#allocation11]
    $region37: #{character_recognition_forward.1} parent=1 // pred_fallthru
      _
    // Predicated region
    $region38: #{character_recognition_forward.1} parent=1 // pred_check
      _
    $region39: #{character_recognition_forward.1} parent=1 // pred_check_branch
      %97 = sbr.rel (0) target = $region41
    $region40: #{character_recognition_forward.1} parent=1 // pred_region
      _
    $region41: #{character_recognition_forward.1} parent=1 // pred_fallthru
      _
    // Predicated region
    $region42: #{character_recognition_forward.1} parent=1 // pred_check
      _
    $region43: #{character_recognition_forward.1} parent=1 // pred_check_branch
      %99 = sbr.rel (0) target = $region45
    $region44: #{character_recognition_forward.1} parent=1 // pred_region
      _
    $region45: #{character_recognition_forward.1} parent=1 // pred_fallthru
      _
    // Predicated region
    $region46: #{character_recognition_forward.1} parent=1 // pred_check
      _
    $region47: #{character_recognition_forward.1} parent=1 // pred_check_branch
      %101 = sbr.rel (0) target = $region49
    $region48: #{character_recognition_forward.1} parent=1 // pred_region
      %s103 = ssub.s32 32, 32
      %104 = vsyncadd [#allocation14], %s103
      %s106 = sshll.u32 [#allocation13], 4
      %s107 = int_to_ptr.vmem [resolvable:$true] %s106
      %109 = dma.hbm_to_vmem [thread:$0]  %s11, 32, %s107, [#allocation14]
    $region49: #{character_recognition_forward.1} parent=1 // pred_fallthru
      _
    // Predicated region
    $region50: #{character_recognition_forward.1} parent=1 // pred_check
      _
    $region51: #{character_recognition_forward.1} parent=1 // pred_check_branch
      %111 = sbr.rel (0) target = $region53
    $region52: #{character_recognition_forward.1} parent=1 // pred_region
      %s113 = ssub.s32 8192, 8192
      %114 = vsyncadd [#allocation14], %s113
      %s115 = sshll.u32 [#allocation15], 4
      %s116 = int_to_ptr.vmem [resolvable:$true] %s115
      %121 = dma.hbm_to_vmem [thread:$0]  %s12, 8192, %s116, [#allocation14], 256, 256, 16
    $region53: #{character_recognition_forward.1} parent=1 // pred_fallthru
      _
    // Predicated region
    $region54: #{character_recognition_forward.1} parent=1 // pred_check
      _
    $region55: #{character_recognition_forward.1} parent=1 // pred_check_branch
      %123 = sbr.rel (0) target = $region57
    $region56: #{character_recognition_forward.1} parent=1 // pred_region
      _
    $region57: #{character_recognition_forward.1} parent=1 // pred_fallthru
      _
    // Predicated region
    $region58: #{character_recognition_forward.1} parent=1 // pred_check
      _
    $region59: #{character_recognition_forward.1} parent=1 // pred_check_branch
      %125 = sbr.rel (0) target = $region61
    $region60: #{character_recognition_forward.1} parent=1 // pred_region
      %s127 = ssub.s32 128, 128
      %128 = vsyncadd [#allocation17], %s127
      %s130 = sshll.u32 [#allocation16], 4
      %s131 = int_to_ptr.vmem [resolvable:$true] %s130
      %133 = dma.hbm_to_vmem [thread:$0]  %s15, 128, %s131, [#allocation17]
    $region61: #{character_recognition_forward.1} parent=1 // pred_fallthru
      _
    // Predicated region
    $region62: #{character_recognition_forward.1} parent=1 // pred_check
      _
    $region63: #{character_recognition_forward.1} parent=1 // pred_check_branch
      %135 = sbr.rel (0) target = $region65
    $region64: #{character_recognition_forward.1} parent=1 // pred_region
      %s137 = ssub.s32 64, 64
      %138 = vsyncadd [#allocation17], %s137
      %s140 = sshll.u32 [#allocation18], 4
      %s141 = int_to_ptr.vmem [resolvable:$true] %s140
      %143 = dma.hbm_to_vmem [thread:$0]  %s17, 64, %s141, [#allocation17]
    $region65: #{character_recognition_forward.1} parent=1 // pred_fallthru
      _
    // Predicated region
    $region66: #{character_recognition_forward.1} parent=1 // pred_check
      _
    $region67: #{character_recognition_forward.1} parent=1 // pred_check_branch
      %145 = sbr.rel (0) target = $region69
    $region68: #{character_recognition_forward.1} parent=1 // pred_region
      %s147 = ssub.s32 16384, 16384
      %148 = vsyncadd [#allocation20], %s147
      %s149 = sshll.u32 [#allocation19], 4
      %s150 = int_to_ptr.vmem [resolvable:$true] %s149
      %155 = dma.hbm_to_vmem [thread:$0]  %s18, 16384, %s150, [#allocation20], 256, 256, 16
    $region69: #{character_recognition_forward.1} parent=1 // pred_fallthru
      _
    // Predicated region
    $region70: #{character_recognition_forward.1} parent=1 // pred_check
      _
    $region71: #{character_recognition_forward.1} parent=1 // pred_check_branch
      %157 = sbr.rel (0) target = $region73
    $region72: #{character_recognition_forward.1} parent=1 // pred_region
      %s159 = ssub.s32 64, 64
      %160 = vsyncadd [#allocation20], %s159
      %s162 = sshll.u32 [#allocation21], 4
      %s163 = int_to_ptr.vmem [resolvable:$true] %s162
      %165 = dma.hbm_to_vmem [thread:$0]  %s19, 64, %s163, [#allocation20]
    $region73: #{character_recognition_forward.1} parent=1 // pred_fallthru
      _
    // Predicated region
    $region74: #{character_recognition_forward.1} parent=1 // pred_check
      _
    $region75: #{character_recognition_forward.1} parent=1 // pred_check_branch
      %167 = sbr.rel (0) target = $region77
    $region76: #{character_recognition_forward.1} parent=1 // pred_region
      %s169 = ssub.s32 4096, 4096
      %170 = vsyncadd [#allocation23], %s169
      %s171 = sshll.u32 [#allocation22], 4
      %s172 = int_to_ptr.vmem [resolvable:$true] %s171
      %177 = dma.hbm_to_vmem [thread:$0]  %s20, 4096, %s172, [#allocation23], 64, 64, 4
    $region77: #{character_recognition_forward.1} parent=1 // pred_fallthru
      _
    // Predicated region
    $region78: #{character_recognition_forward.1} parent=1 // pred_check
      _
    $region79: #{character_recognition_forward.1} parent=1 // pred_check_branch
      %179 = sbr.rel (0) target = $region81
    $region80: #{character_recognition_forward.1} parent=1 // pred_region
      %s181 = ssub.s32 16, 16
      %182 = vsyncadd [#allocation23], %s181
      %s184 = sshll.u32 [#allocation24], 4
      %s185 = int_to_ptr.vmem [resolvable:$true] %s184
      %187 = dma.hbm_to_vmem [thread:$0]  %s21, 16, %s185, [#allocation23]
    $region81: #{character_recognition_forward.1} parent=1 // pred_fallthru
      _
    // Predicated region
    $region82: #{character_recognition_forward.1} parent=1 // pred_check
      _
    $region83: #{character_recognition_forward.1} parent=1 // pred_check_branch
      %189 = sbr.rel (0) target = $region85
    $region84: #{character_recognition_forward.1} parent=1 // pred_region
      %190 = dma.done [#allocation6], 16
    $region85: #{character_recognition_forward.1} parent=1 // pred_fallthru
      _
    // Predicated region
    $region86: #{character_recognition_forward.1} parent=1 // pred_check
      _
    $region87: #{character_recognition_forward.1} parent=1 // pred_check_branch
      %192 = sbr.rel (0) target = $region89
    $region88: #{character_recognition_forward.1} parent=1 // pred_region
      %193 = dma.done [#allocation8], 16
    $region89: #{character_recognition_forward.1} parent=1 // pred_fallthru
      _
    // Predicated region
    $region90: #{character_recognition_forward.1} parent=1 // pred_check
      _
    $region91: #{character_recognition_forward.1} parent=1 // pred_check_branch
      %195 = sbr.rel (0) target = $region93
    $region92: #{character_recognition_forward.1} parent=1 // pred_region
      %196 = dma.done [#allocation8], 2304
    $region93: #{character_recognition_forward.1} parent=1 // pred_fallthru
      _
    // Predicated region
    $region94: #{character_recognition_forward.1} parent=1 // pred_check
      _
    $region95: #{character_recognition_forward.1} parent=1 // pred_check_branch
      %198 = sbr.rel (0) target = $region97
    $region96: #{character_recognition_forward.1} parent=1 // pred_region
      %199 = dma.done [#allocation11], 4608
    $region97: #{character_recognition_forward.1} parent=1 // pred_fallthru
      _
    // Predicated region
    $region98: #{character_recognition_forward.1} parent=1 // pred_check
      _
    $region99: #{character_recognition_forward.1} parent=1 // pred_check_branch
      %201 = sbr.rel (0) target = $region101
    $region100: #{character_recognition_forward.1} parent=1 // pred_region
      %202 = dma.done [#allocation11], 16
    $region101: #{character_recognition_forward.1} parent=1 // pred_fallthru
      _
    // Predicated region
    $region102: #{character_recognition_forward.1} parent=1 // pred_check
      _
    $region103: #{character_recognition_forward.1} parent=1 // pred_check_branch
      %204 = sbr.rel (0) target = $region105
    $region104: #{character_recognition_forward.1} parent=1 // pred_region
      %205 = dma.done [#allocation14], 32
    $region105: #{character_recognition_forward.1} parent=1 // pred_fallthru
      _
    // Predicated region
    $region106: #{character_recognition_forward.1} parent=1 // pred_check
      _
    $region107: #{character_recognition_forward.1} parent=1 // pred_check_branch
      %207 = sbr.rel (0) target = $region109
    $region108: #{character_recognition_forward.1} parent=1 // pred_region
      %208 = dma.done [#allocation14], 8192
    $region109: #{character_recognition_forward.1} parent=1 // pred_fallthru
      _
    // Predicated region
    $region110: #{character_recognition_forward.1} parent=1 // pred_check
      _
    $region111: #{character_recognition_forward.1} parent=1 // pred_check_branch
      %210 = sbr.rel (0) target = $region113
    $region112: #{character_recognition_forward.1} parent=1 // pred_region
      %211 = dma.done [#allocation17], 128
    $region113: #{character_recognition_forward.1} parent=1 // pred_fallthru
      _
    // Predicated region
    $region114: #{character_recognition_forward.1} parent=1 // pred_check
      _
    $region115: #{character_recognition_forward.1} parent=1 // pred_check_branch
      %213 = sbr.rel (0) target = $region117
    $region116: #{character_recognition_forward.1} parent=1 // pred_region
      %214 = dma.done [#allocation17], 64
    $region117: #{character_recognition_forward.1} parent=1 // pred_fallthru
      _
    // Predicated region
    $region118: #{character_recognition_forward.1} parent=1 // pred_check
      _
    $region119: #{character_recognition_forward.1} parent=1 // pred_check_branch
      %216 = sbr.rel (0) target = $region121
    $region120: #{character_recognition_forward.1} parent=1 // pred_region
      %217 = dma.done [#allocation20], 16384
    $region121: #{character_recognition_forward.1} parent=1 // pred_fallthru
      _
    // Predicated region
    $region122: #{character_recognition_forward.1} parent=1 // pred_check
      _
    $region123: #{character_recognition_forward.1} parent=1 // pred_check_branch
      %219 = sbr.rel (0) target = $region125
    $region124: #{character_recognition_forward.1} parent=1 // pred_region
      %220 = dma.done [#allocation20], 64
    $region125: #{character_recognition_forward.1} parent=1 // pred_fallthru
      _
    // Predicated region
    $region126: #{character_recognition_forward.1} parent=1 // pred_check
      _
    $region127: #{character_recognition_forward.1} parent=1 // pred_check_branch
      %222 = sbr.rel (0) target = $region129
    $region128: #{character_recognition_forward.1} parent=1 // pred_region
      %223 = dma.done [#allocation23], 4096
    $region129: #{character_recognition_forward.1} parent=1 // pred_fallthru
      _
    // Predicated region
    $region130: #{character_recognition_forward.1} parent=1 // pred_check
      _
    $region131: #{character_recognition_forward.1} parent=1 // pred_check_branch
      %225 = sbr.rel (0) target = $region133
    $region132: #{character_recognition_forward.1} parent=1 // pred_region
      %226 = dma.done [#allocation23], 16
    $region133: #{character_recognition_forward.1} parent=1 // pred_fallthru
      _
    // Predicated region
    $region134: #{character_recognition_forward.1} parent=1 // pred_check
      _
    $region135: #{character_recognition_forward.1} parent=1 // pred_check_branch
      %229 = sbr.rel target = $region137
    $region136: #{character_recognition_forward.1} parent=1 // pred_region
      %230 = sst [smem:[#allocation27]] [#allocation26]
      %231 = sst [smem:[#allocation28]] [#allocation25]
    $region137: #{character_recognition_forward.1} parent=1 // pred_fallthru
      _
    %233 = shalt.err (0)
    %s235 = sshll.u32 [#allocation2], 4
    %s236 = int_to_ptr.vmem [resolvable:$true] %s235
    %238 = dma.hbm_to_vmem [thread:$0]  %s14, 32768, %s236, [#allocation4]
    %s239 = scalar_lea.sflag [#allocation4], 1
    // Predicated region
    $region138: #{character_recognition_forward.1} parent=1 // pred_check
      _
    $region139: #{character_recognition_forward.1} parent=1 // pred_check_branch
      %241 = sbr.rel target = $region141
    $region140: #{character_recognition_forward.1} parent=1 // pred_region
      %242 = sst [smem:[#allocation27]] [#allocation30]
      %243 = sst [smem:[#allocation28]] [#allocation29]
    $region141: #{character_recognition_forward.1} parent=1 // pred_fallthru
      _
    %245 = shalt.err (0)
    %s247 = sshll.u32 [#allocation3], 4
    %s248 = int_to_ptr.vmem [resolvable:$true] %s247
    %250 = dma.hbm_to_vmem [thread:$0]  %s16, 32768, %s248, %s239
    %v251 = vld [vmem:[%s0] sm:$0xf]
    %v252 = vld [vmem:[%s0 + $0x4] sm:$0xf]
    %v253 = vld [vmem:[%s0 + $0x8] sm:$0xf]
    %v254 = vld [vmem:[%s0 + $0xc] sm:$0xf]
    %v255 = vld [vmem:[%s0 + $0x10] sm:$0xf]
    %v256 = vld [vmem:[%s0 + $0x14] sm:$0xf]
    %v257 = vld [vmem:[%s0 + $0x18] sm:$0xf]
    %v258 = vld [vmem:[%s0 + $0x1c] sm:$0xf]
    %v259 = vld [vmem:[%s0 + $0x20] sm:$0xf]
    %v260 = vld [vmem:[%s0 + $0x24] sm:$0xf]
    %v261 = vld [vmem:[%s0 + $0x28] sm:$0xf]
    %v262 = vld [vmem:[%s0 + $0x2c] sm:$0xf]
    %v263 = vld [vmem:[%s0 + $0x30] sm:$0xf]
    %v264 = vld [vmem:[%s0 + $0x34] sm:$0xf]
    %v265 = vld [vmem:[%s0 + $0x38] sm:$0xf]
    %v266 = vld [vmem:[%s0 + $0x3c] sm:$0xf]
    %v267 = vld [vmem:[%s0 + $0x40] sm:$0xf]
    %v268 = vld [vmem:[%s0 + $0x44] sm:$0xf]
    %v269 = vld [vmem:[%s0 + $0x48] sm:$0xf]
    %v270 = vld [vmem:[%s0 + $0x4c] sm:$0xf]
    %v271 = vld [vmem:[%s0 + $0x50] sm:$0xf]
    %v272 = vld [vmem:[%s0 + $0x54] sm:$0xf]
    %v273 = vld [vmem:[%s0 + $0x58] sm:$0xf]
    %v274 = vld [vmem:[%s0 + $0x5c] sm:$0xf]
    %v275 = vld [vmem:[%s0 + $0x60] sm:$0xf]
    %v276 = vld [vmem:[%s0 + $0x64] sm:$0xf]
    %v277 = vld [vmem:[%s0 + $0x68] sm:$0xf]
    %v278 = vld [vmem:[%s0 + $0x6c] sm:$0xf]
    %v279 = vld [vmem:[%s0 + $0x70] sm:$0xf]
    %v280 = vld [vmem:[%s0 + $0x74] sm:$0xf]
    %v281 = vld [vmem:[%s0 + $0x78] sm:$0xf]
    %v282 = vld [vmem:[%s0 + $0x7c] sm:$0xf]
    %v283 = vld [vmem:[%s0 + $0x80] sm:$0xf]
    %v284 = vld [vmem:[%s0 + $0x84] sm:$0xf]
    %v285 = vld [vmem:[%s0 + $0x88] sm:$0xf]
    %v286 = vld [vmem:[%s0 + $0x8c] sm:$0xf]
    %v287 = vld [vmem:[%s0 + $0x90] sm:$0xf]
    %v288 = vld [vmem:[%s0 + $0x94] sm:$0xf]
    %v289 = vld [vmem:[%s0 + $0x98] sm:$0xf]
    %v290 = vld [vmem:[%s0 + $0x9c] sm:$0xf]
    %v291 = vld [vmem:[%s0 + $0xa0] sm:$0xf]
    %v292 = vld [vmem:[%s0 + $0xa4] sm:$0xf]
    %v293 = vld [vmem:[%s0 + $0xa8] sm:$0xf]
    %v294 = vld [vmem:[%s0 + $0xac] sm:$0xf]
    %v295 = vld [vmem:[%s0 + $0xb0] sm:$0xf]
    %v296 = vld [vmem:[%s0 + $0xb4] sm:$0xf]
    %v297 = vld [vmem:[%s0 + $0xb8] sm:$0xf]
    %v298 = vld [vmem:[%s0 + $0xbc] sm:$0xf]
    %v299 = vld [vmem:[%s0 + $0xc0] sm:$0xf]
    %v300 = vld [vmem:[%s0 + $0xc4] sm:$0xf]
    %v301 = vld [vmem:[%s0 + $0xc8] sm:$0xf]
    %v302 = vld [vmem:[%s0 + $0xcc] sm:$0xf]
    %v303 = vld [vmem:[%s0 + $0xd0] sm:$0xf]
    %v304 = vld [vmem:[%s0 + $0xd4] sm:$0xf]
    %v305 = vld [vmem:[%s0 + $0xd8] sm:$0xf]
    %v306 = vld [vmem:[%s0 + $0xdc] sm:$0xf]
    %v307 = vld [vmem:[%s0 + $0xe0] sm:$0xf]
    %v308 = vld [vmem:[%s0 + $0xe4] sm:$0xf]
    %v309 = vld [vmem:[%s0 + $0xe8] sm:$0xf]
    %v310 = vld [vmem:[%s0 + $0xec] sm:$0xf]
    %v311 = vld [vmem:[%s0 + $0xf0] sm:$0xf]
    %v312 = vld [vmem:[%s0 + $0xf4] sm:$0xf]
    %v313 = vld [vmem:[%s0 + $0xf8] sm:$0xf]
    %v314 = vld [vmem:[%s0 + $0xfc] sm:$0xf]
    %v315 = vld [vmem:[%s1] sm:$0xf]
    %v316 = vld [vmem:[%s1 + $0x4] sm:$0x1]
    %v381 = vunpack.c.l.b16 %v251
    %v382 = vunpack.c.l.b16 %v252
    %v383 = vunpack.c.l.b16 %v253
    %v384 = vunpack.c.l.b16 %v254
    %v385 = vunpack.c.l.b16 %v255
    %v386 = vunpack.c.l.b16 %v256
    %v387 = vunpack.c.l.b16 %v257
    %v388 = vunpack.c.l.b16 %v258
    %v389 = vunpack.c.l.b16 %v259
    %v390 = vunpack.c.l.b16 %v260
    %v391 = vunpack.c.l.b16 %v261
    %v392 = vunpack.c.l.b16 %v262
    %v393 = vunpack.c.l.b16 %v263
    %v394 = vunpack.c.l.b16 %v264
    %v395 = vunpack.c.l.b16 %v265
    %v396 = vunpack.c.l.b16 %v266
    %v397 = vunpack.c.l.b16 %v267
    %v398 = vunpack.c.l.b16 %v268
    %v399 = vunpack.c.l.b16 %v269
    %v400 = vunpack.c.l.b16 %v270
    %v401 = vunpack.c.l.b16 %v271
    %v402 = vunpack.c.l.b16 %v272
    %v403 = vunpack.c.l.b16 %v273
    %v404 = vunpack.c.l.b16 %v274
    %v405 = vunpack.c.l.b16 %v275
    %v406 = vunpack.c.l.b16 %v276
    %v407 = vunpack.c.l.b16 %v277
    %v408 = vunpack.c.l.b16 %v278
    %v409 = vunpack.c.l.b16 %v279
    %v410 = vunpack.c.l.b16 %v280
    %v411 = vunpack.c.l.b16 %v281
    %v412 = vunpack.c.l.b16 %v282
    %v413 = vunpack.c.l.b16 %v283
    %v414 = vunpack.c.l.b16 %v284
    %v415 = vunpack.c.l.b16 %v285
    %v416 = vunpack.c.l.b16 %v286
    %v417 = vunpack.c.l.b16 %v287
    %v418 = vunpack.c.l.b16 %v288
    %v419 = vunpack.c.l.b16 %v289
    %v420 = vunpack.c.l.b16 %v290
    %v421 = vunpack.c.l.b16 %v291
    %v422 = vunpack.c.l.b16 %v292
    %v423 = vunpack.c.l.b16 %v293
    %v424 = vunpack.c.l.b16 %v294
    %v425 = vunpack.c.l.b16 %v295
    %v426 = vunpack.c.l.b16 %v296
    %v427 = vunpack.c.l.b16 %v297
    %v428 = vunpack.c.l.b16 %v298
    %v429 = vunpack.c.l.b16 %v299
    %v430 = vunpack.c.l.b16 %v300
    %v431 = vunpack.c.l.b16 %v301
    %v432 = vunpack.c.l.b16 %v302
    %v433 = vunpack.c.l.b16 %v303
    %v434 = vunpack.c.l.b16 %v304
    %v435 = vunpack.c.l.b16 %v305
    %v436 = vunpack.c.l.b16 %v306
    %v437 = vunpack.c.l.b16 %v307
    %v438 = vunpack.c.l.b16 %v308
    %v439 = vunpack.c.l.b16 %v309
    %v440 = vunpack.c.l.b16 %v310
    %v441 = vunpack.c.l.b16 %v311
    %v442 = vunpack.c.l.b16 %v312
    %v443 = vunpack.c.l.b16 %v313
    %v444 = vunpack.c.l.b16 %v314
    %v445 = vpack.c.b16 %v382, %v381
    %v446 = vpack.c.b16 %v384, %v383
    %v447 = vpack.c.b16 %v386, %v385
    %v448 = vpack.c.b16 %v388, %v387
    %v449 = vpack.c.b16 %v390, %v389
    %v450 = vpack.c.b16 %v392, %v391
    %v451 = vpack.c.b16 %v394, %v393
    %v452 = vpack.c.b16 %v396, %v395
    %v453 = vpack.c.b16 %v398, %v397
    %v454 = vpack.c.b16 %v400, %v399
    %v455 = vpack.c.b16 %v402, %v401
    %v456 = vpack.c.b16 %v404, %v403
    %v457 = vpack.c.b16 %v406, %v405
    %v458 = vpack.c.b16 %v408, %v407
    %v459 = vpack.c.b16 %v410, %v409
    %v460 = vpack.c.b16 %v412, %v411
    %v461 = vpack.c.b16 %v414, %v413
    %v462 = vpack.c.b16 %v416, %v415
    %v463 = vpack.c.b16 %v418, %v417
    %v464 = vpack.c.b16 %v420, %v419
    %v465 = vpack.c.b16 %v422, %v421
    %v466 = vpack.c.b16 %v424, %v423
    %v467 = vpack.c.b16 %v426, %v425
    %v468 = vpack.c.b16 %v428, %v427
    %v469 = vpack.c.b16 %v430, %v429
    %v470 = vpack.c.b16 %v432, %v431
    %v471 = vpack.c.b16 %v434, %v433
    %v472 = vpack.c.b16 %v436, %v435
    %v473 = vpack.c.b16 %v438, %v437
    %v474 = vpack.c.b16 %v440, %v439
    %v475 = vpack.c.b16 %v442, %v441
    %v476 = vpack.c.b16 %v444, %v443
    %v479 = vunpack.c.l.b16 %v315
    %v480 = vunpack.c.l.b16 %v316
    %v481 = vpack.c.b16 %v480, %v479
    %vm482 = vcmask 72704
    %v484 = vsel %vm482, %v445, 0
    %v487 = vsel %vm482, %v446, 0
    %v490 = vsel %vm482, %v447, 0
    %v493 = vsel %vm482, %v448, 0
    %v496 = vsel %vm482, %v449, 0
    %v499 = vsel %vm482, %v450, 0
    %v502 = vsel %vm482, %v451, 0
    %v505 = vsel %vm482, %v452, 0
    %v508 = vsel %vm482, %v453, 0
    %v511 = vsel %vm482, %v454, 0
    %v514 = vsel %vm482, %v455, 0
    %v517 = vsel %vm482, %v456, 0
    %v520 = vsel %vm482, %v457, 0
    %v523 = vsel %vm482, %v458, 0
    %v526 = vsel %vm482, %v459, 0
    %v529 = vsel %vm482, %v460, 0
    %v532 = vsel %vm482, %v461, 0
    %v535 = vsel %vm482, %v462, 0
    %v538 = vsel %vm482, %v463, 0
    %v541 = vsel %vm482, %v464, 0
    %v544 = vsel %vm482, %v465, 0
    %v547 = vsel %vm482, %v466, 0
    %v550 = vsel %vm482, %v467, 0
    %v553 = vsel %vm482, %v468, 0
    %v556 = vsel %vm482, %v469, 0
    %v559 = vsel %vm482, %v470, 0
    %v562 = vsel %vm482, %v471, 0
    %v565 = vsel %vm482, %v472, 0
    %v568 = vsel %vm482, %v473, 0
    %v571 = vsel %vm482, %v474, 0
    %v574 = vsel %vm482, %v475, 0
    %v577 = vsel %vm482, %v476, 0
    %vm579 = vcmask 1043456
    %vm580 = vcmask 1044480
    %v581 = vsel %vm579, 4294967295, 65535
    %v582 = vsel %vm580, %v581, 0
    %v584 = vand.u32 %v481, %v582
    %586 = vmatprep.subr.bf16.mxu0 0
    %587 = vmatpush1.bf16.msra.mxu0 0
    %588 = vmatprep.subr.bf16.mxu0 0
    %589 = vmatpush1.bf16.msra.mxu0 0
    %590 = vmatprep.subr.bf16.mxu0 0
    %591 = vmatpush1.bf16.msra.mxu0 0
    %592 = vmatprep.subr.bf16.mxu0 0
    %593 = vmatpush1.bf16.msra.mxu0 0
    %594 = vmatprep.subr.bf16.mxu0 0
    %595 = vmatpush1.bf16.msra.mxu0 0
    %596 = vmatprep.subr.bf16.mxu0 0
    %597 = vmatpush1.bf16.msra.mxu0 0
    %598 = vmatprep.subr.bf16.mxu0 0
    %599 = vmatpush1.bf16.msra.mxu0 0
    %600 = vmatprep.subr.bf16.mxu0 0
    %601 = vmatpush1.bf16.msra.mxu0 %v584
    %602 = vmatprep.subr.bf16.mxu0 0
    %603 = vmatpush2.bf16.msra.mxu0 0
    %604 = vmatprep.subr.bf16.mxu0 0
    %605 = vmatpush2.bf16.msra.mxu0 0
    %606 = vmatprep.subr.bf16.mxu0 0
    %607 = vmatpush2.bf16.msra.mxu0 0
    %608 = vmatprep.subr.bf16.mxu0 0
    %609 = vmatpush2.bf16.msra.mxu0 0
    %610 = vmatprep.subr.bf16.mxu0 0
    %611 = vmatpush2.bf16.msra.mxu0 0
    %612 = vmatprep.subr.bf16.mxu0 0
    %613 = vmatpush2.bf16.msra.mxu0 0
    %614 = vmatprep.subr.bf16.mxu0 0
    %615 = vmatpush2.bf16.msra.mxu0 0
    %616 = vmatprep.subr.bf16.mxu0 0
    %617 = vmatpush2.bf16.msra.mxu0 0
    %618 = vmatprep.mubr.bf16.mxu0 0
    %619 = vmatmul.mubr.bf16.gmra.mxu0 %v484
    %v620 = vpop.f32.mrf.mxu0
    %v621 = vadd.f32 0.0, %v620
    %v622 = vpop.f32.mrf.mxu0
    %v623 = vpop.f32.mrf.mxu0
    %v624 = vadd.f32 0.0, %v623
    %v625 = vpop.f32.mrf.mxu0
    %626 = vmatprep.mubr.bf16.mxu0 0
    %627 = vmatmul.mubr.bf16.gmra.mxu0 %v487
    %v628 = vpop.f32.mrf.mxu0
    %v629 = vadd.f32 0.0, %v628
    %v630 = vpop.f32.mrf.mxu0
    %v631 = vpop.f32.mrf.mxu0
    %v632 = vadd.f32 0.0, %v631
    %v633 = vpop.f32.mrf.mxu0
    %634 = vmatprep.mubr.bf16.mxu0 0
    %635 = vmatmul.mubr.bf16.gmra.mxu0 %v490
    %v636 = vpop.f32.mrf.mxu0
    %v637 = vadd.f32 0.0, %v636
    %v638 = vpop.f32.mrf.mxu0
    %v639 = vpop.f32.mrf.mxu0
    %v640 = vadd.f32 0.0, %v639
    %v641 = vpop.f32.mrf.mxu0
    %642 = vmatprep.mubr.bf16.mxu0 0
    %643 = vmatmul.mubr.bf16.gmra.mxu0 %v493
    %v644 = vpop.f32.mrf.mxu0
    %v645 = vadd.f32 0.0, %v644
    %v646 = vpop.f32.mrf.mxu0
    %v647 = vpop.f32.mrf.mxu0
    %v648 = vadd.f32 0.0, %v647
    %v649 = vpop.f32.mrf.mxu0
    %650 = vmatprep.mubr.bf16.mxu0 0
    %651 = vmatmul.mubr.bf16.gmra.mxu0 %v496
    %v652 = vpop.f32.mrf.mxu0
    %v653 = vadd.f32 0.0, %v652
    %v654 = vpop.f32.mrf.mxu0
    %v655 = vpop.f32.mrf.mxu0
    %v656 = vadd.f32 0.0, %v655
    %v657 = vpop.f32.mrf.mxu0
    %658 = vmatprep.mubr.bf16.mxu0 0
    %659 = vmatmul.mubr.bf16.gmra.mxu0 %v499
    %v660 = vpop.f32.mrf.mxu0
    %v661 = vadd.f32 0.0, %v660
    %v662 = vpop.f32.mrf.mxu0
    %v663 = vpop.f32.mrf.mxu0
    %v664 = vadd.f32 0.0, %v663
    %v665 = vpop.f32.mrf.mxu0
    %666 = vmatprep.mubr.bf16.mxu0 0
    %667 = vmatmul.mubr.bf16.gmra.mxu0 %v502
    %v668 = vpop.f32.mrf.mxu0
    %v669 = vadd.f32 0.0, %v668
    %v670 = vpop.f32.mrf.mxu0
    %v671 = vpop.f32.mrf.mxu0
    %v672 = vadd.f32 0.0, %v671
    %v673 = vpop.f32.mrf.mxu0
    %674 = vmatprep.mubr.bf16.mxu0 0
    %675 = vmatmul.mubr.bf16.gmra.mxu0 %v505
    %v676 = vpop.f32.mrf.mxu0
    %v677 = vadd.f32 0.0, %v676
    %v678 = vpop.f32.mrf.mxu0
    %v679 = vpop.f32.mrf.mxu0
    %v680 = vadd.f32 0.0, %v679
    %v681 = vpop.f32.mrf.mxu0
    %682 = vmatprep.mubr.bf16.mxu0 0
    %683 = vmatmul.mubr.bf16.gmra.mxu0 %v508
    %v684 = vpop.f32.mrf.mxu0
    %v685 = vadd.f32 0.0, %v684
    %v686 = vpop.f32.mrf.mxu0
    %v687 = vpop.f32.mrf.mxu0
    %v688 = vadd.f32 0.0, %v687
    %v689 = vpop.f32.mrf.mxu0
    %690 = vmatprep.mubr.bf16.mxu0 0
    %691 = vmatmul.mubr.bf16.gmra.mxu0 %v511
    %v692 = vpop.f32.mrf.mxu0
    %v693 = vadd.f32 0.0, %v692
    %v694 = vpop.f32.mrf.mxu0
    %v695 = vpop.f32.mrf.mxu0
    %v696 = vadd.f32 0.0, %v695
    %v697 = vpop.f32.mrf.mxu0
    %698 = vmatprep.mubr.bf16.mxu0 0
    %699 = vmatmul.mubr.bf16.gmra.mxu0 %v514
    %v700 = vpop.f32.mrf.mxu0
    %v701 = vadd.f32 0.0, %v700
    %v702 = vpop.f32.mrf.mxu0
    %v703 = vpop.f32.mrf.mxu0
    %v704 = vadd.f32 0.0, %v703
    %v705 = vpop.f32.mrf.mxu0
    %706 = vmatprep.mubr.bf16.mxu0 0
    %707 = vmatmul.mubr.bf16.gmra.mxu0 %v517
    %v708 = vpop.f32.mrf.mxu0
    %v709 = vadd.f32 0.0, %v708
    %v710 = vpop.f32.mrf.mxu0
    %v711 = vpop.f32.mrf.mxu0
    %v712 = vadd.f32 0.0, %v711
    %v713 = vpop.f32.mrf.mxu0
    %714 = vmatprep.mubr.bf16.mxu0 0
    %715 = vmatmul.mubr.bf16.gmra.mxu0 %v520
    %v716 = vpop.f32.mrf.mxu0
    %v717 = vadd.f32 0.0, %v716
    %v718 = vpop.f32.mrf.mxu0
    %v719 = vpop.f32.mrf.mxu0
    %v720 = vadd.f32 0.0, %v719
    %v721 = vpop.f32.mrf.mxu0
    %722 = vmatprep.mubr.bf16.mxu0 0
    %723 = vmatmul.mubr.bf16.gmra.mxu0 %v523
    %v724 = vpop.f32.mrf.mxu0
    %v725 = vadd.f32 0.0, %v724
    %v726 = vpop.f32.mrf.mxu0
    %v727 = vpop.f32.mrf.mxu0
    %v728 = vadd.f32 0.0, %v727
    %v729 = vpop.f32.mrf.mxu0
    %730 = vmatprep.mubr.bf16.mxu0 0
    %731 = vmatmul.mubr.bf16.gmra.mxu0 %v526
    %v732 = vpop.f32.mrf.mxu0
    %v733 = vadd.f32 0.0, %v732
    %v734 = vpop.f32.mrf.mxu0
    %v735 = vpop.f32.mrf.mxu0
    %v736 = vadd.f32 0.0, %v735
    %v737 = vpop.f32.mrf.mxu0
    %738 = vmatprep.mubr.bf16.mxu0 0
    %739 = vmatmul.mubr.bf16.gmra.mxu0 %v529
    %v740 = vpop.f32.mrf.mxu0
    %v741 = vadd.f32 0.0, %v740
    %v742 = vpop.f32.mrf.mxu0
    %v743 = vpop.f32.mrf.mxu0
    %v744 = vadd.f32 0.0, %v743
    %v745 = vpop.f32.mrf.mxu0
    %746 = vmatprep.mubr.bf16.mxu0 0
    %747 = vmatmul.mubr.bf16.gmra.mxu0 %v532
    %v748 = vpop.f32.mrf.mxu0
    %v749 = vadd.f32 0.0, %v748
    %v750 = vpop.f32.mrf.mxu0
    %v751 = vpop.f32.mrf.mxu0
    %v752 = vadd.f32 0.0, %v751
    %v753 = vpop.f32.mrf.mxu0
    %754 = vmatprep.mubr.bf16.mxu0 0
    %755 = vmatmul.mubr.bf16.gmra.mxu0 %v535
    %v756 = vpop.f32.mrf.mxu0
    %v757 = vadd.f32 0.0, %v756
    %v758 = vpop.f32.mrf.mxu0
    %v759 = vpop.f32.mrf.mxu0
    %v760 = vadd.f32 0.0, %v759
    %v761 = vpop.f32.mrf.mxu0
    %762 = vmatprep.mubr.bf16.mxu0 0
    %763 = vmatmul.mubr.bf16.gmra.mxu0 %v538
    %v764 = vpop.f32.mrf.mxu0
    %v765 = vadd.f32 0.0, %v764
    %v766 = vpop.f32.mrf.mxu0
    %v767 = vpop.f32.mrf.mxu0
    %v768 = vadd.f32 0.0, %v767
    %v769 = vpop.f32.mrf.mxu0
    %770 = vmatprep.mubr.bf16.mxu0 0
    %771 = vmatmul.mubr.bf16.gmra.mxu0 %v541
    %v772 = vpop.f32.mrf.mxu0
    %v773 = vadd.f32 0.0, %v772
    %v774 = vpop.f32.mrf.mxu0
    %v775 = vpop.f32.mrf.mxu0
    %v776 = vadd.f32 0.0, %v775
    %v777 = vpop.f32.mrf.mxu0
    %778 = vmatprep.mubr.bf16.mxu0 0
    %779 = vmatmul.mubr.bf16.gmra.mxu0 %v544
    %v780 = vpop.f32.mrf.mxu0
    %v781 = vadd.f32 0.0, %v780
    %v782 = vpop.f32.mrf.mxu0
    %v783 = vpop.f32.mrf.mxu0
    %v784 = vadd.f32 0.0, %v783
    %v785 = vpop.f32.mrf.mxu0
    %786 = vmatprep.mubr.bf16.mxu0 0
    %787 = vmatmul.mubr.bf16.gmra.mxu0 %v547
    %v788 = vpop.f32.mrf.mxu0
    %v789 = vadd.f32 0.0, %v788
    %v790 = vpop.f32.mrf.mxu0
    %v791 = vpop.f32.mrf.mxu0
    %v792 = vadd.f32 0.0, %v791
    %v793 = vpop.f32.mrf.mxu0
    %794 = vmatprep.mubr.bf16.mxu0 0
    %795 = vmatmul.mubr.bf16.gmra.mxu0 %v550
    %v796 = vpop.f32.mrf.mxu0
    %v797 = vadd.f32 0.0, %v796
    %v798 = vpop.f32.mrf.mxu0
    %v799 = vpop.f32.mrf.mxu0
    %v800 = vadd.f32 0.0, %v799
    %v801 = vpop.f32.mrf.mxu0
    %802 = vmatprep.mubr.bf16.mxu0 0
    %803 = vmatmul.mubr.bf16.gmra.mxu0 %v553
    %v804 = vpop.f32.mrf.mxu0
    %v805 = vadd.f32 0.0, %v804
    %v806 = vpop.f32.mrf.mxu0
    %v807 = vpop.f32.mrf.mxu0
    %v808 = vadd.f32 0.0, %v807
    %v809 = vpop.f32.mrf.mxu0
    %810 = vmatprep.mubr.bf16.mxu0 0
    %811 = vmatmul.mubr.bf16.gmra.mxu0 %v556
    %v812 = vpop.f32.mrf.mxu0
    %v813 = vadd.f32 0.0, %v812
    %v814 = vpop.f32.mrf.mxu0
    %v815 = vpop.f32.mrf.mxu0
    %v816 = vadd.f32 0.0, %v815
    %v817 = vpop.f32.mrf.mxu0
    %818 = vmatprep.mubr.bf16.mxu0 0
    %819 = vmatmul.mubr.bf16.gmra.mxu0 %v559
    %v820 = vpop.f32.mrf.mxu0
    %v821 = vadd.f32 0.0, %v820
    %v822 = vpop.f32.mrf.mxu0
    %v823 = vpop.f32.mrf.mxu0
    %v824 = vadd.f32 0.0, %v823
    %v825 = vpop.f32.mrf.mxu0
    %826 = vmatprep.mubr.bf16.mxu0 0
    %827 = vmatmul.mubr.bf16.gmra.mxu0 %v562
    %v828 = vpop.f32.mrf.mxu0
    %v829 = vadd.f32 0.0, %v828
    %v830 = vpop.f32.mrf.mxu0
    %v831 = vpop.f32.mrf.mxu0
    %v832 = vadd.f32 0.0, %v831
    %v833 = vpop.f32.mrf.mxu0
    %834 = vmatprep.mubr.bf16.mxu0 0
    %835 = vmatmul.mubr.bf16.gmra.mxu0 %v565
    %v836 = vpop.f32.mrf.mxu0
    %v837 = vadd.f32 0.0, %v836
    %v838 = vpop.f32.mrf.mxu0
    %v839 = vpop.f32.mrf.mxu0
    %v840 = vadd.f32 0.0, %v839
    %v841 = vpop.f32.mrf.mxu0
    %842 = vmatprep.mubr.bf16.mxu0 0
    %843 = vmatmul.mubr.bf16.gmra.mxu0 %v568
    %v844 = vpop.f32.mrf.mxu0
    %v845 = vadd.f32 0.0, %v844
    %v846 = vpop.f32.mrf.mxu0
    %v847 = vpop.f32.mrf.mxu0
    %v848 = vadd.f32 0.0, %v847
    %v849 = vpop.f32.mrf.mxu0
    %850 = vmatprep.mubr.bf16.mxu0 0
    %851 = vmatmul.mubr.bf16.gmra.mxu0 %v571
    %v852 = vpop.f32.mrf.mxu0
    %v853 = vadd.f32 0.0, %v852
    %v854 = vpop.f32.mrf.mxu0
    %v855 = vpop.f32.mrf.mxu0
    %v856 = vadd.f32 0.0, %v855
    %v857 = vpop.f32.mrf.mxu0
    %858 = vmatprep.mubr.bf16.mxu0 0
    %859 = vmatmul.mubr.bf16.gmra.mxu0 %v574
    %v860 = vpop.f32.mrf.mxu0
    %v861 = vadd.f32 0.0, %v860
    %v862 = vpop.f32.mrf.mxu0
    %v863 = vpop.f32.mrf.mxu0
    %v864 = vadd.f32 0.0, %v863
    %v865 = vpop.f32.mrf.mxu0
    %866 = vmatprep.mubr.bf16.mxu0 0
    %867 = vmatmul.mubr.bf16.gmra.mxu0 %v577
    %v868 = vpop.f32.mrf.mxu0
    %v869 = vadd.f32 0.0, %v868
    %v870 = vpop.f32.mrf.mxu0
    %v871 = vpop.f32.mrf.mxu0
    %v872 = vadd.f32 0.0, %v871
    %v873 = vpop.f32.mrf.mxu0
    %874 = vdwg.mxu0
    %v875 = vld [vmem:[#allocation5] sm:$0x1]
    %v876 = vmax.f32 %v621, %v685
    %v877 = vmax.f32 %v624, %v688
    %v878 = vmax.f32 %v629, %v693
    %v879 = vmax.f32 %v632, %v696
    %v880 = vmax.f32 %v637, %v701
    %v881 = vmax.f32 %v640, %v704
    %v882 = vmax.f32 %v645, %v709
    %v883 = vmax.f32 %v648, %v712
    %v884 = vmax.f32 %v653, %v717
    %v885 = vmax.f32 %v656, %v720
    %v886 = vmax.f32 %v661, %v725
    %v887 = vmax.f32 %v664, %v728
    %v888 = vmax.f32 %v669, %v733
    %v889 = vmax.f32 %v672, %v736
    %v890 = vmax.f32 %v677, %v741
    %v891 = vmax.f32 %v680, %v744
    %v892 = vmax.f32 %v749, %v813
    %v893 = vmax.f32 %v752, %v816
    %v894 = vmax.f32 %v757, %v821
    %v895 = vmax.f32 %v760, %v824
    %v896 = vmax.f32 %v765, %v829
    %v897 = vmax.f32 %v768, %v832
    %v898 = vmax.f32 %v773, %v837
    %v899 = vmax.f32 %v776, %v840
    %v900 = vmax.f32 %v781, %v845
    %v901 = vmax.f32 %v784, %v848
    %v902 = vmax.f32 %v789, %v853
    %v903 = vmax.f32 %v792, %v856
    %v904 = vmax.f32 %v797, %v861
    %v905 = vmax.f32 %v800, %v864
    %v906 = vmax.f32 %v805, %v869
    %v907 = vmax.f32 %v808, %v872
    %v908 = vmax.f32 %v876, %v892
    %v909 = vmax.f32 %v877, %v893
    %v910 = vmax.f32 %v878, %v894
    %v911 = vmax.f32 %v879, %v895
    %v912 = vmax.f32 %v880, %v896
    %v913 = vmax.f32 %v881, %v897
    %v914 = vmax.f32 %v882, %v898
    %v915 = vmax.f32 %v883, %v899
    %v916 = vmax.f32 %v884, %v900
    %v917 = vmax.f32 %v885, %v901
    %v918 = vmax.f32 %v886, %v902
    %v919 = vmax.f32 %v887, %v903
    %v920 = vmax.f32 %v888, %v904
    %v921 = vmax.f32 %v889, %v905
    %v922 = vmax.f32 %v890, %v906
    %v923 = vmax.f32 %v891, %v907
    %v925 = vlaneseq
    %v926 = vshrl.u32 %v925, 7
    %v927 = vsub.s32 0, %v926
    %v928 = vrot.slane %v875, %v927
    %v930 = vadd.f32 %v908, %v928
    %v931 = vadd.f32 %v909, %v928
    %v932 = vadd.f32 %v910, %v928
    %v933 = vadd.f32 %v911, %v928
    %v934 = vadd.f32 %v912, %v928
    %v935 = vadd.f32 %v913, %v928
    %v936 = vadd.f32 %v914, %v928
    %v937 = vadd.f32 %v915, %v928
    %v938 = vadd.f32 %v916, %v928
    %v939 = vadd.f32 %v917, %v928
    %v940 = vadd.f32 %v918, %v928
    %v941 = vadd.f32 %v919, %v928
    %v942 = vadd.f32 %v920, %v928
    %v943 = vadd.f32 %v921, %v928
    %v944 = vadd.f32 %v922, %v928
    %v945 = vadd.f32 %v923, %v928
    %v946 = vmax.f32 %v930, 0.0
    %v947 = vmax.f32 %v931, 0.0
    %v948 = vmax.f32 %v932, 0.0
    %v949 = vmax.f32 %v933, 0.0
    %v950 = vmax.f32 %v934, 0.0
    %v951 = vmax.f32 %v935, 0.0
    %v952 = vmax.f32 %v936, 0.0
    %v953 = vmax.f32 %v937, 0.0
    %v954 = vmax.f32 %v938, 0.0
    %v955 = vmax.f32 %v939, 0.0
    %v956 = vmax.f32 %v940, 0.0
    %v957 = vmax.f32 %v941, 0.0
    %v958 = vmax.f32 %v942, 0.0
    %v959 = vmax.f32 %v943, 0.0
    %v960 = vmax.f32 %v944, 0.0
    %v961 = vmax.f32 %v945, 0.0
    %v962 = vpack.c.bf16 %v947, %v946
    %v963 = vpack.c.bf16 %v949, %v948
    %v964 = vpack.c.bf16 %v951, %v950
    %v965 = vpack.c.bf16 %v953, %v952
    %v966 = vpack.c.bf16 %v955, %v954
    %v967 = vpack.c.bf16 %v957, %v956
    %v968 = vpack.c.bf16 %v959, %v958
    %v969 = vpack.c.bf16 %v961, %v960
    %v970 = vld [vmem:[%s3] sm:$0xf]
    %v971 = vld [vmem:[%s3 + $0x4] sm:$0xf]
    %v972 = vld [vmem:[%s3 + $0x8] sm:$0xf]
    %v973 = vld [vmem:[%s3 + $0xc] sm:$0xf]
    %v974 = vld [vmem:[%s3 + $0x10] sm:$0xf]
    %v975 = vld [vmem:[%s3 + $0x14] sm:$0xf]
    %v976 = vld [vmem:[%s3 + $0x18] sm:$0xf]
    %v977 = vld [vmem:[%s3 + $0x1c] sm:$0xf]
    %v978 = vld [vmem:[%s3 + $0x20] sm:$0xf]
    %v979 = vld [vmem:[%s3 + $0x24] sm:$0xf]
    %v980 = vld [vmem:[%s3 + $0x28] sm:$0xf]
    %v981 = vld [vmem:[%s3 + $0x2c] sm:$0xf]
    %v982 = vld [vmem:[%s3 + $0x30] sm:$0xf]
    %v983 = vld [vmem:[%s3 + $0x34] sm:$0xf]
    %v984 = vld [vmem:[%s3 + $0x38] sm:$0xf]
    %v985 = vld [vmem:[%s3 + $0x3c] sm:$0xf]
    %v1002 = vunpack.c.l.b16 %v970
    %v1003 = vunpack.c.l.b16 %v971
    %v1004 = vunpack.c.l.b16 %v972
    %v1005 = vunpack.c.l.b16 %v973
    %v1006 = vunpack.c.l.b16 %v974
    %v1007 = vunpack.c.l.b16 %v975
    %v1008 = vunpack.c.l.b16 %v976
    %v1009 = vunpack.c.l.b16 %v977
    %v1010 = vunpack.c.l.b16 %v978
    %v1011 = vunpack.c.l.b16 %v979
    %v1012 = vunpack.c.l.b16 %v980
    %v1013 = vunpack.c.l.b16 %v981
    %v1014 = vunpack.c.l.b16 %v982
    %v1015 = vunpack.c.l.b16 %v983
    %v1016 = vunpack.c.l.b16 %v984
    %v1017 = vunpack.c.l.b16 %v985
    %v1018 = vpack.c.b16 %v1003, %v1002
    %v1019 = vpack.c.b16 %v1005, %v1004
    %v1020 = vpack.c.b16 %v1007, %v1006
    %v1021 = vpack.c.b16 %v1009, %v1008
    %v1022 = vpack.c.b16 %v1011, %v1010
    %v1023 = vpack.c.b16 %v1013, %v1012
    %v1024 = vpack.c.b16 %v1015, %v1014
    %v1025 = vpack.c.b16 %v1017, %v1016
    %1034 = vmatprep.subr.bf16.mxu0 0
    %1035 = vmatpush1.bf16.msra.mxu0 %v969
    %1036 = vmatprep.subr.bf16.mxu0 0
    %1037 = vmatpush1.bf16.msra.mxu0 %v968
    %1038 = vmatprep.subr.bf16.mxu0 0
    %1039 = vmatpush1.bf16.msra.mxu0 %v967
    %1040 = vmatprep.subr.bf16.mxu0 0
    %1041 = vmatpush1.bf16.msra.mxu0 %v966
    %1042 = vmatprep.subr.bf16.mxu0 0
    %1043 = vmatpush1.bf16.msra.mxu0 %v965
    %1044 = vmatprep.subr.bf16.mxu0 0
    %1045 = vmatpush1.bf16.msra.mxu0 %v964
    %1046 = vmatprep.subr.bf16.mxu0 0
    %1047 = vmatpush1.bf16.msra.mxu0 %v963
    %1048 = vmatprep.subr.bf16.mxu0 0
    %1049 = vmatpush1.bf16.msra.mxu0 %v962
    %1050 = vmatprep.subr.bf16.mxu0 0
    %1051 = vmatpush2.bf16.msra.mxu0 0
    %1052 = vmatprep.subr.bf16.mxu0 0
    %1053 = vmatpush2.bf16.msra.mxu0 0
    %1054 = vmatprep.subr.bf16.mxu0 0
    %1055 = vmatpush2.bf16.msra.mxu0 0
    %1056 = vmatprep.subr.bf16.mxu0 0
    %1057 = vmatpush2.bf16.msra.mxu0 0
    %1058 = vmatprep.subr.bf16.mxu0 0
    %1059 = vmatpush2.bf16.msra.mxu0 0
    %1060 = vmatprep.subr.bf16.mxu0 0
    %1061 = vmatpush2.bf16.msra.mxu0 0
    %1062 = vmatprep.subr.bf16.mxu0 0
    %1063 = vmatpush2.bf16.msra.mxu0 0
    %1064 = vmatprep.subr.bf16.mxu0 0
    %1065 = vmatpush2.bf16.msra.mxu0 0
    %1066 = vmatprep.mubr.bf16.mxu0 0
    %1067 = vmatmul.mubr.bf16.gmra.mxu0 %v1018
    %v1068 = vpop.f32.mrf.mxu0
    %v1069 = vadd.f32 0.0, %v1068
    %v1070 = vpop.f32.mrf.mxu0
    %v1071 = vpop.f32.mrf.mxu0
    %v1072 = vadd.f32 0.0, %v1071
    %v1073 = vpop.f32.mrf.mxu0
    %1074 = vmatprep.mubr.bf16.mxu0 0
    %1075 = vmatmul.mubr.bf16.gmra.mxu0 %v1019
    %v1076 = vpop.f32.mrf.mxu0
    %v1077 = vadd.f32 0.0, %v1076
    %v1078 = vpop.f32.mrf.mxu0
    %v1079 = vpop.f32.mrf.mxu0
    %v1080 = vadd.f32 0.0, %v1079
    %v1081 = vpop.f32.mrf.mxu0
    %1082 = vmatprep.mubr.bf16.mxu0 0
    %1083 = vmatmul.mubr.bf16.gmra.mxu0 %v1020
    %v1084 = vpop.f32.mrf.mxu0
    %v1085 = vadd.f32 0.0, %v1084
    %v1086 = vpop.f32.mrf.mxu0
    %v1087 = vpop.f32.mrf.mxu0
    %v1088 = vadd.f32 0.0, %v1087
    %v1089 = vpop.f32.mrf.mxu0
    %1090 = vmatprep.mubr.bf16.mxu0 0
    %1091 = vmatmul.mubr.bf16.gmra.mxu0 %v1021
    %v1092 = vpop.f32.mrf.mxu0
    %v1093 = vadd.f32 0.0, %v1092
    %v1094 = vpop.f32.mrf.mxu0
    %v1095 = vpop.f32.mrf.mxu0
    %v1096 = vadd.f32 0.0, %v1095
    %v1097 = vpop.f32.mrf.mxu0
    %1098 = vmatprep.mubr.bf16.mxu0 0
    %1099 = vmatmul.mubr.bf16.gmra.mxu0 %v1022
    %v1100 = vpop.f32.mrf.mxu0
    %v1101 = vadd.f32 0.0, %v1100
    %v1102 = vpop.f32.mrf.mxu0
    %v1103 = vpop.f32.mrf.mxu0
    %v1104 = vadd.f32 0.0, %v1103
    %v1105 = vpop.f32.mrf.mxu0
    %1106 = vmatprep.mubr.bf16.mxu0 0
    %1107 = vmatmul.mubr.bf16.gmra.mxu0 %v1023
    %v1108 = vpop.f32.mrf.mxu0
    %v1109 = vadd.f32 0.0, %v1108
    %v1110 = vpop.f32.mrf.mxu0
    %v1111 = vpop.f32.mrf.mxu0
    %v1112 = vadd.f32 0.0, %v1111
    %v1113 = vpop.f32.mrf.mxu0
    %1114 = vmatprep.mubr.bf16.mxu0 0
    %1115 = vmatmul.mubr.bf16.gmra.mxu0 %v1024
    %v1116 = vpop.f32.mrf.mxu0
    %v1117 = vadd.f32 0.0, %v1116
    %v1118 = vpop.f32.mrf.mxu0
    %v1119 = vpop.f32.mrf.mxu0
    %v1120 = vadd.f32 0.0, %v1119
    %v1121 = vpop.f32.mrf.mxu0
    %1122 = vmatprep.mubr.bf16.mxu0 0
    %1123 = vmatmul.mubr.bf16.gmra.mxu0 %v1025
    %v1124 = vpop.f32.mrf.mxu0
    %v1125 = vadd.f32 0.0, %v1124
    %v1126 = vpop.f32.mrf.mxu0
    %v1127 = vpop.f32.mrf.mxu0
    %v1128 = vadd.f32 0.0, %v1127
    %v1129 = vpop.f32.mrf.mxu0
    %1130 = vdwg.mxu0
    %v1131 = vpack.c.bf16 %v1072, %v1069
    %v1132 = vpack.c.bf16 %v1080, %v1077
    %v1133 = vpack.c.bf16 %v1088, %v1085
    %v1134 = vpack.c.bf16 %v1096, %v1093
    %v1135 = vpack.c.bf16 %v1104, %v1101
    %v1136 = vpack.c.bf16 %v1112, %v1109
    %v1137 = vpack.c.bf16 %v1120, %v1117
    %v1138 = vpack.c.bf16 %v1128, %v1125
    %v1139 = vld [vmem:[%s4] sm:$0xf]
    %v1140 = vld [vmem:[%s4 + $0x4] sm:$0xf]
    %v1141 = vld [vmem:[%s4 + $0x8] sm:$0xf]
    %v1142 = vld [vmem:[%s4 + $0xc] sm:$0xf]
    %s1143 = scalar_lea.vmem %s3, 64
    %v1144 = vld [vmem:[%s1143] sm:$0xf]
    %v1145 = vld [vmem:[%s1143 + $0x4] sm:$0xf]
    %v1146 = vld [vmem:[%s1143 + $0x8] sm:$0xf]
    %v1147 = vld [vmem:[%s1143 + $0xc] sm:$0xf]
    %v1148 = vld [vmem:[%s1143 + $0x10] sm:$0xf]
    %v1149 = vld [vmem:[%s1143 + $0x14] sm:$0xf]
    %v1150 = vld [vmem:[%s1143 + $0x18] sm:$0xf]
    %v1151 = vld [vmem:[%s1143 + $0x1c] sm:$0xf]
    %v1152 = vld [vmem:[%s1143 + $0x20] sm:$0xf]
    %v1153 = vld [vmem:[%s1143 + $0x24] sm:$0xf]
    %v1154 = vld [vmem:[%s1143 + $0x28] sm:$0xf]
    %v1155 = vld [vmem:[%s1143 + $0x2c] sm:$0xf]
    %v1156 = vld [vmem:[%s1143 + $0x30] sm:$0xf]
    %v1157 = vld [vmem:[%s1143 + $0x34] sm:$0xf]
    %v1158 = vld [vmem:[%s1143 + $0x38] sm:$0xf]
    %v1159 = vld [vmem:[%s1143 + $0x3c] sm:$0xf]
    %v1176 = vunpack.c.l.b16 %v1144
    %v1177 = vunpack.c.l.b16 %v1145
    %v1178 = vunpack.c.l.b16 %v1146
    %v1179 = vunpack.c.l.b16 %v1147
    %v1180 = vunpack.c.l.b16 %v1148
    %v1181 = vunpack.c.l.b16 %v1149
    %v1182 = vunpack.c.l.b16 %v1150
    %v1183 = vunpack.c.l.b16 %v1151
    %v1184 = vunpack.c.l.b16 %v1152
    %v1185 = vunpack.c.l.b16 %v1153
    %v1186 = vunpack.c.l.b16 %v1154
    %v1187 = vunpack.c.l.b16 %v1155
    %v1188 = vunpack.c.l.b16 %v1156
    %v1189 = vunpack.c.l.b16 %v1157
    %v1190 = vunpack.c.l.b16 %v1158
    %v1191 = vunpack.c.l.b16 %v1159
    %v1192 = vpack.c.b16 %v1177, %v1176
    %v1193 = vpack.c.b16 %v1179, %v1178
    %v1194 = vpack.c.b16 %v1181, %v1180
    %v1195 = vpack.c.b16 %v1183, %v1182
    %v1196 = vpack.c.b16 %v1185, %v1184
    %v1197 = vpack.c.b16 %v1187, %v1186
    %v1198 = vpack.c.b16 %v1189, %v1188
    %v1199 = vpack.c.b16 %v1191, %v1190
    %1208 = vmatprep.subr.bf16.mxu0 0
    %1209 = vmatpush1.bf16.msra.mxu0 %v969
    %1210 = vmatprep.subr.bf16.mxu0 0
    %1211 = vmatpush1.bf16.msra.mxu0 %v968
    %1212 = vmatprep.subr.bf16.mxu0 0
    %1213 = vmatpush1.bf16.msra.mxu0 %v967
    %1214 = vmatprep.subr.bf16.mxu0 0
    %1215 = vmatpush1.bf16.msra.mxu0 %v966
    %1216 = vmatprep.subr.bf16.mxu0 0
    %1217 = vmatpush1.bf16.msra.mxu0 %v965
    %1218 = vmatprep.subr.bf16.mxu0 0
    %1219 = vmatpush1.bf16.msra.mxu0 %v964
    %1220 = vmatprep.subr.bf16.mxu0 0
    %1221 = vmatpush1.bf16.msra.mxu0 %v963
    %1222 = vmatprep.subr.bf16.mxu0 0
    %1223 = vmatpush1.bf16.msra.mxu0 %v962
    %1224 = vmatprep.subr.bf16.mxu0 0
    %1225 = vmatpush2.bf16.msra.mxu0 0
    %1226 = vmatprep.subr.bf16.mxu0 0
    %1227 = vmatpush2.bf16.msra.mxu0 0
    %1228 = vmatprep.subr.bf16.mxu0 0
    %1229 = vmatpush2.bf16.msra.mxu0 0
    %1230 = vmatprep.subr.bf16.mxu0 0
    %1231 = vmatpush2.bf16.msra.mxu0 0
    %1232 = vmatprep.subr.bf16.mxu0 0
    %1233 = vmatpush2.bf16.msra.mxu0 0
    %1234 = vmatprep.subr.bf16.mxu0 0
    %1235 = vmatpush2.bf16.msra.mxu0 0
    %1236 = vmatprep.subr.bf16.mxu0 0
    %1237 = vmatpush2.bf16.msra.mxu0 0
    %1238 = vmatprep.subr.bf16.mxu0 0
    %1239 = vmatpush2.bf16.msra.mxu0 0
    %1240 = vmatprep.mubr.bf16.mxu0 0
    %1241 = vmatmul.mubr.bf16.gmra.mxu0 %v1192
    %v1242 = vpop.f32.mrf.mxu0
    %v1243 = vadd.f32 0.0, %v1242
    %v1244 = vpop.f32.mrf.mxu0
    %v1245 = vpop.f32.mrf.mxu0
    %v1246 = vadd.f32 0.0, %v1245
    %v1247 = vpop.f32.mrf.mxu0
    %1248 = vmatprep.mubr.bf16.mxu0 0
    %1249 = vmatmul.mubr.bf16.gmra.mxu0 %v1193
    %v1250 = vpop.f32.mrf.mxu0
    %v1251 = vadd.f32 0.0, %v1250
    %v1252 = vpop.f32.mrf.mxu0
    %v1253 = vpop.f32.mrf.mxu0
    %v1254 = vadd.f32 0.0, %v1253
    %v1255 = vpop.f32.mrf.mxu0
    %1256 = vmatprep.mubr.bf16.mxu0 0
    %1257 = vmatmul.mubr.bf16.gmra.mxu0 %v1194
    %v1258 = vpop.f32.mrf.mxu0
    %v1259 = vadd.f32 0.0, %v1258
    %v1260 = vpop.f32.mrf.mxu0
    %v1261 = vpop.f32.mrf.mxu0
    %v1262 = vadd.f32 0.0, %v1261
    %v1263 = vpop.f32.mrf.mxu0
    %1264 = vmatprep.mubr.bf16.mxu0 0
    %1265 = vmatmul.mubr.bf16.gmra.mxu0 %v1195
    %v1266 = vpop.f32.mrf.mxu0
    %v1267 = vadd.f32 0.0, %v1266
    %v1268 = vpop.f32.mrf.mxu0
    %v1269 = vpop.f32.mrf.mxu0
    %v1270 = vadd.f32 0.0, %v1269
    %v1271 = vpop.f32.mrf.mxu0
    %1272 = vmatprep.mubr.bf16.mxu0 0
    %1273 = vmatmul.mubr.bf16.gmra.mxu0 %v1196
    %v1274 = vpop.f32.mrf.mxu0
    %v1275 = vadd.f32 0.0, %v1274
    %v1276 = vpop.f32.mrf.mxu0
    %v1277 = vpop.f32.mrf.mxu0
    %v1278 = vadd.f32 0.0, %v1277
    %v1279 = vpop.f32.mrf.mxu0
    %1280 = vmatprep.mubr.bf16.mxu0 0
    %1281 = vmatmul.mubr.bf16.gmra.mxu0 %v1197
    %v1282 = vpop.f32.mrf.mxu0
    %v1283 = vadd.f32 0.0, %v1282
    %v1284 = vpop.f32.mrf.mxu0
    %v1285 = vpop.f32.mrf.mxu0
    %v1286 = vadd.f32 0.0, %v1285
    %v1287 = vpop.f32.mrf.mxu0
    %1288 = vmatprep.mubr.bf16.mxu0 0
    %1289 = vmatmul.mubr.bf16.gmra.mxu0 %v1198
    %v1290 = vpop.f32.mrf.mxu0
    %v1291 = vadd.f32 0.0, %v1290
    %v1292 = vpop.f32.mrf.mxu0
    %v1293 = vpop.f32.mrf.mxu0
    %v1294 = vadd.f32 0.0, %v1293
    %v1295 = vpop.f32.mrf.mxu0
    %1296 = vmatprep.mubr.bf16.mxu0 0
    %1297 = vmatmul.mubr.bf16.gmra.mxu0 %v1199
    %v1298 = vpop.f32.mrf.mxu0
    %v1299 = vadd.f32 0.0, %v1298
    %v1300 = vpop.f32.mrf.mxu0
    %v1301 = vpop.f32.mrf.mxu0
    %v1302 = vadd.f32 0.0, %v1301
    %v1303 = vpop.f32.mrf.mxu0
    %1304 = vdwg.mxu0
    %v1305 = vpack.c.bf16 %v1246, %v1243
    %v1306 = vpack.c.bf16 %v1254, %v1251
    %v1307 = vpack.c.bf16 %v1262, %v1259
    %v1308 = vpack.c.bf16 %v1270, %v1267
    %v1309 = vpack.c.bf16 %v1278, %v1275
    %v1310 = vpack.c.bf16 %v1286, %v1283
    %v1311 = vpack.c.bf16 %v1294, %v1291
    %v1312 = vpack.c.bf16 %v1302, %v1299
    %s1313 = scalar_lea.vmem %s4, 16
    %v1314 = vld [vmem:[%s1313] sm:$0xf]
    %v1315 = vld [vmem:[%s1313 + $0x4] sm:$0xf]
    %v1316 = vld [vmem:[%s1313 + $0x8] sm:$0xf]
    %v1317 = vld [vmem:[%s1313 + $0xc] sm:$0xf]
    %v1322 = vunpack.c.l.b16 %v1314
    %v1323 = vunpack.c.l.b16 %v1315
    %v1324 = vunpack.c.l.b16 %v1316
    %v1325 = vunpack.c.l.b16 %v1317
    %v1326 = vpack.c.b16 %v1323, %v1322
    %v1327 = vpack.c.b16 %v1325, %v1324
    %vm1330 = vcmask 261120
    %v1332 = vsel %vm1330, %v1305, 0
    %v1335 = vsel %vm1330, %v1306, 0
    %v1338 = vsel %vm1330, %v1307, 0
    %v1341 = vsel %vm1330, %v1308, 0
    %v1344 = vsel %vm1330, %v1309, 0
    %v1347 = vsel %vm1330, %v1310, 0
    %v1350 = vsel %vm1330, %v1311, 0
    %v1353 = vsel %vm1330, %v1312, 0
    %1355 = vmatprep.subr.bf16.mxu0 0
    %1356 = vmatpush1.bf16.msra.mxu0 0
    %1357 = vmatprep.subr.bf16.mxu0 0
    %1358 = vmatpush1.bf16.msra.mxu0 0
    %1359 = vmatprep.subr.bf16.mxu0 0
    %1360 = vmatpush1.bf16.msra.mxu0 0
    %1361 = vmatprep.subr.bf16.mxu0 0
    %1362 = vmatpush1.bf16.msra.mxu0 0
    %1363 = vmatprep.subr.bf16.mxu0 0
    %1364 = vmatpush1.bf16.msra.mxu0 0
    %1365 = vmatprep.subr.bf16.mxu0 0
    %1366 = vmatpush1.bf16.msra.mxu0 0
    %1367 = vmatprep.subr.bf16.mxu0 0
    %1368 = vmatpush1.bf16.msra.mxu0 %v1327
    %1369 = vmatprep.subr.bf16.mxu0 0
    %1370 = vmatpush1.bf16.msra.mxu0 %v1326
    %1371 = vmatprep.subr.bf16.mxu0 0
    %1372 = vmatpush2.bf16.msra.mxu0 0
    %1373 = vmatprep.subr.bf16.mxu0 0
    %1374 = vmatpush2.bf16.msra.mxu0 0
    %1375 = vmatprep.subr.bf16.mxu0 0
    %1376 = vmatpush2.bf16.msra.mxu0 0
    %1377 = vmatprep.subr.bf16.mxu0 0
    %1378 = vmatpush2.bf16.msra.mxu0 0
    %1379 = vmatprep.subr.bf16.mxu0 0
    %1380 = vmatpush2.bf16.msra.mxu0 0
    %1381 = vmatprep.subr.bf16.mxu0 0
    %1382 = vmatpush2.bf16.msra.mxu0 0
    %1383 = vmatprep.subr.bf16.mxu0 0
    %1384 = vmatpush2.bf16.msra.mxu0 0
    %1385 = vmatprep.subr.bf16.mxu0 0
    %1386 = vmatpush2.bf16.msra.mxu0 0
    %1387 = vmatprep.mubr.bf16.mxu0 0
    %1388 = vmatmul.mubr.bf16.gmra.mxu0 %v1332
    %v1389 = vpop.f32.mrf.mxu0
    %v1390 = vadd.f32 0.0, %v1389
    %v1391 = vpop.f32.mrf.mxu0
    %v1392 = vpop.f32.mrf.mxu0
    %v1393 = vadd.f32 0.0, %v1392
    %v1394 = vpop.f32.mrf.mxu0
    %1395 = vmatprep.mubr.bf16.mxu0 0
    %1396 = vmatmul.mubr.bf16.gmra.mxu0 %v1335
    %v1397 = vpop.f32.mrf.mxu0
    %v1398 = vadd.f32 0.0, %v1397
    %v1399 = vpop.f32.mrf.mxu0
    %v1400 = vpop.f32.mrf.mxu0
    %v1401 = vadd.f32 0.0, %v1400
    %v1402 = vpop.f32.mrf.mxu0
    %1403 = vmatprep.mubr.bf16.mxu0 0
    %1404 = vmatmul.mubr.bf16.gmra.mxu0 %v1338
    %v1405 = vpop.f32.mrf.mxu0
    %v1406 = vadd.f32 0.0, %v1405
    %v1407 = vpop.f32.mrf.mxu0
    %v1408 = vpop.f32.mrf.mxu0
    %v1409 = vadd.f32 0.0, %v1408
    %v1410 = vpop.f32.mrf.mxu0
    %1411 = vmatprep.mubr.bf16.mxu0 0
    %1412 = vmatmul.mubr.bf16.gmra.mxu0 %v1341
    %v1413 = vpop.f32.mrf.mxu0
    %v1414 = vadd.f32 0.0, %v1413
    %v1415 = vpop.f32.mrf.mxu0
    %v1416 = vpop.f32.mrf.mxu0
    %v1417 = vadd.f32 0.0, %v1416
    %v1418 = vpop.f32.mrf.mxu0
    %1419 = vmatprep.mubr.bf16.mxu0 0
    %1420 = vmatmul.mubr.bf16.gmra.mxu0 %v1344
    %v1421 = vpop.f32.mrf.mxu0
    %v1422 = vadd.f32 0.0, %v1421
    %v1423 = vpop.f32.mrf.mxu0
    %v1424 = vpop.f32.mrf.mxu0
    %v1425 = vadd.f32 0.0, %v1424
    %v1426 = vpop.f32.mrf.mxu0
    %1427 = vmatprep.mubr.bf16.mxu0 0
    %1428 = vmatmul.mubr.bf16.gmra.mxu0 %v1347
    %v1429 = vpop.f32.mrf.mxu0
    %v1430 = vadd.f32 0.0, %v1429
    %v1431 = vpop.f32.mrf.mxu0
    %v1432 = vpop.f32.mrf.mxu0
    %v1433 = vadd.f32 0.0, %v1432
    %v1434 = vpop.f32.mrf.mxu0
    %1435 = vmatprep.mubr.bf16.mxu0 0
    %1436 = vmatmul.mubr.bf16.gmra.mxu0 %v1350
    %v1437 = vpop.f32.mrf.mxu0
    %v1438 = vadd.f32 0.0, %v1437
    %v1439 = vpop.f32.mrf.mxu0
    %v1440 = vpop.f32.mrf.mxu0
    %v1441 = vadd.f32 0.0, %v1440
    %v1442 = vpop.f32.mrf.mxu0
    %1443 = vmatprep.mubr.bf16.mxu0 0
    %1444 = vmatmul.mubr.bf16.gmra.mxu0 %v1353
    %v1445 = vpop.f32.mrf.mxu0
    %v1446 = vadd.f32 0.0, %v1445
    %v1447 = vpop.f32.mrf.mxu0
    %v1448 = vpop.f32.mrf.mxu0
    %v1449 = vadd.f32 0.0, %v1448
    %v1450 = vpop.f32.mrf.mxu0
    %1451 = vdwg.mxu0
    %v1456 = vunpack.c.l.b16 %v1139
    %v1457 = vunpack.c.l.b16 %v1140
    %v1458 = vunpack.c.l.b16 %v1141
    %v1459 = vunpack.c.l.b16 %v1142
    %v1460 = vpack.c.b16 %v1457, %v1456
    %v1461 = vpack.c.b16 %v1459, %v1458
    %v1465 = vsel %vm1330, %v1131, 0
    %v1468 = vsel %vm1330, %v1132, 0
    %v1471 = vsel %vm1330, %v1133, 0
    %v1474 = vsel %vm1330, %v1134, 0
    %v1477 = vsel %vm1330, %v1135, 0
    %v1480 = vsel %vm1330, %v1136, 0
    %v1483 = vsel %vm1330, %v1137, 0
    %v1486 = vsel %vm1330, %v1138, 0
    %1488 = vmatprep.subr.bf16.mxu0 0
    %1489 = vmatpush1.bf16.msra.mxu0 0
    %1490 = vmatprep.subr.bf16.mxu0 0
    %1491 = vmatpush1.bf16.msra.mxu0 0
    %1492 = vmatprep.subr.bf16.mxu0 0
    %1493 = vmatpush1.bf16.msra.mxu0 0
    %1494 = vmatprep.subr.bf16.mxu0 0
    %1495 = vmatpush1.bf16.msra.mxu0 0
    %1496 = vmatprep.subr.bf16.mxu0 0
    %1497 = vmatpush1.bf16.msra.mxu0 0
    %1498 = vmatprep.subr.bf16.mxu0 0
    %1499 = vmatpush1.bf16.msra.mxu0 0
    %1500 = vmatprep.subr.bf16.mxu0 0
    %1501 = vmatpush1.bf16.msra.mxu0 %v1461
    %1502 = vmatprep.subr.bf16.mxu0 0
    %1503 = vmatpush1.bf16.msra.mxu0 %v1460
    %1504 = vmatprep.subr.bf16.mxu0 0
    %1505 = vmatpush2.bf16.msra.mxu0 0
    %1506 = vmatprep.subr.bf16.mxu0 0
    %1507 = vmatpush2.bf16.msra.mxu0 0
    %1508 = vmatprep.subr.bf16.mxu0 0
    %1509 = vmatpush2.bf16.msra.mxu0 0
    %1510 = vmatprep.subr.bf16.mxu0 0
    %1511 = vmatpush2.bf16.msra.mxu0 0
    %1512 = vmatprep.subr.bf16.mxu0 0
    %1513 = vmatpush2.bf16.msra.mxu0 0
    %1514 = vmatprep.subr.bf16.mxu0 0
    %1515 = vmatpush2.bf16.msra.mxu0 0
    %1516 = vmatprep.subr.bf16.mxu0 0
    %1517 = vmatpush2.bf16.msra.mxu0 0
    %1518 = vmatprep.subr.bf16.mxu0 0
    %1519 = vmatpush2.bf16.msra.mxu0 0
    %1520 = vmatprep.mubr.bf16.mxu0 0
    %1521 = vmatmul.mubr.bf16.gmra.mxu0 %v1465
    %v1522 = vpop.f32.mrf.mxu0
    %v1523 = vadd.f32 %v1390, %v1522
    %v1524 = vpop.f32.mrf.mxu0
    %v1525 = vpop.f32.mrf.mxu0
    %v1526 = vadd.f32 %v1393, %v1525
    %v1527 = vpop.f32.mrf.mxu0
    %1528 = vmatprep.mubr.bf16.mxu0 0
    %1529 = vmatmul.mubr.bf16.gmra.mxu0 %v1468
    %v1530 = vpop.f32.mrf.mxu0
    %v1531 = vadd.f32 %v1398, %v1530
    %v1532 = vpop.f32.mrf.mxu0
    %v1533 = vpop.f32.mrf.mxu0
    %v1534 = vadd.f32 %v1401, %v1533
    %v1535 = vpop.f32.mrf.mxu0
    %1536 = vmatprep.mubr.bf16.mxu0 0
    %1537 = vmatmul.mubr.bf16.gmra.mxu0 %v1471
    %v1538 = vpop.f32.mrf.mxu0
    %v1539 = vadd.f32 %v1406, %v1538
    %v1540 = vpop.f32.mrf.mxu0
    %v1541 = vpop.f32.mrf.mxu0
    %v1542 = vadd.f32 %v1409, %v1541
    %v1543 = vpop.f32.mrf.mxu0
    %1544 = vmatprep.mubr.bf16.mxu0 0
    %1545 = vmatmul.mubr.bf16.gmra.mxu0 %v1474
    %v1546 = vpop.f32.mrf.mxu0
    %v1547 = vadd.f32 %v1414, %v1546
    %v1548 = vpop.f32.mrf.mxu0
    %v1549 = vpop.f32.mrf.mxu0
    %v1550 = vadd.f32 %v1417, %v1549
    %v1551 = vpop.f32.mrf.mxu0
    %1552 = vmatprep.mubr.bf16.mxu0 0
    %1553 = vmatmul.mubr.bf16.gmra.mxu0 %v1477
    %v1554 = vpop.f32.mrf.mxu0
    %v1555 = vadd.f32 %v1422, %v1554
    %v1556 = vpop.f32.mrf.mxu0
    %v1557 = vpop.f32.mrf.mxu0
    %v1558 = vadd.f32 %v1425, %v1557
    %v1559 = vpop.f32.mrf.mxu0
    %1560 = vmatprep.mubr.bf16.mxu0 0
    %1561 = vmatmul.mubr.bf16.gmra.mxu0 %v1480
    %v1562 = vpop.f32.mrf.mxu0
    %v1563 = vadd.f32 %v1430, %v1562
    %v1564 = vpop.f32.mrf.mxu0
    %v1565 = vpop.f32.mrf.mxu0
    %v1566 = vadd.f32 %v1433, %v1565
    %v1567 = vpop.f32.mrf.mxu0
    %1568 = vmatprep.mubr.bf16.mxu0 0
    %1569 = vmatmul.mubr.bf16.gmra.mxu0 %v1483
    %v1570 = vpop.f32.mrf.mxu0
    %v1571 = vadd.f32 %v1438, %v1570
    %v1572 = vpop.f32.mrf.mxu0
    %v1573 = vpop.f32.mrf.mxu0
    %v1574 = vadd.f32 %v1441, %v1573
    %v1575 = vpop.f32.mrf.mxu0
    %1576 = vmatprep.mubr.bf16.mxu0 0
    %1577 = vmatmul.mubr.bf16.gmra.mxu0 %v1486
    %v1578 = vpop.f32.mrf.mxu0
    %v1579 = vadd.f32 %v1446, %v1578
    %v1580 = vpop.f32.mrf.mxu0
    %v1581 = vpop.f32.mrf.mxu0
    %v1582 = vadd.f32 %v1449, %v1581
    %v1583 = vpop.f32.mrf.mxu0
    %1584 = vdwg.mxu0
    %s1585 = scalar_lea.vmem %s3, 128
    %v1586 = vld [vmem:[%s1585] sm:$0xf]
    %v1587 = vld [vmem:[%s1585 + $0x4] sm:$0xf]
    %v1588 = vld [vmem:[%s1585 + $0x8] sm:$0xf]
    %v1589 = vld [vmem:[%s1585 + $0xc] sm:$0xf]
    %v1590 = vld [vmem:[%s1585 + $0x10] sm:$0xf]
    %v1591 = vld [vmem:[%s1585 + $0x14] sm:$0xf]
    %v1592 = vld [vmem:[%s1585 + $0x18] sm:$0xf]
    %v1593 = vld [vmem:[%s1585 + $0x1c] sm:$0xf]
    %v1594 = vld [vmem:[%s1585 + $0x20] sm:$0xf]
    %v1595 = vld [vmem:[%s1585 + $0x24] sm:$0xf]
    %v1596 = vld [vmem:[%s1585 + $0x28] sm:$0xf]
    %v1597 = vld [vmem:[%s1585 + $0x2c] sm:$0xf]
    %v1598 = vld [vmem:[%s1585 + $0x30] sm:$0xf]
    %v1599 = vld [vmem:[%s1585 + $0x34] sm:$0xf]
    %v1600 = vld [vmem:[%s1585 + $0x38] sm:$0xf]
    %v1601 = vld [vmem:[%s1585 + $0x3c] sm:$0xf]
    %v1618 = vunpack.c.l.b16 %v1586
    %v1619 = vunpack.c.l.b16 %v1587
    %v1620 = vunpack.c.l.b16 %v1588
    %v1621 = vunpack.c.l.b16 %v1589
    %v1622 = vunpack.c.l.b16 %v1590
    %v1623 = vunpack.c.l.b16 %v1591
    %v1624 = vunpack.c.l.b16 %v1592
    %v1625 = vunpack.c.l.b16 %v1593
    %v1626 = vunpack.c.l.b16 %v1594
    %v1627 = vunpack.c.l.b16 %v1595
    %v1628 = vunpack.c.l.b16 %v1596
    %v1629 = vunpack.c.l.b16 %v1597
    %v1630 = vunpack.c.l.b16 %v1598
    %v1631 = vunpack.c.l.b16 %v1599
    %v1632 = vunpack.c.l.b16 %v1600
    %v1633 = vunpack.c.l.b16 %v1601
    %v1634 = vpack.c.b16 %v1619, %v1618
    %v1635 = vpack.c.b16 %v1621, %v1620
    %v1636 = vpack.c.b16 %v1623, %v1622
    %v1637 = vpack.c.b16 %v1625, %v1624
    %v1638 = vpack.c.b16 %v1627, %v1626
    %v1639 = vpack.c.b16 %v1629, %v1628
    %v1640 = vpack.c.b16 %v1631, %v1630
    %v1641 = vpack.c.b16 %v1633, %v1632
    %1650 = vmatprep.subr.bf16.mxu0 0
    %1651 = vmatpush1.bf16.msra.mxu0 %v969
    %1652 = vmatprep.subr.bf16.mxu0 0
    %1653 = vmatpush1.bf16.msra.mxu0 %v968
    %1654 = vmatprep.subr.bf16.mxu0 0
    %1655 = vmatpush1.bf16.msra.mxu0 %v967
    %1656 = vmatprep.subr.bf16.mxu0 0
    %1657 = vmatpush1.bf16.msra.mxu0 %v966
    %1658 = vmatprep.subr.bf16.mxu0 0
    %1659 = vmatpush1.bf16.msra.mxu0 %v965
    %1660 = vmatprep.subr.bf16.mxu0 0
    %1661 = vmatpush1.bf16.msra.mxu0 %v964
    %1662 = vmatprep.subr.bf16.mxu0 0
    %1663 = vmatpush1.bf16.msra.mxu0 %v963
    %1664 = vmatprep.subr.bf16.mxu0 0
    %1665 = vmatpush1.bf16.msra.mxu0 %v962
    %1666 = vmatprep.subr.bf16.mxu0 0
    %1667 = vmatpush2.bf16.msra.mxu0 0
    %1668 = vmatprep.subr.bf16.mxu0 0
    %1669 = vmatpush2.bf16.msra.mxu0 0
    %1670 = vmatprep.subr.bf16.mxu0 0
    %1671 = vmatpush2.bf16.msra.mxu0 0
    %1672 = vmatprep.subr.bf16.mxu0 0
    %1673 = vmatpush2.bf16.msra.mxu0 0
    %1674 = vmatprep.subr.bf16.mxu0 0
    %1675 = vmatpush2.bf16.msra.mxu0 0
    %1676 = vmatprep.subr.bf16.mxu0 0
    %1677 = vmatpush2.bf16.msra.mxu0 0
    %1678 = vmatprep.subr.bf16.mxu0 0
    %1679 = vmatpush2.bf16.msra.mxu0 0
    %1680 = vmatprep.subr.bf16.mxu0 0
    %1681 = vmatpush2.bf16.msra.mxu0 0
    %1682 = vmatprep.mubr.bf16.mxu0 0
    %1683 = vmatmul.mubr.bf16.gmra.mxu0 %v1634
    %v1684 = vpop.f32.mrf.mxu0
    %v1685 = vadd.f32 0.0, %v1684
    %v1686 = vpop.f32.mrf.mxu0
    %v1687 = vpop.f32.mrf.mxu0
    %v1688 = vadd.f32 0.0, %v1687
    %v1689 = vpop.f32.mrf.mxu0
    %1690 = vmatprep.mubr.bf16.mxu0 0
    %1691 = vmatmul.mubr.bf16.gmra.mxu0 %v1635
    %v1692 = vpop.f32.mrf.mxu0
    %v1693 = vadd.f32 0.0, %v1692
    %v1694 = vpop.f32.mrf.mxu0
    %v1695 = vpop.f32.mrf.mxu0
    %v1696 = vadd.f32 0.0, %v1695
    %v1697 = vpop.f32.mrf.mxu0
    %1698 = vmatprep.mubr.bf16.mxu0 0
    %1699 = vmatmul.mubr.bf16.gmra.mxu0 %v1636
    %v1700 = vpop.f32.mrf.mxu0
    %v1701 = vadd.f32 0.0, %v1700
    %v1702 = vpop.f32.mrf.mxu0
    %v1703 = vpop.f32.mrf.mxu0
    %v1704 = vadd.f32 0.0, %v1703
    %v1705 = vpop.f32.mrf.mxu0
    %1706 = vmatprep.mubr.bf16.mxu0 0
    %1707 = vmatmul.mubr.bf16.gmra.mxu0 %v1637
    %v1708 = vpop.f32.mrf.mxu0
    %v1709 = vadd.f32 0.0, %v1708
    %v1710 = vpop.f32.mrf.mxu0
    %v1711 = vpop.f32.mrf.mxu0
    %v1712 = vadd.f32 0.0, %v1711
    %v1713 = vpop.f32.mrf.mxu0
    %1714 = vmatprep.mubr.bf16.mxu0 0
    %1715 = vmatmul.mubr.bf16.gmra.mxu0 %v1638
    %v1716 = vpop.f32.mrf.mxu0
    %v1717 = vadd.f32 0.0, %v1716
    %v1718 = vpop.f32.mrf.mxu0
    %v1719 = vpop.f32.mrf.mxu0
    %v1720 = vadd.f32 0.0, %v1719
    %v1721 = vpop.f32.mrf.mxu0
    %1722 = vmatprep.mubr.bf16.mxu0 0
    %1723 = vmatmul.mubr.bf16.gmra.mxu0 %v1639
    %v1724 = vpop.f32.mrf.mxu0
    %v1725 = vadd.f32 0.0, %v1724
    %v1726 = vpop.f32.mrf.mxu0
    %v1727 = vpop.f32.mrf.mxu0
    %v1728 = vadd.f32 0.0, %v1727
    %v1729 = vpop.f32.mrf.mxu0
    %1730 = vmatprep.mubr.bf16.mxu0 0
    %1731 = vmatmul.mubr.bf16.gmra.mxu0 %v1640
    %v1732 = vpop.f32.mrf.mxu0
    %v1733 = vadd.f32 0.0, %v1732
    %v1734 = vpop.f32.mrf.mxu0
    %v1735 = vpop.f32.mrf.mxu0
    %v1736 = vadd.f32 0.0, %v1735
    %v1737 = vpop.f32.mrf.mxu0
    %1738 = vmatprep.mubr.bf16.mxu0 0
    %1739 = vmatmul.mubr.bf16.gmra.mxu0 %v1641
    %v1740 = vpop.f32.mrf.mxu0
    %v1741 = vadd.f32 0.0, %v1740
    %v1742 = vpop.f32.mrf.mxu0
    %v1743 = vpop.f32.mrf.mxu0
    %v1744 = vadd.f32 0.0, %v1743
    %v1745 = vpop.f32.mrf.mxu0
    %1746 = vdwg.mxu0
    %v1747 = vpack.c.bf16 %v1688, %v1685
    %v1748 = vpack.c.bf16 %v1696, %v1693
    %v1749 = vpack.c.bf16 %v1704, %v1701
    %v1750 = vpack.c.bf16 %v1712, %v1709
    %v1751 = vpack.c.bf16 %v1720, %v1717
    %v1752 = vpack.c.bf16 %v1728, %v1725
    %v1753 = vpack.c.bf16 %v1736, %v1733
    %v1754 = vpack.c.bf16 %v1744, %v1741
    %s1755 = scalar_lea.vmem %s4, 32
    %v1756 = vld [vmem:[%s1755] sm:$0xf]
    %v1757 = vld [vmem:[%s1755 + $0x4] sm:$0xf]
    %v1758 = vld [vmem:[%s1755 + $0x8] sm:$0xf]
    %v1759 = vld [vmem:[%s1755 + $0xc] sm:$0xf]
    %v1764 = vunpack.c.l.b16 %v1756
    %v1765 = vunpack.c.l.b16 %v1757
    %v1766 = vunpack.c.l.b16 %v1758
    %v1767 = vunpack.c.l.b16 %v1759
    %v1768 = vpack.c.b16 %v1765, %v1764
    %v1769 = vpack.c.b16 %v1767, %v1766
    %v1773 = vsel %vm1330, %v1747, 0
    %v1776 = vsel %vm1330, %v1748, 0
    %v1779 = vsel %vm1330, %v1749, 0
    %v1782 = vsel %vm1330, %v1750, 0
    %v1785 = vsel %vm1330, %v1751, 0
    %v1788 = vsel %vm1330, %v1752, 0
    %v1791 = vsel %vm1330, %v1753, 0
    %v1794 = vsel %vm1330, %v1754, 0
    %1796 = vmatprep.subr.bf16.mxu0 0
    %1797 = vmatpush1.bf16.msra.mxu0 0
    %1798 = vmatprep.subr.bf16.mxu0 0
    %1799 = vmatpush1.bf16.msra.mxu0 0
    %1800 = vmatprep.subr.bf16.mxu0 0
    %1801 = vmatpush1.bf16.msra.mxu0 0
    %1802 = vmatprep.subr.bf16.mxu0 0
    %1803 = vmatpush1.bf16.msra.mxu0 0
    %1804 = vmatprep.subr.bf16.mxu0 0
    %1805 = vmatpush1.bf16.msra.mxu0 0
    %1806 = vmatprep.subr.bf16.mxu0 0
    %1807 = vmatpush1.bf16.msra.mxu0 0
    %1808 = vmatprep.subr.bf16.mxu0 0
    %1809 = vmatpush1.bf16.msra.mxu0 %v1769
    %1810 = vmatprep.subr.bf16.mxu0 0
    %1811 = vmatpush1.bf16.msra.mxu0 %v1768
    %1812 = vmatprep.subr.bf16.mxu0 0
    %1813 = vmatpush2.bf16.msra.mxu0 0
    %1814 = vmatprep.subr.bf16.mxu0 0
    %1815 = vmatpush2.bf16.msra.mxu0 0
    %1816 = vmatprep.subr.bf16.mxu0 0
    %1817 = vmatpush2.bf16.msra.mxu0 0
    %1818 = vmatprep.subr.bf16.mxu0 0
    %1819 = vmatpush2.bf16.msra.mxu0 0
    %1820 = vmatprep.subr.bf16.mxu0 0
    %1821 = vmatpush2.bf16.msra.mxu0 0
    %1822 = vmatprep.subr.bf16.mxu0 0
    %1823 = vmatpush2.bf16.msra.mxu0 0
    %1824 = vmatprep.subr.bf16.mxu0 0
    %1825 = vmatpush2.bf16.msra.mxu0 0
    %1826 = vmatprep.subr.bf16.mxu0 0
    %1827 = vmatpush2.bf16.msra.mxu0 0
    %1828 = vmatprep.mubr.bf16.mxu0 0
    %1829 = vmatmul.mubr.bf16.gmra.mxu0 %v1773
    %v1830 = vpop.f32.mrf.mxu0
    %v1831 = vadd.f32 0.0, %v1830
    %v1832 = vpop.f32.mrf.mxu0
    %v1833 = vpop.f32.mrf.mxu0
    %v1834 = vadd.f32 0.0, %v1833
    %v1835 = vpop.f32.mrf.mxu0
    %1836 = vmatprep.mubr.bf16.mxu0 0
    %1837 = vmatmul.mubr.bf16.gmra.mxu0 %v1776
    %v1838 = vpop.f32.mrf.mxu0
    %v1839 = vadd.f32 0.0, %v1838
    %v1840 = vpop.f32.mrf.mxu0
    %v1841 = vpop.f32.mrf.mxu0
    %v1842 = vadd.f32 0.0, %v1841
    %v1843 = vpop.f32.mrf.mxu0
    %1844 = vmatprep.mubr.bf16.mxu0 0
    %1845 = vmatmul.mubr.bf16.gmra.mxu0 %v1779
    %v1846 = vpop.f32.mrf.mxu0
    %v1847 = vadd.f32 0.0, %v1846
    %v1848 = vpop.f32.mrf.mxu0
    %v1849 = vpop.f32.mrf.mxu0
    %v1850 = vadd.f32 0.0, %v1849
    %v1851 = vpop.f32.mrf.mxu0
    %1852 = vmatprep.mubr.bf16.mxu0 0
    %1853 = vmatmul.mubr.bf16.gmra.mxu0 %v1782
    %v1854 = vpop.f32.mrf.mxu0
    %v1855 = vadd.f32 0.0, %v1854
    %v1856 = vpop.f32.mrf.mxu0
    %v1857 = vpop.f32.mrf.mxu0
    %v1858 = vadd.f32 0.0, %v1857
    %v1859 = vpop.f32.mrf.mxu0
    %1860 = vmatprep.mubr.bf16.mxu0 0
    %1861 = vmatmul.mubr.bf16.gmra.mxu0 %v1785
    %v1862 = vpop.f32.mrf.mxu0
    %v1863 = vadd.f32 0.0, %v1862
    %v1864 = vpop.f32.mrf.mxu0
    %v1865 = vpop.f32.mrf.mxu0
    %v1866 = vadd.f32 0.0, %v1865
    %v1867 = vpop.f32.mrf.mxu0
    %1868 = vmatprep.mubr.bf16.mxu0 0
    %1869 = vmatmul.mubr.bf16.gmra.mxu0 %v1788
    %v1870 = vpop.f32.mrf.mxu0
    %v1871 = vadd.f32 0.0, %v1870
    %v1872 = vpop.f32.mrf.mxu0
    %v1873 = vpop.f32.mrf.mxu0
    %v1874 = vadd.f32 0.0, %v1873
    %v1875 = vpop.f32.mrf.mxu0
    %1876 = vmatprep.mubr.bf16.mxu0 0
    %1877 = vmatmul.mubr.bf16.gmra.mxu0 %v1791
    %v1878 = vpop.f32.mrf.mxu0
    %v1879 = vadd.f32 0.0, %v1878
    %v1880 = vpop.f32.mrf.mxu0
    %v1881 = vpop.f32.mrf.mxu0
    %v1882 = vadd.f32 0.0, %v1881
    %v1883 = vpop.f32.mrf.mxu0
    %1884 = vmatprep.mubr.bf16.mxu0 0
    %1885 = vmatmul.mubr.bf16.gmra.mxu0 %v1794
    %v1886 = vpop.f32.mrf.mxu0
    %v1887 = vadd.f32 0.0, %v1886
    %v1888 = vpop.f32.mrf.mxu0
    %v1889 = vpop.f32.mrf.mxu0
    %v1890 = vadd.f32 0.0, %v1889
    %v1891 = vpop.f32.mrf.mxu0
    %1892 = vdwg.mxu0
    %v1893 = vadd.f32 %v1523, %v1831
    %v1894 = vadd.f32 %v1526, %v1834
    %v1895 = vadd.f32 %v1531, %v1839
    %v1896 = vadd.f32 %v1534, %v1842
    %v1897 = vadd.f32 %v1539, %v1847
    %v1898 = vadd.f32 %v1542, %v1850
    %v1899 = vadd.f32 %v1547, %v1855
    %v1900 = vadd.f32 %v1550, %v1858
    %v1901 = vadd.f32 %v1555, %v1863
    %v1902 = vadd.f32 %v1558, %v1866
    %v1903 = vadd.f32 %v1563, %v1871
    %v1904 = vadd.f32 %v1566, %v1874
    %v1905 = vadd.f32 %v1571, %v1879
    %v1906 = vadd.f32 %v1574, %v1882
    %v1907 = vadd.f32 %v1579, %v1887
    %v1908 = vadd.f32 %v1582, %v1890
    %s1909 = scalar_lea.vmem %s3, 192
    %v1910 = vld [vmem:[%s1909] sm:$0xf]
    %v1911 = vld [vmem:[%s1909 + $0x4] sm:$0xf]
    %v1912 = vld [vmem:[%s1909 + $0x8] sm:$0xf]
    %v1913 = vld [vmem:[%s1909 + $0xc] sm:$0xf]
    %v1914 = vld [vmem:[%s1909 + $0x10] sm:$0xf]
    %v1915 = vld [vmem:[%s1909 + $0x14] sm:$0xf]
    %v1916 = vld [vmem:[%s1909 + $0x18] sm:$0xf]
    %v1917 = vld [vmem:[%s1909 + $0x1c] sm:$0xf]
    %v1918 = vld [vmem:[%s1909 + $0x20] sm:$0xf]
    %v1919 = vld [vmem:[%s1909 + $0x24] sm:$0xf]
    %v1920 = vld [vmem:[%s1909 + $0x28] sm:$0xf]
    %v1921 = vld [vmem:[%s1909 + $0x2c] sm:$0xf]
    %v1922 = vld [vmem:[%s1909 + $0x30] sm:$0xf]
    %v1923 = vld [vmem:[%s1909 + $0x34] sm:$0xf]
    %v1924 = vld [vmem:[%s1909 + $0x38] sm:$0xf]
    %v1925 = vld [vmem:[%s1909 + $0x3c] sm:$0xf]
    %v1942 = vunpack.c.l.b16 %v1910
    %v1943 = vunpack.c.l.b16 %v1911
    %v1944 = vunpack.c.l.b16 %v1912
    %v1945 = vunpack.c.l.b16 %v1913
    %v1946 = vunpack.c.l.b16 %v1914
    %v1947 = vunpack.c.l.b16 %v1915
    %v1948 = vunpack.c.l.b16 %v1916
    %v1949 = vunpack.c.l.b16 %v1917
    %v1950 = vunpack.c.l.b16 %v1918
    %v1951 = vunpack.c.l.b16 %v1919
    %v1952 = vunpack.c.l.b16 %v1920
    %v1953 = vunpack.c.l.b16 %v1921
    %v1954 = vunpack.c.l.b16 %v1922
    %v1955 = vunpack.c.l.b16 %v1923
    %v1956 = vunpack.c.l.b16 %v1924
    %v1957 = vunpack.c.l.b16 %v1925
    %v1958 = vpack.c.b16 %v1943, %v1942
    %v1959 = vpack.c.b16 %v1945, %v1944
    %v1960 = vpack.c.b16 %v1947, %v1946
    %v1961 = vpack.c.b16 %v1949, %v1948
    %v1962 = vpack.c.b16 %v1951, %v1950
    %v1963 = vpack.c.b16 %v1953, %v1952
    %v1964 = vpack.c.b16 %v1955, %v1954
    %v1965 = vpack.c.b16 %v1957, %v1956
    %1974 = vmatprep.subr.bf16.mxu0 0
    %1975 = vmatpush1.bf16.msra.mxu0 %v969
    %1976 = vmatprep.subr.bf16.mxu0 0
    %1977 = vmatpush1.bf16.msra.mxu0 %v968
    %1978 = vmatprep.subr.bf16.mxu0 0
    %1979 = vmatpush1.bf16.msra.mxu0 %v967
    %1980 = vmatprep.subr.bf16.mxu0 0
    %1981 = vmatpush1.bf16.msra.mxu0 %v966
    %1982 = vmatprep.subr.bf16.mxu0 0
    %1983 = vmatpush1.bf16.msra.mxu0 %v965
    %1984 = vmatprep.subr.bf16.mxu0 0
    %1985 = vmatpush1.bf16.msra.mxu0 %v964
    %1986 = vmatprep.subr.bf16.mxu0 0
    %1987 = vmatpush1.bf16.msra.mxu0 %v963
    %1988 = vmatprep.subr.bf16.mxu0 0
    %1989 = vmatpush1.bf16.msra.mxu0 %v962
    %1990 = vmatprep.subr.bf16.mxu0 0
    %1991 = vmatpush2.bf16.msra.mxu0 0
    %1992 = vmatprep.subr.bf16.mxu0 0
    %1993 = vmatpush2.bf16.msra.mxu0 0
    %1994 = vmatprep.subr.bf16.mxu0 0
    %1995 = vmatpush2.bf16.msra.mxu0 0
    %1996 = vmatprep.subr.bf16.mxu0 0
    %1997 = vmatpush2.bf16.msra.mxu0 0
    %1998 = vmatprep.subr.bf16.mxu0 0
    %1999 = vmatpush2.bf16.msra.mxu0 0
    %2000 = vmatprep.subr.bf16.mxu0 0
    %2001 = vmatpush2.bf16.msra.mxu0 0
    %2002 = vmatprep.subr.bf16.mxu0 0
    %2003 = vmatpush2.bf16.msra.mxu0 0
    %2004 = vmatprep.subr.bf16.mxu0 0
    %2005 = vmatpush2.bf16.msra.mxu0 0
    %2006 = vmatprep.mubr.bf16.mxu0 0
    %2007 = vmatmul.mubr.bf16.gmra.mxu0 %v1958
    %v2008 = vpop.f32.mrf.mxu0
    %v2009 = vadd.f32 0.0, %v2008
    %v2010 = vpop.f32.mrf.mxu0
    %v2011 = vpop.f32.mrf.mxu0
    %v2012 = vadd.f32 0.0, %v2011
    %v2013 = vpop.f32.mrf.mxu0
    %2014 = vmatprep.mubr.bf16.mxu0 0
    %2015 = vmatmul.mubr.bf16.gmra.mxu0 %v1959
    %v2016 = vpop.f32.mrf.mxu0
    %v2017 = vadd.f32 0.0, %v2016
    %v2018 = vpop.f32.mrf.mxu0
    %v2019 = vpop.f32.mrf.mxu0
    %v2020 = vadd.f32 0.0, %v2019
    %v2021 = vpop.f32.mrf.mxu0
    %2022 = vmatprep.mubr.bf16.mxu0 0
    %2023 = vmatmul.mubr.bf16.gmra.mxu0 %v1960
    %v2024 = vpop.f32.mrf.mxu0
    %v2025 = vadd.f32 0.0, %v2024
    %v2026 = vpop.f32.mrf.mxu0
    %v2027 = vpop.f32.mrf.mxu0
    %v2028 = vadd.f32 0.0, %v2027
    %v2029 = vpop.f32.mrf.mxu0
    %2030 = vmatprep.mubr.bf16.mxu0 0
    %2031 = vmatmul.mubr.bf16.gmra.mxu0 %v1961
    %v2032 = vpop.f32.mrf.mxu0
    %v2033 = vadd.f32 0.0, %v2032
    %v2034 = vpop.f32.mrf.mxu0
    %v2035 = vpop.f32.mrf.mxu0
    %v2036 = vadd.f32 0.0, %v2035
    %v2037 = vpop.f32.mrf.mxu0
    %2038 = vmatprep.mubr.bf16.mxu0 0
    %2039 = vmatmul.mubr.bf16.gmra.mxu0 %v1962
    %v2040 = vpop.f32.mrf.mxu0
    %v2041 = vadd.f32 0.0, %v2040
    %v2042 = vpop.f32.mrf.mxu0
    %v2043 = vpop.f32.mrf.mxu0
    %v2044 = vadd.f32 0.0, %v2043
    %v2045 = vpop.f32.mrf.mxu0
    %2046 = vmatprep.mubr.bf16.mxu0 0
    %2047 = vmatmul.mubr.bf16.gmra.mxu0 %v1963
    %v2048 = vpop.f32.mrf.mxu0
    %v2049 = vadd.f32 0.0, %v2048
    %v2050 = vpop.f32.mrf.mxu0
    %v2051 = vpop.f32.mrf.mxu0
    %v2052 = vadd.f32 0.0, %v2051
    %v2053 = vpop.f32.mrf.mxu0
    %2054 = vmatprep.mubr.bf16.mxu0 0
    %2055 = vmatmul.mubr.bf16.gmra.mxu0 %v1964
    %v2056 = vpop.f32.mrf.mxu0
    %v2057 = vadd.f32 0.0, %v2056
    %v2058 = vpop.f32.mrf.mxu0
    %v2059 = vpop.f32.mrf.mxu0
    %v2060 = vadd.f32 0.0, %v2059
    %v2061 = vpop.f32.mrf.mxu0
    %2062 = vmatprep.mubr.bf16.mxu0 0
    %2063 = vmatmul.mubr.bf16.gmra.mxu0 %v1965
    %v2064 = vpop.f32.mrf.mxu0
    %v2065 = vadd.f32 0.0, %v2064
    %v2066 = vpop.f32.mrf.mxu0
    %v2067 = vpop.f32.mrf.mxu0
    %v2068 = vadd.f32 0.0, %v2067
    %v2069 = vpop.f32.mrf.mxu0
    %2070 = vdwg.mxu0
    %v2071 = vpack.c.bf16 %v2012, %v2009
    %v2072 = vpack.c.bf16 %v2020, %v2017
    %v2073 = vpack.c.bf16 %v2028, %v2025
    %v2074 = vpack.c.bf16 %v2036, %v2033
    %v2075 = vpack.c.bf16 %v2044, %v2041
    %v2076 = vpack.c.bf16 %v2052, %v2049
    %v2077 = vpack.c.bf16 %v2060, %v2057
    %v2078 = vpack.c.bf16 %v2068, %v2065
    %s2079 = scalar_lea.vmem %s4, 48
    %v2080 = vld [vmem:[%s2079] sm:$0xf]
    %v2081 = vld [vmem:[%s2079 + $0x4] sm:$0xf]
    %v2082 = vld [vmem:[%s2079 + $0x8] sm:$0xf]
    %v2083 = vld [vmem:[%s2079 + $0xc] sm:$0xf]
    %v2088 = vunpack.c.l.b16 %v2080
    %v2089 = vunpack.c.l.b16 %v2081
    %v2090 = vunpack.c.l.b16 %v2082
    %v2091 = vunpack.c.l.b16 %v2083
    %v2092 = vpack.c.b16 %v2089, %v2088
    %v2093 = vpack.c.b16 %v2091, %v2090
    %v2097 = vsel %vm1330, %v2071, 0
    %v2100 = vsel %vm1330, %v2072, 0
    %v2103 = vsel %vm1330, %v2073, 0
    %v2106 = vsel %vm1330, %v2074, 0
    %v2109 = vsel %vm1330, %v2075, 0
    %v2112 = vsel %vm1330, %v2076, 0
    %v2115 = vsel %vm1330, %v2077, 0
    %v2118 = vsel %vm1330, %v2078, 0
    %2120 = vmatprep.subr.bf16.mxu0 0
    %2121 = vmatpush1.bf16.msra.mxu0 0
    %2122 = vmatprep.subr.bf16.mxu0 0
    %2123 = vmatpush1.bf16.msra.mxu0 0
    %2124 = vmatprep.subr.bf16.mxu0 0
    %2125 = vmatpush1.bf16.msra.mxu0 0
    %2126 = vmatprep.subr.bf16.mxu0 0
    %2127 = vmatpush1.bf16.msra.mxu0 0
    %2128 = vmatprep.subr.bf16.mxu0 0
    %2129 = vmatpush1.bf16.msra.mxu0 0
    %2130 = vmatprep.subr.bf16.mxu0 0
    %2131 = vmatpush1.bf16.msra.mxu0 0
    %2132 = vmatprep.subr.bf16.mxu0 0
    %2133 = vmatpush1.bf16.msra.mxu0 %v2093
    %2134 = vmatprep.subr.bf16.mxu0 0
    %2135 = vmatpush1.bf16.msra.mxu0 %v2092
    %2136 = vmatprep.subr.bf16.mxu0 0
    %2137 = vmatpush2.bf16.msra.mxu0 0
    %2138 = vmatprep.subr.bf16.mxu0 0
    %2139 = vmatpush2.bf16.msra.mxu0 0
    %2140 = vmatprep.subr.bf16.mxu0 0
    %2141 = vmatpush2.bf16.msra.mxu0 0
    %2142 = vmatprep.subr.bf16.mxu0 0
    %2143 = vmatpush2.bf16.msra.mxu0 0
    %2144 = vmatprep.subr.bf16.mxu0 0
    %2145 = vmatpush2.bf16.msra.mxu0 0
    %2146 = vmatprep.subr.bf16.mxu0 0
    %2147 = vmatpush2.bf16.msra.mxu0 0
    %2148 = vmatprep.subr.bf16.mxu0 0
    %2149 = vmatpush2.bf16.msra.mxu0 0
    %2150 = vmatprep.subr.bf16.mxu0 0
    %2151 = vmatpush2.bf16.msra.mxu0 0
    %2152 = vmatprep.mubr.bf16.mxu0 0
    %2153 = vmatmul.mubr.bf16.gmra.mxu0 %v2097
    %v2154 = vpop.f32.mrf.mxu0
    %v2155 = vadd.f32 0.0, %v2154
    %v2156 = vpop.f32.mrf.mxu0
    %v2157 = vpop.f32.mrf.mxu0
    %v2158 = vadd.f32 0.0, %v2157
    %v2159 = vpop.f32.mrf.mxu0
    %2160 = vmatprep.mubr.bf16.mxu0 0
    %2161 = vmatmul.mubr.bf16.gmra.mxu0 %v2100
    %v2162 = vpop.f32.mrf.mxu0
    %v2163 = vadd.f32 0.0, %v2162
    %v2164 = vpop.f32.mrf.mxu0
    %v2165 = vpop.f32.mrf.mxu0
    %v2166 = vadd.f32 0.0, %v2165
    %v2167 = vpop.f32.mrf.mxu0
    %2168 = vmatprep.mubr.bf16.mxu0 0
    %2169 = vmatmul.mubr.bf16.gmra.mxu0 %v2103
    %v2170 = vpop.f32.mrf.mxu0
    %v2171 = vadd.f32 0.0, %v2170
    %v2172 = vpop.f32.mrf.mxu0
    %v2173 = vpop.f32.mrf.mxu0
    %v2174 = vadd.f32 0.0, %v2173
    %v2175 = vpop.f32.mrf.mxu0
    %2176 = vmatprep.mubr.bf16.mxu0 0
    %2177 = vmatmul.mubr.bf16.gmra.mxu0 %v2106
    %v2178 = vpop.f32.mrf.mxu0
    %v2179 = vadd.f32 0.0, %v2178
    %v2180 = vpop.f32.mrf.mxu0
    %v2181 = vpop.f32.mrf.mxu0
    %v2182 = vadd.f32 0.0, %v2181
    %v2183 = vpop.f32.mrf.mxu0
    %2184 = vmatprep.mubr.bf16.mxu0 0
    %2185 = vmatmul.mubr.bf16.gmra.mxu0 %v2109
    %v2186 = vpop.f32.mrf.mxu0
    %v2187 = vadd.f32 0.0, %v2186
    %v2188 = vpop.f32.mrf.mxu0
    %v2189 = vpop.f32.mrf.mxu0
    %v2190 = vadd.f32 0.0, %v2189
    %v2191 = vpop.f32.mrf.mxu0
    %2192 = vmatprep.mubr.bf16.mxu0 0
    %2193 = vmatmul.mubr.bf16.gmra.mxu0 %v2112
    %v2194 = vpop.f32.mrf.mxu0
    %v2195 = vadd.f32 0.0, %v2194
    %v2196 = vpop.f32.mrf.mxu0
    %v2197 = vpop.f32.mrf.mxu0
    %v2198 = vadd.f32 0.0, %v2197
    %v2199 = vpop.f32.mrf.mxu0
    %2200 = vmatprep.mubr.bf16.mxu0 0
    %2201 = vmatmul.mubr.bf16.gmra.mxu0 %v2115
    %v2202 = vpop.f32.mrf.mxu0
    %v2203 = vadd.f32 0.0, %v2202
    %v2204 = vpop.f32.mrf.mxu0
    %v2205 = vpop.f32.mrf.mxu0
    %v2206 = vadd.f32 0.0, %v2205
    %v2207 = vpop.f32.mrf.mxu0
    %2208 = vmatprep.mubr.bf16.mxu0 0
    %2209 = vmatmul.mubr.bf16.gmra.mxu0 %v2118
    %v2210 = vpop.f32.mrf.mxu0
    %v2211 = vadd.f32 0.0, %v2210
    %v2212 = vpop.f32.mrf.mxu0
    %v2213 = vpop.f32.mrf.mxu0
    %v2214 = vadd.f32 0.0, %v2213
    %v2215 = vpop.f32.mrf.mxu0
    %2216 = vdwg.mxu0
    %v2217 = vadd.f32 %v1893, %v2155
    %v2218 = vadd.f32 %v1894, %v2158
    %v2219 = vadd.f32 %v1895, %v2163
    %v2220 = vadd.f32 %v1896, %v2166
    %v2221 = vadd.f32 %v1897, %v2171
    %v2222 = vadd.f32 %v1898, %v2174
    %v2223 = vadd.f32 %v1899, %v2179
    %v2224 = vadd.f32 %v1900, %v2182
    %v2225 = vadd.f32 %v1901, %v2187
    %v2226 = vadd.f32 %v1902, %v2190
    %v2227 = vadd.f32 %v1903, %v2195
    %v2228 = vadd.f32 %v1904, %v2198
    %v2229 = vadd.f32 %v1905, %v2203
    %v2230 = vadd.f32 %v1906, %v2206
    %v2231 = vadd.f32 %v1907, %v2211
    %v2232 = vadd.f32 %v1908, %v2214
    %s2233 = scalar_lea.vmem %s3, 256
    %v2234 = vld [vmem:[%s2233] sm:$0xf]
    %v2235 = vld [vmem:[%s2233 + $0x4] sm:$0xf]
    %v2236 = vld [vmem:[%s2233 + $0x8] sm:$0xf]
    %v2237 = vld [vmem:[%s2233 + $0xc] sm:$0xf]
    %v2238 = vld [vmem:[%s2233 + $0x10] sm:$0xf]
    %v2239 = vld [vmem:[%s2233 + $0x14] sm:$0xf]
    %v2240 = vld [vmem:[%s2233 + $0x18] sm:$0xf]
    %v2241 = vld [vmem:[%s2233 + $0x1c] sm:$0xf]
    %v2242 = vld [vmem:[%s2233 + $0x20] sm:$0xf]
    %v2243 = vld [vmem:[%s2233 + $0x24] sm:$0xf]
    %v2244 = vld [vmem:[%s2233 + $0x28] sm:$0xf]
    %v2245 = vld [vmem:[%s2233 + $0x2c] sm:$0xf]
    %v2246 = vld [vmem:[%s2233 + $0x30] sm:$0xf]
    %v2247 = vld [vmem:[%s2233 + $0x34] sm:$0xf]
    %v2248 = vld [vmem:[%s2233 + $0x38] sm:$0xf]
    %v2249 = vld [vmem:[%s2233 + $0x3c] sm:$0xf]
    %v2266 = vunpack.c.l.b16 %v2234
    %v2267 = vunpack.c.l.b16 %v2235
    %v2268 = vunpack.c.l.b16 %v2236
    %v2269 = vunpack.c.l.b16 %v2237
    %v2270 = vunpack.c.l.b16 %v2238
    %v2271 = vunpack.c.l.b16 %v2239
    %v2272 = vunpack.c.l.b16 %v2240
    %v2273 = vunpack.c.l.b16 %v2241
    %v2274 = vunpack.c.l.b16 %v2242
    %v2275 = vunpack.c.l.b16 %v2243
    %v2276 = vunpack.c.l.b16 %v2244
    %v2277 = vunpack.c.l.b16 %v2245
    %v2278 = vunpack.c.l.b16 %v2246
    %v2279 = vunpack.c.l.b16 %v2247
    %v2280 = vunpack.c.l.b16 %v2248
    %v2281 = vunpack.c.l.b16 %v2249
    %v2282 = vpack.c.b16 %v2267, %v2266
    %v2283 = vpack.c.b16 %v2269, %v2268
    %v2284 = vpack.c.b16 %v2271, %v2270
    %v2285 = vpack.c.b16 %v2273, %v2272
    %v2286 = vpack.c.b16 %v2275, %v2274
    %v2287 = vpack.c.b16 %v2277, %v2276
    %v2288 = vpack.c.b16 %v2279, %v2278
    %v2289 = vpack.c.b16 %v2281, %v2280
    %2298 = vmatprep.subr.bf16.mxu0 0
    %2299 = vmatpush1.bf16.msra.mxu0 %v969
    %2300 = vmatprep.subr.bf16.mxu0 0
    %2301 = vmatpush1.bf16.msra.mxu0 %v968
    %2302 = vmatprep.subr.bf16.mxu0 0
    %2303 = vmatpush1.bf16.msra.mxu0 %v967
    %2304 = vmatprep.subr.bf16.mxu0 0
    %2305 = vmatpush1.bf16.msra.mxu0 %v966
    %2306 = vmatprep.subr.bf16.mxu0 0
    %2307 = vmatpush1.bf16.msra.mxu0 %v965
    %2308 = vmatprep.subr.bf16.mxu0 0
    %2309 = vmatpush1.bf16.msra.mxu0 %v964
    %2310 = vmatprep.subr.bf16.mxu0 0
    %2311 = vmatpush1.bf16.msra.mxu0 %v963
    %2312 = vmatprep.subr.bf16.mxu0 0
    %2313 = vmatpush1.bf16.msra.mxu0 %v962
    %2314 = vmatprep.subr.bf16.mxu0 0
    %2315 = vmatpush2.bf16.msra.mxu0 0
    %2316 = vmatprep.subr.bf16.mxu0 0
    %2317 = vmatpush2.bf16.msra.mxu0 0
    %2318 = vmatprep.subr.bf16.mxu0 0
    %2319 = vmatpush2.bf16.msra.mxu0 0
    %2320 = vmatprep.subr.bf16.mxu0 0
    %2321 = vmatpush2.bf16.msra.mxu0 0
    %2322 = vmatprep.subr.bf16.mxu0 0
    %2323 = vmatpush2.bf16.msra.mxu0 0
    %2324 = vmatprep.subr.bf16.mxu0 0
    %2325 = vmatpush2.bf16.msra.mxu0 0
    %2326 = vmatprep.subr.bf16.mxu0 0
    %2327 = vmatpush2.bf16.msra.mxu0 0
    %2328 = vmatprep.subr.bf16.mxu0 0
    %2329 = vmatpush2.bf16.msra.mxu0 0
    %2330 = vmatprep.mubr.bf16.mxu0 0
    %2331 = vmatmul.mubr.bf16.gmra.mxu0 %v2282
    %v2332 = vpop.f32.mrf.mxu0
    %v2333 = vadd.f32 0.0, %v2332
    %v2334 = vpop.f32.mrf.mxu0
    %v2335 = vpop.f32.mrf.mxu0
    %v2336 = vadd.f32 0.0, %v2335
    %v2337 = vpop.f32.mrf.mxu0
    %2338 = vmatprep.mubr.bf16.mxu0 0
    %2339 = vmatmul.mubr.bf16.gmra.mxu0 %v2283
    %v2340 = vpop.f32.mrf.mxu0
    %v2341 = vadd.f32 0.0, %v2340
    %v2342 = vpop.f32.mrf.mxu0
    %v2343 = vpop.f32.mrf.mxu0
    %v2344 = vadd.f32 0.0, %v2343
    %v2345 = vpop.f32.mrf.mxu0
    %2346 = vmatprep.mubr.bf16.mxu0 0
    %2347 = vmatmul.mubr.bf16.gmra.mxu0 %v2284
    %v2348 = vpop.f32.mrf.mxu0
    %v2349 = vadd.f32 0.0, %v2348
    %v2350 = vpop.f32.mrf.mxu0
    %v2351 = vpop.f32.mrf.mxu0
    %v2352 = vadd.f32 0.0, %v2351
    %v2353 = vpop.f32.mrf.mxu0
    %2354 = vmatprep.mubr.bf16.mxu0 0
    %2355 = vmatmul.mubr.bf16.gmra.mxu0 %v2285
    %v2356 = vpop.f32.mrf.mxu0
    %v2357 = vadd.f32 0.0, %v2356
    %v2358 = vpop.f32.mrf.mxu0
    %v2359 = vpop.f32.mrf.mxu0
    %v2360 = vadd.f32 0.0, %v2359
    %v2361 = vpop.f32.mrf.mxu0
    %2362 = vmatprep.mubr.bf16.mxu0 0
    %2363 = vmatmul.mubr.bf16.gmra.mxu0 %v2286
    %v2364 = vpop.f32.mrf.mxu0
    %v2365 = vadd.f32 0.0, %v2364
    %v2366 = vpop.f32.mrf.mxu0
    %v2367 = vpop.f32.mrf.mxu0
    %v2368 = vadd.f32 0.0, %v2367
    %v2369 = vpop.f32.mrf.mxu0
    %2370 = vmatprep.mubr.bf16.mxu0 0
    %2371 = vmatmul.mubr.bf16.gmra.mxu0 %v2287
    %v2372 = vpop.f32.mrf.mxu0
    %v2373 = vadd.f32 0.0, %v2372
    %v2374 = vpop.f32.mrf.mxu0
    %v2375 = vpop.f32.mrf.mxu0
    %v2376 = vadd.f32 0.0, %v2375
    %v2377 = vpop.f32.mrf.mxu0
    %2378 = vmatprep.mubr.bf16.mxu0 0
    %2379 = vmatmul.mubr.bf16.gmra.mxu0 %v2288
    %v2380 = vpop.f32.mrf.mxu0
    %v2381 = vadd.f32 0.0, %v2380
    %v2382 = vpop.f32.mrf.mxu0
    %v2383 = vpop.f32.mrf.mxu0
    %v2384 = vadd.f32 0.0, %v2383
    %v2385 = vpop.f32.mrf.mxu0
    %2386 = vmatprep.mubr.bf16.mxu0 0
    %2387 = vmatmul.mubr.bf16.gmra.mxu0 %v2289
    %v2388 = vpop.f32.mrf.mxu0
    %v2389 = vadd.f32 0.0, %v2388
    %v2390 = vpop.f32.mrf.mxu0
    %v2391 = vpop.f32.mrf.mxu0
    %v2392 = vadd.f32 0.0, %v2391
    %v2393 = vpop.f32.mrf.mxu0
    %2394 = vdwg.mxu0
    %v2395 = vpack.c.bf16 %v2336, %v2333
    %v2396 = vpack.c.bf16 %v2344, %v2341
    %v2397 = vpack.c.bf16 %v2352, %v2349
    %v2398 = vpack.c.bf16 %v2360, %v2357
    %v2399 = vpack.c.bf16 %v2368, %v2365
    %v2400 = vpack.c.bf16 %v2376, %v2373
    %v2401 = vpack.c.bf16 %v2384, %v2381
    %v2402 = vpack.c.bf16 %v2392, %v2389
    %s2403 = scalar_lea.vmem %s4, 64
    %v2404 = vld [vmem:[%s2403] sm:$0xf]
    %v2405 = vld [vmem:[%s2403 + $0x4] sm:$0xf]
    %v2406 = vld [vmem:[%s2403 + $0x8] sm:$0xf]
    %v2407 = vld [vmem:[%s2403 + $0xc] sm:$0xf]
    %v2412 = vunpack.c.l.b16 %v2404
    %v2413 = vunpack.c.l.b16 %v2405
    %v2414 = vunpack.c.l.b16 %v2406
    %v2415 = vunpack.c.l.b16 %v2407
    %v2416 = vpack.c.b16 %v2413, %v2412
    %v2417 = vpack.c.b16 %v2415, %v2414
    %v2421 = vsel %vm1330, %v2395, 0
    %v2424 = vsel %vm1330, %v2396, 0
    %v2427 = vsel %vm1330, %v2397, 0
    %v2430 = vsel %vm1330, %v2398, 0
    %v2433 = vsel %vm1330, %v2399, 0
    %v2436 = vsel %vm1330, %v2400, 0
    %v2439 = vsel %vm1330, %v2401, 0
    %v2442 = vsel %vm1330, %v2402, 0
    %2444 = vmatprep.subr.bf16.mxu0 0
    %2445 = vmatpush1.bf16.msra.mxu0 0
    %2446 = vmatprep.subr.bf16.mxu0 0
    %2447 = vmatpush1.bf16.msra.mxu0 0
    %2448 = vmatprep.subr.bf16.mxu0 0
    %2449 = vmatpush1.bf16.msra.mxu0 0
    %2450 = vmatprep.subr.bf16.mxu0 0
    %2451 = vmatpush1.bf16.msra.mxu0 0
    %2452 = vmatprep.subr.bf16.mxu0 0
    %2453 = vmatpush1.bf16.msra.mxu0 0
    %2454 = vmatprep.subr.bf16.mxu0 0
    %2455 = vmatpush1.bf16.msra.mxu0 0
    %2456 = vmatprep.subr.bf16.mxu0 0
    %2457 = vmatpush1.bf16.msra.mxu0 %v2417
    %2458 = vmatprep.subr.bf16.mxu0 0
    %2459 = vmatpush1.bf16.msra.mxu0 %v2416
    %2460 = vmatprep.subr.bf16.mxu0 0
    %2461 = vmatpush2.bf16.msra.mxu0 0
    %2462 = vmatprep.subr.bf16.mxu0 0
    %2463 = vmatpush2.bf16.msra.mxu0 0
    %2464 = vmatprep.subr.bf16.mxu0 0
    %2465 = vmatpush2.bf16.msra.mxu0 0
    %2466 = vmatprep.subr.bf16.mxu0 0
    %2467 = vmatpush2.bf16.msra.mxu0 0
    %2468 = vmatprep.subr.bf16.mxu0 0
    %2469 = vmatpush2.bf16.msra.mxu0 0
    %2470 = vmatprep.subr.bf16.mxu0 0
    %2471 = vmatpush2.bf16.msra.mxu0 0
    %2472 = vmatprep.subr.bf16.mxu0 0
    %2473 = vmatpush2.bf16.msra.mxu0 0
    %2474 = vmatprep.subr.bf16.mxu0 0
    %2475 = vmatpush2.bf16.msra.mxu0 0
    %2476 = vmatprep.mubr.bf16.mxu0 0
    %2477 = vmatmul.mubr.bf16.gmra.mxu0 %v2421
    %v2478 = vpop.f32.mrf.mxu0
    %v2479 = vadd.f32 0.0, %v2478
    %v2480 = vpop.f32.mrf.mxu0
    %v2481 = vpop.f32.mrf.mxu0
    %v2482 = vadd.f32 0.0, %v2481
    %v2483 = vpop.f32.mrf.mxu0
    %2484 = vmatprep.mubr.bf16.mxu0 0
    %2485 = vmatmul.mubr.bf16.gmra.mxu0 %v2424
    %v2486 = vpop.f32.mrf.mxu0
    %v2487 = vadd.f32 0.0, %v2486
    %v2488 = vpop.f32.mrf.mxu0
    %v2489 = vpop.f32.mrf.mxu0
    %v2490 = vadd.f32 0.0, %v2489
    %v2491 = vpop.f32.mrf.mxu0
    %2492 = vmatprep.mubr.bf16.mxu0 0
    %2493 = vmatmul.mubr.bf16.gmra.mxu0 %v2427
    %v2494 = vpop.f32.mrf.mxu0
    %v2495 = vadd.f32 0.0, %v2494
    %v2496 = vpop.f32.mrf.mxu0
    %v2497 = vpop.f32.mrf.mxu0
    %v2498 = vadd.f32 0.0, %v2497
    %v2499 = vpop.f32.mrf.mxu0
    %2500 = vmatprep.mubr.bf16.mxu0 0
    %2501 = vmatmul.mubr.bf16.gmra.mxu0 %v2430
    %v2502 = vpop.f32.mrf.mxu0
    %v2503 = vadd.f32 0.0, %v2502
    %v2504 = vpop.f32.mrf.mxu0
    %v2505 = vpop.f32.mrf.mxu0
    %v2506 = vadd.f32 0.0, %v2505
    %v2507 = vpop.f32.mrf.mxu0
    %2508 = vmatprep.mubr.bf16.mxu0 0
    %2509 = vmatmul.mubr.bf16.gmra.mxu0 %v2433
    %v2510 = vpop.f32.mrf.mxu0
    %v2511 = vadd.f32 0.0, %v2510
    %v2512 = vpop.f32.mrf.mxu0
    %v2513 = vpop.f32.mrf.mxu0
    %v2514 = vadd.f32 0.0, %v2513
    %v2515 = vpop.f32.mrf.mxu0
    %2516 = vmatprep.mubr.bf16.mxu0 0
    %2517 = vmatmul.mubr.bf16.gmra.mxu0 %v2436
    %v2518 = vpop.f32.mrf.mxu0
    %v2519 = vadd.f32 0.0, %v2518
    %v2520 = vpop.f32.mrf.mxu0
    %v2521 = vpop.f32.mrf.mxu0
    %v2522 = vadd.f32 0.0, %v2521
    %v2523 = vpop.f32.mrf.mxu0
    %2524 = vmatprep.mubr.bf16.mxu0 0
    %2525 = vmatmul.mubr.bf16.gmra.mxu0 %v2439
    %v2526 = vpop.f32.mrf.mxu0
    %v2527 = vadd.f32 0.0, %v2526
    %v2528 = vpop.f32.mrf.mxu0
    %v2529 = vpop.f32.mrf.mxu0
    %v2530 = vadd.f32 0.0, %v2529
    %v2531 = vpop.f32.mrf.mxu0
    %2532 = vmatprep.mubr.bf16.mxu0 0
    %2533 = vmatmul.mubr.bf16.gmra.mxu0 %v2442
    %v2534 = vpop.f32.mrf.mxu0
    %v2535 = vadd.f32 0.0, %v2534
    %v2536 = vpop.f32.mrf.mxu0
    %v2537 = vpop.f32.mrf.mxu0
    %v2538 = vadd.f32 0.0, %v2537
    %v2539 = vpop.f32.mrf.mxu0
    %2540 = vdwg.mxu0
    %v2541 = vadd.f32 %v2217, %v2479
    %v2542 = vadd.f32 %v2218, %v2482
    %v2543 = vadd.f32 %v2219, %v2487
    %v2544 = vadd.f32 %v2220, %v2490
    %v2545 = vadd.f32 %v2221, %v2495
    %v2546 = vadd.f32 %v2222, %v2498
    %v2547 = vadd.f32 %v2223, %v2503
    %v2548 = vadd.f32 %v2224, %v2506
    %v2549 = vadd.f32 %v2225, %v2511
    %v2550 = vadd.f32 %v2226, %v2514
    %v2551 = vadd.f32 %v2227, %v2519
    %v2552 = vadd.f32 %v2228, %v2522
    %v2553 = vadd.f32 %v2229, %v2527
    %v2554 = vadd.f32 %v2230, %v2530
    %v2555 = vadd.f32 %v2231, %v2535
    %v2556 = vadd.f32 %v2232, %v2538
    %s2557 = scalar_lea.vmem %s3, 320
    %v2558 = vld [vmem:[%s2557] sm:$0xf]
    %v2559 = vld [vmem:[%s2557 + $0x4] sm:$0xf]
    %v2560 = vld [vmem:[%s2557 + $0x8] sm:$0xf]
    %v2561 = vld [vmem:[%s2557 + $0xc] sm:$0xf]
    %v2562 = vld [vmem:[%s2557 + $0x10] sm:$0xf]
    %v2563 = vld [vmem:[%s2557 + $0x14] sm:$0xf]
    %v2564 = vld [vmem:[%s2557 + $0x18] sm:$0xf]
    %v2565 = vld [vmem:[%s2557 + $0x1c] sm:$0xf]
    %v2566 = vld [vmem:[%s2557 + $0x20] sm:$0xf]
    %v2567 = vld [vmem:[%s2557 + $0x24] sm:$0xf]
    %v2568 = vld [vmem:[%s2557 + $0x28] sm:$0xf]
    %v2569 = vld [vmem:[%s2557 + $0x2c] sm:$0xf]
    %v2570 = vld [vmem:[%s2557 + $0x30] sm:$0xf]
    %v2571 = vld [vmem:[%s2557 + $0x34] sm:$0xf]
    %v2572 = vld [vmem:[%s2557 + $0x38] sm:$0xf]
    %v2573 = vld [vmem:[%s2557 + $0x3c] sm:$0xf]
    %v2590 = vunpack.c.l.b16 %v2558
    %v2591 = vunpack.c.l.b16 %v2559
    %v2592 = vunpack.c.l.b16 %v2560
    %v2593 = vunpack.c.l.b16 %v2561
    %v2594 = vunpack.c.l.b16 %v2562
    %v2595 = vunpack.c.l.b16 %v2563
    %v2596 = vunpack.c.l.b16 %v2564
    %v2597 = vunpack.c.l.b16 %v2565
    %v2598 = vunpack.c.l.b16 %v2566
    %v2599 = vunpack.c.l.b16 %v2567
    %v2600 = vunpack.c.l.b16 %v2568
    %v2601 = vunpack.c.l.b16 %v2569
    %v2602 = vunpack.c.l.b16 %v2570
    %v2603 = vunpack.c.l.b16 %v2571
    %v2604 = vunpack.c.l.b16 %v2572
    %v2605 = vunpack.c.l.b16 %v2573
    %v2606 = vpack.c.b16 %v2591, %v2590
    %v2607 = vpack.c.b16 %v2593, %v2592
    %v2608 = vpack.c.b16 %v2595, %v2594
    %v2609 = vpack.c.b16 %v2597, %v2596
    %v2610 = vpack.c.b16 %v2599, %v2598
    %v2611 = vpack.c.b16 %v2601, %v2600
    %v2612 = vpack.c.b16 %v2603, %v2602
    %v2613 = vpack.c.b16 %v2605, %v2604
    %2622 = vmatprep.subr.bf16.mxu0 0
    %2623 = vmatpush1.bf16.msra.mxu0 %v969
    %2624 = vmatprep.subr.bf16.mxu0 0
    %2625 = vmatpush1.bf16.msra.mxu0 %v968
    %2626 = vmatprep.subr.bf16.mxu0 0
    %2627 = vmatpush1.bf16.msra.mxu0 %v967
    %2628 = vmatprep.subr.bf16.mxu0 0
    %2629 = vmatpush1.bf16.msra.mxu0 %v966
    %2630 = vmatprep.subr.bf16.mxu0 0
    %2631 = vmatpush1.bf16.msra.mxu0 %v965
    %2632 = vmatprep.subr.bf16.mxu0 0
    %2633 = vmatpush1.bf16.msra.mxu0 %v964
    %2634 = vmatprep.subr.bf16.mxu0 0
    %2635 = vmatpush1.bf16.msra.mxu0 %v963
    %2636 = vmatprep.subr.bf16.mxu0 0
    %2637 = vmatpush1.bf16.msra.mxu0 %v962
    %2638 = vmatprep.subr.bf16.mxu0 0
    %2639 = vmatpush2.bf16.msra.mxu0 0
    %2640 = vmatprep.subr.bf16.mxu0 0
    %2641 = vmatpush2.bf16.msra.mxu0 0
    %2642 = vmatprep.subr.bf16.mxu0 0
    %2643 = vmatpush2.bf16.msra.mxu0 0
    %2644 = vmatprep.subr.bf16.mxu0 0
    %2645 = vmatpush2.bf16.msra.mxu0 0
    %2646 = vmatprep.subr.bf16.mxu0 0
    %2647 = vmatpush2.bf16.msra.mxu0 0
    %2648 = vmatprep.subr.bf16.mxu0 0
    %2649 = vmatpush2.bf16.msra.mxu0 0
    %2650 = vmatprep.subr.bf16.mxu0 0
    %2651 = vmatpush2.bf16.msra.mxu0 0
    %2652 = vmatprep.subr.bf16.mxu0 0
    %2653 = vmatpush2.bf16.msra.mxu0 0
    %2654 = vmatprep.mubr.bf16.mxu0 0
    %2655 = vmatmul.mubr.bf16.gmra.mxu0 %v2606
    %v2656 = vpop.f32.mrf.mxu0
    %v2657 = vadd.f32 0.0, %v2656
    %v2658 = vpop.f32.mrf.mxu0
    %v2659 = vpop.f32.mrf.mxu0
    %v2660 = vadd.f32 0.0, %v2659
    %v2661 = vpop.f32.mrf.mxu0
    %2662 = vmatprep.mubr.bf16.mxu0 0
    %2663 = vmatmul.mubr.bf16.gmra.mxu0 %v2607
    %v2664 = vpop.f32.mrf.mxu0
    %v2665 = vadd.f32 0.0, %v2664
    %v2666 = vpop.f32.mrf.mxu0
    %v2667 = vpop.f32.mrf.mxu0
    %v2668 = vadd.f32 0.0, %v2667
    %v2669 = vpop.f32.mrf.mxu0
    %2670 = vmatprep.mubr.bf16.mxu0 0
    %2671 = vmatmul.mubr.bf16.gmra.mxu0 %v2608
    %v2672 = vpop.f32.mrf.mxu0
    %v2673 = vadd.f32 0.0, %v2672
    %v2674 = vpop.f32.mrf.mxu0
    %v2675 = vpop.f32.mrf.mxu0
    %v2676 = vadd.f32 0.0, %v2675
    %v2677 = vpop.f32.mrf.mxu0
    %2678 = vmatprep.mubr.bf16.mxu0 0
    %2679 = vmatmul.mubr.bf16.gmra.mxu0 %v2609
    %v2680 = vpop.f32.mrf.mxu0
    %v2681 = vadd.f32 0.0, %v2680
    %v2682 = vpop.f32.mrf.mxu0
    %v2683 = vpop.f32.mrf.mxu0
    %v2684 = vadd.f32 0.0, %v2683
    %v2685 = vpop.f32.mrf.mxu0
    %2686 = vmatprep.mubr.bf16.mxu0 0
    %2687 = vmatmul.mubr.bf16.gmra.mxu0 %v2610
    %v2688 = vpop.f32.mrf.mxu0
    %v2689 = vadd.f32 0.0, %v2688
    %v2690 = vpop.f32.mrf.mxu0
    %v2691 = vpop.f32.mrf.mxu0
    %v2692 = vadd.f32 0.0, %v2691
    %v2693 = vpop.f32.mrf.mxu0
    %2694 = vmatprep.mubr.bf16.mxu0 0
    %2695 = vmatmul.mubr.bf16.gmra.mxu0 %v2611
    %v2696 = vpop.f32.mrf.mxu0
    %v2697 = vadd.f32 0.0, %v2696
    %v2698 = vpop.f32.mrf.mxu0
    %v2699 = vpop.f32.mrf.mxu0
    %v2700 = vadd.f32 0.0, %v2699
    %v2701 = vpop.f32.mrf.mxu0
    %2702 = vmatprep.mubr.bf16.mxu0 0
    %2703 = vmatmul.mubr.bf16.gmra.mxu0 %v2612
    %v2704 = vpop.f32.mrf.mxu0
    %v2705 = vadd.f32 0.0, %v2704
    %v2706 = vpop.f32.mrf.mxu0
    %v2707 = vpop.f32.mrf.mxu0
    %v2708 = vadd.f32 0.0, %v2707
    %v2709 = vpop.f32.mrf.mxu0
    %2710 = vmatprep.mubr.bf16.mxu0 0
    %2711 = vmatmul.mubr.bf16.gmra.mxu0 %v2613
    %v2712 = vpop.f32.mrf.mxu0
    %v2713 = vadd.f32 0.0, %v2712
    %v2714 = vpop.f32.mrf.mxu0
    %v2715 = vpop.f32.mrf.mxu0
    %v2716 = vadd.f32 0.0, %v2715
    %v2717 = vpop.f32.mrf.mxu0
    %2718 = vdwg.mxu0
    %v2719 = vpack.c.bf16 %v2660, %v2657
    %v2720 = vpack.c.bf16 %v2668, %v2665
    %v2721 = vpack.c.bf16 %v2676, %v2673
    %v2722 = vpack.c.bf16 %v2684, %v2681
    %v2723 = vpack.c.bf16 %v2692, %v2689
    %v2724 = vpack.c.bf16 %v2700, %v2697
    %v2725 = vpack.c.bf16 %v2708, %v2705
    %v2726 = vpack.c.bf16 %v2716, %v2713
    %s2727 = scalar_lea.vmem %s4, 80
    %v2728 = vld [vmem:[%s2727] sm:$0xf]
    %v2729 = vld [vmem:[%s2727 + $0x4] sm:$0xf]
    %v2730 = vld [vmem:[%s2727 + $0x8] sm:$0xf]
    %v2731 = vld [vmem:[%s2727 + $0xc] sm:$0xf]
    %v2736 = vunpack.c.l.b16 %v2728
    %v2737 = vunpack.c.l.b16 %v2729
    %v2738 = vunpack.c.l.b16 %v2730
    %v2739 = vunpack.c.l.b16 %v2731
    %v2740 = vpack.c.b16 %v2737, %v2736
    %v2741 = vpack.c.b16 %v2739, %v2738
    %v2745 = vsel %vm1330, %v2719, 0
    %v2748 = vsel %vm1330, %v2720, 0
    %v2751 = vsel %vm1330, %v2721, 0
    %v2754 = vsel %vm1330, %v2722, 0
    %v2757 = vsel %vm1330, %v2723, 0
    %v2760 = vsel %vm1330, %v2724, 0
    %v2763 = vsel %vm1330, %v2725, 0
    %v2766 = vsel %vm1330, %v2726, 0
    %2768 = vmatprep.subr.bf16.mxu0 0
    %2769 = vmatpush1.bf16.msra.mxu0 0
    %2770 = vmatprep.subr.bf16.mxu0 0
    %2771 = vmatpush1.bf16.msra.mxu0 0
    %2772 = vmatprep.subr.bf16.mxu0 0
    %2773 = vmatpush1.bf16.msra.mxu0 0
    %2774 = vmatprep.subr.bf16.mxu0 0
    %2775 = vmatpush1.bf16.msra.mxu0 0
    %2776 = vmatprep.subr.bf16.mxu0 0
    %2777 = vmatpush1.bf16.msra.mxu0 0
    %2778 = vmatprep.subr.bf16.mxu0 0
    %2779 = vmatpush1.bf16.msra.mxu0 0
    %2780 = vmatprep.subr.bf16.mxu0 0
    %2781 = vmatpush1.bf16.msra.mxu0 %v2741
    %2782 = vmatprep.subr.bf16.mxu0 0
    %2783 = vmatpush1.bf16.msra.mxu0 %v2740
    %2784 = vmatprep.subr.bf16.mxu0 0
    %2785 = vmatpush2.bf16.msra.mxu0 0
    %2786 = vmatprep.subr.bf16.mxu0 0
    %2787 = vmatpush2.bf16.msra.mxu0 0
    %2788 = vmatprep.subr.bf16.mxu0 0
    %2789 = vmatpush2.bf16.msra.mxu0 0
    %2790 = vmatprep.subr.bf16.mxu0 0
    %2791 = vmatpush2.bf16.msra.mxu0 0
    %2792 = vmatprep.subr.bf16.mxu0 0
    %2793 = vmatpush2.bf16.msra.mxu0 0
    %2794 = vmatprep.subr.bf16.mxu0 0
    %2795 = vmatpush2.bf16.msra.mxu0 0
    %2796 = vmatprep.subr.bf16.mxu0 0
    %2797 = vmatpush2.bf16.msra.mxu0 0
    %2798 = vmatprep.subr.bf16.mxu0 0
    %2799 = vmatpush2.bf16.msra.mxu0 0
    %2800 = vmatprep.mubr.bf16.mxu0 0
    %2801 = vmatmul.mubr.bf16.gmra.mxu0 %v2745
    %v2802 = vpop.f32.mrf.mxu0
    %v2803 = vadd.f32 0.0, %v2802
    %v2804 = vpop.f32.mrf.mxu0
    %v2805 = vpop.f32.mrf.mxu0
    %v2806 = vadd.f32 0.0, %v2805
    %v2807 = vpop.f32.mrf.mxu0
    %2808 = vmatprep.mubr.bf16.mxu0 0
    %2809 = vmatmul.mubr.bf16.gmra.mxu0 %v2748
    %v2810 = vpop.f32.mrf.mxu0
    %v2811 = vadd.f32 0.0, %v2810
    %v2812 = vpop.f32.mrf.mxu0
    %v2813 = vpop.f32.mrf.mxu0
    %v2814 = vadd.f32 0.0, %v2813
    %v2815 = vpop.f32.mrf.mxu0
    %2816 = vmatprep.mubr.bf16.mxu0 0
    %2817 = vmatmul.mubr.bf16.gmra.mxu0 %v2751
    %v2818 = vpop.f32.mrf.mxu0
    %v2819 = vadd.f32 0.0, %v2818
    %v2820 = vpop.f32.mrf.mxu0
    %v2821 = vpop.f32.mrf.mxu0
    %v2822 = vadd.f32 0.0, %v2821
    %v2823 = vpop.f32.mrf.mxu0
    %2824 = vmatprep.mubr.bf16.mxu0 0
    %2825 = vmatmul.mubr.bf16.gmra.mxu0 %v2754
    %v2826 = vpop.f32.mrf.mxu0
    %v2827 = vadd.f32 0.0, %v2826
    %v2828 = vpop.f32.mrf.mxu0
    %v2829 = vpop.f32.mrf.mxu0
    %v2830 = vadd.f32 0.0, %v2829
    %v2831 = vpop.f32.mrf.mxu0
    %2832 = vmatprep.mubr.bf16.mxu0 0
    %2833 = vmatmul.mubr.bf16.gmra.mxu0 %v2757
    %v2834 = vpop.f32.mrf.mxu0
    %v2835 = vadd.f32 0.0, %v2834
    %v2836 = vpop.f32.mrf.mxu0
    %v2837 = vpop.f32.mrf.mxu0
    %v2838 = vadd.f32 0.0, %v2837
    %v2839 = vpop.f32.mrf.mxu0
    %2840 = vmatprep.mubr.bf16.mxu0 0
    %2841 = vmatmul.mubr.bf16.gmra.mxu0 %v2760
    %v2842 = vpop.f32.mrf.mxu0
    %v2843 = vadd.f32 0.0, %v2842
    %v2844 = vpop.f32.mrf.mxu0
    %v2845 = vpop.f32.mrf.mxu0
    %v2846 = vadd.f32 0.0, %v2845
    %v2847 = vpop.f32.mrf.mxu0
    %2848 = vmatprep.mubr.bf16.mxu0 0
    %2849 = vmatmul.mubr.bf16.gmra.mxu0 %v2763
    %v2850 = vpop.f32.mrf.mxu0
    %v2851 = vadd.f32 0.0, %v2850
    %v2852 = vpop.f32.mrf.mxu0
    %v2853 = vpop.f32.mrf.mxu0
    %v2854 = vadd.f32 0.0, %v2853
    %v2855 = vpop.f32.mrf.mxu0
    %2856 = vmatprep.mubr.bf16.mxu0 0
    %2857 = vmatmul.mubr.bf16.gmra.mxu0 %v2766
    %v2858 = vpop.f32.mrf.mxu0
    %v2859 = vadd.f32 0.0, %v2858
    %v2860 = vpop.f32.mrf.mxu0
    %v2861 = vpop.f32.mrf.mxu0
    %v2862 = vadd.f32 0.0, %v2861
    %v2863 = vpop.f32.mrf.mxu0
    %2864 = vdwg.mxu0
    %v2865 = vadd.f32 %v2541, %v2803
    %v2866 = vadd.f32 %v2542, %v2806
    %v2867 = vadd.f32 %v2543, %v2811
    %v2868 = vadd.f32 %v2544, %v2814
    %v2869 = vadd.f32 %v2545, %v2819
    %v2870 = vadd.f32 %v2546, %v2822
    %v2871 = vadd.f32 %v2547, %v2827
    %v2872 = vadd.f32 %v2548, %v2830
    %v2873 = vadd.f32 %v2549, %v2835
    %v2874 = vadd.f32 %v2550, %v2838
    %v2875 = vadd.f32 %v2551, %v2843
    %v2876 = vadd.f32 %v2552, %v2846
    %v2877 = vadd.f32 %v2553, %v2851
    %v2878 = vadd.f32 %v2554, %v2854
    %v2879 = vadd.f32 %v2555, %v2859
    %v2880 = vadd.f32 %v2556, %v2862
    %s2881 = scalar_lea.vmem %s3, 384
    %v2882 = vld [vmem:[%s2881] sm:$0xf]
    %v2883 = vld [vmem:[%s2881 + $0x4] sm:$0xf]
    %v2884 = vld [vmem:[%s2881 + $0x8] sm:$0xf]
    %v2885 = vld [vmem:[%s2881 + $0xc] sm:$0xf]
    %v2886 = vld [vmem:[%s2881 + $0x10] sm:$0xf]
    %v2887 = vld [vmem:[%s2881 + $0x14] sm:$0xf]
    %v2888 = vld [vmem:[%s2881 + $0x18] sm:$0xf]
    %v2889 = vld [vmem:[%s2881 + $0x1c] sm:$0xf]
    %v2890 = vld [vmem:[%s2881 + $0x20] sm:$0xf]
    %v2891 = vld [vmem:[%s2881 + $0x24] sm:$0xf]
    %v2892 = vld [vmem:[%s2881 + $0x28] sm:$0xf]
    %v2893 = vld [vmem:[%s2881 + $0x2c] sm:$0xf]
    %v2894 = vld [vmem:[%s2881 + $0x30] sm:$0xf]
    %v2895 = vld [vmem:[%s2881 + $0x34] sm:$0xf]
    %v2896 = vld [vmem:[%s2881 + $0x38] sm:$0xf]
    %v2897 = vld [vmem:[%s2881 + $0x3c] sm:$0xf]
    %v2914 = vunpack.c.l.b16 %v2882
    %v2915 = vunpack.c.l.b16 %v2883
    %v2916 = vunpack.c.l.b16 %v2884
    %v2917 = vunpack.c.l.b16 %v2885
    %v2918 = vunpack.c.l.b16 %v2886
    %v2919 = vunpack.c.l.b16 %v2887
    %v2920 = vunpack.c.l.b16 %v2888
    %v2921 = vunpack.c.l.b16 %v2889
    %v2922 = vunpack.c.l.b16 %v2890
    %v2923 = vunpack.c.l.b16 %v2891
    %v2924 = vunpack.c.l.b16 %v2892
    %v2925 = vunpack.c.l.b16 %v2893
    %v2926 = vunpack.c.l.b16 %v2894
    %v2927 = vunpack.c.l.b16 %v2895
    %v2928 = vunpack.c.l.b16 %v2896
    %v2929 = vunpack.c.l.b16 %v2897
    %v2930 = vpack.c.b16 %v2915, %v2914
    %v2931 = vpack.c.b16 %v2917, %v2916
    %v2932 = vpack.c.b16 %v2919, %v2918
    %v2933 = vpack.c.b16 %v2921, %v2920
    %v2934 = vpack.c.b16 %v2923, %v2922
    %v2935 = vpack.c.b16 %v2925, %v2924
    %v2936 = vpack.c.b16 %v2927, %v2926
    %v2937 = vpack.c.b16 %v2929, %v2928
    %2946 = vmatprep.subr.bf16.mxu0 0
    %2947 = vmatpush1.bf16.msra.mxu0 %v969
    %2948 = vmatprep.subr.bf16.mxu0 0
    %2949 = vmatpush1.bf16.msra.mxu0 %v968
    %2950 = vmatprep.subr.bf16.mxu0 0
    %2951 = vmatpush1.bf16.msra.mxu0 %v967
    %2952 = vmatprep.subr.bf16.mxu0 0
    %2953 = vmatpush1.bf16.msra.mxu0 %v966
    %2954 = vmatprep.subr.bf16.mxu0 0
    %2955 = vmatpush1.bf16.msra.mxu0 %v965
    %2956 = vmatprep.subr.bf16.mxu0 0
    %2957 = vmatpush1.bf16.msra.mxu0 %v964
    %2958 = vmatprep.subr.bf16.mxu0 0
    %2959 = vmatpush1.bf16.msra.mxu0 %v963
    %2960 = vmatprep.subr.bf16.mxu0 0
    %2961 = vmatpush1.bf16.msra.mxu0 %v962
    %2962 = vmatprep.subr.bf16.mxu0 0
    %2963 = vmatpush2.bf16.msra.mxu0 0
    %2964 = vmatprep.subr.bf16.mxu0 0
    %2965 = vmatpush2.bf16.msra.mxu0 0
    %2966 = vmatprep.subr.bf16.mxu0 0
    %2967 = vmatpush2.bf16.msra.mxu0 0
    %2968 = vmatprep.subr.bf16.mxu0 0
    %2969 = vmatpush2.bf16.msra.mxu0 0
    %2970 = vmatprep.subr.bf16.mxu0 0
    %2971 = vmatpush2.bf16.msra.mxu0 0
    %2972 = vmatprep.subr.bf16.mxu0 0
    %2973 = vmatpush2.bf16.msra.mxu0 0
    %2974 = vmatprep.subr.bf16.mxu0 0
    %2975 = vmatpush2.bf16.msra.mxu0 0
    %2976 = vmatprep.subr.bf16.mxu0 0
    %2977 = vmatpush2.bf16.msra.mxu0 0
    %2978 = vmatprep.mubr.bf16.mxu0 0
    %2979 = vmatmul.mubr.bf16.gmra.mxu0 %v2930
    %v2980 = vpop.f32.mrf.mxu0
    %v2981 = vadd.f32 0.0, %v2980
    %v2982 = vpop.f32.mrf.mxu0
    %v2983 = vpop.f32.mrf.mxu0
    %v2984 = vadd.f32 0.0, %v2983
    %v2985 = vpop.f32.mrf.mxu0
    %2986 = vmatprep.mubr.bf16.mxu0 0
    %2987 = vmatmul.mubr.bf16.gmra.mxu0 %v2931
    %v2988 = vpop.f32.mrf.mxu0
    %v2989 = vadd.f32 0.0, %v2988
    %v2990 = vpop.f32.mrf.mxu0
    %v2991 = vpop.f32.mrf.mxu0
    %v2992 = vadd.f32 0.0, %v2991
    %v2993 = vpop.f32.mrf.mxu0
    %2994 = vmatprep.mubr.bf16.mxu0 0
    %2995 = vmatmul.mubr.bf16.gmra.mxu0 %v2932
    %v2996 = vpop.f32.mrf.mxu0
    %v2997 = vadd.f32 0.0, %v2996
    %v2998 = vpop.f32.mrf.mxu0
    %v2999 = vpop.f32.mrf.mxu0
    %v3000 = vadd.f32 0.0, %v2999
    %v3001 = vpop.f32.mrf.mxu0
    %3002 = vmatprep.mubr.bf16.mxu0 0
    %3003 = vmatmul.mubr.bf16.gmra.mxu0 %v2933
    %v3004 = vpop.f32.mrf.mxu0
    %v3005 = vadd.f32 0.0, %v3004
    %v3006 = vpop.f32.mrf.mxu0
    %v3007 = vpop.f32.mrf.mxu0
    %v3008 = vadd.f32 0.0, %v3007
    %v3009 = vpop.f32.mrf.mxu0
    %3010 = vmatprep.mubr.bf16.mxu0 0
    %3011 = vmatmul.mubr.bf16.gmra.mxu0 %v2934
    %v3012 = vpop.f32.mrf.mxu0
    %v3013 = vadd.f32 0.0, %v3012
    %v3014 = vpop.f32.mrf.mxu0
    %v3015 = vpop.f32.mrf.mxu0
    %v3016 = vadd.f32 0.0, %v3015
    %v3017 = vpop.f32.mrf.mxu0
    %3018 = vmatprep.mubr.bf16.mxu0 0
    %3019 = vmatmul.mubr.bf16.gmra.mxu0 %v2935
    %v3020 = vpop.f32.mrf.mxu0
    %v3021 = vadd.f32 0.0, %v3020
    %v3022 = vpop.f32.mrf.mxu0
    %v3023 = vpop.f32.mrf.mxu0
    %v3024 = vadd.f32 0.0, %v3023
    %v3025 = vpop.f32.mrf.mxu0
    %3026 = vmatprep.mubr.bf16.mxu0 0
    %3027 = vmatmul.mubr.bf16.gmra.mxu0 %v2936
    %v3028 = vpop.f32.mrf.mxu0
    %v3029 = vadd.f32 0.0, %v3028
    %v3030 = vpop.f32.mrf.mxu0
    %v3031 = vpop.f32.mrf.mxu0
    %v3032 = vadd.f32 0.0, %v3031
    %v3033 = vpop.f32.mrf.mxu0
    %3034 = vmatprep.mubr.bf16.mxu0 0
    %3035 = vmatmul.mubr.bf16.gmra.mxu0 %v2937
    %v3036 = vpop.f32.mrf.mxu0
    %v3037 = vadd.f32 0.0, %v3036
    %v3038 = vpop.f32.mrf.mxu0
    %v3039 = vpop.f32.mrf.mxu0
    %v3040 = vadd.f32 0.0, %v3039
    %v3041 = vpop.f32.mrf.mxu0
    %3042 = vdwg.mxu0
    %v3043 = vpack.c.bf16 %v2984, %v2981
    %v3044 = vpack.c.bf16 %v2992, %v2989
    %v3045 = vpack.c.bf16 %v3000, %v2997
    %v3046 = vpack.c.bf16 %v3008, %v3005
    %v3047 = vpack.c.bf16 %v3016, %v3013
    %v3048 = vpack.c.bf16 %v3024, %v3021
    %v3049 = vpack.c.bf16 %v3032, %v3029
    %v3050 = vpack.c.bf16 %v3040, %v3037
    %s3051 = scalar_lea.vmem %s4, 96
    %v3052 = vld [vmem:[%s3051] sm:$0xf]
    %v3053 = vld [vmem:[%s3051 + $0x4] sm:$0xf]
    %v3054 = vld [vmem:[%s3051 + $0x8] sm:$0xf]
    %v3055 = vld [vmem:[%s3051 + $0xc] sm:$0xf]
    %v3060 = vunpack.c.l.b16 %v3052
    %v3061 = vunpack.c.l.b16 %v3053
    %v3062 = vunpack.c.l.b16 %v3054
    %v3063 = vunpack.c.l.b16 %v3055
    %v3064 = vpack.c.b16 %v3061, %v3060
    %v3065 = vpack.c.b16 %v3063, %v3062
    %v3069 = vsel %vm1330, %v3043, 0
    %v3072 = vsel %vm1330, %v3044, 0
    %v3075 = vsel %vm1330, %v3045, 0
    %v3078 = vsel %vm1330, %v3046, 0
    %v3081 = vsel %vm1330, %v3047, 0
    %v3084 = vsel %vm1330, %v3048, 0
    %v3087 = vsel %vm1330, %v3049, 0
    %v3090 = vsel %vm1330, %v3050, 0
    %3092 = vmatprep.subr.bf16.mxu0 0
    %3093 = vmatpush1.bf16.msra.mxu0 0
    %3094 = vmatprep.subr.bf16.mxu0 0
    %3095 = vmatpush1.bf16.msra.mxu0 0
    %3096 = vmatprep.subr.bf16.mxu0 0
    %3097 = vmatpush1.bf16.msra.mxu0 0
    %3098 = vmatprep.subr.bf16.mxu0 0
    %3099 = vmatpush1.bf16.msra.mxu0 0
    %3100 = vmatprep.subr.bf16.mxu0 0
    %3101 = vmatpush1.bf16.msra.mxu0 0
    %3102 = vmatprep.subr.bf16.mxu0 0
    %3103 = vmatpush1.bf16.msra.mxu0 0
    %3104 = vmatprep.subr.bf16.mxu0 0
    %3105 = vmatpush1.bf16.msra.mxu0 %v3065
    %3106 = vmatprep.subr.bf16.mxu0 0
    %3107 = vmatpush1.bf16.msra.mxu0 %v3064
    %3108 = vmatprep.subr.bf16.mxu0 0
    %3109 = vmatpush2.bf16.msra.mxu0 0
    %3110 = vmatprep.subr.bf16.mxu0 0
    %3111 = vmatpush2.bf16.msra.mxu0 0
    %3112 = vmatprep.subr.bf16.mxu0 0
    %3113 = vmatpush2.bf16.msra.mxu0 0
    %3114 = vmatprep.subr.bf16.mxu0 0
    %3115 = vmatpush2.bf16.msra.mxu0 0
    %3116 = vmatprep.subr.bf16.mxu0 0
    %3117 = vmatpush2.bf16.msra.mxu0 0
    %3118 = vmatprep.subr.bf16.mxu0 0
    %3119 = vmatpush2.bf16.msra.mxu0 0
    %3120 = vmatprep.subr.bf16.mxu0 0
    %3121 = vmatpush2.bf16.msra.mxu0 0
    %3122 = vmatprep.subr.bf16.mxu0 0
    %3123 = vmatpush2.bf16.msra.mxu0 0
    %3124 = vmatprep.mubr.bf16.mxu0 0
    %3125 = vmatmul.mubr.bf16.gmra.mxu0 %v3069
    %v3126 = vpop.f32.mrf.mxu0
    %v3127 = vadd.f32 0.0, %v3126
    %v3128 = vpop.f32.mrf.mxu0
    %v3129 = vpop.f32.mrf.mxu0
    %v3130 = vadd.f32 0.0, %v3129
    %v3131 = vpop.f32.mrf.mxu0
    %3132 = vmatprep.mubr.bf16.mxu0 0
    %3133 = vmatmul.mubr.bf16.gmra.mxu0 %v3072
    %v3134 = vpop.f32.mrf.mxu0
    %v3135 = vadd.f32 0.0, %v3134
    %v3136 = vpop.f32.mrf.mxu0
    %v3137 = vpop.f32.mrf.mxu0
    %v3138 = vadd.f32 0.0, %v3137
    %v3139 = vpop.f32.mrf.mxu0
    %3140 = vmatprep.mubr.bf16.mxu0 0
    %3141 = vmatmul.mubr.bf16.gmra.mxu0 %v3075
    %v3142 = vpop.f32.mrf.mxu0
    %v3143 = vadd.f32 0.0, %v3142
    %v3144 = vpop.f32.mrf.mxu0
    %v3145 = vpop.f32.mrf.mxu0
    %v3146 = vadd.f32 0.0, %v3145
    %v3147 = vpop.f32.mrf.mxu0
    %3148 = vmatprep.mubr.bf16.mxu0 0
    %3149 = vmatmul.mubr.bf16.gmra.mxu0 %v3078
    %v3150 = vpop.f32.mrf.mxu0
    %v3151 = vadd.f32 0.0, %v3150
    %v3152 = vpop.f32.mrf.mxu0
    %v3153 = vpop.f32.mrf.mxu0
    %v3154 = vadd.f32 0.0, %v3153
    %v3155 = vpop.f32.mrf.mxu0
    %3156 = vmatprep.mubr.bf16.mxu0 0
    %3157 = vmatmul.mubr.bf16.gmra.mxu0 %v3081
    %v3158 = vpop.f32.mrf.mxu0
    %v3159 = vadd.f32 0.0, %v3158
    %v3160 = vpop.f32.mrf.mxu0
    %v3161 = vpop.f32.mrf.mxu0
    %v3162 = vadd.f32 0.0, %v3161
    %v3163 = vpop.f32.mrf.mxu0
    %3164 = vmatprep.mubr.bf16.mxu0 0
    %3165 = vmatmul.mubr.bf16.gmra.mxu0 %v3084
    %v3166 = vpop.f32.mrf.mxu0
    %v3167 = vadd.f32 0.0, %v3166
    %v3168 = vpop.f32.mrf.mxu0
    %v3169 = vpop.f32.mrf.mxu0
    %v3170 = vadd.f32 0.0, %v3169
    %v3171 = vpop.f32.mrf.mxu0
    %3172 = vmatprep.mubr.bf16.mxu0 0
    %3173 = vmatmul.mubr.bf16.gmra.mxu0 %v3087
    %v3174 = vpop.f32.mrf.mxu0
    %v3175 = vadd.f32 0.0, %v3174
    %v3176 = vpop.f32.mrf.mxu0
    %v3177 = vpop.f32.mrf.mxu0
    %v3178 = vadd.f32 0.0, %v3177
    %v3179 = vpop.f32.mrf.mxu0
    %3180 = vmatprep.mubr.bf16.mxu0 0
    %3181 = vmatmul.mubr.bf16.gmra.mxu0 %v3090
    %v3182 = vpop.f32.mrf.mxu0
    %v3183 = vadd.f32 0.0, %v3182
    %v3184 = vpop.f32.mrf.mxu0
    %v3185 = vpop.f32.mrf.mxu0
    %v3186 = vadd.f32 0.0, %v3185
    %v3187 = vpop.f32.mrf.mxu0
    %3188 = vdwg.mxu0
    %v3189 = vadd.f32 %v2865, %v3127
    %v3190 = vadd.f32 %v2866, %v3130
    %v3191 = vadd.f32 %v2867, %v3135
    %v3192 = vadd.f32 %v2868, %v3138
    %v3193 = vadd.f32 %v2869, %v3143
    %v3194 = vadd.f32 %v2870, %v3146
    %v3195 = vadd.f32 %v2871, %v3151
    %v3196 = vadd.f32 %v2872, %v3154
    %v3197 = vadd.f32 %v2873, %v3159
    %v3198 = vadd.f32 %v2874, %v3162
    %v3199 = vadd.f32 %v2875, %v3167
    %v3200 = vadd.f32 %v2876, %v3170
    %v3201 = vadd.f32 %v2877, %v3175
    %v3202 = vadd.f32 %v2878, %v3178
    %v3203 = vadd.f32 %v2879, %v3183
    %v3204 = vadd.f32 %v2880, %v3186
    %s3205 = scalar_lea.vmem %s3, 448
    %v3206 = vld [vmem:[%s3205] sm:$0xf]
    %v3207 = vld [vmem:[%s3205 + $0x4] sm:$0xf]
    %v3208 = vld [vmem:[%s3205 + $0x8] sm:$0xf]
    %v3209 = vld [vmem:[%s3205 + $0xc] sm:$0xf]
    %v3210 = vld [vmem:[%s3205 + $0x10] sm:$0xf]
    %v3211 = vld [vmem:[%s3205 + $0x14] sm:$0xf]
    %v3212 = vld [vmem:[%s3205 + $0x18] sm:$0xf]
    %v3213 = vld [vmem:[%s3205 + $0x1c] sm:$0xf]
    %v3214 = vld [vmem:[%s3205 + $0x20] sm:$0xf]
    %v3215 = vld [vmem:[%s3205 + $0x24] sm:$0xf]
    %v3216 = vld [vmem:[%s3205 + $0x28] sm:$0xf]
    %v3217 = vld [vmem:[%s3205 + $0x2c] sm:$0xf]
    %v3218 = vld [vmem:[%s3205 + $0x30] sm:$0xf]
    %v3219 = vld [vmem:[%s3205 + $0x34] sm:$0xf]
    %v3220 = vld [vmem:[%s3205 + $0x38] sm:$0xf]
    %v3221 = vld [vmem:[%s3205 + $0x3c] sm:$0xf]
    %v3238 = vunpack.c.l.b16 %v3206
    %v3239 = vunpack.c.l.b16 %v3207
    %v3240 = vunpack.c.l.b16 %v3208
    %v3241 = vunpack.c.l.b16 %v3209
    %v3242 = vunpack.c.l.b16 %v3210
    %v3243 = vunpack.c.l.b16 %v3211
    %v3244 = vunpack.c.l.b16 %v3212
    %v3245 = vunpack.c.l.b16 %v3213
    %v3246 = vunpack.c.l.b16 %v3214
    %v3247 = vunpack.c.l.b16 %v3215
    %v3248 = vunpack.c.l.b16 %v3216
    %v3249 = vunpack.c.l.b16 %v3217
    %v3250 = vunpack.c.l.b16 %v3218
    %v3251 = vunpack.c.l.b16 %v3219
    %v3252 = vunpack.c.l.b16 %v3220
    %v3253 = vunpack.c.l.b16 %v3221
    %v3254 = vpack.c.b16 %v3239, %v3238
    %v3255 = vpack.c.b16 %v3241, %v3240
    %v3256 = vpack.c.b16 %v3243, %v3242
    %v3257 = vpack.c.b16 %v3245, %v3244
    %v3258 = vpack.c.b16 %v3247, %v3246
    %v3259 = vpack.c.b16 %v3249, %v3248
    %v3260 = vpack.c.b16 %v3251, %v3250
    %v3261 = vpack.c.b16 %v3253, %v3252
    %3270 = vmatprep.subr.bf16.mxu0 0
    %3271 = vmatpush1.bf16.msra.mxu0 %v969
    %3272 = vmatprep.subr.bf16.mxu0 0
    %3273 = vmatpush1.bf16.msra.mxu0 %v968
    %3274 = vmatprep.subr.bf16.mxu0 0
    %3275 = vmatpush1.bf16.msra.mxu0 %v967
    %3276 = vmatprep.subr.bf16.mxu0 0
    %3277 = vmatpush1.bf16.msra.mxu0 %v966
    %3278 = vmatprep.subr.bf16.mxu0 0
    %3279 = vmatpush1.bf16.msra.mxu0 %v965
    %3280 = vmatprep.subr.bf16.mxu0 0
    %3281 = vmatpush1.bf16.msra.mxu0 %v964
    %3282 = vmatprep.subr.bf16.mxu0 0
    %3283 = vmatpush1.bf16.msra.mxu0 %v963
    %3284 = vmatprep.subr.bf16.mxu0 0
    %3285 = vmatpush1.bf16.msra.mxu0 %v962
    %3286 = vmatprep.subr.bf16.mxu0 0
    %3287 = vmatpush2.bf16.msra.mxu0 0
    %3288 = vmatprep.subr.bf16.mxu0 0
    %3289 = vmatpush2.bf16.msra.mxu0 0
    %3290 = vmatprep.subr.bf16.mxu0 0
    %3291 = vmatpush2.bf16.msra.mxu0 0
    %3292 = vmatprep.subr.bf16.mxu0 0
    %3293 = vmatpush2.bf16.msra.mxu0 0
    %3294 = vmatprep.subr.bf16.mxu0 0
    %3295 = vmatpush2.bf16.msra.mxu0 0
    %3296 = vmatprep.subr.bf16.mxu0 0
    %3297 = vmatpush2.bf16.msra.mxu0 0
    %3298 = vmatprep.subr.bf16.mxu0 0
    %3299 = vmatpush2.bf16.msra.mxu0 0
    %3300 = vmatprep.subr.bf16.mxu0 0
    %3301 = vmatpush2.bf16.msra.mxu0 0
    %3302 = vmatprep.mubr.bf16.mxu0 0
    %3303 = vmatmul.mubr.bf16.gmra.mxu0 %v3254
    %v3304 = vpop.f32.mrf.mxu0
    %v3305 = vadd.f32 0.0, %v3304
    %v3306 = vpop.f32.mrf.mxu0
    %v3307 = vpop.f32.mrf.mxu0
    %v3308 = vadd.f32 0.0, %v3307
    %v3309 = vpop.f32.mrf.mxu0
    %3310 = vmatprep.mubr.bf16.mxu0 0
    %3311 = vmatmul.mubr.bf16.gmra.mxu0 %v3255
    %v3312 = vpop.f32.mrf.mxu0
    %v3313 = vadd.f32 0.0, %v3312
    %v3314 = vpop.f32.mrf.mxu0
    %v3315 = vpop.f32.mrf.mxu0
    %v3316 = vadd.f32 0.0, %v3315
    %v3317 = vpop.f32.mrf.mxu0
    %3318 = vmatprep.mubr.bf16.mxu0 0
    %3319 = vmatmul.mubr.bf16.gmra.mxu0 %v3256
    %v3320 = vpop.f32.mrf.mxu0
    %v3321 = vadd.f32 0.0, %v3320
    %v3322 = vpop.f32.mrf.mxu0
    %v3323 = vpop.f32.mrf.mxu0
    %v3324 = vadd.f32 0.0, %v3323
    %v3325 = vpop.f32.mrf.mxu0
    %3326 = vmatprep.mubr.bf16.mxu0 0
    %3327 = vmatmul.mubr.bf16.gmra.mxu0 %v3257
    %v3328 = vpop.f32.mrf.mxu0
    %v3329 = vadd.f32 0.0, %v3328
    %v3330 = vpop.f32.mrf.mxu0
    %v3331 = vpop.f32.mrf.mxu0
    %v3332 = vadd.f32 0.0, %v3331
    %v3333 = vpop.f32.mrf.mxu0
    %3334 = vmatprep.mubr.bf16.mxu0 0
    %3335 = vmatmul.mubr.bf16.gmra.mxu0 %v3258
    %v3336 = vpop.f32.mrf.mxu0
    %v3337 = vadd.f32 0.0, %v3336
    %v3338 = vpop.f32.mrf.mxu0
    %v3339 = vpop.f32.mrf.mxu0
    %v3340 = vadd.f32 0.0, %v3339
    %v3341 = vpop.f32.mrf.mxu0
    %3342 = vmatprep.mubr.bf16.mxu0 0
    %3343 = vmatmul.mubr.bf16.gmra.mxu0 %v3259
    %v3344 = vpop.f32.mrf.mxu0
    %v3345 = vadd.f32 0.0, %v3344
    %v3346 = vpop.f32.mrf.mxu0
    %v3347 = vpop.f32.mrf.mxu0
    %v3348 = vadd.f32 0.0, %v3347
    %v3349 = vpop.f32.mrf.mxu0
    %3350 = vmatprep.mubr.bf16.mxu0 0
    %3351 = vmatmul.mubr.bf16.gmra.mxu0 %v3260
    %v3352 = vpop.f32.mrf.mxu0
    %v3353 = vadd.f32 0.0, %v3352
    %v3354 = vpop.f32.mrf.mxu0
    %v3355 = vpop.f32.mrf.mxu0
    %v3356 = vadd.f32 0.0, %v3355
    %v3357 = vpop.f32.mrf.mxu0
    %3358 = vmatprep.mubr.bf16.mxu0 0
    %3359 = vmatmul.mubr.bf16.gmra.mxu0 %v3261
    %v3360 = vpop.f32.mrf.mxu0
    %v3361 = vadd.f32 0.0, %v3360
    %v3362 = vpop.f32.mrf.mxu0
    %v3363 = vpop.f32.mrf.mxu0
    %v3364 = vadd.f32 0.0, %v3363
    %v3365 = vpop.f32.mrf.mxu0
    %3366 = vdwg.mxu0
    %v3367 = vpack.c.bf16 %v3308, %v3305
    %v3368 = vpack.c.bf16 %v3316, %v3313
    %v3369 = vpack.c.bf16 %v3324, %v3321
    %v3370 = vpack.c.bf16 %v3332, %v3329
    %v3371 = vpack.c.bf16 %v3340, %v3337
    %v3372 = vpack.c.bf16 %v3348, %v3345
    %v3373 = vpack.c.bf16 %v3356, %v3353
    %v3374 = vpack.c.bf16 %v3364, %v3361
    %s3375 = scalar_lea.vmem %s4, 112
    %v3376 = vld [vmem:[%s3375] sm:$0xf]
    %v3377 = vld [vmem:[%s3375 + $0x4] sm:$0xf]
    %v3378 = vld [vmem:[%s3375 + $0x8] sm:$0xf]
    %v3379 = vld [vmem:[%s3375 + $0xc] sm:$0xf]
    %v3384 = vunpack.c.l.b16 %v3376
    %v3385 = vunpack.c.l.b16 %v3377
    %v3386 = vunpack.c.l.b16 %v3378
    %v3387 = vunpack.c.l.b16 %v3379
    %v3388 = vpack.c.b16 %v3385, %v3384
    %v3389 = vpack.c.b16 %v3387, %v3386
    %v3393 = vsel %vm1330, %v3367, 0
    %v3396 = vsel %vm1330, %v3368, 0
    %v3399 = vsel %vm1330, %v3369, 0
    %v3402 = vsel %vm1330, %v3370, 0
    %v3405 = vsel %vm1330, %v3371, 0
    %v3408 = vsel %vm1330, %v3372, 0
    %v3411 = vsel %vm1330, %v3373, 0
    %v3414 = vsel %vm1330, %v3374, 0
    %3416 = vmatprep.subr.bf16.mxu0 0
    %3417 = vmatpush1.bf16.msra.mxu0 0
    %3418 = vmatprep.subr.bf16.mxu0 0
    %3419 = vmatpush1.bf16.msra.mxu0 0
    %3420 = vmatprep.subr.bf16.mxu0 0
    %3421 = vmatpush1.bf16.msra.mxu0 0
    %3422 = vmatprep.subr.bf16.mxu0 0
    %3423 = vmatpush1.bf16.msra.mxu0 0
    %3424 = vmatprep.subr.bf16.mxu0 0
    %3425 = vmatpush1.bf16.msra.mxu0 0
    %3426 = vmatprep.subr.bf16.mxu0 0
    %3427 = vmatpush1.bf16.msra.mxu0 0
    %3428 = vmatprep.subr.bf16.mxu0 0
    %3429 = vmatpush1.bf16.msra.mxu0 %v3389
    %3430 = vmatprep.subr.bf16.mxu0 0
    %3431 = vmatpush1.bf16.msra.mxu0 %v3388
    %3432 = vmatprep.subr.bf16.mxu0 0
    %3433 = vmatpush2.bf16.msra.mxu0 0
    %3434 = vmatprep.subr.bf16.mxu0 0
    %3435 = vmatpush2.bf16.msra.mxu0 0
    %3436 = vmatprep.subr.bf16.mxu0 0
    %3437 = vmatpush2.bf16.msra.mxu0 0
    %3438 = vmatprep.subr.bf16.mxu0 0
    %3439 = vmatpush2.bf16.msra.mxu0 0
    %3440 = vmatprep.subr.bf16.mxu0 0
    %3441 = vmatpush2.bf16.msra.mxu0 0
    %3442 = vmatprep.subr.bf16.mxu0 0
    %3443 = vmatpush2.bf16.msra.mxu0 0
    %3444 = vmatprep.subr.bf16.mxu0 0
    %3445 = vmatpush2.bf16.msra.mxu0 0
    %3446 = vmatprep.subr.bf16.mxu0 0
    %3447 = vmatpush2.bf16.msra.mxu0 0
    %3448 = vmatprep.mubr.bf16.mxu0 0
    %3449 = vmatmul.mubr.bf16.gmra.mxu0 %v3393
    %v3450 = vpop.f32.mrf.mxu0
    %v3451 = vadd.f32 0.0, %v3450
    %v3452 = vpop.f32.mrf.mxu0
    %v3453 = vpop.f32.mrf.mxu0
    %v3454 = vadd.f32 0.0, %v3453
    %v3455 = vpop.f32.mrf.mxu0
    %3456 = vmatprep.mubr.bf16.mxu0 0
    %3457 = vmatmul.mubr.bf16.gmra.mxu0 %v3396
    %v3458 = vpop.f32.mrf.mxu0
    %v3459 = vadd.f32 0.0, %v3458
    %v3460 = vpop.f32.mrf.mxu0
    %v3461 = vpop.f32.mrf.mxu0
    %v3462 = vadd.f32 0.0, %v3461
    %v3463 = vpop.f32.mrf.mxu0
    %3464 = vmatprep.mubr.bf16.mxu0 0
    %3465 = vmatmul.mubr.bf16.gmra.mxu0 %v3399
    %v3466 = vpop.f32.mrf.mxu0
    %v3467 = vadd.f32 0.0, %v3466
    %v3468 = vpop.f32.mrf.mxu0
    %v3469 = vpop.f32.mrf.mxu0
    %v3470 = vadd.f32 0.0, %v3469
    %v3471 = vpop.f32.mrf.mxu0
    %3472 = vmatprep.mubr.bf16.mxu0 0
    %3473 = vmatmul.mubr.bf16.gmra.mxu0 %v3402
    %v3474 = vpop.f32.mrf.mxu0
    %v3475 = vadd.f32 0.0, %v3474
    %v3476 = vpop.f32.mrf.mxu0
    %v3477 = vpop.f32.mrf.mxu0
    %v3478 = vadd.f32 0.0, %v3477
    %v3479 = vpop.f32.mrf.mxu0
    %3480 = vmatprep.mubr.bf16.mxu0 0
    %3481 = vmatmul.mubr.bf16.gmra.mxu0 %v3405
    %v3482 = vpop.f32.mrf.mxu0
    %v3483 = vadd.f32 0.0, %v3482
    %v3484 = vpop.f32.mrf.mxu0
    %v3485 = vpop.f32.mrf.mxu0
    %v3486 = vadd.f32 0.0, %v3485
    %v3487 = vpop.f32.mrf.mxu0
    %3488 = vmatprep.mubr.bf16.mxu0 0
    %3489 = vmatmul.mubr.bf16.gmra.mxu0 %v3408
    %v3490 = vpop.f32.mrf.mxu0
    %v3491 = vadd.f32 0.0, %v3490
    %v3492 = vpop.f32.mrf.mxu0
    %v3493 = vpop.f32.mrf.mxu0
    %v3494 = vadd.f32 0.0, %v3493
    %v3495 = vpop.f32.mrf.mxu0
    %3496 = vmatprep.mubr.bf16.mxu0 0
    %3497 = vmatmul.mubr.bf16.gmra.mxu0 %v3411
    %v3498 = vpop.f32.mrf.mxu0
    %v3499 = vadd.f32 0.0, %v3498
    %v3500 = vpop.f32.mrf.mxu0
    %v3501 = vpop.f32.mrf.mxu0
    %v3502 = vadd.f32 0.0, %v3501
    %v3503 = vpop.f32.mrf.mxu0
    %3504 = vmatprep.mubr.bf16.mxu0 0
    %3505 = vmatmul.mubr.bf16.gmra.mxu0 %v3414
    %v3506 = vpop.f32.mrf.mxu0
    %v3507 = vadd.f32 0.0, %v3506
    %v3508 = vpop.f32.mrf.mxu0
    %v3509 = vpop.f32.mrf.mxu0
    %v3510 = vadd.f32 0.0, %v3509
    %v3511 = vpop.f32.mrf.mxu0
    %3512 = vdwg.mxu0
    %v3513 = vadd.f32 %v3189, %v3451
    %v3514 = vadd.f32 %v3190, %v3454
    %v3515 = vadd.f32 %v3191, %v3459
    %v3516 = vadd.f32 %v3192, %v3462
    %v3517 = vadd.f32 %v3193, %v3467
    %v3518 = vadd.f32 %v3194, %v3470
    %v3519 = vadd.f32 %v3195, %v3475
    %v3520 = vadd.f32 %v3196, %v3478
    %v3521 = vadd.f32 %v3197, %v3483
    %v3522 = vadd.f32 %v3198, %v3486
    %v3523 = vadd.f32 %v3199, %v3491
    %v3524 = vadd.f32 %v3200, %v3494
    %v3525 = vadd.f32 %v3201, %v3499
    %v3526 = vadd.f32 %v3202, %v3502
    %v3527 = vadd.f32 %v3203, %v3507
    %v3528 = vadd.f32 %v3204, %v3510
    %s3529 = scalar_lea.vmem %s3, 512
    %v3530 = vld [vmem:[%s3529] sm:$0xf]
    %v3531 = vld [vmem:[%s3529 + $0x4] sm:$0xf]
    %v3532 = vld [vmem:[%s3529 + $0x8] sm:$0xf]
    %v3533 = vld [vmem:[%s3529 + $0xc] sm:$0xf]
    %v3534 = vld [vmem:[%s3529 + $0x10] sm:$0xf]
    %v3535 = vld [vmem:[%s3529 + $0x14] sm:$0xf]
    %v3536 = vld [vmem:[%s3529 + $0x18] sm:$0xf]
    %v3537 = vld [vmem:[%s3529 + $0x1c] sm:$0xf]
    %v3538 = vld [vmem:[%s3529 + $0x20] sm:$0xf]
    %v3539 = vld [vmem:[%s3529 + $0x24] sm:$0xf]
    %v3540 = vld [vmem:[%s3529 + $0x28] sm:$0xf]
    %v3541 = vld [vmem:[%s3529 + $0x2c] sm:$0xf]
    %v3542 = vld [vmem:[%s3529 + $0x30] sm:$0xf]
    %v3543 = vld [vmem:[%s3529 + $0x34] sm:$0xf]
    %v3544 = vld [vmem:[%s3529 + $0x38] sm:$0xf]
    %v3545 = vld [vmem:[%s3529 + $0x3c] sm:$0xf]
    %v3562 = vunpack.c.l.b16 %v3530
    %v3563 = vunpack.c.l.b16 %v3531
    %v3564 = vunpack.c.l.b16 %v3532
    %v3565 = vunpack.c.l.b16 %v3533
    %v3566 = vunpack.c.l.b16 %v3534
    %v3567 = vunpack.c.l.b16 %v3535
    %v3568 = vunpack.c.l.b16 %v3536
    %v3569 = vunpack.c.l.b16 %v3537
    %v3570 = vunpack.c.l.b16 %v3538
    %v3571 = vunpack.c.l.b16 %v3539
    %v3572 = vunpack.c.l.b16 %v3540
    %v3573 = vunpack.c.l.b16 %v3541
    %v3574 = vunpack.c.l.b16 %v3542
    %v3575 = vunpack.c.l.b16 %v3543
    %v3576 = vunpack.c.l.b16 %v3544
    %v3577 = vunpack.c.l.b16 %v3545
    %v3578 = vpack.c.b16 %v3563, %v3562
    %v3579 = vpack.c.b16 %v3565, %v3564
    %v3580 = vpack.c.b16 %v3567, %v3566
    %v3581 = vpack.c.b16 %v3569, %v3568
    %v3582 = vpack.c.b16 %v3571, %v3570
    %v3583 = vpack.c.b16 %v3573, %v3572
    %v3584 = vpack.c.b16 %v3575, %v3574
    %v3585 = vpack.c.b16 %v3577, %v3576
    %3594 = vmatprep.subr.bf16.mxu0 0
    %3595 = vmatpush1.bf16.msra.mxu0 %v969
    %3596 = vmatprep.subr.bf16.mxu0 0
    %3597 = vmatpush1.bf16.msra.mxu0 %v968
    %3598 = vmatprep.subr.bf16.mxu0 0
    %3599 = vmatpush1.bf16.msra.mxu0 %v967
    %3600 = vmatprep.subr.bf16.mxu0 0
    %3601 = vmatpush1.bf16.msra.mxu0 %v966
    %3602 = vmatprep.subr.bf16.mxu0 0
    %3603 = vmatpush1.bf16.msra.mxu0 %v965
    %3604 = vmatprep.subr.bf16.mxu0 0
    %3605 = vmatpush1.bf16.msra.mxu0 %v964
    %3606 = vmatprep.subr.bf16.mxu0 0
    %3607 = vmatpush1.bf16.msra.mxu0 %v963
    %3608 = vmatprep.subr.bf16.mxu0 0
    %3609 = vmatpush1.bf16.msra.mxu0 %v962
    %3610 = vmatprep.subr.bf16.mxu0 0
    %3611 = vmatpush2.bf16.msra.mxu0 0
    %3612 = vmatprep.subr.bf16.mxu0 0
    %3613 = vmatpush2.bf16.msra.mxu0 0
    %3614 = vmatprep.subr.bf16.mxu0 0
    %3615 = vmatpush2.bf16.msra.mxu0 0
    %3616 = vmatprep.subr.bf16.mxu0 0
    %3617 = vmatpush2.bf16.msra.mxu0 0
    %3618 = vmatprep.subr.bf16.mxu0 0
    %3619 = vmatpush2.bf16.msra.mxu0 0
    %3620 = vmatprep.subr.bf16.mxu0 0
    %3621 = vmatpush2.bf16.msra.mxu0 0
    %3622 = vmatprep.subr.bf16.mxu0 0
    %3623 = vmatpush2.bf16.msra.mxu0 0
    %3624 = vmatprep.subr.bf16.mxu0 0
    %3625 = vmatpush2.bf16.msra.mxu0 0
    %3626 = vmatprep.mubr.bf16.mxu0 0
    %3627 = vmatmul.mubr.bf16.gmra.mxu0 %v3578
    %v3628 = vpop.f32.mrf.mxu0
    %v3629 = vadd.f32 0.0, %v3628
    %v3630 = vpop.f32.mrf.mxu0
    %v3631 = vpop.f32.mrf.mxu0
    %v3632 = vadd.f32 0.0, %v3631
    %v3633 = vpop.f32.mrf.mxu0
    %3634 = vmatprep.mubr.bf16.mxu0 0
    %3635 = vmatmul.mubr.bf16.gmra.mxu0 %v3579
    %v3636 = vpop.f32.mrf.mxu0
    %v3637 = vadd.f32 0.0, %v3636
    %v3638 = vpop.f32.mrf.mxu0
    %v3639 = vpop.f32.mrf.mxu0
    %v3640 = vadd.f32 0.0, %v3639
    %v3641 = vpop.f32.mrf.mxu0
    %3642 = vmatprep.mubr.bf16.mxu0 0
    %3643 = vmatmul.mubr.bf16.gmra.mxu0 %v3580
    %v3644 = vpop.f32.mrf.mxu0
    %v3645 = vadd.f32 0.0, %v3644
    %v3646 = vpop.f32.mrf.mxu0
    %v3647 = vpop.f32.mrf.mxu0
    %v3648 = vadd.f32 0.0, %v3647
    %v3649 = vpop.f32.mrf.mxu0
    %3650 = vmatprep.mubr.bf16.mxu0 0
    %3651 = vmatmul.mubr.bf16.gmra.mxu0 %v3581
    %v3652 = vpop.f32.mrf.mxu0
    %v3653 = vadd.f32 0.0, %v3652
    %v3654 = vpop.f32.mrf.mxu0
    %v3655 = vpop.f32.mrf.mxu0
    %v3656 = vadd.f32 0.0, %v3655
    %v3657 = vpop.f32.mrf.mxu0
    %3658 = vmatprep.mubr.bf16.mxu0 0
    %3659 = vmatmul.mubr.bf16.gmra.mxu0 %v3582
    %v3660 = vpop.f32.mrf.mxu0
    %v3661 = vadd.f32 0.0, %v3660
    %v3662 = vpop.f32.mrf.mxu0
    %v3663 = vpop.f32.mrf.mxu0
    %v3664 = vadd.f32 0.0, %v3663
    %v3665 = vpop.f32.mrf.mxu0
    %3666 = vmatprep.mubr.bf16.mxu0 0
    %3667 = vmatmul.mubr.bf16.gmra.mxu0 %v3583
    %v3668 = vpop.f32.mrf.mxu0
    %v3669 = vadd.f32 0.0, %v3668
    %v3670 = vpop.f32.mrf.mxu0
    %v3671 = vpop.f32.mrf.mxu0
    %v3672 = vadd.f32 0.0, %v3671
    %v3673 = vpop.f32.mrf.mxu0
    %3674 = vmatprep.mubr.bf16.mxu0 0
    %3675 = vmatmul.mubr.bf16.gmra.mxu0 %v3584
    %v3676 = vpop.f32.mrf.mxu0
    %v3677 = vadd.f32 0.0, %v3676
    %v3678 = vpop.f32.mrf.mxu0
    %v3679 = vpop.f32.mrf.mxu0
    %v3680 = vadd.f32 0.0, %v3679
    %v3681 = vpop.f32.mrf.mxu0
    %3682 = vmatprep.mubr.bf16.mxu0 0
    %3683 = vmatmul.mubr.bf16.gmra.mxu0 %v3585
    %v3684 = vpop.f32.mrf.mxu0
    %v3685 = vadd.f32 0.0, %v3684
    %v3686 = vpop.f32.mrf.mxu0
    %v3687 = vpop.f32.mrf.mxu0
    %v3688 = vadd.f32 0.0, %v3687
    %v3689 = vpop.f32.mrf.mxu0
    %3690 = vdwg.mxu0
    %v3691 = vpack.c.bf16 %v3632, %v3629
    %v3692 = vpack.c.bf16 %v3640, %v3637
    %v3693 = vpack.c.bf16 %v3648, %v3645
    %v3694 = vpack.c.bf16 %v3656, %v3653
    %v3695 = vpack.c.bf16 %v3664, %v3661
    %v3696 = vpack.c.bf16 %v3672, %v3669
    %v3697 = vpack.c.bf16 %v3680, %v3677
    %v3698 = vpack.c.bf16 %v3688, %v3685
    %s3699 = scalar_lea.vmem %s4, 128
    %v3700 = vld [vmem:[%s3699] sm:$0xf]
    %v3701 = vld [vmem:[%s3699 + $0x4] sm:$0xf]
    %v3702 = vld [vmem:[%s3699 + $0x8] sm:$0xf]
    %v3703 = vld [vmem:[%s3699 + $0xc] sm:$0xf]
    %v3708 = vunpack.c.l.b16 %v3700
    %v3709 = vunpack.c.l.b16 %v3701
    %v3710 = vunpack.c.l.b16 %v3702
    %v3711 = vunpack.c.l.b16 %v3703
    %v3712 = vpack.c.b16 %v3709, %v3708
    %v3713 = vpack.c.b16 %v3711, %v3710
    %v3717 = vsel %vm1330, %v3691, 0
    %v3720 = vsel %vm1330, %v3692, 0
    %v3723 = vsel %vm1330, %v3693, 0
    %v3726 = vsel %vm1330, %v3694, 0
    %v3729 = vsel %vm1330, %v3695, 0
    %v3732 = vsel %vm1330, %v3696, 0
    %v3735 = vsel %vm1330, %v3697, 0
    %v3738 = vsel %vm1330, %v3698, 0
    %3740 = vmatprep.subr.bf16.mxu0 0
    %3741 = vmatpush1.bf16.msra.mxu0 0
    %3742 = vmatprep.subr.bf16.mxu0 0
    %3743 = vmatpush1.bf16.msra.mxu0 0
    %3744 = vmatprep.subr.bf16.mxu0 0
    %3745 = vmatpush1.bf16.msra.mxu0 0
    %3746 = vmatprep.subr.bf16.mxu0 0
    %3747 = vmatpush1.bf16.msra.mxu0 0
    %3748 = vmatprep.subr.bf16.mxu0 0
    %3749 = vmatpush1.bf16.msra.mxu0 0
    %3750 = vmatprep.subr.bf16.mxu0 0
    %3751 = vmatpush1.bf16.msra.mxu0 0
    %3752 = vmatprep.subr.bf16.mxu0 0
    %3753 = vmatpush1.bf16.msra.mxu0 %v3713
    %3754 = vmatprep.subr.bf16.mxu0 0
    %3755 = vmatpush1.bf16.msra.mxu0 %v3712
    %3756 = vmatprep.subr.bf16.mxu0 0
    %3757 = vmatpush2.bf16.msra.mxu0 0
    %3758 = vmatprep.subr.bf16.mxu0 0
    %3759 = vmatpush2.bf16.msra.mxu0 0
    %3760 = vmatprep.subr.bf16.mxu0 0
    %3761 = vmatpush2.bf16.msra.mxu0 0
    %3762 = vmatprep.subr.bf16.mxu0 0
    %3763 = vmatpush2.bf16.msra.mxu0 0
    %3764 = vmatprep.subr.bf16.mxu0 0
    %3765 = vmatpush2.bf16.msra.mxu0 0
    %3766 = vmatprep.subr.bf16.mxu0 0
    %3767 = vmatpush2.bf16.msra.mxu0 0
    %3768 = vmatprep.subr.bf16.mxu0 0
    %3769 = vmatpush2.bf16.msra.mxu0 0
    %3770 = vmatprep.subr.bf16.mxu0 0
    %3771 = vmatpush2.bf16.msra.mxu0 0
    %3772 = vmatprep.mubr.bf16.mxu0 0
    %3773 = vmatmul.mubr.bf16.gmra.mxu0 %v3717
    %v3774 = vpop.f32.mrf.mxu0
    %v3775 = vadd.f32 0.0, %v3774
    %v3776 = vpop.f32.mrf.mxu0
    %v3777 = vpop.f32.mrf.mxu0
    %v3778 = vadd.f32 0.0, %v3777
    %v3779 = vpop.f32.mrf.mxu0
    %3780 = vmatprep.mubr.bf16.mxu0 0
    %3781 = vmatmul.mubr.bf16.gmra.mxu0 %v3720
    %v3782 = vpop.f32.mrf.mxu0
    %v3783 = vadd.f32 0.0, %v3782
    %v3784 = vpop.f32.mrf.mxu0
    %v3785 = vpop.f32.mrf.mxu0
    %v3786 = vadd.f32 0.0, %v3785
    %v3787 = vpop.f32.mrf.mxu0
    %3788 = vmatprep.mubr.bf16.mxu0 0
    %3789 = vmatmul.mubr.bf16.gmra.mxu0 %v3723
    %v3790 = vpop.f32.mrf.mxu0
    %v3791 = vadd.f32 0.0, %v3790
    %v3792 = vpop.f32.mrf.mxu0
    %v3793 = vpop.f32.mrf.mxu0
    %v3794 = vadd.f32 0.0, %v3793
    %v3795 = vpop.f32.mrf.mxu0
    %3796 = vmatprep.mubr.bf16.mxu0 0
    %3797 = vmatmul.mubr.bf16.gmra.mxu0 %v3726
    %v3798 = vpop.f32.mrf.mxu0
    %v3799 = vadd.f32 0.0, %v3798
    %v3800 = vpop.f32.mrf.mxu0
    %v3801 = vpop.f32.mrf.mxu0
    %v3802 = vadd.f32 0.0, %v3801
    %v3803 = vpop.f32.mrf.mxu0
    %3804 = vmatprep.mubr.bf16.mxu0 0
    %3805 = vmatmul.mubr.bf16.gmra.mxu0 %v3729
    %v3806 = vpop.f32.mrf.mxu0
    %v3807 = vadd.f32 0.0, %v3806
    %v3808 = vpop.f32.mrf.mxu0
    %v3809 = vpop.f32.mrf.mxu0
    %v3810 = vadd.f32 0.0, %v3809
    %v3811 = vpop.f32.mrf.mxu0
    %3812 = vmatprep.mubr.bf16.mxu0 0
    %3813 = vmatmul.mubr.bf16.gmra.mxu0 %v3732
    %v3814 = vpop.f32.mrf.mxu0
    %v3815 = vadd.f32 0.0, %v3814
    %v3816 = vpop.f32.mrf.mxu0
    %v3817 = vpop.f32.mrf.mxu0
    %v3818 = vadd.f32 0.0, %v3817
    %v3819 = vpop.f32.mrf.mxu0
    %3820 = vmatprep.mubr.bf16.mxu0 0
    %3821 = vmatmul.mubr.bf16.gmra.mxu0 %v3735
    %v3822 = vpop.f32.mrf.mxu0
    %v3823 = vadd.f32 0.0, %v3822
    %v3824 = vpop.f32.mrf.mxu0
    %v3825 = vpop.f32.mrf.mxu0
    %v3826 = vadd.f32 0.0, %v3825
    %v3827 = vpop.f32.mrf.mxu0
    %3828 = vmatprep.mubr.bf16.mxu0 0
    %3829 = vmatmul.mubr.bf16.gmra.mxu0 %v3738
    %v3830 = vpop.f32.mrf.mxu0
    %v3831 = vadd.f32 0.0, %v3830
    %v3832 = vpop.f32.mrf.mxu0
    %v3833 = vpop.f32.mrf.mxu0
    %v3834 = vadd.f32 0.0, %v3833
    %v3835 = vpop.f32.mrf.mxu0
    %3836 = vdwg.mxu0
    %v3837 = vadd.f32 %v3513, %v3775
    %v3838 = vadd.f32 %v3514, %v3778
    %v3839 = vadd.f32 %v3515, %v3783
    %v3840 = vadd.f32 %v3516, %v3786
    %v3841 = vadd.f32 %v3517, %v3791
    %v3842 = vadd.f32 %v3518, %v3794
    %v3843 = vadd.f32 %v3519, %v3799
    %v3844 = vadd.f32 %v3520, %v3802
    %v3845 = vadd.f32 %v3521, %v3807
    %v3846 = vadd.f32 %v3522, %v3810
    %v3847 = vadd.f32 %v3523, %v3815
    %v3848 = vadd.f32 %v3524, %v3818
    %v3849 = vadd.f32 %v3525, %v3823
    %v3850 = vadd.f32 %v3526, %v3826
    %v3851 = vadd.f32 %v3527, %v3831
    %v3852 = vadd.f32 %v3528, %v3834
    %v3853 = vld [vmem:[#allocation7] sm:$0x1]
    %v3854 = vmax.f32 %v3837, %v3841
    %v3855 = vmax.f32 %v3838, %v3842
    %v3856 = vmax.f32 %v3839, %v3843
    %v3857 = vmax.f32 %v3840, %v3844
    %v3858 = vmax.f32 %v3845, %v3849
    %v3859 = vmax.f32 %v3846, %v3850
    %v3860 = vmax.f32 %v3847, %v3851
    %v3861 = vmax.f32 %v3848, %v3852
    %v3862 = vmax.f32 %v3854, %v3858
    %v3863 = vmax.f32 %v3855, %v3859
    %v3864 = vmax.f32 %v3856, %v3860
    %v3865 = vmax.f32 %v3857, %v3861
    %v3867 = vlaneseq
    %v3868 = vshrl.u32 %v3867, 7
    %v3869 = vsub.s32 0, %v3868
    %v3870 = vrot.slane %v3853, %v3869
    %v3872 = vadd.f32 %v3862, %v3870
    %v3873 = vadd.f32 %v3863, %v3870
    %v3874 = vadd.f32 %v3864, %v3870
    %v3875 = vadd.f32 %v3865, %v3870
    %v3876 = vmax.f32 %v3872, 0.0
    %v3877 = vmax.f32 %v3873, 0.0
    %v3878 = vmax.f32 %v3874, 0.0
    %v3879 = vmax.f32 %v3875, 0.0
    %v3880 = vpack.c.bf16 %v3877, %v3876
    %v3881 = vpack.c.bf16 %v3879, %v3878
    %v3882 = vld [vmem:[#allocation9] sm:$0xf]
    %v3883 = vld [vmem:[#allocation9 + $0x4] sm:$0xf]
    %v3884 = vld [vmem:[#allocation9 + $0x8] sm:$0xf]
    %v3885 = vld [vmem:[#allocation9 + $0xc] sm:$0xf]
    %v3890 = vunpack.c.l.b16 %v3882
    %v3891 = vunpack.c.l.b16 %v3883
    %v3892 = vunpack.c.l.b16 %v3884
    %v3893 = vunpack.c.l.b16 %v3885
    %v3894 = vpack.c.b16 %v3891, %v3890
    %v3895 = vpack.c.b16 %v3893, %v3892
    %v3897 = vsel %vm1330, %v3894, 0
    %v3900 = vsel %vm1330, %v3895, 0
    %3902 = vmatprep.subr.bf16.mxu0 0
    %3903 = vmatpush1.bf16.msra.mxu0 0
    %3904 = vmatprep.subr.bf16.mxu0 0
    %3905 = vmatpush1.bf16.msra.mxu0 0
    %3906 = vmatprep.subr.bf16.mxu0 0
    %3907 = vmatpush1.bf16.msra.mxu0 0
    %3908 = vmatprep.subr.bf16.mxu0 0
    %3909 = vmatpush1.bf16.msra.mxu0 0
    %3910 = vmatprep.subr.bf16.mxu0 0
    %3911 = vmatpush1.bf16.msra.mxu0 0
    %3912 = vmatprep.subr.bf16.mxu0 0
    %3913 = vmatpush1.bf16.msra.mxu0 0
    %3914 = vmatprep.subr.bf16.mxu0 0
    %3915 = vmatpush1.bf16.msra.mxu0 %v3881
    %3916 = vmatprep.subr.bf16.mxu0 0
    %3917 = vmatpush1.bf16.msra.mxu0 %v3880
    %3918 = vmatprep.subr.bf16.mxu0 0
    %3919 = vmatpush2.bf16.msra.mxu0 0
    %3920 = vmatprep.subr.bf16.mxu0 0
    %3921 = vmatpush2.bf16.msra.mxu0 0
    %3922 = vmatprep.subr.bf16.mxu0 0
    %3923 = vmatpush2.bf16.msra.mxu0 0
    %3924 = vmatprep.subr.bf16.mxu0 0
    %3925 = vmatpush2.bf16.msra.mxu0 0
    %3926 = vmatprep.subr.bf16.mxu0 0
    %3927 = vmatpush2.bf16.msra.mxu0 0
    %3928 = vmatprep.subr.bf16.mxu0 0
    %3929 = vmatpush2.bf16.msra.mxu0 0
    %3930 = vmatprep.subr.bf16.mxu0 0
    %3931 = vmatpush2.bf16.msra.mxu0 0
    %3932 = vmatprep.subr.bf16.mxu0 0
    %3933 = vmatpush2.bf16.msra.mxu0 0
    %3934 = vmatprep.mubr.bf16.mxu0 0
    %3935 = vmatmul.mubr.bf16.gmra.mxu0 %v3897
    %v3936 = vpop.f32.mrf.mxu0
    %v3937 = vadd.f32 0.0, %v3936
    %v3938 = vpop.f32.mrf.mxu0
    %v3939 = vpop.f32.mrf.mxu0
    %v3940 = vadd.f32 0.0, %v3939
    %v3941 = vpop.f32.mrf.mxu0
    %3942 = vmatprep.mubr.bf16.mxu0 0
    %3943 = vmatmul.mubr.bf16.gmra.mxu0 %v3900
    %v3944 = vpop.f32.mrf.mxu0
    %v3945 = vadd.f32 0.0, %v3944
    %v3946 = vpop.f32.mrf.mxu0
    %v3947 = vpop.f32.mrf.mxu0
    %v3948 = vadd.f32 0.0, %v3947
    %v3949 = vpop.f32.mrf.mxu0
    %3950 = vdwg.mxu0
    %v3951 = vpack.c.bf16 %v3940, %v3937
    %v3952 = vpack.c.bf16 %v3948, %v3945
    %v3953 = vld [vmem:[#allocation10] sm:$0xf]
    %v3954 = vld [vmem:[#allocation10 + $0x4] sm:$0xf]
    %v3955 = vld [vmem:[#allocation10 + $0x8] sm:$0xf]
    %v3956 = vld [vmem:[#allocation10 + $0xc] sm:$0xf]
    %v3957 = vld [vmem:[#allocation10 + $0x10] sm:$0xf]
    %v3958 = vld [vmem:[#allocation10 + $0x14] sm:$0xf]
    %v3959 = vld [vmem:[#allocation10 + $0x18] sm:$0xf]
    %v3960 = vld [vmem:[#allocation10 + $0x1c] sm:$0xf]
    %s3961 = scalar_lea.vmem [#allocation9], 16
    %v3962 = vld [vmem:[%s3961] sm:$0xf]
    %v3963 = vld [vmem:[%s3961 + $0x4] sm:$0xf]
    %v3964 = vld [vmem:[%s3961 + $0x8] sm:$0xf]
    %v3965 = vld [vmem:[%s3961 + $0xc] sm:$0xf]
    %v3970 = vunpack.c.l.b16 %v3962
    %v3971 = vunpack.c.l.b16 %v3963
    %v3972 = vunpack.c.l.b16 %v3964
    %v3973 = vunpack.c.l.b16 %v3965
    %v3974 = vpack.c.b16 %v3971, %v3970
    %v3975 = vpack.c.b16 %v3973, %v3972
    %v3977 = vsel %vm1330, %v3974, 0
    %v3980 = vsel %vm1330, %v3975, 0
    %3982 = vmatprep.subr.bf16.mxu0 0
    %3983 = vmatpush1.bf16.msra.mxu0 0
    %3984 = vmatprep.subr.bf16.mxu0 0
    %3985 = vmatpush1.bf16.msra.mxu0 0
    %3986 = vmatprep.subr.bf16.mxu0 0
    %3987 = vmatpush1.bf16.msra.mxu0 0
    %3988 = vmatprep.subr.bf16.mxu0 0
    %3989 = vmatpush1.bf16.msra.mxu0 0
    %3990 = vmatprep.subr.bf16.mxu0 0
    %3991 = vmatpush1.bf16.msra.mxu0 0
    %3992 = vmatprep.subr.bf16.mxu0 0
    %3993 = vmatpush1.bf16.msra.mxu0 0
    %3994 = vmatprep.subr.bf16.mxu0 0
    %3995 = vmatpush1.bf16.msra.mxu0 %v3881
    %3996 = vmatprep.subr.bf16.mxu0 0
    %3997 = vmatpush1.bf16.msra.mxu0 %v3880
    %3998 = vmatprep.subr.bf16.mxu0 0
    %3999 = vmatpush2.bf16.msra.mxu0 0
    %4000 = vmatprep.subr.bf16.mxu0 0
    %4001 = vmatpush2.bf16.msra.mxu0 0
    %4002 = vmatprep.subr.bf16.mxu0 0
    %4003 = vmatpush2.bf16.msra.mxu0 0
    %4004 = vmatprep.subr.bf16.mxu0 0
    %4005 = vmatpush2.bf16.msra.mxu0 0
    %4006 = vmatprep.subr.bf16.mxu0 0
    %4007 = vmatpush2.bf16.msra.mxu0 0
    %4008 = vmatprep.subr.bf16.mxu0 0
    %4009 = vmatpush2.bf16.msra.mxu0 0
    %4010 = vmatprep.subr.bf16.mxu0 0
    %4011 = vmatpush2.bf16.msra.mxu0 0
    %4012 = vmatprep.subr.bf16.mxu0 0
    %4013 = vmatpush2.bf16.msra.mxu0 0
    %4014 = vmatprep.mubr.bf16.mxu0 0
    %4015 = vmatmul.mubr.bf16.gmra.mxu0 %v3977
    %v4016 = vpop.f32.mrf.mxu0
    %v4017 = vadd.f32 0.0, %v4016
    %v4018 = vpop.f32.mrf.mxu0
    %v4019 = vpop.f32.mrf.mxu0
    %v4020 = vadd.f32 0.0, %v4019
    %v4021 = vpop.f32.mrf.mxu0
    %4022 = vmatprep.mubr.bf16.mxu0 0
    %4023 = vmatmul.mubr.bf16.gmra.mxu0 %v3980
    %v4024 = vpop.f32.mrf.mxu0
    %v4025 = vadd.f32 0.0, %v4024
    %v4026 = vpop.f32.mrf.mxu0
    %v4027 = vpop.f32.mrf.mxu0
    %v4028 = vadd.f32 0.0, %v4027
    %v4029 = vpop.f32.mrf.mxu0
    %4030 = vdwg.mxu0
    %v4031 = vpack.c.bf16 %v4020, %v4017
    %v4032 = vpack.c.bf16 %v4028, %v4025
    %s4033 = scalar_lea.vmem [#allocation10], 32
    %v4034 = vld [vmem:[%s4033] sm:$0xf]
    %v4035 = vld [vmem:[%s4033 + $0x4] sm:$0xf]
    %v4036 = vld [vmem:[%s4033 + $0x8] sm:$0xf]
    %v4037 = vld [vmem:[%s4033 + $0xc] sm:$0xf]
    %v4038 = vld [vmem:[%s4033 + $0x10] sm:$0xf]
    %v4039 = vld [vmem:[%s4033 + $0x14] sm:$0xf]
    %v4040 = vld [vmem:[%s4033 + $0x18] sm:$0xf]
    %v4041 = vld [vmem:[%s4033 + $0x1c] sm:$0xf]
    %v4050 = vunpack.c.l.b16 %v4034
    %v4051 = vunpack.c.l.b16 %v4035
    %v4052 = vunpack.c.l.b16 %v4036
    %v4053 = vunpack.c.l.b16 %v4037
    %v4054 = vunpack.c.l.b16 %v4038
    %v4055 = vunpack.c.l.b16 %v4039
    %v4056 = vunpack.c.l.b16 %v4040
    %v4057 = vunpack.c.l.b16 %v4041
    %v4058 = vpack.c.b16 %v4051, %v4050
    %v4059 = vpack.c.b16 %v4053, %v4052
    %v4060 = vpack.c.b16 %v4055, %v4054
    %v4061 = vpack.c.b16 %v4057, %v4056
    %vm4066 = vcmask 523264
    %v4068 = vsel %vm4066, %v4031, 0
    %v4071 = vsel %vm4066, %v4032, 0
    %4073 = vmatprep.subr.bf16.mxu0 0
    %4074 = vmatpush1.bf16.msra.mxu0 0
    %4075 = vmatprep.subr.bf16.mxu0 0
    %4076 = vmatpush1.bf16.msra.mxu0 0
    %4077 = vmatprep.subr.bf16.mxu0 0
    %4078 = vmatpush1.bf16.msra.mxu0 0
    %4079 = vmatprep.subr.bf16.mxu0 0
    %4080 = vmatpush1.bf16.msra.mxu0 0
    %4081 = vmatprep.subr.bf16.mxu0 0
    %4082 = vmatpush1.bf16.msra.mxu0 %v4061
    %4083 = vmatprep.subr.bf16.mxu0 0
    %4084 = vmatpush1.bf16.msra.mxu0 %v4060
    %4085 = vmatprep.subr.bf16.mxu0 0
    %4086 = vmatpush1.bf16.msra.mxu0 %v4059
    %4087 = vmatprep.subr.bf16.mxu0 0
    %4088 = vmatpush1.bf16.msra.mxu0 %v4058
    %4089 = vmatprep.subr.bf16.mxu0 0
    %4090 = vmatpush2.bf16.msra.mxu0 0
    %4091 = vmatprep.subr.bf16.mxu0 0
    %4092 = vmatpush2.bf16.msra.mxu0 0
    %4093 = vmatprep.subr.bf16.mxu0 0
    %4094 = vmatpush2.bf16.msra.mxu0 0
    %4095 = vmatprep.subr.bf16.mxu0 0
    %4096 = vmatpush2.bf16.msra.mxu0 0
    %4097 = vmatprep.subr.bf16.mxu0 0
    %4098 = vmatpush2.bf16.msra.mxu0 0
    %4099 = vmatprep.subr.bf16.mxu0 0
    %4100 = vmatpush2.bf16.msra.mxu0 0
    %4101 = vmatprep.subr.bf16.mxu0 0
    %4102 = vmatpush2.bf16.msra.mxu0 0
    %4103 = vmatprep.subr.bf16.mxu0 0
    %4104 = vmatpush2.bf16.msra.mxu0 0
    %4105 = vmatprep.mubr.bf16.mxu0 0
    %4106 = vmatmul.mubr.bf16.gmra.mxu0 %v4068
    %v4107 = vpop.f32.mrf.mxu0
    %v4108 = vadd.f32 0.0, %v4107
    %v4109 = vpop.f32.mrf.mxu0
    %v4110 = vpop.f32.mrf.mxu0
    %v4111 = vadd.f32 0.0, %v4110
    %v4112 = vpop.f32.mrf.mxu0
    %4113 = vmatprep.mubr.bf16.mxu0 0
    %4114 = vmatmul.mubr.bf16.gmra.mxu0 %v4071
    %v4115 = vpop.f32.mrf.mxu0
    %v4116 = vadd.f32 0.0, %v4115
    %v4117 = vpop.f32.mrf.mxu0
    %v4118 = vpop.f32.mrf.mxu0
    %v4119 = vadd.f32 0.0, %v4118
    %v4120 = vpop.f32.mrf.mxu0
    %4121 = vdwg.mxu0
    %v4130 = vunpack.c.l.b16 %v3953
    %v4131 = vunpack.c.l.b16 %v3954
    %v4132 = vunpack.c.l.b16 %v3955
    %v4133 = vunpack.c.l.b16 %v3956
    %v4134 = vunpack.c.l.b16 %v3957
    %v4135 = vunpack.c.l.b16 %v3958
    %v4136 = vunpack.c.l.b16 %v3959
    %v4137 = vunpack.c.l.b16 %v3960
    %v4138 = vpack.c.b16 %v4131, %v4130
    %v4139 = vpack.c.b16 %v4133, %v4132
    %v4140 = vpack.c.b16 %v4135, %v4134
    %v4141 = vpack.c.b16 %v4137, %v4136
    %v4147 = vsel %vm4066, %v3951, 0
    %v4150 = vsel %vm4066, %v3952, 0
    %4152 = vmatprep.subr.bf16.mxu0 0
    %4153 = vmatpush1.bf16.msra.mxu0 0
    %4154 = vmatprep.subr.bf16.mxu0 0
    %4155 = vmatpush1.bf16.msra.mxu0 0
    %4156 = vmatprep.subr.bf16.mxu0 0
    %4157 = vmatpush1.bf16.msra.mxu0 0
    %4158 = vmatprep.subr.bf16.mxu0 0
    %4159 = vmatpush1.bf16.msra.mxu0 0
    %4160 = vmatprep.subr.bf16.mxu0 0
    %4161 = vmatpush1.bf16.msra.mxu0 %v4141
    %4162 = vmatprep.subr.bf16.mxu0 0
    %4163 = vmatpush1.bf16.msra.mxu0 %v4140
    %4164 = vmatprep.subr.bf16.mxu0 0
    %4165 = vmatpush1.bf16.msra.mxu0 %v4139
    %4166 = vmatprep.subr.bf16.mxu0 0
    %4167 = vmatpush1.bf16.msra.mxu0 %v4138
    %4168 = vmatprep.subr.bf16.mxu0 0
    %4169 = vmatpush2.bf16.msra.mxu0 0
    %4170 = vmatprep.subr.bf16.mxu0 0
    %4171 = vmatpush2.bf16.msra.mxu0 0
    %4172 = vmatprep.subr.bf16.mxu0 0
    %4173 = vmatpush2.bf16.msra.mxu0 0
    %4174 = vmatprep.subr.bf16.mxu0 0
    %4175 = vmatpush2.bf16.msra.mxu0 0
    %4176 = vmatprep.subr.bf16.mxu0 0
    %4177 = vmatpush2.bf16.msra.mxu0 0
    %4178 = vmatprep.subr.bf16.mxu0 0
    %4179 = vmatpush2.bf16.msra.mxu0 0
    %4180 = vmatprep.subr.bf16.mxu0 0
    %4181 = vmatpush2.bf16.msra.mxu0 0
    %4182 = vmatprep.subr.bf16.mxu0 0
    %4183 = vmatpush2.bf16.msra.mxu0 0
    %4184 = vmatprep.mubr.bf16.mxu0 0
    %4185 = vmatmul.mubr.bf16.gmra.mxu0 %v4147
    %v4186 = vpop.f32.mrf.mxu0
    %v4187 = vadd.f32 %v4108, %v4186
    %v4188 = vpop.f32.mrf.mxu0
    %v4189 = vpop.f32.mrf.mxu0
    %v4190 = vadd.f32 %v4111, %v4189
    %v4191 = vpop.f32.mrf.mxu0
    %4192 = vmatprep.mubr.bf16.mxu0 0
    %4193 = vmatmul.mubr.bf16.gmra.mxu0 %v4150
    %v4194 = vpop.f32.mrf.mxu0
    %v4195 = vadd.f32 %v4116, %v4194
    %v4196 = vpop.f32.mrf.mxu0
    %v4197 = vpop.f32.mrf.mxu0
    %v4198 = vadd.f32 %v4119, %v4197
    %v4199 = vpop.f32.mrf.mxu0
    %4200 = vdwg.mxu0
    %s4201 = scalar_lea.vmem [#allocation9], 32
    %v4202 = vld [vmem:[%s4201] sm:$0xf]
    %v4203 = vld [vmem:[%s4201 + $0x4] sm:$0xf]
    %v4204 = vld [vmem:[%s4201 + $0x8] sm:$0xf]
    %v4205 = vld [vmem:[%s4201 + $0xc] sm:$0xf]
    %v4210 = vunpack.c.l.b16 %v4202
    %v4211 = vunpack.c.l.b16 %v4203
    %v4212 = vunpack.c.l.b16 %v4204
    %v4213 = vunpack.c.l.b16 %v4205
    %v4214 = vpack.c.b16 %v4211, %v4210
    %v4215 = vpack.c.b16 %v4213, %v4212
    %v4217 = vsel %vm1330, %v4214, 0
    %v4220 = vsel %vm1330, %v4215, 0
    %4222 = vmatprep.subr.bf16.mxu0 0
    %4223 = vmatpush1.bf16.msra.mxu0 0
    %4224 = vmatprep.subr.bf16.mxu0 0
    %4225 = vmatpush1.bf16.msra.mxu0 0
    %4226 = vmatprep.subr.bf16.mxu0 0
    %4227 = vmatpush1.bf16.msra.mxu0 0
    %4228 = vmatprep.subr.bf16.mxu0 0
    %4229 = vmatpush1.bf16.msra.mxu0 0
    %4230 = vmatprep.subr.bf16.mxu0 0
    %4231 = vmatpush1.bf16.msra.mxu0 0
    %4232 = vmatprep.subr.bf16.mxu0 0
    %4233 = vmatpush1.bf16.msra.mxu0 0
    %4234 = vmatprep.subr.bf16.mxu0 0
    %4235 = vmatpush1.bf16.msra.mxu0 %v3881
    %4236 = vmatprep.subr.bf16.mxu0 0
    %4237 = vmatpush1.bf16.msra.mxu0 %v3880
    %4238 = vmatprep.subr.bf16.mxu0 0
    %4239 = vmatpush2.bf16.msra.mxu0 0
    %4240 = vmatprep.subr.bf16.mxu0 0
    %4241 = vmatpush2.bf16.msra.mxu0 0
    %4242 = vmatprep.subr.bf16.mxu0 0
    %4243 = vmatpush2.bf16.msra.mxu0 0
    %4244 = vmatprep.subr.bf16.mxu0 0
    %4245 = vmatpush2.bf16.msra.mxu0 0
    %4246 = vmatprep.subr.bf16.mxu0 0
    %4247 = vmatpush2.bf16.msra.mxu0 0
    %4248 = vmatprep.subr.bf16.mxu0 0
    %4249 = vmatpush2.bf16.msra.mxu0 0
    %4250 = vmatprep.subr.bf16.mxu0 0
    %4251 = vmatpush2.bf16.msra.mxu0 0
    %4252 = vmatprep.subr.bf16.mxu0 0
    %4253 = vmatpush2.bf16.msra.mxu0 0
    %4254 = vmatprep.mubr.bf16.mxu0 0
    %4255 = vmatmul.mubr.bf16.gmra.mxu0 %v4217
    %v4256 = vpop.f32.mrf.mxu0
    %v4257 = vadd.f32 0.0, %v4256
    %v4258 = vpop.f32.mrf.mxu0
    %v4259 = vpop.f32.mrf.mxu0
    %v4260 = vadd.f32 0.0, %v4259
    %v4261 = vpop.f32.mrf.mxu0
    %4262 = vmatprep.mubr.bf16.mxu0 0
    %4263 = vmatmul.mubr.bf16.gmra.mxu0 %v4220
    %v4264 = vpop.f32.mrf.mxu0
    %v4265 = vadd.f32 0.0, %v4264
    %v4266 = vpop.f32.mrf.mxu0
    %v4267 = vpop.f32.mrf.mxu0
    %v4268 = vadd.f32 0.0, %v4267
    %v4269 = vpop.f32.mrf.mxu0
    %4270 = vdwg.mxu0
    %v4271 = vpack.c.bf16 %v4260, %v4257
    %v4272 = vpack.c.bf16 %v4268, %v4265
    %s4273 = scalar_lea.vmem [#allocation10], 64
    %v4274 = vld [vmem:[%s4273] sm:$0xf]
    %v4275 = vld [vmem:[%s4273 + $0x4] sm:$0xf]
    %v4276 = vld [vmem:[%s4273 + $0x8] sm:$0xf]
    %v4277 = vld [vmem:[%s4273 + $0xc] sm:$0xf]
    %v4278 = vld [vmem:[%s4273 + $0x10] sm:$0xf]
    %v4279 = vld [vmem:[%s4273 + $0x14] sm:$0xf]
    %v4280 = vld [vmem:[%s4273 + $0x18] sm:$0xf]
    %v4281 = vld [vmem:[%s4273 + $0x1c] sm:$0xf]
    %v4290 = vunpack.c.l.b16 %v4274
    %v4291 = vunpack.c.l.b16 %v4275
    %v4292 = vunpack.c.l.b16 %v4276
    %v4293 = vunpack.c.l.b16 %v4277
    %v4294 = vunpack.c.l.b16 %v4278
    %v4295 = vunpack.c.l.b16 %v4279
    %v4296 = vunpack.c.l.b16 %v4280
    %v4297 = vunpack.c.l.b16 %v4281
    %v4298 = vpack.c.b16 %v4291, %v4290
    %v4299 = vpack.c.b16 %v4293, %v4292
    %v4300 = vpack.c.b16 %v4295, %v4294
    %v4301 = vpack.c.b16 %v4297, %v4296
    %v4307 = vsel %vm4066, %v4271, 0
    %v4310 = vsel %vm4066, %v4272, 0
    %4312 = vmatprep.subr.bf16.mxu0 0
    %4313 = vmatpush1.bf16.msra.mxu0 0
    %4314 = vmatprep.subr.bf16.mxu0 0
    %4315 = vmatpush1.bf16.msra.mxu0 0
    %4316 = vmatprep.subr.bf16.mxu0 0
    %4317 = vmatpush1.bf16.msra.mxu0 0
    %4318 = vmatprep.subr.bf16.mxu0 0
    %4319 = vmatpush1.bf16.msra.mxu0 0
    %4320 = vmatprep.subr.bf16.mxu0 0
    %4321 = vmatpush1.bf16.msra.mxu0 %v4301
    %4322 = vmatprep.subr.bf16.mxu0 0
    %4323 = vmatpush1.bf16.msra.mxu0 %v4300
    %4324 = vmatprep.subr.bf16.mxu0 0
    %4325 = vmatpush1.bf16.msra.mxu0 %v4299
    %4326 = vmatprep.subr.bf16.mxu0 0
    %4327 = vmatpush1.bf16.msra.mxu0 %v4298
    %4328 = vmatprep.subr.bf16.mxu0 0
    %4329 = vmatpush2.bf16.msra.mxu0 0
    %4330 = vmatprep.subr.bf16.mxu0 0
    %4331 = vmatpush2.bf16.msra.mxu0 0
    %4332 = vmatprep.subr.bf16.mxu0 0
    %4333 = vmatpush2.bf16.msra.mxu0 0
    %4334 = vmatprep.subr.bf16.mxu0 0
    %4335 = vmatpush2.bf16.msra.mxu0 0
    %4336 = vmatprep.subr.bf16.mxu0 0
    %4337 = vmatpush2.bf16.msra.mxu0 0
    %4338 = vmatprep.subr.bf16.mxu0 0
    %4339 = vmatpush2.bf16.msra.mxu0 0
    %4340 = vmatprep.subr.bf16.mxu0 0
    %4341 = vmatpush2.bf16.msra.mxu0 0
    %4342 = vmatprep.subr.bf16.mxu0 0
    %4343 = vmatpush2.bf16.msra.mxu0 0
    %4344 = vmatprep.mubr.bf16.mxu0 0
    %4345 = vmatmul.mubr.bf16.gmra.mxu0 %v4307
    %v4346 = vpop.f32.mrf.mxu0
    %v4347 = vadd.f32 0.0, %v4346
    %v4348 = vpop.f32.mrf.mxu0
    %v4349 = vpop.f32.mrf.mxu0
    %v4350 = vadd.f32 0.0, %v4349
    %v4351 = vpop.f32.mrf.mxu0
    %4352 = vmatprep.mubr.bf16.mxu0 0
    %4353 = vmatmul.mubr.bf16.gmra.mxu0 %v4310
    %v4354 = vpop.f32.mrf.mxu0
    %v4355 = vadd.f32 0.0, %v4354
    %v4356 = vpop.f32.mrf.mxu0
    %v4357 = vpop.f32.mrf.mxu0
    %v4358 = vadd.f32 0.0, %v4357
    %v4359 = vpop.f32.mrf.mxu0
    %4360 = vdwg.mxu0
    %v4361 = vadd.f32 %v4187, %v4347
    %v4362 = vadd.f32 %v4190, %v4350
    %v4363 = vadd.f32 %v4195, %v4355
    %v4364 = vadd.f32 %v4198, %v4358
    %s4365 = scalar_lea.vmem [#allocation9], 48
    %v4366 = vld [vmem:[%s4365] sm:$0xf]
    %v4367 = vld [vmem:[%s4365 + $0x4] sm:$0xf]
    %v4368 = vld [vmem:[%s4365 + $0x8] sm:$0xf]
    %v4369 = vld [vmem:[%s4365 + $0xc] sm:$0xf]
    %v4374 = vunpack.c.l.b16 %v4366
    %v4375 = vunpack.c.l.b16 %v4367
    %v4376 = vunpack.c.l.b16 %v4368
    %v4377 = vunpack.c.l.b16 %v4369
    %v4378 = vpack.c.b16 %v4375, %v4374
    %v4379 = vpack.c.b16 %v4377, %v4376
    %v4381 = vsel %vm1330, %v4378, 0
    %v4384 = vsel %vm1330, %v4379, 0
    %4386 = vmatprep.subr.bf16.mxu0 0
    %4387 = vmatpush1.bf16.msra.mxu0 0
    %4388 = vmatprep.subr.bf16.mxu0 0
    %4389 = vmatpush1.bf16.msra.mxu0 0
    %4390 = vmatprep.subr.bf16.mxu0 0
    %4391 = vmatpush1.bf16.msra.mxu0 0
    %4392 = vmatprep.subr.bf16.mxu0 0
    %4393 = vmatpush1.bf16.msra.mxu0 0
    %4394 = vmatprep.subr.bf16.mxu0 0
    %4395 = vmatpush1.bf16.msra.mxu0 0
    %4396 = vmatprep.subr.bf16.mxu0 0
    %4397 = vmatpush1.bf16.msra.mxu0 0
    %4398 = vmatprep.subr.bf16.mxu0 0
    %4399 = vmatpush1.bf16.msra.mxu0 %v3881
    %4400 = vmatprep.subr.bf16.mxu0 0
    %4401 = vmatpush1.bf16.msra.mxu0 %v3880
    %4402 = vmatprep.subr.bf16.mxu0 0
    %4403 = vmatpush2.bf16.msra.mxu0 0
    %4404 = vmatprep.subr.bf16.mxu0 0
    %4405 = vmatpush2.bf16.msra.mxu0 0
    %4406 = vmatprep.subr.bf16.mxu0 0
    %4407 = vmatpush2.bf16.msra.mxu0 0
    %4408 = vmatprep.subr.bf16.mxu0 0
    %4409 = vmatpush2.bf16.msra.mxu0 0
    %4410 = vmatprep.subr.bf16.mxu0 0
    %4411 = vmatpush2.bf16.msra.mxu0 0
    %4412 = vmatprep.subr.bf16.mxu0 0
    %4413 = vmatpush2.bf16.msra.mxu0 0
    %4414 = vmatprep.subr.bf16.mxu0 0
    %4415 = vmatpush2.bf16.msra.mxu0 0
    %4416 = vmatprep.subr.bf16.mxu0 0
    %4417 = vmatpush2.bf16.msra.mxu0 0
    %4418 = vmatprep.mubr.bf16.mxu0 0
    %4419 = vmatmul.mubr.bf16.gmra.mxu0 %v4381
    %v4420 = vpop.f32.mrf.mxu0
    %v4421 = vadd.f32 0.0, %v4420
    %v4422 = vpop.f32.mrf.mxu0
    %v4423 = vpop.f32.mrf.mxu0
    %v4424 = vadd.f32 0.0, %v4423
    %v4425 = vpop.f32.mrf.mxu0
    %4426 = vmatprep.mubr.bf16.mxu0 0
    %4427 = vmatmul.mubr.bf16.gmra.mxu0 %v4384
    %v4428 = vpop.f32.mrf.mxu0
    %v4429 = vadd.f32 0.0, %v4428
    %v4430 = vpop.f32.mrf.mxu0
    %v4431 = vpop.f32.mrf.mxu0
    %v4432 = vadd.f32 0.0, %v4431
    %v4433 = vpop.f32.mrf.mxu0
    %4434 = vdwg.mxu0
    %v4435 = vpack.c.bf16 %v4424, %v4421
    %v4436 = vpack.c.bf16 %v4432, %v4429
    %s4437 = scalar_lea.vmem [#allocation10], 96
    %v4438 = vld [vmem:[%s4437] sm:$0xf]
    %v4439 = vld [vmem:[%s4437 + $0x4] sm:$0xf]
    %v4440 = vld [vmem:[%s4437 + $0x8] sm:$0xf]
    %v4441 = vld [vmem:[%s4437 + $0xc] sm:$0xf]
    %v4442 = vld [vmem:[%s4437 + $0x10] sm:$0xf]
    %v4443 = vld [vmem:[%s4437 + $0x14] sm:$0xf]
    %v4444 = vld [vmem:[%s4437 + $0x18] sm:$0xf]
    %v4445 = vld [vmem:[%s4437 + $0x1c] sm:$0xf]
    %v4454 = vunpack.c.l.b16 %v4438
    %v4455 = vunpack.c.l.b16 %v4439
    %v4456 = vunpack.c.l.b16 %v4440
    %v4457 = vunpack.c.l.b16 %v4441
    %v4458 = vunpack.c.l.b16 %v4442
    %v4459 = vunpack.c.l.b16 %v4443
    %v4460 = vunpack.c.l.b16 %v4444
    %v4461 = vunpack.c.l.b16 %v4445
    %v4462 = vpack.c.b16 %v4455, %v4454
    %v4463 = vpack.c.b16 %v4457, %v4456
    %v4464 = vpack.c.b16 %v4459, %v4458
    %v4465 = vpack.c.b16 %v4461, %v4460
    %v4471 = vsel %vm4066, %v4435, 0
    %v4474 = vsel %vm4066, %v4436, 0
    %4476 = vmatprep.subr.bf16.mxu0 0
    %4477 = vmatpush1.bf16.msra.mxu0 0
    %4478 = vmatprep.subr.bf16.mxu0 0
    %4479 = vmatpush1.bf16.msra.mxu0 0
    %4480 = vmatprep.subr.bf16.mxu0 0
    %4481 = vmatpush1.bf16.msra.mxu0 0
    %4482 = vmatprep.subr.bf16.mxu0 0
    %4483 = vmatpush1.bf16.msra.mxu0 0
    %4484 = vmatprep.subr.bf16.mxu0 0
    %4485 = vmatpush1.bf16.msra.mxu0 %v4465
    %4486 = vmatprep.subr.bf16.mxu0 0
    %4487 = vmatpush1.bf16.msra.mxu0 %v4464
    %4488 = vmatprep.subr.bf16.mxu0 0
    %4489 = vmatpush1.bf16.msra.mxu0 %v4463
    %4490 = vmatprep.subr.bf16.mxu0 0
    %4491 = vmatpush1.bf16.msra.mxu0 %v4462
    %4492 = vmatprep.subr.bf16.mxu0 0
    %4493 = vmatpush2.bf16.msra.mxu0 0
    %4494 = vmatprep.subr.bf16.mxu0 0
    %4495 = vmatpush2.bf16.msra.mxu0 0
    %4496 = vmatprep.subr.bf16.mxu0 0
    %4497 = vmatpush2.bf16.msra.mxu0 0
    %4498 = vmatprep.subr.bf16.mxu0 0
    %4499 = vmatpush2.bf16.msra.mxu0 0
    %4500 = vmatprep.subr.bf16.mxu0 0
    %4501 = vmatpush2.bf16.msra.mxu0 0
    %4502 = vmatprep.subr.bf16.mxu0 0
    %4503 = vmatpush2.bf16.msra.mxu0 0
    %4504 = vmatprep.subr.bf16.mxu0 0
    %4505 = vmatpush2.bf16.msra.mxu0 0
    %4506 = vmatprep.subr.bf16.mxu0 0
    %4507 = vmatpush2.bf16.msra.mxu0 0
    %4508 = vmatprep.mubr.bf16.mxu0 0
    %4509 = vmatmul.mubr.bf16.gmra.mxu0 %v4471
    %v4510 = vpop.f32.mrf.mxu0
    %v4511 = vadd.f32 0.0, %v4510
    %v4512 = vpop.f32.mrf.mxu0
    %v4513 = vpop.f32.mrf.mxu0
    %v4514 = vadd.f32 0.0, %v4513
    %v4515 = vpop.f32.mrf.mxu0
    %4516 = vmatprep.mubr.bf16.mxu0 0
    %4517 = vmatmul.mubr.bf16.gmra.mxu0 %v4474
    %v4518 = vpop.f32.mrf.mxu0
    %v4519 = vadd.f32 0.0, %v4518
    %v4520 = vpop.f32.mrf.mxu0
    %v4521 = vpop.f32.mrf.mxu0
    %v4522 = vadd.f32 0.0, %v4521
    %v4523 = vpop.f32.mrf.mxu0
    %4524 = vdwg.mxu0
    %v4525 = vadd.f32 %v4361, %v4511
    %v4526 = vadd.f32 %v4362, %v4514
    %v4527 = vadd.f32 %v4363, %v4519
    %v4528 = vadd.f32 %v4364, %v4522
    %s4529 = scalar_lea.vmem [#allocation9], 64
    %v4530 = vld [vmem:[%s4529] sm:$0xf]
    %v4531 = vld [vmem:[%s4529 + $0x4] sm:$0xf]
    %v4532 = vld [vmem:[%s4529 + $0x8] sm:$0xf]
    %v4533 = vld [vmem:[%s4529 + $0xc] sm:$0xf]
    %v4538 = vunpack.c.l.b16 %v4530
    %v4539 = vunpack.c.l.b16 %v4531
    %v4540 = vunpack.c.l.b16 %v4532
    %v4541 = vunpack.c.l.b16 %v4533
    %v4542 = vpack.c.b16 %v4539, %v4538
    %v4543 = vpack.c.b16 %v4541, %v4540
    %v4545 = vsel %vm1330, %v4542, 0
    %v4548 = vsel %vm1330, %v4543, 0
    %4550 = vmatprep.subr.bf16.mxu0 0
    %4551 = vmatpush1.bf16.msra.mxu0 0
    %4552 = vmatprep.subr.bf16.mxu0 0
    %4553 = vmatpush1.bf16.msra.mxu0 0
    %4554 = vmatprep.subr.bf16.mxu0 0
    %4555 = vmatpush1.bf16.msra.mxu0 0
    %4556 = vmatprep.subr.bf16.mxu0 0
    %4557 = vmatpush1.bf16.msra.mxu0 0
    %4558 = vmatprep.subr.bf16.mxu0 0
    %4559 = vmatpush1.bf16.msra.mxu0 0
    %4560 = vmatprep.subr.bf16.mxu0 0
    %4561 = vmatpush1.bf16.msra.mxu0 0
    %4562 = vmatprep.subr.bf16.mxu0 0
    %4563 = vmatpush1.bf16.msra.mxu0 %v3881
    %4564 = vmatprep.subr.bf16.mxu0 0
    %4565 = vmatpush1.bf16.msra.mxu0 %v3880
    %4566 = vmatprep.subr.bf16.mxu0 0
    %4567 = vmatpush2.bf16.msra.mxu0 0
    %4568 = vmatprep.subr.bf16.mxu0 0
    %4569 = vmatpush2.bf16.msra.mxu0 0
    %4570 = vmatprep.subr.bf16.mxu0 0
    %4571 = vmatpush2.bf16.msra.mxu0 0
    %4572 = vmatprep.subr.bf16.mxu0 0
    %4573 = vmatpush2.bf16.msra.mxu0 0
    %4574 = vmatprep.subr.bf16.mxu0 0
    %4575 = vmatpush2.bf16.msra.mxu0 0
    %4576 = vmatprep.subr.bf16.mxu0 0
    %4577 = vmatpush2.bf16.msra.mxu0 0
    %4578 = vmatprep.subr.bf16.mxu0 0
    %4579 = vmatpush2.bf16.msra.mxu0 0
    %4580 = vmatprep.subr.bf16.mxu0 0
    %4581 = vmatpush2.bf16.msra.mxu0 0
    %4582 = vmatprep.mubr.bf16.mxu0 0
    %4583 = vmatmul.mubr.bf16.gmra.mxu0 %v4545
    %v4584 = vpop.f32.mrf.mxu0
    %v4585 = vadd.f32 0.0, %v4584
    %v4586 = vpop.f32.mrf.mxu0
    %v4587 = vpop.f32.mrf.mxu0
    %v4588 = vadd.f32 0.0, %v4587
    %v4589 = vpop.f32.mrf.mxu0
    %4590 = vmatprep.mubr.bf16.mxu0 0
    %4591 = vmatmul.mubr.bf16.gmra.mxu0 %v4548
    %v4592 = vpop.f32.mrf.mxu0
    %v4593 = vadd.f32 0.0, %v4592
    %v4594 = vpop.f32.mrf.mxu0
    %v4595 = vpop.f32.mrf.mxu0
    %v4596 = vadd.f32 0.0, %v4595
    %v4597 = vpop.f32.mrf.mxu0
    %4598 = vdwg.mxu0
    %v4599 = vpack.c.bf16 %v4588, %v4585
    %v4600 = vpack.c.bf16 %v4596, %v4593
    %s4601 = scalar_lea.vmem [#allocation10], 128
    %v4602 = vld [vmem:[%s4601] sm:$0xf]
    %v4603 = vld [vmem:[%s4601 + $0x4] sm:$0xf]
    %v4604 = vld [vmem:[%s4601 + $0x8] sm:$0xf]
    %v4605 = vld [vmem:[%s4601 + $0xc] sm:$0xf]
    %v4606 = vld [vmem:[%s4601 + $0x10] sm:$0xf]
    %v4607 = vld [vmem:[%s4601 + $0x14] sm:$0xf]
    %v4608 = vld [vmem:[%s4601 + $0x18] sm:$0xf]
    %v4609 = vld [vmem:[%s4601 + $0x1c] sm:$0xf]
    %v4618 = vunpack.c.l.b16 %v4602
    %v4619 = vunpack.c.l.b16 %v4603
    %v4620 = vunpack.c.l.b16 %v4604
    %v4621 = vunpack.c.l.b16 %v4605
    %v4622 = vunpack.c.l.b16 %v4606
    %v4623 = vunpack.c.l.b16 %v4607
    %v4624 = vunpack.c.l.b16 %v4608
    %v4625 = vunpack.c.l.b16 %v4609
    %v4626 = vpack.c.b16 %v4619, %v4618
    %v4627 = vpack.c.b16 %v4621, %v4620
    %v4628 = vpack.c.b16 %v4623, %v4622
    %v4629 = vpack.c.b16 %v4625, %v4624
    %v4635 = vsel %vm4066, %v4599, 0
    %v4638 = vsel %vm4066, %v4600, 0
    %4640 = vmatprep.subr.bf16.mxu0 0
    %4641 = vmatpush1.bf16.msra.mxu0 0
    %4642 = vmatprep.subr.bf16.mxu0 0
    %4643 = vmatpush1.bf16.msra.mxu0 0
    %4644 = vmatprep.subr.bf16.mxu0 0
    %4645 = vmatpush1.bf16.msra.mxu0 0
    %4646 = vmatprep.subr.bf16.mxu0 0
    %4647 = vmatpush1.bf16.msra.mxu0 0
    %4648 = vmatprep.subr.bf16.mxu0 0
    %4649 = vmatpush1.bf16.msra.mxu0 %v4629
    %4650 = vmatprep.subr.bf16.mxu0 0
    %4651 = vmatpush1.bf16.msra.mxu0 %v4628
    %4652 = vmatprep.subr.bf16.mxu0 0
    %4653 = vmatpush1.bf16.msra.mxu0 %v4627
    %4654 = vmatprep.subr.bf16.mxu0 0
    %4655 = vmatpush1.bf16.msra.mxu0 %v4626
    %4656 = vmatprep.subr.bf16.mxu0 0
    %4657 = vmatpush2.bf16.msra.mxu0 0
    %4658 = vmatprep.subr.bf16.mxu0 0
    %4659 = vmatpush2.bf16.msra.mxu0 0
    %4660 = vmatprep.subr.bf16.mxu0 0
    %4661 = vmatpush2.bf16.msra.mxu0 0
    %4662 = vmatprep.subr.bf16.mxu0 0
    %4663 = vmatpush2.bf16.msra.mxu0 0
    %4664 = vmatprep.subr.bf16.mxu0 0
    %4665 = vmatpush2.bf16.msra.mxu0 0
    %4666 = vmatprep.subr.bf16.mxu0 0
    %4667 = vmatpush2.bf16.msra.mxu0 0
    %4668 = vmatprep.subr.bf16.mxu0 0
    %4669 = vmatpush2.bf16.msra.mxu0 0
    %4670 = vmatprep.subr.bf16.mxu0 0
    %4671 = vmatpush2.bf16.msra.mxu0 0
    %4672 = vmatprep.mubr.bf16.mxu0 0
    %4673 = vmatmul.mubr.bf16.gmra.mxu0 %v4635
    %v4674 = vpop.f32.mrf.mxu0
    %v4675 = vadd.f32 0.0, %v4674
    %v4676 = vpop.f32.mrf.mxu0
    %v4677 = vpop.f32.mrf.mxu0
    %v4678 = vadd.f32 0.0, %v4677
    %v4679 = vpop.f32.mrf.mxu0
    %4680 = vmatprep.mubr.bf16.mxu0 0
    %4681 = vmatmul.mubr.bf16.gmra.mxu0 %v4638
    %v4682 = vpop.f32.mrf.mxu0
    %v4683 = vadd.f32 0.0, %v4682
    %v4684 = vpop.f32.mrf.mxu0
    %v4685 = vpop.f32.mrf.mxu0
    %v4686 = vadd.f32 0.0, %v4685
    %v4687 = vpop.f32.mrf.mxu0
    %4688 = vdwg.mxu0
    %v4689 = vadd.f32 %v4525, %v4675
    %v4690 = vadd.f32 %v4526, %v4678
    %v4691 = vadd.f32 %v4527, %v4683
    %v4692 = vadd.f32 %v4528, %v4686
    %s4693 = scalar_lea.vmem [#allocation9], 80
    %v4694 = vld [vmem:[%s4693] sm:$0xf]
    %v4695 = vld [vmem:[%s4693 + $0x4] sm:$0xf]
    %v4696 = vld [vmem:[%s4693 + $0x8] sm:$0xf]
    %v4697 = vld [vmem:[%s4693 + $0xc] sm:$0xf]
    %v4702 = vunpack.c.l.b16 %v4694
    %v4703 = vunpack.c.l.b16 %v4695
    %v4704 = vunpack.c.l.b16 %v4696
    %v4705 = vunpack.c.l.b16 %v4697
    %v4706 = vpack.c.b16 %v4703, %v4702
    %v4707 = vpack.c.b16 %v4705, %v4704
    %v4709 = vsel %vm1330, %v4706, 0
    %v4712 = vsel %vm1330, %v4707, 0
    %4714 = vmatprep.subr.bf16.mxu0 0
    %4715 = vmatpush1.bf16.msra.mxu0 0
    %4716 = vmatprep.subr.bf16.mxu0 0
    %4717 = vmatpush1.bf16.msra.mxu0 0
    %4718 = vmatprep.subr.bf16.mxu0 0
    %4719 = vmatpush1.bf16.msra.mxu0 0
    %4720 = vmatprep.subr.bf16.mxu0 0
    %4721 = vmatpush1.bf16.msra.mxu0 0
    %4722 = vmatprep.subr.bf16.mxu0 0
    %4723 = vmatpush1.bf16.msra.mxu0 0
    %4724 = vmatprep.subr.bf16.mxu0 0
    %4725 = vmatpush1.bf16.msra.mxu0 0
    %4726 = vmatprep.subr.bf16.mxu0 0
    %4727 = vmatpush1.bf16.msra.mxu0 %v3881
    %4728 = vmatprep.subr.bf16.mxu0 0
    %4729 = vmatpush1.bf16.msra.mxu0 %v3880
    %4730 = vmatprep.subr.bf16.mxu0 0
    %4731 = vmatpush2.bf16.msra.mxu0 0
    %4732 = vmatprep.subr.bf16.mxu0 0
    %4733 = vmatpush2.bf16.msra.mxu0 0
    %4734 = vmatprep.subr.bf16.mxu0 0
    %4735 = vmatpush2.bf16.msra.mxu0 0
    %4736 = vmatprep.subr.bf16.mxu0 0
    %4737 = vmatpush2.bf16.msra.mxu0 0
    %4738 = vmatprep.subr.bf16.mxu0 0
    %4739 = vmatpush2.bf16.msra.mxu0 0
    %4740 = vmatprep.subr.bf16.mxu0 0
    %4741 = vmatpush2.bf16.msra.mxu0 0
    %4742 = vmatprep.subr.bf16.mxu0 0
    %4743 = vmatpush2.bf16.msra.mxu0 0
    %4744 = vmatprep.subr.bf16.mxu0 0
    %4745 = vmatpush2.bf16.msra.mxu0 0
    %4746 = vmatprep.mubr.bf16.mxu0 0
    %4747 = vmatmul.mubr.bf16.gmra.mxu0 %v4709
    %v4748 = vpop.f32.mrf.mxu0
    %v4749 = vadd.f32 0.0, %v4748
    %v4750 = vpop.f32.mrf.mxu0
    %v4751 = vpop.f32.mrf.mxu0
    %v4752 = vadd.f32 0.0, %v4751
    %v4753 = vpop.f32.mrf.mxu0
    %4754 = vmatprep.mubr.bf16.mxu0 0
    %4755 = vmatmul.mubr.bf16.gmra.mxu0 %v4712
    %v4756 = vpop.f32.mrf.mxu0
    %v4757 = vadd.f32 0.0, %v4756
    %v4758 = vpop.f32.mrf.mxu0
    %v4759 = vpop.f32.mrf.mxu0
    %v4760 = vadd.f32 0.0, %v4759
    %v4761 = vpop.f32.mrf.mxu0
    %4762 = vdwg.mxu0
    %v4763 = vpack.c.bf16 %v4752, %v4749
    %v4764 = vpack.c.bf16 %v4760, %v4757
    %s4765 = scalar_lea.vmem [#allocation10], 160
    %v4766 = vld [vmem:[%s4765] sm:$0xf]
    %v4767 = vld [vmem:[%s4765 + $0x4] sm:$0xf]
    %v4768 = vld [vmem:[%s4765 + $0x8] sm:$0xf]
    %v4769 = vld [vmem:[%s4765 + $0xc] sm:$0xf]
    %v4770 = vld [vmem:[%s4765 + $0x10] sm:$0xf]
    %v4771 = vld [vmem:[%s4765 + $0x14] sm:$0xf]
    %v4772 = vld [vmem:[%s4765 + $0x18] sm:$0xf]
    %v4773 = vld [vmem:[%s4765 + $0x1c] sm:$0xf]
    %v4782 = vunpack.c.l.b16 %v4766
    %v4783 = vunpack.c.l.b16 %v4767
    %v4784 = vunpack.c.l.b16 %v4768
    %v4785 = vunpack.c.l.b16 %v4769
    %v4786 = vunpack.c.l.b16 %v4770
    %v4787 = vunpack.c.l.b16 %v4771
    %v4788 = vunpack.c.l.b16 %v4772
    %v4789 = vunpack.c.l.b16 %v4773
    %v4790 = vpack.c.b16 %v4783, %v4782
    %v4791 = vpack.c.b16 %v4785, %v4784
    %v4792 = vpack.c.b16 %v4787, %v4786
    %v4793 = vpack.c.b16 %v4789, %v4788
    %v4799 = vsel %vm4066, %v4763, 0
    %v4802 = vsel %vm4066, %v4764, 0
    %4804 = vmatprep.subr.bf16.mxu0 0
    %4805 = vmatpush1.bf16.msra.mxu0 0
    %4806 = vmatprep.subr.bf16.mxu0 0
    %4807 = vmatpush1.bf16.msra.mxu0 0
    %4808 = vmatprep.subr.bf16.mxu0 0
    %4809 = vmatpush1.bf16.msra.mxu0 0
    %4810 = vmatprep.subr.bf16.mxu0 0
    %4811 = vmatpush1.bf16.msra.mxu0 0
    %4812 = vmatprep.subr.bf16.mxu0 0
    %4813 = vmatpush1.bf16.msra.mxu0 %v4793
    %4814 = vmatprep.subr.bf16.mxu0 0
    %4815 = vmatpush1.bf16.msra.mxu0 %v4792
    %4816 = vmatprep.subr.bf16.mxu0 0
    %4817 = vmatpush1.bf16.msra.mxu0 %v4791
    %4818 = vmatprep.subr.bf16.mxu0 0
    %4819 = vmatpush1.bf16.msra.mxu0 %v4790
    %4820 = vmatprep.subr.bf16.mxu0 0
    %4821 = vmatpush2.bf16.msra.mxu0 0
    %4822 = vmatprep.subr.bf16.mxu0 0
    %4823 = vmatpush2.bf16.msra.mxu0 0
    %4824 = vmatprep.subr.bf16.mxu0 0
    %4825 = vmatpush2.bf16.msra.mxu0 0
    %4826 = vmatprep.subr.bf16.mxu0 0
    %4827 = vmatpush2.bf16.msra.mxu0 0
    %4828 = vmatprep.subr.bf16.mxu0 0
    %4829 = vmatpush2.bf16.msra.mxu0 0
    %4830 = vmatprep.subr.bf16.mxu0 0
    %4831 = vmatpush2.bf16.msra.mxu0 0
    %4832 = vmatprep.subr.bf16.mxu0 0
    %4833 = vmatpush2.bf16.msra.mxu0 0
    %4834 = vmatprep.subr.bf16.mxu0 0
    %4835 = vmatpush2.bf16.msra.mxu0 0
    %4836 = vmatprep.mubr.bf16.mxu0 0
    %4837 = vmatmul.mubr.bf16.gmra.mxu0 %v4799
    %v4838 = vpop.f32.mrf.mxu0
    %v4839 = vadd.f32 0.0, %v4838
    %v4840 = vpop.f32.mrf.mxu0
    %v4841 = vpop.f32.mrf.mxu0
    %v4842 = vadd.f32 0.0, %v4841
    %v4843 = vpop.f32.mrf.mxu0
    %4844 = vmatprep.mubr.bf16.mxu0 0
    %4845 = vmatmul.mubr.bf16.gmra.mxu0 %v4802
    %v4846 = vpop.f32.mrf.mxu0
    %v4847 = vadd.f32 0.0, %v4846
    %v4848 = vpop.f32.mrf.mxu0
    %v4849 = vpop.f32.mrf.mxu0
    %v4850 = vadd.f32 0.0, %v4849
    %v4851 = vpop.f32.mrf.mxu0
    %4852 = vdwg.mxu0
    %v4853 = vadd.f32 %v4689, %v4839
    %v4854 = vadd.f32 %v4690, %v4842
    %v4855 = vadd.f32 %v4691, %v4847
    %v4856 = vadd.f32 %v4692, %v4850
    %s4857 = scalar_lea.vmem [#allocation9], 96
    %v4858 = vld [vmem:[%s4857] sm:$0xf]
    %v4859 = vld [vmem:[%s4857 + $0x4] sm:$0xf]
    %v4860 = vld [vmem:[%s4857 + $0x8] sm:$0xf]
    %v4861 = vld [vmem:[%s4857 + $0xc] sm:$0xf]
    %v4866 = vunpack.c.l.b16 %v4858
    %v4867 = vunpack.c.l.b16 %v4859
    %v4868 = vunpack.c.l.b16 %v4860
    %v4869 = vunpack.c.l.b16 %v4861
    %v4870 = vpack.c.b16 %v4867, %v4866
    %v4871 = vpack.c.b16 %v4869, %v4868
    %v4873 = vsel %vm1330, %v4870, 0
    %v4876 = vsel %vm1330, %v4871, 0
    %4878 = vmatprep.subr.bf16.mxu0 0
    %4879 = vmatpush1.bf16.msra.mxu0 0
    %4880 = vmatprep.subr.bf16.mxu0 0
    %4881 = vmatpush1.bf16.msra.mxu0 0
    %4882 = vmatprep.subr.bf16.mxu0 0
    %4883 = vmatpush1.bf16.msra.mxu0 0
    %4884 = vmatprep.subr.bf16.mxu0 0
    %4885 = vmatpush1.bf16.msra.mxu0 0
    %4886 = vmatprep.subr.bf16.mxu0 0
    %4887 = vmatpush1.bf16.msra.mxu0 0
    %4888 = vmatprep.subr.bf16.mxu0 0
    %4889 = vmatpush1.bf16.msra.mxu0 0
    %4890 = vmatprep.subr.bf16.mxu0 0
    %4891 = vmatpush1.bf16.msra.mxu0 %v3881
    %4892 = vmatprep.subr.bf16.mxu0 0
    %4893 = vmatpush1.bf16.msra.mxu0 %v3880
    %4894 = vmatprep.subr.bf16.mxu0 0
    %4895 = vmatpush2.bf16.msra.mxu0 0
    %4896 = vmatprep.subr.bf16.mxu0 0
    %4897 = vmatpush2.bf16.msra.mxu0 0
    %4898 = vmatprep.subr.bf16.mxu0 0
    %4899 = vmatpush2.bf16.msra.mxu0 0
    %4900 = vmatprep.subr.bf16.mxu0 0
    %4901 = vmatpush2.bf16.msra.mxu0 0
    %4902 = vmatprep.subr.bf16.mxu0 0
    %4903 = vmatpush2.bf16.msra.mxu0 0
    %4904 = vmatprep.subr.bf16.mxu0 0
    %4905 = vmatpush2.bf16.msra.mxu0 0
    %4906 = vmatprep.subr.bf16.mxu0 0
    %4907 = vmatpush2.bf16.msra.mxu0 0
    %4908 = vmatprep.subr.bf16.mxu0 0
    %4909 = vmatpush2.bf16.msra.mxu0 0
    %4910 = vmatprep.mubr.bf16.mxu0 0
    %4911 = vmatmul.mubr.bf16.gmra.mxu0 %v4873
    %v4912 = vpop.f32.mrf.mxu0
    %v4913 = vadd.f32 0.0, %v4912
    %v4914 = vpop.f32.mrf.mxu0
    %v4915 = vpop.f32.mrf.mxu0
    %v4916 = vadd.f32 0.0, %v4915
    %v4917 = vpop.f32.mrf.mxu0
    %4918 = vmatprep.mubr.bf16.mxu0 0
    %4919 = vmatmul.mubr.bf16.gmra.mxu0 %v4876
    %v4920 = vpop.f32.mrf.mxu0
    %v4921 = vadd.f32 0.0, %v4920
    %v4922 = vpop.f32.mrf.mxu0
    %v4923 = vpop.f32.mrf.mxu0
    %v4924 = vadd.f32 0.0, %v4923
    %v4925 = vpop.f32.mrf.mxu0
    %4926 = vdwg.mxu0
    %v4927 = vpack.c.bf16 %v4916, %v4913
    %v4928 = vpack.c.bf16 %v4924, %v4921
    %s4929 = scalar_lea.vmem [#allocation10], 192
    %v4930 = vld [vmem:[%s4929] sm:$0xf]
    %v4931 = vld [vmem:[%s4929 + $0x4] sm:$0xf]
    %v4932 = vld [vmem:[%s4929 + $0x8] sm:$0xf]
    %v4933 = vld [vmem:[%s4929 + $0xc] sm:$0xf]
    %v4934 = vld [vmem:[%s4929 + $0x10] sm:$0xf]
    %v4935 = vld [vmem:[%s4929 + $0x14] sm:$0xf]
    %v4936 = vld [vmem:[%s4929 + $0x18] sm:$0xf]
    %v4937 = vld [vmem:[%s4929 + $0x1c] sm:$0xf]
    %v4946 = vunpack.c.l.b16 %v4930
    %v4947 = vunpack.c.l.b16 %v4931
    %v4948 = vunpack.c.l.b16 %v4932
    %v4949 = vunpack.c.l.b16 %v4933
    %v4950 = vunpack.c.l.b16 %v4934
    %v4951 = vunpack.c.l.b16 %v4935
    %v4952 = vunpack.c.l.b16 %v4936
    %v4953 = vunpack.c.l.b16 %v4937
    %v4954 = vpack.c.b16 %v4947, %v4946
    %v4955 = vpack.c.b16 %v4949, %v4948
    %v4956 = vpack.c.b16 %v4951, %v4950
    %v4957 = vpack.c.b16 %v4953, %v4952
    %v4963 = vsel %vm4066, %v4927, 0
    %v4966 = vsel %vm4066, %v4928, 0
    %4968 = vmatprep.subr.bf16.mxu0 0
    %4969 = vmatpush1.bf16.msra.mxu0 0
    %4970 = vmatprep.subr.bf16.mxu0 0
    %4971 = vmatpush1.bf16.msra.mxu0 0
    %4972 = vmatprep.subr.bf16.mxu0 0
    %4973 = vmatpush1.bf16.msra.mxu0 0
    %4974 = vmatprep.subr.bf16.mxu0 0
    %4975 = vmatpush1.bf16.msra.mxu0 0
    %4976 = vmatprep.subr.bf16.mxu0 0
    %4977 = vmatpush1.bf16.msra.mxu0 %v4957
    %4978 = vmatprep.subr.bf16.mxu0 0
    %4979 = vmatpush1.bf16.msra.mxu0 %v4956
    %4980 = vmatprep.subr.bf16.mxu0 0
    %4981 = vmatpush1.bf16.msra.mxu0 %v4955
    %4982 = vmatprep.subr.bf16.mxu0 0
    %4983 = vmatpush1.bf16.msra.mxu0 %v4954
    %4984 = vmatprep.subr.bf16.mxu0 0
    %4985 = vmatpush2.bf16.msra.mxu0 0
    %4986 = vmatprep.subr.bf16.mxu0 0
    %4987 = vmatpush2.bf16.msra.mxu0 0
    %4988 = vmatprep.subr.bf16.mxu0 0
    %4989 = vmatpush2.bf16.msra.mxu0 0
    %4990 = vmatprep.subr.bf16.mxu0 0
    %4991 = vmatpush2.bf16.msra.mxu0 0
    %4992 = vmatprep.subr.bf16.mxu0 0
    %4993 = vmatpush2.bf16.msra.mxu0 0
    %4994 = vmatprep.subr.bf16.mxu0 0
    %4995 = vmatpush2.bf16.msra.mxu0 0
    %4996 = vmatprep.subr.bf16.mxu0 0
    %4997 = vmatpush2.bf16.msra.mxu0 0
    %4998 = vmatprep.subr.bf16.mxu0 0
    %4999 = vmatpush2.bf16.msra.mxu0 0
    %5000 = vmatprep.mubr.bf16.mxu0 0
    %5001 = vmatmul.mubr.bf16.gmra.mxu0 %v4963
    %v5002 = vpop.f32.mrf.mxu0
    %v5003 = vadd.f32 0.0, %v5002
    %v5004 = vpop.f32.mrf.mxu0
    %v5005 = vpop.f32.mrf.mxu0
    %v5006 = vadd.f32 0.0, %v5005
    %v5007 = vpop.f32.mrf.mxu0
    %5008 = vmatprep.mubr.bf16.mxu0 0
    %5009 = vmatmul.mubr.bf16.gmra.mxu0 %v4966
    %v5010 = vpop.f32.mrf.mxu0
    %v5011 = vadd.f32 0.0, %v5010
    %v5012 = vpop.f32.mrf.mxu0
    %v5013 = vpop.f32.mrf.mxu0
    %v5014 = vadd.f32 0.0, %v5013
    %v5015 = vpop.f32.mrf.mxu0
    %5016 = vdwg.mxu0
    %v5017 = vadd.f32 %v4853, %v5003
    %v5018 = vadd.f32 %v4854, %v5006
    %v5019 = vadd.f32 %v4855, %v5011
    %v5020 = vadd.f32 %v4856, %v5014
    %s5021 = scalar_lea.vmem [#allocation9], 112
    %v5022 = vld [vmem:[%s5021] sm:$0xf]
    %v5023 = vld [vmem:[%s5021 + $0x4] sm:$0xf]
    %v5024 = vld [vmem:[%s5021 + $0x8] sm:$0xf]
    %v5025 = vld [vmem:[%s5021 + $0xc] sm:$0xf]
    %v5030 = vunpack.c.l.b16 %v5022
    %v5031 = vunpack.c.l.b16 %v5023
    %v5032 = vunpack.c.l.b16 %v5024
    %v5033 = vunpack.c.l.b16 %v5025
    %v5034 = vpack.c.b16 %v5031, %v5030
    %v5035 = vpack.c.b16 %v5033, %v5032
    %v5037 = vsel %vm1330, %v5034, 0
    %v5040 = vsel %vm1330, %v5035, 0
    %5042 = vmatprep.subr.bf16.mxu0 0
    %5043 = vmatpush1.bf16.msra.mxu0 0
    %5044 = vmatprep.subr.bf16.mxu0 0
    %5045 = vmatpush1.bf16.msra.mxu0 0
    %5046 = vmatprep.subr.bf16.mxu0 0
    %5047 = vmatpush1.bf16.msra.mxu0 0
    %5048 = vmatprep.subr.bf16.mxu0 0
    %5049 = vmatpush1.bf16.msra.mxu0 0
    %5050 = vmatprep.subr.bf16.mxu0 0
    %5051 = vmatpush1.bf16.msra.mxu0 0
    %5052 = vmatprep.subr.bf16.mxu0 0
    %5053 = vmatpush1.bf16.msra.mxu0 0
    %5054 = vmatprep.subr.bf16.mxu0 0
    %5055 = vmatpush1.bf16.msra.mxu0 %v3881
    %5056 = vmatprep.subr.bf16.mxu0 0
    %5057 = vmatpush1.bf16.msra.mxu0 %v3880
    %5058 = vmatprep.subr.bf16.mxu0 0
    %5059 = vmatpush2.bf16.msra.mxu0 0
    %5060 = vmatprep.subr.bf16.mxu0 0
    %5061 = vmatpush2.bf16.msra.mxu0 0
    %5062 = vmatprep.subr.bf16.mxu0 0
    %5063 = vmatpush2.bf16.msra.mxu0 0
    %5064 = vmatprep.subr.bf16.mxu0 0
    %5065 = vmatpush2.bf16.msra.mxu0 0
    %5066 = vmatprep.subr.bf16.mxu0 0
    %5067 = vmatpush2.bf16.msra.mxu0 0
    %5068 = vmatprep.subr.bf16.mxu0 0
    %5069 = vmatpush2.bf16.msra.mxu0 0
    %5070 = vmatprep.subr.bf16.mxu0 0
    %5071 = vmatpush2.bf16.msra.mxu0 0
    %5072 = vmatprep.subr.bf16.mxu0 0
    %5073 = vmatpush2.bf16.msra.mxu0 0
    %5074 = vmatprep.mubr.bf16.mxu0 0
    %5075 = vmatmul.mubr.bf16.gmra.mxu0 %v5037
    %v5076 = vpop.f32.mrf.mxu0
    %v5077 = vadd.f32 0.0, %v5076
    %v5078 = vpop.f32.mrf.mxu0
    %v5079 = vpop.f32.mrf.mxu0
    %v5080 = vadd.f32 0.0, %v5079
    %v5081 = vpop.f32.mrf.mxu0
    %5082 = vmatprep.mubr.bf16.mxu0 0
    %5083 = vmatmul.mubr.bf16.gmra.mxu0 %v5040
    %v5084 = vpop.f32.mrf.mxu0
    %v5085 = vadd.f32 0.0, %v5084
    %v5086 = vpop.f32.mrf.mxu0
    %v5087 = vpop.f32.mrf.mxu0
    %v5088 = vadd.f32 0.0, %v5087
    %v5089 = vpop.f32.mrf.mxu0
    %5090 = vdwg.mxu0
    %v5091 = vpack.c.bf16 %v5080, %v5077
    %v5092 = vpack.c.bf16 %v5088, %v5085
    %s5093 = scalar_lea.vmem [#allocation10], 224
    %v5094 = vld [vmem:[%s5093] sm:$0xf]
    %v5095 = vld [vmem:[%s5093 + $0x4] sm:$0xf]
    %v5096 = vld [vmem:[%s5093 + $0x8] sm:$0xf]
    %v5097 = vld [vmem:[%s5093 + $0xc] sm:$0xf]
    %v5098 = vld [vmem:[%s5093 + $0x10] sm:$0xf]
    %v5099 = vld [vmem:[%s5093 + $0x14] sm:$0xf]
    %v5100 = vld [vmem:[%s5093 + $0x18] sm:$0xf]
    %v5101 = vld [vmem:[%s5093 + $0x1c] sm:$0xf]
    %v5110 = vunpack.c.l.b16 %v5094
    %v5111 = vunpack.c.l.b16 %v5095
    %v5112 = vunpack.c.l.b16 %v5096
    %v5113 = vunpack.c.l.b16 %v5097
    %v5114 = vunpack.c.l.b16 %v5098
    %v5115 = vunpack.c.l.b16 %v5099
    %v5116 = vunpack.c.l.b16 %v5100
    %v5117 = vunpack.c.l.b16 %v5101
    %v5118 = vpack.c.b16 %v5111, %v5110
    %v5119 = vpack.c.b16 %v5113, %v5112
    %v5120 = vpack.c.b16 %v5115, %v5114
    %v5121 = vpack.c.b16 %v5117, %v5116
    %v5127 = vsel %vm4066, %v5091, 0
    %v5130 = vsel %vm4066, %v5092, 0
    %5132 = vmatprep.subr.bf16.mxu0 0
    %5133 = vmatpush1.bf16.msra.mxu0 0
    %5134 = vmatprep.subr.bf16.mxu0 0
    %5135 = vmatpush1.bf16.msra.mxu0 0
    %5136 = vmatprep.subr.bf16.mxu0 0
    %5137 = vmatpush1.bf16.msra.mxu0 0
    %5138 = vmatprep.subr.bf16.mxu0 0
    %5139 = vmatpush1.bf16.msra.mxu0 0
    %5140 = vmatprep.subr.bf16.mxu0 0
    %5141 = vmatpush1.bf16.msra.mxu0 %v5121
    %5142 = vmatprep.subr.bf16.mxu0 0
    %5143 = vmatpush1.bf16.msra.mxu0 %v5120
    %5144 = vmatprep.subr.bf16.mxu0 0
    %5145 = vmatpush1.bf16.msra.mxu0 %v5119
    %5146 = vmatprep.subr.bf16.mxu0 0
    %5147 = vmatpush1.bf16.msra.mxu0 %v5118
    %5148 = vmatprep.subr.bf16.mxu0 0
    %5149 = vmatpush2.bf16.msra.mxu0 0
    %5150 = vmatprep.subr.bf16.mxu0 0
    %5151 = vmatpush2.bf16.msra.mxu0 0
    %5152 = vmatprep.subr.bf16.mxu0 0
    %5153 = vmatpush2.bf16.msra.mxu0 0
    %5154 = vmatprep.subr.bf16.mxu0 0
    %5155 = vmatpush2.bf16.msra.mxu0 0
    %5156 = vmatprep.subr.bf16.mxu0 0
    %5157 = vmatpush2.bf16.msra.mxu0 0
    %5158 = vmatprep.subr.bf16.mxu0 0
    %5159 = vmatpush2.bf16.msra.mxu0 0
    %5160 = vmatprep.subr.bf16.mxu0 0
    %5161 = vmatpush2.bf16.msra.mxu0 0
    %5162 = vmatprep.subr.bf16.mxu0 0
    %5163 = vmatpush2.bf16.msra.mxu0 0
    %5164 = vmatprep.mubr.bf16.mxu0 0
    %5165 = vmatmul.mubr.bf16.gmra.mxu0 %v5127
    %v5166 = vpop.f32.mrf.mxu0
    %v5167 = vadd.f32 0.0, %v5166
    %v5168 = vpop.f32.mrf.mxu0
    %v5169 = vpop.f32.mrf.mxu0
    %v5170 = vadd.f32 0.0, %v5169
    %v5171 = vpop.f32.mrf.mxu0
    %5172 = vmatprep.mubr.bf16.mxu0 0
    %5173 = vmatmul.mubr.bf16.gmra.mxu0 %v5130
    %v5174 = vpop.f32.mrf.mxu0
    %v5175 = vadd.f32 0.0, %v5174
    %v5176 = vpop.f32.mrf.mxu0
    %v5177 = vpop.f32.mrf.mxu0
    %v5178 = vadd.f32 0.0, %v5177
    %v5179 = vpop.f32.mrf.mxu0
    %5180 = vdwg.mxu0
    %v5181 = vadd.f32 %v5017, %v5167
    %v5182 = vadd.f32 %v5018, %v5170
    %v5183 = vadd.f32 %v5019, %v5175
    %v5184 = vadd.f32 %v5020, %v5178
    %s5185 = scalar_lea.vmem [#allocation9], 128
    %v5186 = vld [vmem:[%s5185] sm:$0xf]
    %v5187 = vld [vmem:[%s5185 + $0x4] sm:$0xf]
    %v5188 = vld [vmem:[%s5185 + $0x8] sm:$0xf]
    %v5189 = vld [vmem:[%s5185 + $0xc] sm:$0xf]
    %v5194 = vunpack.c.l.b16 %v5186
    %v5195 = vunpack.c.l.b16 %v5187
    %v5196 = vunpack.c.l.b16 %v5188
    %v5197 = vunpack.c.l.b16 %v5189
    %v5198 = vpack.c.b16 %v5195, %v5194
    %v5199 = vpack.c.b16 %v5197, %v5196
    %v5201 = vsel %vm1330, %v5198, 0
    %v5204 = vsel %vm1330, %v5199, 0
    %5206 = vmatprep.subr.bf16.mxu0 0
    %5207 = vmatpush1.bf16.msra.mxu0 0
    %5208 = vmatprep.subr.bf16.mxu0 0
    %5209 = vmatpush1.bf16.msra.mxu0 0
    %5210 = vmatprep.subr.bf16.mxu0 0
    %5211 = vmatpush1.bf16.msra.mxu0 0
    %5212 = vmatprep.subr.bf16.mxu0 0
    %5213 = vmatpush1.bf16.msra.mxu0 0
    %5214 = vmatprep.subr.bf16.mxu0 0
    %5215 = vmatpush1.bf16.msra.mxu0 0
    %5216 = vmatprep.subr.bf16.mxu0 0
    %5217 = vmatpush1.bf16.msra.mxu0 0
    %5218 = vmatprep.subr.bf16.mxu0 0
    %5219 = vmatpush1.bf16.msra.mxu0 %v3881
    %5220 = vmatprep.subr.bf16.mxu0 0
    %5221 = vmatpush1.bf16.msra.mxu0 %v3880
    %5222 = vmatprep.subr.bf16.mxu0 0
    %5223 = vmatpush2.bf16.msra.mxu0 0
    %5224 = vmatprep.subr.bf16.mxu0 0
    %5225 = vmatpush2.bf16.msra.mxu0 0
    %5226 = vmatprep.subr.bf16.mxu0 0
    %5227 = vmatpush2.bf16.msra.mxu0 0
    %5228 = vmatprep.subr.bf16.mxu0 0
    %5229 = vmatpush2.bf16.msra.mxu0 0
    %5230 = vmatprep.subr.bf16.mxu0 0
    %5231 = vmatpush2.bf16.msra.mxu0 0
    %5232 = vmatprep.subr.bf16.mxu0 0
    %5233 = vmatpush2.bf16.msra.mxu0 0
    %5234 = vmatprep.subr.bf16.mxu0 0
    %5235 = vmatpush2.bf16.msra.mxu0 0
    %5236 = vmatprep.subr.bf16.mxu0 0
    %5237 = vmatpush2.bf16.msra.mxu0 0
    %5238 = vmatprep.mubr.bf16.mxu0 0
    %5239 = vmatmul.mubr.bf16.gmra.mxu0 %v5201
    %v5240 = vpop.f32.mrf.mxu0
    %v5241 = vadd.f32 0.0, %v5240
    %v5242 = vpop.f32.mrf.mxu0
    %v5243 = vpop.f32.mrf.mxu0
    %v5244 = vadd.f32 0.0, %v5243
    %v5245 = vpop.f32.mrf.mxu0
    %5246 = vmatprep.mubr.bf16.mxu0 0
    %5247 = vmatmul.mubr.bf16.gmra.mxu0 %v5204
    %v5248 = vpop.f32.mrf.mxu0
    %v5249 = vadd.f32 0.0, %v5248
    %v5250 = vpop.f32.mrf.mxu0
    %v5251 = vpop.f32.mrf.mxu0
    %v5252 = vadd.f32 0.0, %v5251
    %v5253 = vpop.f32.mrf.mxu0
    %5254 = vdwg.mxu0
    %v5255 = vpack.c.bf16 %v5244, %v5241
    %v5256 = vpack.c.bf16 %v5252, %v5249
    %s5257 = scalar_lea.vmem [#allocation10], 256
    %v5258 = vld [vmem:[%s5257] sm:$0xf]
    %v5259 = vld [vmem:[%s5257 + $0x4] sm:$0xf]
    %v5260 = vld [vmem:[%s5257 + $0x8] sm:$0xf]
    %v5261 = vld [vmem:[%s5257 + $0xc] sm:$0xf]
    %v5262 = vld [vmem:[%s5257 + $0x10] sm:$0xf]
    %v5263 = vld [vmem:[%s5257 + $0x14] sm:$0xf]
    %v5264 = vld [vmem:[%s5257 + $0x18] sm:$0xf]
    %v5265 = vld [vmem:[%s5257 + $0x1c] sm:$0xf]
    %v5274 = vunpack.c.l.b16 %v5258
    %v5275 = vunpack.c.l.b16 %v5259
    %v5276 = vunpack.c.l.b16 %v5260
    %v5277 = vunpack.c.l.b16 %v5261
    %v5278 = vunpack.c.l.b16 %v5262
    %v5279 = vunpack.c.l.b16 %v5263
    %v5280 = vunpack.c.l.b16 %v5264
    %v5281 = vunpack.c.l.b16 %v5265
    %v5282 = vpack.c.b16 %v5275, %v5274
    %v5283 = vpack.c.b16 %v5277, %v5276
    %v5284 = vpack.c.b16 %v5279, %v5278
    %v5285 = vpack.c.b16 %v5281, %v5280
    %v5291 = vsel %vm4066, %v5255, 0
    %v5294 = vsel %vm4066, %v5256, 0
    %5296 = vmatprep.subr.bf16.mxu0 0
    %5297 = vmatpush1.bf16.msra.mxu0 0
    %5298 = vmatprep.subr.bf16.mxu0 0
    %5299 = vmatpush1.bf16.msra.mxu0 0
    %5300 = vmatprep.subr.bf16.mxu0 0
    %5301 = vmatpush1.bf16.msra.mxu0 0
    %5302 = vmatprep.subr.bf16.mxu0 0
    %5303 = vmatpush1.bf16.msra.mxu0 0
    %5304 = vmatprep.subr.bf16.mxu0 0
    %5305 = vmatpush1.bf16.msra.mxu0 %v5285
    %5306 = vmatprep.subr.bf16.mxu0 0
    %5307 = vmatpush1.bf16.msra.mxu0 %v5284
    %5308 = vmatprep.subr.bf16.mxu0 0
    %5309 = vmatpush1.bf16.msra.mxu0 %v5283
    %5310 = vmatprep.subr.bf16.mxu0 0
    %5311 = vmatpush1.bf16.msra.mxu0 %v5282
    %5312 = vmatprep.subr.bf16.mxu0 0
    %5313 = vmatpush2.bf16.msra.mxu0 0
    %5314 = vmatprep.subr.bf16.mxu0 0
    %5315 = vmatpush2.bf16.msra.mxu0 0
    %5316 = vmatprep.subr.bf16.mxu0 0
    %5317 = vmatpush2.bf16.msra.mxu0 0
    %5318 = vmatprep.subr.bf16.mxu0 0
    %5319 = vmatpush2.bf16.msra.mxu0 0
    %5320 = vmatprep.subr.bf16.mxu0 0
    %5321 = vmatpush2.bf16.msra.mxu0 0
    %5322 = vmatprep.subr.bf16.mxu0 0
    %5323 = vmatpush2.bf16.msra.mxu0 0
    %5324 = vmatprep.subr.bf16.mxu0 0
    %5325 = vmatpush2.bf16.msra.mxu0 0
    %5326 = vmatprep.subr.bf16.mxu0 0
    %5327 = vmatpush2.bf16.msra.mxu0 0
    %5328 = vmatprep.mubr.bf16.mxu0 0
    %5329 = vmatmul.mubr.bf16.gmra.mxu0 %v5291
    %v5330 = vpop.f32.mrf.mxu0
    %v5331 = vadd.f32 0.0, %v5330
    %v5332 = vpop.f32.mrf.mxu0
    %v5333 = vpop.f32.mrf.mxu0
    %v5334 = vadd.f32 0.0, %v5333
    %v5335 = vpop.f32.mrf.mxu0
    %5336 = vmatprep.mubr.bf16.mxu0 0
    %5337 = vmatmul.mubr.bf16.gmra.mxu0 %v5294
    %v5338 = vpop.f32.mrf.mxu0
    %v5339 = vadd.f32 0.0, %v5338
    %v5340 = vpop.f32.mrf.mxu0
    %v5341 = vpop.f32.mrf.mxu0
    %v5342 = vadd.f32 0.0, %v5341
    %v5343 = vpop.f32.mrf.mxu0
    %5344 = vdwg.mxu0
    %v5345 = vadd.f32 %v5181, %v5331
    %v5346 = vadd.f32 %v5182, %v5334
    %v5347 = vadd.f32 %v5183, %v5339
    %v5348 = vadd.f32 %v5184, %v5342
    %v5349 = vld [vmem:[#allocation12] sm:$0x1]
    %v5350 = vmax.f32 %v5345, %v5346
    %v5351 = vmax.f32 %v5347, %v5348
    %v5352 = vmax.f32 %v5350, %v5351
    %v5354 = vlaneseq
    %v5355 = vshrl.u32 %v5354, 7
    %v5356 = vsub.s32 0, %v5355
    %v5357 = vrot.slane %v5349, %v5356
    %v5359 = vadd.f32 %v5352, %v5357
    %v5360 = vmax.f32 %v5359, 0.0
    %v5361 = vpack.c.bf16 %v5360, %v5360
    %v5362 = vld [vmem:[%s9] sm:$0xf]
    %v5363 = vld [vmem:[%s9 + $0x4] sm:$0xf]
    %v5364 = vld [vmem:[%s9 + $0x8] sm:$0xf]
    %v5365 = vld [vmem:[%s9 + $0xc] sm:$0xf]
    %v5370 = vunpack.c.l.b16 %v5362
    %v5371 = vunpack.c.l.b16 %v5363
    %v5372 = vunpack.c.l.b16 %v5364
    %v5373 = vunpack.c.l.b16 %v5365
    %v5374 = vpack.c.b16 %v5371, %v5370
    %v5375 = vpack.c.b16 %v5373, %v5372
    %vm5376 = vcmask 64512
    %v5378 = vsel %vm5376, %v5374, 0
    %v5381 = vsel %vm5376, %v5375, 0
    %v5384 = vsel %vm579, %v5361, 0
    %5386 = vmatprep.subr.bf16.mxu0 0
    %5387 = vmatpush1.bf16.msra.mxu0 0
    %5388 = vmatprep.subr.bf16.mxu0 0
    %5389 = vmatpush1.bf16.msra.mxu0 0
    %5390 = vmatprep.subr.bf16.mxu0 0
    %5391 = vmatpush1.bf16.msra.mxu0 0
    %5392 = vmatprep.subr.bf16.mxu0 0
    %5393 = vmatpush1.bf16.msra.mxu0 0
    %5394 = vmatprep.subr.bf16.mxu0 0
    %5395 = vmatpush1.bf16.msra.mxu0 0
    %5396 = vmatprep.subr.bf16.mxu0 0
    %5397 = vmatpush1.bf16.msra.mxu0 0
    %5398 = vmatprep.subr.bf16.mxu0 0
    %5399 = vmatpush1.bf16.msra.mxu0 0
    %5400 = vmatprep.subr.bf16.mxu0 0
    %5401 = vmatpush1.bf16.msra.mxu0 %v5384
    %5402 = vmatprep.subr.bf16.mxu0 0
    %5403 = vmatpush2.bf16.msra.mxu0 0
    %5404 = vmatprep.subr.bf16.mxu0 0
    %5405 = vmatpush2.bf16.msra.mxu0 0
    %5406 = vmatprep.subr.bf16.mxu0 0
    %5407 = vmatpush2.bf16.msra.mxu0 0
    %5408 = vmatprep.subr.bf16.mxu0 0
    %5409 = vmatpush2.bf16.msra.mxu0 0
    %5410 = vmatprep.subr.bf16.mxu0 0
    %5411 = vmatpush2.bf16.msra.mxu0 0
    %5412 = vmatprep.subr.bf16.mxu0 0
    %5413 = vmatpush2.bf16.msra.mxu0 0
    %5414 = vmatprep.subr.bf16.mxu0 0
    %5415 = vmatpush2.bf16.msra.mxu0 0
    %5416 = vmatprep.subr.bf16.mxu0 0
    %5417 = vmatpush2.bf16.msra.mxu0 0
    %5418 = vmatprep.mubr.bf16.mxu0 0
    %5419 = vmatmul.mubr.bf16.gmra.mxu0 %v5378
    %v5420 = vpop.f32.mrf.mxu0
    %v5421 = vadd.f32 0.0, %v5420
    %v5422 = vpop.f32.mrf.mxu0
    %v5423 = vpop.f32.mrf.mxu0
    %v5424 = vadd.f32 0.0, %v5423
    %v5425 = vpop.f32.mrf.mxu0
    %5426 = vmatprep.mubr.bf16.mxu0 0
    %5427 = vmatmul.mubr.bf16.gmra.mxu0 %v5381
    %v5428 = vpop.f32.mrf.mxu0
    %v5429 = vadd.f32 0.0, %v5428
    %v5430 = vpop.f32.mrf.mxu0
    %v5431 = vpop.f32.mrf.mxu0
    %v5432 = vadd.f32 0.0, %v5431
    %v5433 = vpop.f32.mrf.mxu0
    %5434 = vdwg.mxu0
    %v5435 = vpack.c.bf16 %v5424, %v5421
    %v5436 = vpack.c.bf16 %v5432, %v5429
    %v5437 = vld [vmem:[%s10] sm:$0xff]
    %v5438 = vld [vmem:[%s10 + $0x8] sm:$0xff]
    %v5439 = vld [vmem:[%s10 + $0x10] sm:$0xff]
    %v5440 = vld [vmem:[%s10 + $0x18] sm:$0xff]
    %v5441 = vld [vmem:[%s10 + $0x20] sm:$0xff]
    %v5442 = vld [vmem:[%s10 + $0x28] sm:$0xff]
    %v5443 = vld [vmem:[%s10 + $0x30] sm:$0xff]
    %v5444 = vld [vmem:[%s10 + $0x38] sm:$0xff]
    %v5445 = vld [vmem:[%s10 + $0x40] sm:$0xff]
    %v5446 = vld [vmem:[%s10 + $0x48] sm:$0xff]
    %v5447 = vld [vmem:[%s10 + $0x50] sm:$0xff]
    %v5448 = vld [vmem:[%s10 + $0x58] sm:$0xff]
    %v5449 = vld [vmem:[%s10 + $0x60] sm:$0xff]
    %v5450 = vld [vmem:[%s10 + $0x68] sm:$0xff]
    %v5451 = vld [vmem:[%s10 + $0x70] sm:$0xff]
    %v5452 = vld [vmem:[%s10 + $0x78] sm:$0xff]
    %s5453 = scalar_lea.vmem %s9, 16
    %v5454 = vld [vmem:[%s5453] sm:$0xf]
    %v5455 = vld [vmem:[%s5453 + $0x4] sm:$0xf]
    %v5456 = vld [vmem:[%s5453 + $0x8] sm:$0xf]
    %v5457 = vld [vmem:[%s5453 + $0xc] sm:$0xf]
    %v5462 = vunpack.c.l.b16 %v5454
    %v5463 = vunpack.c.l.b16 %v5455
    %v5464 = vunpack.c.l.b16 %v5456
    %v5465 = vunpack.c.l.b16 %v5457
    %v5466 = vpack.c.b16 %v5463, %v5462
    %v5467 = vpack.c.b16 %v5465, %v5464
    %v5469 = vsel %vm5376, %v5466, 0
    %v5472 = vsel %vm5376, %v5467, 0
    %5474 = vmatprep.subr.bf16.mxu0 0
    %5475 = vmatpush1.bf16.msra.mxu0 0
    %5476 = vmatprep.subr.bf16.mxu0 0
    %5477 = vmatpush1.bf16.msra.mxu0 0
    %5478 = vmatprep.subr.bf16.mxu0 0
    %5479 = vmatpush1.bf16.msra.mxu0 0
    %5480 = vmatprep.subr.bf16.mxu0 0
    %5481 = vmatpush1.bf16.msra.mxu0 0
    %5482 = vmatprep.subr.bf16.mxu0 0
    %5483 = vmatpush1.bf16.msra.mxu0 0
    %5484 = vmatprep.subr.bf16.mxu0 0
    %5485 = vmatpush1.bf16.msra.mxu0 0
    %5486 = vmatprep.subr.bf16.mxu0 0
    %5487 = vmatpush1.bf16.msra.mxu0 0
    %5488 = vmatprep.subr.bf16.mxu0 0
    %5489 = vmatpush1.bf16.msra.mxu0 %v5384
    %5490 = vmatprep.subr.bf16.mxu0 0
    %5491 = vmatpush2.bf16.msra.mxu0 0
    %5492 = vmatprep.subr.bf16.mxu0 0
    %5493 = vmatpush2.bf16.msra.mxu0 0
    %5494 = vmatprep.subr.bf16.mxu0 0
    %5495 = vmatpush2.bf16.msra.mxu0 0
    %5496 = vmatprep.subr.bf16.mxu0 0
    %5497 = vmatpush2.bf16.msra.mxu0 0
    %5498 = vmatprep.subr.bf16.mxu0 0
    %5499 = vmatpush2.bf16.msra.mxu0 0
    %5500 = vmatprep.subr.bf16.mxu0 0
    %5501 = vmatpush2.bf16.msra.mxu0 0
    %5502 = vmatprep.subr.bf16.mxu0 0
    %5503 = vmatpush2.bf16.msra.mxu0 0
    %5504 = vmatprep.subr.bf16.mxu0 0
    %5505 = vmatpush2.bf16.msra.mxu0 0
    %5506 = vmatprep.mubr.bf16.mxu0 0
    %5507 = vmatmul.mubr.bf16.gmra.mxu0 %v5469
    %v5508 = vpop.f32.mrf.mxu0
    %v5509 = vadd.f32 0.0, %v5508
    %v5510 = vpop.f32.mrf.mxu0
    %v5511 = vpop.f32.mrf.mxu0
    %v5512 = vadd.f32 0.0, %v5511
    %v5513 = vpop.f32.mrf.mxu0
    %5514 = vmatprep.mubr.bf16.mxu0 0
    %5515 = vmatmul.mubr.bf16.gmra.mxu0 %v5472
    %v5516 = vpop.f32.mrf.mxu0
    %v5517 = vadd.f32 0.0, %v5516
    %v5518 = vpop.f32.mrf.mxu0
    %v5519 = vpop.f32.mrf.mxu0
    %v5520 = vadd.f32 0.0, %v5519
    %v5521 = vpop.f32.mrf.mxu0
    %5522 = vdwg.mxu0
    %v5523 = vpack.c.bf16 %v5512, %v5509
    %v5524 = vpack.c.bf16 %v5520, %v5517
    %s5525 = scalar_lea.vmem %s10, 128
    %v5526 = vld [vmem:[%s5525] sm:$0xff]
    %v5527 = vld [vmem:[%s5525 + $0x8] sm:$0xff]
    %v5528 = vld [vmem:[%s5525 + $0x10] sm:$0xff]
    %v5529 = vld [vmem:[%s5525 + $0x18] sm:$0xff]
    %v5530 = vld [vmem:[%s5525 + $0x20] sm:$0xff]
    %v5531 = vld [vmem:[%s5525 + $0x28] sm:$0xff]
    %v5532 = vld [vmem:[%s5525 + $0x30] sm:$0xff]
    %v5533 = vld [vmem:[%s5525 + $0x38] sm:$0xff]
    %v5534 = vld [vmem:[%s5525 + $0x40] sm:$0xff]
    %v5535 = vld [vmem:[%s5525 + $0x48] sm:$0xff]
    %v5536 = vld [vmem:[%s5525 + $0x50] sm:$0xff]
    %v5537 = vld [vmem:[%s5525 + $0x58] sm:$0xff]
    %v5538 = vld [vmem:[%s5525 + $0x60] sm:$0xff]
    %v5539 = vld [vmem:[%s5525 + $0x68] sm:$0xff]
    %v5540 = vld [vmem:[%s5525 + $0x70] sm:$0xff]
    %v5541 = vld [vmem:[%s5525 + $0x78] sm:$0xff]
    %v5558 = vunpack.c.l.b16 %v5526
    %v5559 = vunpack.c.h.b16 %v5526
    %v5560 = vunpack.c.l.b16 %v5527
    %v5561 = vunpack.c.h.b16 %v5527
    %v5562 = vunpack.c.l.b16 %v5528
    %v5563 = vunpack.c.h.b16 %v5528
    %v5564 = vunpack.c.l.b16 %v5529
    %v5565 = vunpack.c.h.b16 %v5529
    %v5566 = vunpack.c.l.b16 %v5530
    %v5567 = vunpack.c.h.b16 %v5530
    %v5568 = vunpack.c.l.b16 %v5531
    %v5569 = vunpack.c.h.b16 %v5531
    %v5570 = vunpack.c.l.b16 %v5532
    %v5571 = vunpack.c.h.b16 %v5532
    %v5572 = vunpack.c.l.b16 %v5533
    %v5573 = vunpack.c.h.b16 %v5533
    %v5574 = vunpack.c.l.b16 %v5534
    %v5575 = vunpack.c.h.b16 %v5534
    %v5576 = vunpack.c.l.b16 %v5535
    %v5577 = vunpack.c.h.b16 %v5535
    %v5578 = vunpack.c.l.b16 %v5536
    %v5579 = vunpack.c.h.b16 %v5536
    %v5580 = vunpack.c.l.b16 %v5537
    %v5581 = vunpack.c.h.b16 %v5537
    %v5582 = vunpack.c.l.b16 %v5538
    %v5583 = vunpack.c.h.b16 %v5538
    %v5584 = vunpack.c.l.b16 %v5539
    %v5585 = vunpack.c.h.b16 %v5539
    %v5586 = vunpack.c.l.b16 %v5540
    %v5587 = vunpack.c.h.b16 %v5540
    %v5588 = vunpack.c.l.b16 %v5541
    %v5589 = vunpack.c.h.b16 %v5541
    %v5590 = vpack.c.b16 %v5560, %v5558
    %v5591 = vpack.c.b16 %v5561, %v5559
    %v5592 = vpack.c.b16 %v5564, %v5562
    %v5593 = vpack.c.b16 %v5565, %v5563
    %v5594 = vpack.c.b16 %v5568, %v5566
    %v5595 = vpack.c.b16 %v5569, %v5567
    %v5596 = vpack.c.b16 %v5572, %v5570
    %v5597 = vpack.c.b16 %v5573, %v5571
    %v5598 = vpack.c.b16 %v5576, %v5574
    %v5599 = vpack.c.b16 %v5577, %v5575
    %v5600 = vpack.c.b16 %v5580, %v5578
    %v5601 = vpack.c.b16 %v5581, %v5579
    %v5602 = vpack.c.b16 %v5584, %v5582
    %v5603 = vpack.c.b16 %v5585, %v5583
    %v5604 = vpack.c.b16 %v5588, %v5586
    %v5605 = vpack.c.b16 %v5589, %v5587
    %5622 = vmatprep.subr.bf16.mxu0 %v5605
    %5623 = vmatpush1.bf16.msra.mxu0 %v5604
    %5624 = vmatprep.subr.bf16.mxu0 %v5603
    %5625 = vmatpush1.bf16.msra.mxu0 %v5602
    %5626 = vmatprep.subr.bf16.mxu0 %v5601
    %5627 = vmatpush1.bf16.msra.mxu0 %v5600
    %5628 = vmatprep.subr.bf16.mxu0 %v5599
    %5629 = vmatpush1.bf16.msra.mxu0 %v5598
    %5630 = vmatprep.subr.bf16.mxu0 %v5597
    %5631 = vmatpush1.bf16.msra.mxu0 %v5596
    %5632 = vmatprep.subr.bf16.mxu0 %v5595
    %5633 = vmatpush1.bf16.msra.mxu0 %v5594
    %5634 = vmatprep.subr.bf16.mxu0 %v5593
    %5635 = vmatpush1.bf16.msra.mxu0 %v5592
    %5636 = vmatprep.subr.bf16.mxu0 %v5591
    %5637 = vmatpush1.bf16.msra.mxu0 %v5590
    %5638 = vmatprep.subr.bf16.mxu0 0
    %5639 = vmatpush2.bf16.msra.mxu0 0
    %5640 = vmatprep.subr.bf16.mxu0 0
    %5641 = vmatpush2.bf16.msra.mxu0 0
    %5642 = vmatprep.subr.bf16.mxu0 0
    %5643 = vmatpush2.bf16.msra.mxu0 0
    %5644 = vmatprep.subr.bf16.mxu0 0
    %5645 = vmatpush2.bf16.msra.mxu0 0
    %5646 = vmatprep.subr.bf16.mxu0 0
    %5647 = vmatpush2.bf16.msra.mxu0 0
    %5648 = vmatprep.subr.bf16.mxu0 0
    %5649 = vmatpush2.bf16.msra.mxu0 0
    %5650 = vmatprep.subr.bf16.mxu0 0
    %5651 = vmatpush2.bf16.msra.mxu0 0
    %5652 = vmatprep.subr.bf16.mxu0 0
    %5653 = vmatpush2.bf16.msra.mxu0 0
    %5654 = vmatprep.mubr.bf16.mxu0 0
    %5655 = vmatmul.mubr.bf16.gmra.mxu0 %v5523
    %v5656 = vpop.f32.mrf.mxu0
    %v5657 = vadd.f32 0.0, %v5656
    %v5658 = vpop.f32.mrf.mxu0
    %v5659 = vadd.f32 0.0, %v5658
    %v5660 = vpop.f32.mrf.mxu0
    %v5661 = vadd.f32 0.0, %v5660
    %v5662 = vpop.f32.mrf.mxu0
    %v5663 = vadd.f32 0.0, %v5662
    %5664 = vmatprep.mubr.bf16.mxu0 0
    %5665 = vmatmul.mubr.bf16.gmra.mxu0 %v5524
    %v5666 = vpop.f32.mrf.mxu0
    %v5667 = vadd.f32 0.0, %v5666
    %v5668 = vpop.f32.mrf.mxu0
    %v5669 = vadd.f32 0.0, %v5668
    %v5670 = vpop.f32.mrf.mxu0
    %v5671 = vadd.f32 0.0, %v5670
    %v5672 = vpop.f32.mrf.mxu0
    %v5673 = vadd.f32 0.0, %v5672
    %5674 = vdwg.mxu0
    %v5691 = vunpack.c.l.b16 %v5437
    %v5692 = vunpack.c.h.b16 %v5437
    %v5693 = vunpack.c.l.b16 %v5438
    %v5694 = vunpack.c.h.b16 %v5438
    %v5695 = vunpack.c.l.b16 %v5439
    %v5696 = vunpack.c.h.b16 %v5439
    %v5697 = vunpack.c.l.b16 %v5440
    %v5698 = vunpack.c.h.b16 %v5440
    %v5699 = vunpack.c.l.b16 %v5441
    %v5700 = vunpack.c.h.b16 %v5441
    %v5701 = vunpack.c.l.b16 %v5442
    %v5702 = vunpack.c.h.b16 %v5442
    %v5703 = vunpack.c.l.b16 %v5443
    %v5704 = vunpack.c.h.b16 %v5443
    %v5705 = vunpack.c.l.b16 %v5444
    %v5706 = vunpack.c.h.b16 %v5444
    %v5707 = vunpack.c.l.b16 %v5445
    %v5708 = vunpack.c.h.b16 %v5445
    %v5709 = vunpack.c.l.b16 %v5446
    %v5710 = vunpack.c.h.b16 %v5446
    %v5711 = vunpack.c.l.b16 %v5447
    %v5712 = vunpack.c.h.b16 %v5447
    %v5713 = vunpack.c.l.b16 %v5448
    %v5714 = vunpack.c.h.b16 %v5448
    %v5715 = vunpack.c.l.b16 %v5449
    %v5716 = vunpack.c.h.b16 %v5449
    %v5717 = vunpack.c.l.b16 %v5450
    %v5718 = vunpack.c.h.b16 %v5450
    %v5719 = vunpack.c.l.b16 %v5451
    %v5720 = vunpack.c.h.b16 %v5451
    %v5721 = vunpack.c.l.b16 %v5452
    %v5722 = vunpack.c.h.b16 %v5452
    %v5723 = vpack.c.b16 %v5693, %v5691
    %v5724 = vpack.c.b16 %v5694, %v5692
    %v5725 = vpack.c.b16 %v5697, %v5695
    %v5726 = vpack.c.b16 %v5698, %v5696
    %v5727 = vpack.c.b16 %v5701, %v5699
    %v5728 = vpack.c.b16 %v5702, %v5700
    %v5729 = vpack.c.b16 %v5705, %v5703
    %v5730 = vpack.c.b16 %v5706, %v5704
    %v5731 = vpack.c.b16 %v5709, %v5707
    %v5732 = vpack.c.b16 %v5710, %v5708
    %v5733 = vpack.c.b16 %v5713, %v5711
    %v5734 = vpack.c.b16 %v5714, %v5712
    %v5735 = vpack.c.b16 %v5717, %v5715
    %v5736 = vpack.c.b16 %v5718, %v5716
    %v5737 = vpack.c.b16 %v5721, %v5719
    %v5738 = vpack.c.b16 %v5722, %v5720
    %5755 = vmatprep.subr.bf16.mxu0 %v5738
    %5756 = vmatpush1.bf16.msra.mxu0 %v5737
    %5757 = vmatprep.subr.bf16.mxu0 %v5736
    %5758 = vmatpush1.bf16.msra.mxu0 %v5735
    %5759 = vmatprep.subr.bf16.mxu0 %v5734
    %5760 = vmatpush1.bf16.msra.mxu0 %v5733
    %5761 = vmatprep.subr.bf16.mxu0 %v5732
    %5762 = vmatpush1.bf16.msra.mxu0 %v5731
    %5763 = vmatprep.subr.bf16.mxu0 %v5730
    %5764 = vmatpush1.bf16.msra.mxu0 %v5729
    %5765 = vmatprep.subr.bf16.mxu0 %v5728
    %5766 = vmatpush1.bf16.msra.mxu0 %v5727
    %5767 = vmatprep.subr.bf16.mxu0 %v5726
    %5768 = vmatpush1.bf16.msra.mxu0 %v5725
    %5769 = vmatprep.subr.bf16.mxu0 %v5724
    %5770 = vmatpush1.bf16.msra.mxu0 %v5723
    %5771 = vmatprep.subr.bf16.mxu0 0
    %5772 = vmatpush2.bf16.msra.mxu0 0
    %5773 = vmatprep.subr.bf16.mxu0 0
    %5774 = vmatpush2.bf16.msra.mxu0 0
    %5775 = vmatprep.subr.bf16.mxu0 0
    %5776 = vmatpush2.bf16.msra.mxu0 0
    %5777 = vmatprep.subr.bf16.mxu0 0
    %5778 = vmatpush2.bf16.msra.mxu0 0
    %5779 = vmatprep.subr.bf16.mxu0 0
    %5780 = vmatpush2.bf16.msra.mxu0 0
    %5781 = vmatprep.subr.bf16.mxu0 0
    %5782 = vmatpush2.bf16.msra.mxu0 0
    %5783 = vmatprep.subr.bf16.mxu0 0
    %5784 = vmatpush2.bf16.msra.mxu0 0
    %5785 = vmatprep.subr.bf16.mxu0 0
    %5786 = vmatpush2.bf16.msra.mxu0 0
    %5787 = vmatprep.mubr.bf16.mxu0 0
    %5788 = vmatmul.mubr.bf16.gmra.mxu0 %v5435
    %v5789 = vpop.f32.mrf.mxu0
    %v5790 = vadd.f32 %v5657, %v5789
    %v5791 = vpop.f32.mrf.mxu0
    %v5792 = vadd.f32 %v5659, %v5791
    %v5793 = vpop.f32.mrf.mxu0
    %v5794 = vadd.f32 %v5661, %v5793
    %v5795 = vpop.f32.mrf.mxu0
    %v5796 = vadd.f32 %v5663, %v5795
    %5797 = vmatprep.mubr.bf16.mxu0 0
    %5798 = vmatmul.mubr.bf16.gmra.mxu0 %v5436
    %v5799 = vpop.f32.mrf.mxu0
    %v5800 = vadd.f32 %v5667, %v5799
    %v5801 = vpop.f32.mrf.mxu0
    %v5802 = vadd.f32 %v5669, %v5801
    %v5803 = vpop.f32.mrf.mxu0
    %v5804 = vadd.f32 %v5671, %v5803
    %v5805 = vpop.f32.mrf.mxu0
    %v5806 = vadd.f32 %v5673, %v5805
    %5807 = vdwg.mxu0
    %s5808 = scalar_lea.vmem %s9, 32
    %v5809 = vld [vmem:[%s5808] sm:$0xf]
    %v5810 = vld [vmem:[%s5808 + $0x4] sm:$0xf]
    %v5811 = vld [vmem:[%s5808 + $0x8] sm:$0xf]
    %v5812 = vld [vmem:[%s5808 + $0xc] sm:$0xf]
    %v5817 = vunpack.c.l.b16 %v5809
    %v5818 = vunpack.c.l.b16 %v5810
    %v5819 = vunpack.c.l.b16 %v5811
    %v5820 = vunpack.c.l.b16 %v5812
    %v5821 = vpack.c.b16 %v5818, %v5817
    %v5822 = vpack.c.b16 %v5820, %v5819
    %v5824 = vsel %vm5376, %v5821, 0
    %v5827 = vsel %vm5376, %v5822, 0
    %5829 = vmatprep.subr.bf16.mxu0 0
    %5830 = vmatpush1.bf16.msra.mxu0 0
    %5831 = vmatprep.subr.bf16.mxu0 0
    %5832 = vmatpush1.bf16.msra.mxu0 0
    %5833 = vmatprep.subr.bf16.mxu0 0
    %5834 = vmatpush1.bf16.msra.mxu0 0
    %5835 = vmatprep.subr.bf16.mxu0 0
    %5836 = vmatpush1.bf16.msra.mxu0 0
    %5837 = vmatprep.subr.bf16.mxu0 0
    %5838 = vmatpush1.bf16.msra.mxu0 0
    %5839 = vmatprep.subr.bf16.mxu0 0
    %5840 = vmatpush1.bf16.msra.mxu0 0
    %5841 = vmatprep.subr.bf16.mxu0 0
    %5842 = vmatpush1.bf16.msra.mxu0 0
    %5843 = vmatprep.subr.bf16.mxu0 0
    %5844 = vmatpush1.bf16.msra.mxu0 %v5384
    %5845 = vmatprep.subr.bf16.mxu0 0
    %5846 = vmatpush2.bf16.msra.mxu0 0
    %5847 = vmatprep.subr.bf16.mxu0 0
    %5848 = vmatpush2.bf16.msra.mxu0 0
    %5849 = vmatprep.subr.bf16.mxu0 0
    %5850 = vmatpush2.bf16.msra.mxu0 0
    %5851 = vmatprep.subr.bf16.mxu0 0
    %5852 = vmatpush2.bf16.msra.mxu0 0
    %5853 = vmatprep.subr.bf16.mxu0 0
    %5854 = vmatpush2.bf16.msra.mxu0 0
    %5855 = vmatprep.subr.bf16.mxu0 0
    %5856 = vmatpush2.bf16.msra.mxu0 0
    %5857 = vmatprep.subr.bf16.mxu0 0
    %5858 = vmatpush2.bf16.msra.mxu0 0
    %5859 = vmatprep.subr.bf16.mxu0 0
    %5860 = vmatpush2.bf16.msra.mxu0 0
    %5861 = vmatprep.mubr.bf16.mxu0 0
    %5862 = vmatmul.mubr.bf16.gmra.mxu0 %v5824
    %v5863 = vpop.f32.mrf.mxu0
    %v5864 = vadd.f32 0.0, %v5863
    %v5865 = vpop.f32.mrf.mxu0
    %v5866 = vpop.f32.mrf.mxu0
    %v5867 = vadd.f32 0.0, %v5866
    %v5868 = vpop.f32.mrf.mxu0
    %5869 = vmatprep.mubr.bf16.mxu0 0
    %5870 = vmatmul.mubr.bf16.gmra.mxu0 %v5827
    %v5871 = vpop.f32.mrf.mxu0
    %v5872 = vadd.f32 0.0, %v5871
    %v5873 = vpop.f32.mrf.mxu0
    %v5874 = vpop.f32.mrf.mxu0
    %v5875 = vadd.f32 0.0, %v5874
    %v5876 = vpop.f32.mrf.mxu0
    %5877 = vdwg.mxu0
    %v5878 = vpack.c.bf16 %v5867, %v5864
    %v5879 = vpack.c.bf16 %v5875, %v5872
    %s5880 = scalar_lea.vmem %s10, 256
    %v5881 = vld [vmem:[%s5880] sm:$0xff]
    %v5882 = vld [vmem:[%s5880 + $0x8] sm:$0xff]
    %v5883 = vld [vmem:[%s5880 + $0x10] sm:$0xff]
    %v5884 = vld [vmem:[%s5880 + $0x18] sm:$0xff]
    %v5885 = vld [vmem:[%s5880 + $0x20] sm:$0xff]
    %v5886 = vld [vmem:[%s5880 + $0x28] sm:$0xff]
    %v5887 = vld [vmem:[%s5880 + $0x30] sm:$0xff]
    %v5888 = vld [vmem:[%s5880 + $0x38] sm:$0xff]
    %v5889 = vld [vmem:[%s5880 + $0x40] sm:$0xff]
    %v5890 = vld [vmem:[%s5880 + $0x48] sm:$0xff]
    %v5891 = vld [vmem:[%s5880 + $0x50] sm:$0xff]
    %v5892 = vld [vmem:[%s5880 + $0x58] sm:$0xff]
    %v5893 = vld [vmem:[%s5880 + $0x60] sm:$0xff]
    %v5894 = vld [vmem:[%s5880 + $0x68] sm:$0xff]
    %v5895 = vld [vmem:[%s5880 + $0x70] sm:$0xff]
    %v5896 = vld [vmem:[%s5880 + $0x78] sm:$0xff]
    %v5913 = vunpack.c.l.b16 %v5881
    %v5914 = vunpack.c.h.b16 %v5881
    %v5915 = vunpack.c.l.b16 %v5882
    %v5916 = vunpack.c.h.b16 %v5882
    %v5917 = vunpack.c.l.b16 %v5883
    %v5918 = vunpack.c.h.b16 %v5883
    %v5919 = vunpack.c.l.b16 %v5884
    %v5920 = vunpack.c.h.b16 %v5884
    %v5921 = vunpack.c.l.b16 %v5885
    %v5922 = vunpack.c.h.b16 %v5885
    %v5923 = vunpack.c.l.b16 %v5886
    %v5924 = vunpack.c.h.b16 %v5886
    %v5925 = vunpack.c.l.b16 %v5887
    %v5926 = vunpack.c.h.b16 %v5887
    %v5927 = vunpack.c.l.b16 %v5888
    %v5928 = vunpack.c.h.b16 %v5888
    %v5929 = vunpack.c.l.b16 %v5889
    %v5930 = vunpack.c.h.b16 %v5889
    %v5931 = vunpack.c.l.b16 %v5890
    %v5932 = vunpack.c.h.b16 %v5890
    %v5933 = vunpack.c.l.b16 %v5891
    %v5934 = vunpack.c.h.b16 %v5891
    %v5935 = vunpack.c.l.b16 %v5892
    %v5936 = vunpack.c.h.b16 %v5892
    %v5937 = vunpack.c.l.b16 %v5893
    %v5938 = vunpack.c.h.b16 %v5893
    %v5939 = vunpack.c.l.b16 %v5894
    %v5940 = vunpack.c.h.b16 %v5894
    %v5941 = vunpack.c.l.b16 %v5895
    %v5942 = vunpack.c.h.b16 %v5895
    %v5943 = vunpack.c.l.b16 %v5896
    %v5944 = vunpack.c.h.b16 %v5896
    %v5945 = vpack.c.b16 %v5915, %v5913
    %v5946 = vpack.c.b16 %v5916, %v5914
    %v5947 = vpack.c.b16 %v5919, %v5917
    %v5948 = vpack.c.b16 %v5920, %v5918
    %v5949 = vpack.c.b16 %v5923, %v5921
    %v5950 = vpack.c.b16 %v5924, %v5922
    %v5951 = vpack.c.b16 %v5927, %v5925
    %v5952 = vpack.c.b16 %v5928, %v5926
    %v5953 = vpack.c.b16 %v5931, %v5929
    %v5954 = vpack.c.b16 %v5932, %v5930
    %v5955 = vpack.c.b16 %v5935, %v5933
    %v5956 = vpack.c.b16 %v5936, %v5934
    %v5957 = vpack.c.b16 %v5939, %v5937
    %v5958 = vpack.c.b16 %v5940, %v5938
    %v5959 = vpack.c.b16 %v5943, %v5941
    %v5960 = vpack.c.b16 %v5944, %v5942
    %5977 = vmatprep.subr.bf16.mxu0 %v5960
    %5978 = vmatpush1.bf16.msra.mxu0 %v5959
    %5979 = vmatprep.subr.bf16.mxu0 %v5958
    %5980 = vmatpush1.bf16.msra.mxu0 %v5957
    %5981 = vmatprep.subr.bf16.mxu0 %v5956
    %5982 = vmatpush1.bf16.msra.mxu0 %v5955
    %5983 = vmatprep.subr.bf16.mxu0 %v5954
    %5984 = vmatpush1.bf16.msra.mxu0 %v5953
    %5985 = vmatprep.subr.bf16.mxu0 %v5952
    %5986 = vmatpush1.bf16.msra.mxu0 %v5951
    %5987 = vmatprep.subr.bf16.mxu0 %v5950
    %5988 = vmatpush1.bf16.msra.mxu0 %v5949
    %5989 = vmatprep.subr.bf16.mxu0 %v5948
    %5990 = vmatpush1.bf16.msra.mxu0 %v5947
    %5991 = vmatprep.subr.bf16.mxu0 %v5946
    %5992 = vmatpush1.bf16.msra.mxu0 %v5945
    %5993 = vmatprep.subr.bf16.mxu0 0
    %5994 = vmatpush2.bf16.msra.mxu0 0
    %5995 = vmatprep.subr.bf16.mxu0 0
    %5996 = vmatpush2.bf16.msra.mxu0 0
    %5997 = vmatprep.subr.bf16.mxu0 0
    %5998 = vmatpush2.bf16.msra.mxu0 0
    %5999 = vmatprep.subr.bf16.mxu0 0
    %6000 = vmatpush2.bf16.msra.mxu0 0
    %6001 = vmatprep.subr.bf16.mxu0 0
    %6002 = vmatpush2.bf16.msra.mxu0 0
    %6003 = vmatprep.subr.bf16.mxu0 0
    %6004 = vmatpush2.bf16.msra.mxu0 0
    %6005 = vmatprep.subr.bf16.mxu0 0
    %6006 = vmatpush2.bf16.msra.mxu0 0
    %6007 = vmatprep.subr.bf16.mxu0 0
    %6008 = vmatpush2.bf16.msra.mxu0 0
    %6009 = vmatprep.mubr.bf16.mxu0 0
    %6010 = vmatmul.mubr.bf16.gmra.mxu0 %v5878
    %v6011 = vpop.f32.mrf.mxu0
    %v6012 = vadd.f32 0.0, %v6011
    %v6013 = vpop.f32.mrf.mxu0
    %v6014 = vadd.f32 0.0, %v6013
    %v6015 = vpop.f32.mrf.mxu0
    %v6016 = vadd.f32 0.0, %v6015
    %v6017 = vpop.f32.mrf.mxu0
    %v6018 = vadd.f32 0.0, %v6017
    %6019 = vmatprep.mubr.bf16.mxu0 0
    %6020 = vmatmul.mubr.bf16.gmra.mxu0 %v5879
    %v6021 = vpop.f32.mrf.mxu0
    %v6022 = vadd.f32 0.0, %v6021
    %v6023 = vpop.f32.mrf.mxu0
    %v6024 = vadd.f32 0.0, %v6023
    %v6025 = vpop.f32.mrf.mxu0
    %v6026 = vadd.f32 0.0, %v6025
    %v6027 = vpop.f32.mrf.mxu0
    %v6028 = vadd.f32 0.0, %v6027
    %6029 = vdwg.mxu0
    %v6030 = vadd.f32 %v5790, %v6012
    %v6031 = vadd.f32 %v5792, %v6014
    %v6032 = vadd.f32 %v5794, %v6016
    %v6033 = vadd.f32 %v5796, %v6018
    %v6034 = vadd.f32 %v5800, %v6022
    %v6035 = vadd.f32 %v5802, %v6024
    %v6036 = vadd.f32 %v5804, %v6026
    %v6037 = vadd.f32 %v5806, %v6028
    %s6038 = scalar_lea.vmem %s9, 48
    %v6039 = vld [vmem:[%s6038] sm:$0xf]
    %v6040 = vld [vmem:[%s6038 + $0x4] sm:$0xf]
    %v6041 = vld [vmem:[%s6038 + $0x8] sm:$0xf]
    %v6042 = vld [vmem:[%s6038 + $0xc] sm:$0xf]
    %v6047 = vunpack.c.l.b16 %v6039
    %v6048 = vunpack.c.l.b16 %v6040
    %v6049 = vunpack.c.l.b16 %v6041
    %v6050 = vunpack.c.l.b16 %v6042
    %v6051 = vpack.c.b16 %v6048, %v6047
    %v6052 = vpack.c.b16 %v6050, %v6049
    %v6054 = vsel %vm5376, %v6051, 0
    %v6057 = vsel %vm5376, %v6052, 0
    %6059 = vmatprep.subr.bf16.mxu0 0
    %6060 = vmatpush1.bf16.msra.mxu0 0
    %6061 = vmatprep.subr.bf16.mxu0 0
    %6062 = vmatpush1.bf16.msra.mxu0 0
    %6063 = vmatprep.subr.bf16.mxu0 0
    %6064 = vmatpush1.bf16.msra.mxu0 0
    %6065 = vmatprep.subr.bf16.mxu0 0
    %6066 = vmatpush1.bf16.msra.mxu0 0
    %6067 = vmatprep.subr.bf16.mxu0 0
    %6068 = vmatpush1.bf16.msra.mxu0 0
    %6069 = vmatprep.subr.bf16.mxu0 0
    %6070 = vmatpush1.bf16.msra.mxu0 0
    %6071 = vmatprep.subr.bf16.mxu0 0
    %6072 = vmatpush1.bf16.msra.mxu0 0
    %6073 = vmatprep.subr.bf16.mxu0 0
    %6074 = vmatpush1.bf16.msra.mxu0 %v5384
    %6075 = vmatprep.subr.bf16.mxu0 0
    %6076 = vmatpush2.bf16.msra.mxu0 0
    %6077 = vmatprep.subr.bf16.mxu0 0
    %6078 = vmatpush2.bf16.msra.mxu0 0
    %6079 = vmatprep.subr.bf16.mxu0 0
    %6080 = vmatpush2.bf16.msra.mxu0 0
    %6081 = vmatprep.subr.bf16.mxu0 0
    %6082 = vmatpush2.bf16.msra.mxu0 0
    %6083 = vmatprep.subr.bf16.mxu0 0
    %6084 = vmatpush2.bf16.msra.mxu0 0
    %6085 = vmatprep.subr.bf16.mxu0 0
    %6086 = vmatpush2.bf16.msra.mxu0 0
    %6087 = vmatprep.subr.bf16.mxu0 0
    %6088 = vmatpush2.bf16.msra.mxu0 0
    %6089 = vmatprep.subr.bf16.mxu0 0
    %6090 = vmatpush2.bf16.msra.mxu0 0
    %6091 = vmatprep.mubr.bf16.mxu0 0
    %6092 = vmatmul.mubr.bf16.gmra.mxu0 %v6054
    %v6093 = vpop.f32.mrf.mxu0
    %v6094 = vadd.f32 0.0, %v6093
    %v6095 = vpop.f32.mrf.mxu0
    %v6096 = vpop.f32.mrf.mxu0
    %v6097 = vadd.f32 0.0, %v6096
    %v6098 = vpop.f32.mrf.mxu0
    %6099 = vmatprep.mubr.bf16.mxu0 0
    %6100 = vmatmul.mubr.bf16.gmra.mxu0 %v6057
    %v6101 = vpop.f32.mrf.mxu0
    %v6102 = vadd.f32 0.0, %v6101
    %v6103 = vpop.f32.mrf.mxu0
    %v6104 = vpop.f32.mrf.mxu0
    %v6105 = vadd.f32 0.0, %v6104
    %v6106 = vpop.f32.mrf.mxu0
    %6107 = vdwg.mxu0
    %v6108 = vpack.c.bf16 %v6097, %v6094
    %v6109 = vpack.c.bf16 %v6105, %v6102
    %s6110 = scalar_lea.vmem %s10, 384
    %v6111 = vld [vmem:[%s6110] sm:$0xff]
    %v6112 = vld [vmem:[%s6110 + $0x8] sm:$0xff]
    %v6113 = vld [vmem:[%s6110 + $0x10] sm:$0xff]
    %v6114 = vld [vmem:[%s6110 + $0x18] sm:$0xff]
    %v6115 = vld [vmem:[%s6110 + $0x20] sm:$0xff]
    %v6116 = vld [vmem:[%s6110 + $0x28] sm:$0xff]
    %v6117 = vld [vmem:[%s6110 + $0x30] sm:$0xff]
    %v6118 = vld [vmem:[%s6110 + $0x38] sm:$0xff]
    %v6119 = vld [vmem:[%s6110 + $0x40] sm:$0xff]
    %v6120 = vld [vmem:[%s6110 + $0x48] sm:$0xff]
    %v6121 = vld [vmem:[%s6110 + $0x50] sm:$0xff]
    %v6122 = vld [vmem:[%s6110 + $0x58] sm:$0xff]
    %v6123 = vld [vmem:[%s6110 + $0x60] sm:$0xff]
    %v6124 = vld [vmem:[%s6110 + $0x68] sm:$0xff]
    %v6125 = vld [vmem:[%s6110 + $0x70] sm:$0xff]
    %v6126 = vld [vmem:[%s6110 + $0x78] sm:$0xff]
    %v6143 = vunpack.c.l.b16 %v6111
    %v6144 = vunpack.c.h.b16 %v6111
    %v6145 = vunpack.c.l.b16 %v6112
    %v6146 = vunpack.c.h.b16 %v6112
    %v6147 = vunpack.c.l.b16 %v6113
    %v6148 = vunpack.c.h.b16 %v6113
    %v6149 = vunpack.c.l.b16 %v6114
    %v6150 = vunpack.c.h.b16 %v6114
    %v6151 = vunpack.c.l.b16 %v6115
    %v6152 = vunpack.c.h.b16 %v6115
    %v6153 = vunpack.c.l.b16 %v6116
    %v6154 = vunpack.c.h.b16 %v6116
    %v6155 = vunpack.c.l.b16 %v6117
    %v6156 = vunpack.c.h.b16 %v6117
    %v6157 = vunpack.c.l.b16 %v6118
    %v6158 = vunpack.c.h.b16 %v6118
    %v6159 = vunpack.c.l.b16 %v6119
    %v6160 = vunpack.c.h.b16 %v6119
    %v6161 = vunpack.c.l.b16 %v6120
    %v6162 = vunpack.c.h.b16 %v6120
    %v6163 = vunpack.c.l.b16 %v6121
    %v6164 = vunpack.c.h.b16 %v6121
    %v6165 = vunpack.c.l.b16 %v6122
    %v6166 = vunpack.c.h.b16 %v6122
    %v6167 = vunpack.c.l.b16 %v6123
    %v6168 = vunpack.c.h.b16 %v6123
    %v6169 = vunpack.c.l.b16 %v6124
    %v6170 = vunpack.c.h.b16 %v6124
    %v6171 = vunpack.c.l.b16 %v6125
    %v6172 = vunpack.c.h.b16 %v6125
    %v6173 = vunpack.c.l.b16 %v6126
    %v6174 = vunpack.c.h.b16 %v6126
    %v6175 = vpack.c.b16 %v6145, %v6143
    %v6176 = vpack.c.b16 %v6146, %v6144
    %v6177 = vpack.c.b16 %v6149, %v6147
    %v6178 = vpack.c.b16 %v6150, %v6148
    %v6179 = vpack.c.b16 %v6153, %v6151
    %v6180 = vpack.c.b16 %v6154, %v6152
    %v6181 = vpack.c.b16 %v6157, %v6155
    %v6182 = vpack.c.b16 %v6158, %v6156
    %v6183 = vpack.c.b16 %v6161, %v6159
    %v6184 = vpack.c.b16 %v6162, %v6160
    %v6185 = vpack.c.b16 %v6165, %v6163
    %v6186 = vpack.c.b16 %v6166, %v6164
    %v6187 = vpack.c.b16 %v6169, %v6167
    %v6188 = vpack.c.b16 %v6170, %v6168
    %v6189 = vpack.c.b16 %v6173, %v6171
    %v6190 = vpack.c.b16 %v6174, %v6172
    %6207 = vmatprep.subr.bf16.mxu0 %v6190
    %6208 = vmatpush1.bf16.msra.mxu0 %v6189
    %6209 = vmatprep.subr.bf16.mxu0 %v6188
    %6210 = vmatpush1.bf16.msra.mxu0 %v6187
    %6211 = vmatprep.subr.bf16.mxu0 %v6186
    %6212 = vmatpush1.bf16.msra.mxu0 %v6185
    %6213 = vmatprep.subr.bf16.mxu0 %v6184
    %6214 = vmatpush1.bf16.msra.mxu0 %v6183
    %6215 = vmatprep.subr.bf16.mxu0 %v6182
    %6216 = vmatpush1.bf16.msra.mxu0 %v6181
    %6217 = vmatprep.subr.bf16.mxu0 %v6180
    %6218 = vmatpush1.bf16.msra.mxu0 %v6179
    %6219 = vmatprep.subr.bf16.mxu0 %v6178
    %6220 = vmatpush1.bf16.msra.mxu0 %v6177
    %6221 = vmatprep.subr.bf16.mxu0 %v6176
    %6222 = vmatpush1.bf16.msra.mxu0 %v6175
    %6223 = vmatprep.subr.bf16.mxu0 0
    %6224 = vmatpush2.bf16.msra.mxu0 0
    %6225 = vmatprep.subr.bf16.mxu0 0
    %6226 = vmatpush2.bf16.msra.mxu0 0
    %6227 = vmatprep.subr.bf16.mxu0 0
    %6228 = vmatpush2.bf16.msra.mxu0 0
    %6229 = vmatprep.subr.bf16.mxu0 0
    %6230 = vmatpush2.bf16.msra.mxu0 0
    %6231 = vmatprep.subr.bf16.mxu0 0
    %6232 = vmatpush2.bf16.msra.mxu0 0
    %6233 = vmatprep.subr.bf16.mxu0 0
    %6234 = vmatpush2.bf16.msra.mxu0 0
    %6235 = vmatprep.subr.bf16.mxu0 0
    %6236 = vmatpush2.bf16.msra.mxu0 0
    %6237 = vmatprep.subr.bf16.mxu0 0
    %6238 = vmatpush2.bf16.msra.mxu0 0
    %6239 = vmatprep.mubr.bf16.mxu0 0
    %6240 = vmatmul.mubr.bf16.gmra.mxu0 %v6108
    %v6241 = vpop.f32.mrf.mxu0
    %v6242 = vadd.f32 0.0, %v6241
    %v6243 = vpop.f32.mrf.mxu0
    %v6244 = vadd.f32 0.0, %v6243
    %v6245 = vpop.f32.mrf.mxu0
    %v6246 = vadd.f32 0.0, %v6245
    %v6247 = vpop.f32.mrf.mxu0
    %v6248 = vadd.f32 0.0, %v6247
    %6249 = vmatprep.mubr.bf16.mxu0 0
    %6250 = vmatmul.mubr.bf16.gmra.mxu0 %v6109
    %v6251 = vpop.f32.mrf.mxu0
    %v6252 = vadd.f32 0.0, %v6251
    %v6253 = vpop.f32.mrf.mxu0
    %v6254 = vadd.f32 0.0, %v6253
    %v6255 = vpop.f32.mrf.mxu0
    %v6256 = vadd.f32 0.0, %v6255
    %v6257 = vpop.f32.mrf.mxu0
    %v6258 = vadd.f32 0.0, %v6257
    %6259 = vdwg.mxu0
    %v6260 = vadd.f32 %v6030, %v6242
    %v6261 = vadd.f32 %v6031, %v6244
    %v6262 = vadd.f32 %v6032, %v6246
    %v6263 = vadd.f32 %v6033, %v6248
    %v6264 = vadd.f32 %v6034, %v6252
    %v6265 = vadd.f32 %v6035, %v6254
    %v6266 = vadd.f32 %v6036, %v6256
    %v6267 = vadd.f32 %v6037, %v6258
    %s6268 = scalar_lea.vmem %s9, 64
    %v6269 = vld [vmem:[%s6268] sm:$0xf]
    %v6270 = vld [vmem:[%s6268 + $0x4] sm:$0xf]
    %v6271 = vld [vmem:[%s6268 + $0x8] sm:$0xf]
    %v6272 = vld [vmem:[%s6268 + $0xc] sm:$0xf]
    %v6277 = vunpack.c.l.b16 %v6269
    %v6278 = vunpack.c.l.b16 %v6270
    %v6279 = vunpack.c.l.b16 %v6271
    %v6280 = vunpack.c.l.b16 %v6272
    %v6281 = vpack.c.b16 %v6278, %v6277
    %v6282 = vpack.c.b16 %v6280, %v6279
    %v6284 = vsel %vm5376, %v6281, 0
    %v6287 = vsel %vm5376, %v6282, 0
    %6289 = vmatprep.subr.bf16.mxu0 0
    %6290 = vmatpush1.bf16.msra.mxu0 0
    %6291 = vmatprep.subr.bf16.mxu0 0
    %6292 = vmatpush1.bf16.msra.mxu0 0
    %6293 = vmatprep.subr.bf16.mxu0 0
    %6294 = vmatpush1.bf16.msra.mxu0 0
    %6295 = vmatprep.subr.bf16.mxu0 0
    %6296 = vmatpush1.bf16.msra.mxu0 0
    %6297 = vmatprep.subr.bf16.mxu0 0
    %6298 = vmatpush1.bf16.msra.mxu0 0
    %6299 = vmatprep.subr.bf16.mxu0 0
    %6300 = vmatpush1.bf16.msra.mxu0 0
    %6301 = vmatprep.subr.bf16.mxu0 0
    %6302 = vmatpush1.bf16.msra.mxu0 0
    %6303 = vmatprep.subr.bf16.mxu0 0
    %6304 = vmatpush1.bf16.msra.mxu0 %v5384
    %6305 = vmatprep.subr.bf16.mxu0 0
    %6306 = vmatpush2.bf16.msra.mxu0 0
    %6307 = vmatprep.subr.bf16.mxu0 0
    %6308 = vmatpush2.bf16.msra.mxu0 0
    %6309 = vmatprep.subr.bf16.mxu0 0
    %6310 = vmatpush2.bf16.msra.mxu0 0
    %6311 = vmatprep.subr.bf16.mxu0 0
    %6312 = vmatpush2.bf16.msra.mxu0 0
    %6313 = vmatprep.subr.bf16.mxu0 0
    %6314 = vmatpush2.bf16.msra.mxu0 0
    %6315 = vmatprep.subr.bf16.mxu0 0
    %6316 = vmatpush2.bf16.msra.mxu0 0
    %6317 = vmatprep.subr.bf16.mxu0 0
    %6318 = vmatpush2.bf16.msra.mxu0 0
    %6319 = vmatprep.subr.bf16.mxu0 0
    %6320 = vmatpush2.bf16.msra.mxu0 0
    %6321 = vmatprep.mubr.bf16.mxu0 0
    %6322 = vmatmul.mubr.bf16.gmra.mxu0 %v6284
    %v6323 = vpop.f32.mrf.mxu0
    %v6324 = vadd.f32 0.0, %v6323
    %v6325 = vpop.f32.mrf.mxu0
    %v6326 = vpop.f32.mrf.mxu0
    %v6327 = vadd.f32 0.0, %v6326
    %v6328 = vpop.f32.mrf.mxu0
    %6329 = vmatprep.mubr.bf16.mxu0 0
    %6330 = vmatmul.mubr.bf16.gmra.mxu0 %v6287
    %v6331 = vpop.f32.mrf.mxu0
    %v6332 = vadd.f32 0.0, %v6331
    %v6333 = vpop.f32.mrf.mxu0
    %v6334 = vpop.f32.mrf.mxu0
    %v6335 = vadd.f32 0.0, %v6334
    %v6336 = vpop.f32.mrf.mxu0
    %6337 = vdwg.mxu0
    %v6338 = vpack.c.bf16 %v6327, %v6324
    %v6339 = vpack.c.bf16 %v6335, %v6332
    %s6340 = scalar_lea.vmem %s10, 512
    %v6341 = vld [vmem:[%s6340] sm:$0xff]
    %v6342 = vld [vmem:[%s6340 + $0x8] sm:$0xff]
    %v6343 = vld [vmem:[%s6340 + $0x10] sm:$0xff]
    %v6344 = vld [vmem:[%s6340 + $0x18] sm:$0xff]
    %v6345 = vld [vmem:[%s6340 + $0x20] sm:$0xff]
    %v6346 = vld [vmem:[%s6340 + $0x28] sm:$0xff]
    %v6347 = vld [vmem:[%s6340 + $0x30] sm:$0xff]
    %v6348 = vld [vmem:[%s6340 + $0x38] sm:$0xff]
    %v6349 = vld [vmem:[%s6340 + $0x40] sm:$0xff]
    %v6350 = vld [vmem:[%s6340 + $0x48] sm:$0xff]
    %v6351 = vld [vmem:[%s6340 + $0x50] sm:$0xff]
    %v6352 = vld [vmem:[%s6340 + $0x58] sm:$0xff]
    %v6353 = vld [vmem:[%s6340 + $0x60] sm:$0xff]
    %v6354 = vld [vmem:[%s6340 + $0x68] sm:$0xff]
    %v6355 = vld [vmem:[%s6340 + $0x70] sm:$0xff]
    %v6356 = vld [vmem:[%s6340 + $0x78] sm:$0xff]
    %v6373 = vunpack.c.l.b16 %v6341
    %v6374 = vunpack.c.h.b16 %v6341
    %v6375 = vunpack.c.l.b16 %v6342
    %v6376 = vunpack.c.h.b16 %v6342
    %v6377 = vunpack.c.l.b16 %v6343
    %v6378 = vunpack.c.h.b16 %v6343
    %v6379 = vunpack.c.l.b16 %v6344
    %v6380 = vunpack.c.h.b16 %v6344
    %v6381 = vunpack.c.l.b16 %v6345
    %v6382 = vunpack.c.h.b16 %v6345
    %v6383 = vunpack.c.l.b16 %v6346
    %v6384 = vunpack.c.h.b16 %v6346
    %v6385 = vunpack.c.l.b16 %v6347
    %v6386 = vunpack.c.h.b16 %v6347
    %v6387 = vunpack.c.l.b16 %v6348
    %v6388 = vunpack.c.h.b16 %v6348
    %v6389 = vunpack.c.l.b16 %v6349
    %v6390 = vunpack.c.h.b16 %v6349
    %v6391 = vunpack.c.l.b16 %v6350
    %v6392 = vunpack.c.h.b16 %v6350
    %v6393 = vunpack.c.l.b16 %v6351
    %v6394 = vunpack.c.h.b16 %v6351
    %v6395 = vunpack.c.l.b16 %v6352
    %v6396 = vunpack.c.h.b16 %v6352
    %v6397 = vunpack.c.l.b16 %v6353
    %v6398 = vunpack.c.h.b16 %v6353
    %v6399 = vunpack.c.l.b16 %v6354
    %v6400 = vunpack.c.h.b16 %v6354
    %v6401 = vunpack.c.l.b16 %v6355
    %v6402 = vunpack.c.h.b16 %v6355
    %v6403 = vunpack.c.l.b16 %v6356
    %v6404 = vunpack.c.h.b16 %v6356
    %v6405 = vpack.c.b16 %v6375, %v6373
    %v6406 = vpack.c.b16 %v6376, %v6374
    %v6407 = vpack.c.b16 %v6379, %v6377
    %v6408 = vpack.c.b16 %v6380, %v6378
    %v6409 = vpack.c.b16 %v6383, %v6381
    %v6410 = vpack.c.b16 %v6384, %v6382
    %v6411 = vpack.c.b16 %v6387, %v6385
    %v6412 = vpack.c.b16 %v6388, %v6386
    %v6413 = vpack.c.b16 %v6391, %v6389
    %v6414 = vpack.c.b16 %v6392, %v6390
    %v6415 = vpack.c.b16 %v6395, %v6393
    %v6416 = vpack.c.b16 %v6396, %v6394
    %v6417 = vpack.c.b16 %v6399, %v6397
    %v6418 = vpack.c.b16 %v6400, %v6398
    %v6419 = vpack.c.b16 %v6403, %v6401
    %v6420 = vpack.c.b16 %v6404, %v6402
    %6437 = vmatprep.subr.bf16.mxu0 %v6420
    %6438 = vmatpush1.bf16.msra.mxu0 %v6419
    %6439 = vmatprep.subr.bf16.mxu0 %v6418
    %6440 = vmatpush1.bf16.msra.mxu0 %v6417
    %6441 = vmatprep.subr.bf16.mxu0 %v6416
    %6442 = vmatpush1.bf16.msra.mxu0 %v6415
    %6443 = vmatprep.subr.bf16.mxu0 %v6414
    %6444 = vmatpush1.bf16.msra.mxu0 %v6413
    %6445 = vmatprep.subr.bf16.mxu0 %v6412
    %6446 = vmatpush1.bf16.msra.mxu0 %v6411
    %6447 = vmatprep.subr.bf16.mxu0 %v6410
    %6448 = vmatpush1.bf16.msra.mxu0 %v6409
    %6449 = vmatprep.subr.bf16.mxu0 %v6408
    %6450 = vmatpush1.bf16.msra.mxu0 %v6407
    %6451 = vmatprep.subr.bf16.mxu0 %v6406
    %6452 = vmatpush1.bf16.msra.mxu0 %v6405
    %6453 = vmatprep.subr.bf16.mxu0 0
    %6454 = vmatpush2.bf16.msra.mxu0 0
    %6455 = vmatprep.subr.bf16.mxu0 0
    %6456 = vmatpush2.bf16.msra.mxu0 0
    %6457 = vmatprep.subr.bf16.mxu0 0
    %6458 = vmatpush2.bf16.msra.mxu0 0
    %6459 = vmatprep.subr.bf16.mxu0 0
    %6460 = vmatpush2.bf16.msra.mxu0 0
    %6461 = vmatprep.subr.bf16.mxu0 0
    %6462 = vmatpush2.bf16.msra.mxu0 0
    %6463 = vmatprep.subr.bf16.mxu0 0
    %6464 = vmatpush2.bf16.msra.mxu0 0
    %6465 = vmatprep.subr.bf16.mxu0 0
    %6466 = vmatpush2.bf16.msra.mxu0 0
    %6467 = vmatprep.subr.bf16.mxu0 0
    %6468 = vmatpush2.bf16.msra.mxu0 0
    %6469 = vmatprep.mubr.bf16.mxu0 0
    %6470 = vmatmul.mubr.bf16.gmra.mxu0 %v6338
    %v6471 = vpop.f32.mrf.mxu0
    %v6472 = vadd.f32 0.0, %v6471
    %v6473 = vpop.f32.mrf.mxu0
    %v6474 = vadd.f32 0.0, %v6473
    %v6475 = vpop.f32.mrf.mxu0
    %v6476 = vadd.f32 0.0, %v6475
    %v6477 = vpop.f32.mrf.mxu0
    %v6478 = vadd.f32 0.0, %v6477
    %6479 = vmatprep.mubr.bf16.mxu0 0
    %6480 = vmatmul.mubr.bf16.gmra.mxu0 %v6339
    %v6481 = vpop.f32.mrf.mxu0
    %v6482 = vadd.f32 0.0, %v6481
    %v6483 = vpop.f32.mrf.mxu0
    %v6484 = vadd.f32 0.0, %v6483
    %v6485 = vpop.f32.mrf.mxu0
    %v6486 = vadd.f32 0.0, %v6485
    %v6487 = vpop.f32.mrf.mxu0
    %v6488 = vadd.f32 0.0, %v6487
    %6489 = vdwg.mxu0
    %v6490 = vadd.f32 %v6260, %v6472
    %v6491 = vadd.f32 %v6261, %v6474
    %v6492 = vadd.f32 %v6262, %v6476
    %v6493 = vadd.f32 %v6263, %v6478
    %v6494 = vadd.f32 %v6264, %v6482
    %v6495 = vadd.f32 %v6265, %v6484
    %v6496 = vadd.f32 %v6266, %v6486
    %v6497 = vadd.f32 %v6267, %v6488
    %s6498 = scalar_lea.vmem %s9, 80
    %v6499 = vld [vmem:[%s6498] sm:$0xf]
    %v6500 = vld [vmem:[%s6498 + $0x4] sm:$0xf]
    %v6501 = vld [vmem:[%s6498 + $0x8] sm:$0xf]
    %v6502 = vld [vmem:[%s6498 + $0xc] sm:$0xf]
    %v6507 = vunpack.c.l.b16 %v6499
    %v6508 = vunpack.c.l.b16 %v6500
    %v6509 = vunpack.c.l.b16 %v6501
    %v6510 = vunpack.c.l.b16 %v6502
    %v6511 = vpack.c.b16 %v6508, %v6507
    %v6512 = vpack.c.b16 %v6510, %v6509
    %v6514 = vsel %vm5376, %v6511, 0
    %v6517 = vsel %vm5376, %v6512, 0
    %6519 = vmatprep.subr.bf16.mxu0 0
    %6520 = vmatpush1.bf16.msra.mxu0 0
    %6521 = vmatprep.subr.bf16.mxu0 0
    %6522 = vmatpush1.bf16.msra.mxu0 0
    %6523 = vmatprep.subr.bf16.mxu0 0
    %6524 = vmatpush1.bf16.msra.mxu0 0
    %6525 = vmatprep.subr.bf16.mxu0 0
    %6526 = vmatpush1.bf16.msra.mxu0 0
    %6527 = vmatprep.subr.bf16.mxu0 0
    %6528 = vmatpush1.bf16.msra.mxu0 0
    %6529 = vmatprep.subr.bf16.mxu0 0
    %6530 = vmatpush1.bf16.msra.mxu0 0
    %6531 = vmatprep.subr.bf16.mxu0 0
    %6532 = vmatpush1.bf16.msra.mxu0 0
    %6533 = vmatprep.subr.bf16.mxu0 0
    %6534 = vmatpush1.bf16.msra.mxu0 %v5384
    %6535 = vmatprep.subr.bf16.mxu0 0
    %6536 = vmatpush2.bf16.msra.mxu0 0
    %6537 = vmatprep.subr.bf16.mxu0 0
    %6538 = vmatpush2.bf16.msra.mxu0 0
    %6539 = vmatprep.subr.bf16.mxu0 0
    %6540 = vmatpush2.bf16.msra.mxu0 0
    %6541 = vmatprep.subr.bf16.mxu0 0
    %6542 = vmatpush2.bf16.msra.mxu0 0
    %6543 = vmatprep.subr.bf16.mxu0 0
    %6544 = vmatpush2.bf16.msra.mxu0 0
    %6545 = vmatprep.subr.bf16.mxu0 0
    %6546 = vmatpush2.bf16.msra.mxu0 0
    %6547 = vmatprep.subr.bf16.mxu0 0
    %6548 = vmatpush2.bf16.msra.mxu0 0
    %6549 = vmatprep.subr.bf16.mxu0 0
    %6550 = vmatpush2.bf16.msra.mxu0 0
    %6551 = vmatprep.mubr.bf16.mxu0 0
    %6552 = vmatmul.mubr.bf16.gmra.mxu0 %v6514
    %v6553 = vpop.f32.mrf.mxu0
    %v6554 = vadd.f32 0.0, %v6553
    %v6555 = vpop.f32.mrf.mxu0
    %v6556 = vpop.f32.mrf.mxu0
    %v6557 = vadd.f32 0.0, %v6556
    %v6558 = vpop.f32.mrf.mxu0
    %6559 = vmatprep.mubr.bf16.mxu0 0
    %6560 = vmatmul.mubr.bf16.gmra.mxu0 %v6517
    %v6561 = vpop.f32.mrf.mxu0
    %v6562 = vadd.f32 0.0, %v6561
    %v6563 = vpop.f32.mrf.mxu0
    %v6564 = vpop.f32.mrf.mxu0
    %v6565 = vadd.f32 0.0, %v6564
    %v6566 = vpop.f32.mrf.mxu0
    %6567 = vdwg.mxu0
    %v6568 = vpack.c.bf16 %v6557, %v6554
    %v6569 = vpack.c.bf16 %v6565, %v6562
    %s6570 = scalar_lea.vmem %s10, 640
    %v6571 = vld [vmem:[%s6570] sm:$0xff]
    %v6572 = vld [vmem:[%s6570 + $0x8] sm:$0xff]
    %v6573 = vld [vmem:[%s6570 + $0x10] sm:$0xff]
    %v6574 = vld [vmem:[%s6570 + $0x18] sm:$0xff]
    %v6575 = vld [vmem:[%s6570 + $0x20] sm:$0xff]
    %v6576 = vld [vmem:[%s6570 + $0x28] sm:$0xff]
    %v6577 = vld [vmem:[%s6570 + $0x30] sm:$0xff]
    %v6578 = vld [vmem:[%s6570 + $0x38] sm:$0xff]
    %v6579 = vld [vmem:[%s6570 + $0x40] sm:$0xff]
    %v6580 = vld [vmem:[%s6570 + $0x48] sm:$0xff]
    %v6581 = vld [vmem:[%s6570 + $0x50] sm:$0xff]
    %v6582 = vld [vmem:[%s6570 + $0x58] sm:$0xff]
    %v6583 = vld [vmem:[%s6570 + $0x60] sm:$0xff]
    %v6584 = vld [vmem:[%s6570 + $0x68] sm:$0xff]
    %v6585 = vld [vmem:[%s6570 + $0x70] sm:$0xff]
    %v6586 = vld [vmem:[%s6570 + $0x78] sm:$0xff]
    %v6603 = vunpack.c.l.b16 %v6571
    %v6604 = vunpack.c.h.b16 %v6571
    %v6605 = vunpack.c.l.b16 %v6572
    %v6606 = vunpack.c.h.b16 %v6572
    %v6607 = vunpack.c.l.b16 %v6573
    %v6608 = vunpack.c.h.b16 %v6573
    %v6609 = vunpack.c.l.b16 %v6574
    %v6610 = vunpack.c.h.b16 %v6574
    %v6611 = vunpack.c.l.b16 %v6575
    %v6612 = vunpack.c.h.b16 %v6575
    %v6613 = vunpack.c.l.b16 %v6576
    %v6614 = vunpack.c.h.b16 %v6576
    %v6615 = vunpack.c.l.b16 %v6577
    %v6616 = vunpack.c.h.b16 %v6577
    %v6617 = vunpack.c.l.b16 %v6578
    %v6618 = vunpack.c.h.b16 %v6578
    %v6619 = vunpack.c.l.b16 %v6579
    %v6620 = vunpack.c.h.b16 %v6579
    %v6621 = vunpack.c.l.b16 %v6580
    %v6622 = vunpack.c.h.b16 %v6580
    %v6623 = vunpack.c.l.b16 %v6581
    %v6624 = vunpack.c.h.b16 %v6581
    %v6625 = vunpack.c.l.b16 %v6582
    %v6626 = vunpack.c.h.b16 %v6582
    %v6627 = vunpack.c.l.b16 %v6583
    %v6628 = vunpack.c.h.b16 %v6583
    %v6629 = vunpack.c.l.b16 %v6584
    %v6630 = vunpack.c.h.b16 %v6584
    %v6631 = vunpack.c.l.b16 %v6585
    %v6632 = vunpack.c.h.b16 %v6585
    %v6633 = vunpack.c.l.b16 %v6586
    %v6634 = vunpack.c.h.b16 %v6586
    %v6635 = vpack.c.b16 %v6605, %v6603
    %v6636 = vpack.c.b16 %v6606, %v6604
    %v6637 = vpack.c.b16 %v6609, %v6607
    %v6638 = vpack.c.b16 %v6610, %v6608
    %v6639 = vpack.c.b16 %v6613, %v6611
    %v6640 = vpack.c.b16 %v6614, %v6612
    %v6641 = vpack.c.b16 %v6617, %v6615
    %v6642 = vpack.c.b16 %v6618, %v6616
    %v6643 = vpack.c.b16 %v6621, %v6619
    %v6644 = vpack.c.b16 %v6622, %v6620
    %v6645 = vpack.c.b16 %v6625, %v6623
    %v6646 = vpack.c.b16 %v6626, %v6624
    %v6647 = vpack.c.b16 %v6629, %v6627
    %v6648 = vpack.c.b16 %v6630, %v6628
    %v6649 = vpack.c.b16 %v6633, %v6631
    %v6650 = vpack.c.b16 %v6634, %v6632
    %6667 = vmatprep.subr.bf16.mxu0 %v6650
    %6668 = vmatpush1.bf16.msra.mxu0 %v6649
    %6669 = vmatprep.subr.bf16.mxu0 %v6648
    %6670 = vmatpush1.bf16.msra.mxu0 %v6647
    %6671 = vmatprep.subr.bf16.mxu0 %v6646
    %6672 = vmatpush1.bf16.msra.mxu0 %v6645
    %6673 = vmatprep.subr.bf16.mxu0 %v6644
    %6674 = vmatpush1.bf16.msra.mxu0 %v6643
    %6675 = vmatprep.subr.bf16.mxu0 %v6642
    %6676 = vmatpush1.bf16.msra.mxu0 %v6641
    %6677 = vmatprep.subr.bf16.mxu0 %v6640
    %6678 = vmatpush1.bf16.msra.mxu0 %v6639
    %6679 = vmatprep.subr.bf16.mxu0 %v6638
    %6680 = vmatpush1.bf16.msra.mxu0 %v6637
    %6681 = vmatprep.subr.bf16.mxu0 %v6636
    %6682 = vmatpush1.bf16.msra.mxu0 %v6635
    %6683 = vmatprep.subr.bf16.mxu0 0
    %6684 = vmatpush2.bf16.msra.mxu0 0
    %6685 = vmatprep.subr.bf16.mxu0 0
    %6686 = vmatpush2.bf16.msra.mxu0 0
    %6687 = vmatprep.subr.bf16.mxu0 0
    %6688 = vmatpush2.bf16.msra.mxu0 0
    %6689 = vmatprep.subr.bf16.mxu0 0
    %6690 = vmatpush2.bf16.msra.mxu0 0
    %6691 = vmatprep.subr.bf16.mxu0 0
    %6692 = vmatpush2.bf16.msra.mxu0 0
    %6693 = vmatprep.subr.bf16.mxu0 0
    %6694 = vmatpush2.bf16.msra.mxu0 0
    %6695 = vmatprep.subr.bf16.mxu0 0
    %6696 = vmatpush2.bf16.msra.mxu0 0
    %6697 = vmatprep.subr.bf16.mxu0 0
    %6698 = vmatpush2.bf16.msra.mxu0 0
    %6699 = vmatprep.mubr.bf16.mxu0 0
    %6700 = vmatmul.mubr.bf16.gmra.mxu0 %v6568
    %v6701 = vpop.f32.mrf.mxu0
    %v6702 = vadd.f32 0.0, %v6701
    %v6703 = vpop.f32.mrf.mxu0
    %v6704 = vadd.f32 0.0, %v6703
    %v6705 = vpop.f32.mrf.mxu0
    %v6706 = vadd.f32 0.0, %v6705
    %v6707 = vpop.f32.mrf.mxu0
    %v6708 = vadd.f32 0.0, %v6707
    %6709 = vmatprep.mubr.bf16.mxu0 0
    %6710 = vmatmul.mubr.bf16.gmra.mxu0 %v6569
    %v6711 = vpop.f32.mrf.mxu0
    %v6712 = vadd.f32 0.0, %v6711
    %v6713 = vpop.f32.mrf.mxu0
    %v6714 = vadd.f32 0.0, %v6713
    %v6715 = vpop.f32.mrf.mxu0
    %v6716 = vadd.f32 0.0, %v6715
    %v6717 = vpop.f32.mrf.mxu0
    %v6718 = vadd.f32 0.0, %v6717
    %6719 = vdwg.mxu0
    %v6720 = vadd.f32 %v6490, %v6702
    %v6721 = vadd.f32 %v6491, %v6704
    %v6722 = vadd.f32 %v6492, %v6706
    %v6723 = vadd.f32 %v6493, %v6708
    %v6724 = vadd.f32 %v6494, %v6712
    %v6725 = vadd.f32 %v6495, %v6714
    %v6726 = vadd.f32 %v6496, %v6716
    %v6727 = vadd.f32 %v6497, %v6718
    %s6728 = scalar_lea.vmem %s9, 96
    %v6729 = vld [vmem:[%s6728] sm:$0xf]
    %v6730 = vld [vmem:[%s6728 + $0x4] sm:$0xf]
    %v6731 = vld [vmem:[%s6728 + $0x8] sm:$0xf]
    %v6732 = vld [vmem:[%s6728 + $0xc] sm:$0xf]
    %v6737 = vunpack.c.l.b16 %v6729
    %v6738 = vunpack.c.l.b16 %v6730
    %v6739 = vunpack.c.l.b16 %v6731
    %v6740 = vunpack.c.l.b16 %v6732
    %v6741 = vpack.c.b16 %v6738, %v6737
    %v6742 = vpack.c.b16 %v6740, %v6739
    %v6744 = vsel %vm5376, %v6741, 0
    %v6747 = vsel %vm5376, %v6742, 0
    %6749 = vmatprep.subr.bf16.mxu0 0
    %6750 = vmatpush1.bf16.msra.mxu0 0
    %6751 = vmatprep.subr.bf16.mxu0 0
    %6752 = vmatpush1.bf16.msra.mxu0 0
    %6753 = vmatprep.subr.bf16.mxu0 0
    %6754 = vmatpush1.bf16.msra.mxu0 0
    %6755 = vmatprep.subr.bf16.mxu0 0
    %6756 = vmatpush1.bf16.msra.mxu0 0
    %6757 = vmatprep.subr.bf16.mxu0 0
    %6758 = vmatpush1.bf16.msra.mxu0 0
    %6759 = vmatprep.subr.bf16.mxu0 0
    %6760 = vmatpush1.bf16.msra.mxu0 0
    %6761 = vmatprep.subr.bf16.mxu0 0
    %6762 = vmatpush1.bf16.msra.mxu0 0
    %6763 = vmatprep.subr.bf16.mxu0 0
    %6764 = vmatpush1.bf16.msra.mxu0 %v5384
    %6765 = vmatprep.subr.bf16.mxu0 0
    %6766 = vmatpush2.bf16.msra.mxu0 0
    %6767 = vmatprep.subr.bf16.mxu0 0
    %6768 = vmatpush2.bf16.msra.mxu0 0
    %6769 = vmatprep.subr.bf16.mxu0 0
    %6770 = vmatpush2.bf16.msra.mxu0 0
    %6771 = vmatprep.subr.bf16.mxu0 0
    %6772 = vmatpush2.bf16.msra.mxu0 0
    %6773 = vmatprep.subr.bf16.mxu0 0
    %6774 = vmatpush2.bf16.msra.mxu0 0
    %6775 = vmatprep.subr.bf16.mxu0 0
    %6776 = vmatpush2.bf16.msra.mxu0 0
    %6777 = vmatprep.subr.bf16.mxu0 0
    %6778 = vmatpush2.bf16.msra.mxu0 0
    %6779 = vmatprep.subr.bf16.mxu0 0
    %6780 = vmatpush2.bf16.msra.mxu0 0
    %6781 = vmatprep.mubr.bf16.mxu0 0
    %6782 = vmatmul.mubr.bf16.gmra.mxu0 %v6744
    %v6783 = vpop.f32.mrf.mxu0
    %v6784 = vadd.f32 0.0, %v6783
    %v6785 = vpop.f32.mrf.mxu0
    %v6786 = vpop.f32.mrf.mxu0
    %v6787 = vadd.f32 0.0, %v6786
    %v6788 = vpop.f32.mrf.mxu0
    %6789 = vmatprep.mubr.bf16.mxu0 0
    %6790 = vmatmul.mubr.bf16.gmra.mxu0 %v6747
    %v6791 = vpop.f32.mrf.mxu0
    %v6792 = vadd.f32 0.0, %v6791
    %v6793 = vpop.f32.mrf.mxu0
    %v6794 = vpop.f32.mrf.mxu0
    %v6795 = vadd.f32 0.0, %v6794
    %v6796 = vpop.f32.mrf.mxu0
    %6797 = vdwg.mxu0
    %v6798 = vpack.c.bf16 %v6787, %v6784
    %v6799 = vpack.c.bf16 %v6795, %v6792
    %s6800 = scalar_lea.vmem %s10, 768
    %v6801 = vld [vmem:[%s6800] sm:$0xff]
    %v6802 = vld [vmem:[%s6800 + $0x8] sm:$0xff]
    %v6803 = vld [vmem:[%s6800 + $0x10] sm:$0xff]
    %v6804 = vld [vmem:[%s6800 + $0x18] sm:$0xff]
    %v6805 = vld [vmem:[%s6800 + $0x20] sm:$0xff]
    %v6806 = vld [vmem:[%s6800 + $0x28] sm:$0xff]
    %v6807 = vld [vmem:[%s6800 + $0x30] sm:$0xff]
    %v6808 = vld [vmem:[%s6800 + $0x38] sm:$0xff]
    %v6809 = vld [vmem:[%s6800 + $0x40] sm:$0xff]
    %v6810 = vld [vmem:[%s6800 + $0x48] sm:$0xff]
    %v6811 = vld [vmem:[%s6800 + $0x50] sm:$0xff]
    %v6812 = vld [vmem:[%s6800 + $0x58] sm:$0xff]
    %v6813 = vld [vmem:[%s6800 + $0x60] sm:$0xff]
    %v6814 = vld [vmem:[%s6800 + $0x68] sm:$0xff]
    %v6815 = vld [vmem:[%s6800 + $0x70] sm:$0xff]
    %v6816 = vld [vmem:[%s6800 + $0x78] sm:$0xff]
    %v6833 = vunpack.c.l.b16 %v6801
    %v6834 = vunpack.c.h.b16 %v6801
    %v6835 = vunpack.c.l.b16 %v6802
    %v6836 = vunpack.c.h.b16 %v6802
    %v6837 = vunpack.c.l.b16 %v6803
    %v6838 = vunpack.c.h.b16 %v6803
    %v6839 = vunpack.c.l.b16 %v6804
    %v6840 = vunpack.c.h.b16 %v6804
    %v6841 = vunpack.c.l.b16 %v6805
    %v6842 = vunpack.c.h.b16 %v6805
    %v6843 = vunpack.c.l.b16 %v6806
    %v6844 = vunpack.c.h.b16 %v6806
    %v6845 = vunpack.c.l.b16 %v6807
    %v6846 = vunpack.c.h.b16 %v6807
    %v6847 = vunpack.c.l.b16 %v6808
    %v6848 = vunpack.c.h.b16 %v6808
    %v6849 = vunpack.c.l.b16 %v6809
    %v6850 = vunpack.c.h.b16 %v6809
    %v6851 = vunpack.c.l.b16 %v6810
    %v6852 = vunpack.c.h.b16 %v6810
    %v6853 = vunpack.c.l.b16 %v6811
    %v6854 = vunpack.c.h.b16 %v6811
    %v6855 = vunpack.c.l.b16 %v6812
    %v6856 = vunpack.c.h.b16 %v6812
    %v6857 = vunpack.c.l.b16 %v6813
    %v6858 = vunpack.c.h.b16 %v6813
    %v6859 = vunpack.c.l.b16 %v6814
    %v6860 = vunpack.c.h.b16 %v6814
    %v6861 = vunpack.c.l.b16 %v6815
    %v6862 = vunpack.c.h.b16 %v6815
    %v6863 = vunpack.c.l.b16 %v6816
    %v6864 = vunpack.c.h.b16 %v6816
    %v6865 = vpack.c.b16 %v6835, %v6833
    %v6866 = vpack.c.b16 %v6836, %v6834
    %v6867 = vpack.c.b16 %v6839, %v6837
    %v6868 = vpack.c.b16 %v6840, %v6838
    %v6869 = vpack.c.b16 %v6843, %v6841
    %v6870 = vpack.c.b16 %v6844, %v6842
    %v6871 = vpack.c.b16 %v6847, %v6845
    %v6872 = vpack.c.b16 %v6848, %v6846
    %v6873 = vpack.c.b16 %v6851, %v6849
    %v6874 = vpack.c.b16 %v6852, %v6850
    %v6875 = vpack.c.b16 %v6855, %v6853
    %v6876 = vpack.c.b16 %v6856, %v6854
    %v6877 = vpack.c.b16 %v6859, %v6857
    %v6878 = vpack.c.b16 %v6860, %v6858
    %v6879 = vpack.c.b16 %v6863, %v6861
    %v6880 = vpack.c.b16 %v6864, %v6862
    %6897 = vmatprep.subr.bf16.mxu0 %v6880
    %6898 = vmatpush1.bf16.msra.mxu0 %v6879
    %6899 = vmatprep.subr.bf16.mxu0 %v6878
    %6900 = vmatpush1.bf16.msra.mxu0 %v6877
    %6901 = vmatprep.subr.bf16.mxu0 %v6876
    %6902 = vmatpush1.bf16.msra.mxu0 %v6875
    %6903 = vmatprep.subr.bf16.mxu0 %v6874
    %6904 = vmatpush1.bf16.msra.mxu0 %v6873
    %6905 = vmatprep.subr.bf16.mxu0 %v6872
    %6906 = vmatpush1.bf16.msra.mxu0 %v6871
    %6907 = vmatprep.subr.bf16.mxu0 %v6870
    %6908 = vmatpush1.bf16.msra.mxu0 %v6869
    %6909 = vmatprep.subr.bf16.mxu0 %v6868
    %6910 = vmatpush1.bf16.msra.mxu0 %v6867
    %6911 = vmatprep.subr.bf16.mxu0 %v6866
    %6912 = vmatpush1.bf16.msra.mxu0 %v6865
    %6913 = vmatprep.subr.bf16.mxu0 0
    %6914 = vmatpush2.bf16.msra.mxu0 0
    %6915 = vmatprep.subr.bf16.mxu0 0
    %6916 = vmatpush2.bf16.msra.mxu0 0
    %6917 = vmatprep.subr.bf16.mxu0 0
    %6918 = vmatpush2.bf16.msra.mxu0 0
    %6919 = vmatprep.subr.bf16.mxu0 0
    %6920 = vmatpush2.bf16.msra.mxu0 0
    %6921 = vmatprep.subr.bf16.mxu0 0
    %6922 = vmatpush2.bf16.msra.mxu0 0
    %6923 = vmatprep.subr.bf16.mxu0 0
    %6924 = vmatpush2.bf16.msra.mxu0 0
    %6925 = vmatprep.subr.bf16.mxu0 0
    %6926 = vmatpush2.bf16.msra.mxu0 0
    %6927 = vmatprep.subr.bf16.mxu0 0
    %6928 = vmatpush2.bf16.msra.mxu0 0
    %6929 = vmatprep.mubr.bf16.mxu0 0
    %6930 = vmatmul.mubr.bf16.gmra.mxu0 %v6798
    %v6931 = vpop.f32.mrf.mxu0
    %v6932 = vadd.f32 0.0, %v6931
    %v6933 = vpop.f32.mrf.mxu0
    %v6934 = vadd.f32 0.0, %v6933
    %v6935 = vpop.f32.mrf.mxu0
    %v6936 = vadd.f32 0.0, %v6935
    %v6937 = vpop.f32.mrf.mxu0
    %v6938 = vadd.f32 0.0, %v6937
    %6939 = vmatprep.mubr.bf16.mxu0 0
    %6940 = vmatmul.mubr.bf16.gmra.mxu0 %v6799
    %v6941 = vpop.f32.mrf.mxu0
    %v6942 = vadd.f32 0.0, %v6941
    %v6943 = vpop.f32.mrf.mxu0
    %v6944 = vadd.f32 0.0, %v6943
    %v6945 = vpop.f32.mrf.mxu0
    %v6946 = vadd.f32 0.0, %v6945
    %v6947 = vpop.f32.mrf.mxu0
    %v6948 = vadd.f32 0.0, %v6947
    %6949 = vdwg.mxu0
    %v6950 = vadd.f32 %v6720, %v6932
    %v6951 = vadd.f32 %v6721, %v6934
    %v6952 = vadd.f32 %v6722, %v6936
    %v6953 = vadd.f32 %v6723, %v6938
    %v6954 = vadd.f32 %v6724, %v6942
    %v6955 = vadd.f32 %v6725, %v6944
    %v6956 = vadd.f32 %v6726, %v6946
    %v6957 = vadd.f32 %v6727, %v6948
    %s6958 = scalar_lea.vmem %s9, 112
    %v6959 = vld [vmem:[%s6958] sm:$0xf]
    %v6960 = vld [vmem:[%s6958 + $0x4] sm:$0xf]
    %v6961 = vld [vmem:[%s6958 + $0x8] sm:$0xf]
    %v6962 = vld [vmem:[%s6958 + $0xc] sm:$0xf]
    %v6967 = vunpack.c.l.b16 %v6959
    %v6968 = vunpack.c.l.b16 %v6960
    %v6969 = vunpack.c.l.b16 %v6961
    %v6970 = vunpack.c.l.b16 %v6962
    %v6971 = vpack.c.b16 %v6968, %v6967
    %v6972 = vpack.c.b16 %v6970, %v6969
    %v6974 = vsel %vm5376, %v6971, 0
    %v6977 = vsel %vm5376, %v6972, 0
    %6979 = vmatprep.subr.bf16.mxu0 0
    %6980 = vmatpush1.bf16.msra.mxu0 0
    %6981 = vmatprep.subr.bf16.mxu0 0
    %6982 = vmatpush1.bf16.msra.mxu0 0
    %6983 = vmatprep.subr.bf16.mxu0 0
    %6984 = vmatpush1.bf16.msra.mxu0 0
    %6985 = vmatprep.subr.bf16.mxu0 0
    %6986 = vmatpush1.bf16.msra.mxu0 0
    %6987 = vmatprep.subr.bf16.mxu0 0
    %6988 = vmatpush1.bf16.msra.mxu0 0
    %6989 = vmatprep.subr.bf16.mxu0 0
    %6990 = vmatpush1.bf16.msra.mxu0 0
    %6991 = vmatprep.subr.bf16.mxu0 0
    %6992 = vmatpush1.bf16.msra.mxu0 0
    %6993 = vmatprep.subr.bf16.mxu0 0
    %6994 = vmatpush1.bf16.msra.mxu0 %v5384
    %6995 = vmatprep.subr.bf16.mxu0 0
    %6996 = vmatpush2.bf16.msra.mxu0 0
    %6997 = vmatprep.subr.bf16.mxu0 0
    %6998 = vmatpush2.bf16.msra.mxu0 0
    %6999 = vmatprep.subr.bf16.mxu0 0
    %7000 = vmatpush2.bf16.msra.mxu0 0
    %7001 = vmatprep.subr.bf16.mxu0 0
    %7002 = vmatpush2.bf16.msra.mxu0 0
    %7003 = vmatprep.subr.bf16.mxu0 0
    %7004 = vmatpush2.bf16.msra.mxu0 0
    %7005 = vmatprep.subr.bf16.mxu0 0
    %7006 = vmatpush2.bf16.msra.mxu0 0
    %7007 = vmatprep.subr.bf16.mxu0 0
    %7008 = vmatpush2.bf16.msra.mxu0 0
    %7009 = vmatprep.subr.bf16.mxu0 0
    %7010 = vmatpush2.bf16.msra.mxu0 0
    %7011 = vmatprep.mubr.bf16.mxu0 0
    %7012 = vmatmul.mubr.bf16.gmra.mxu0 %v6974
    %v7013 = vpop.f32.mrf.mxu0
    %v7014 = vadd.f32 0.0, %v7013
    %v7015 = vpop.f32.mrf.mxu0
    %v7016 = vpop.f32.mrf.mxu0
    %v7017 = vadd.f32 0.0, %v7016
    %v7018 = vpop.f32.mrf.mxu0
    %7019 = vmatprep.mubr.bf16.mxu0 0
    %7020 = vmatmul.mubr.bf16.gmra.mxu0 %v6977
    %v7021 = vpop.f32.mrf.mxu0
    %v7022 = vadd.f32 0.0, %v7021
    %v7023 = vpop.f32.mrf.mxu0
    %v7024 = vpop.f32.mrf.mxu0
    %v7025 = vadd.f32 0.0, %v7024
    %v7026 = vpop.f32.mrf.mxu0
    %7027 = vdwg.mxu0
    %v7028 = vpack.c.bf16 %v7017, %v7014
    %v7029 = vpack.c.bf16 %v7025, %v7022
    %s7030 = scalar_lea.vmem %s10, 896
    %v7031 = vld [vmem:[%s7030] sm:$0xff]
    %v7032 = vld [vmem:[%s7030 + $0x8] sm:$0xff]
    %v7033 = vld [vmem:[%s7030 + $0x10] sm:$0xff]
    %v7034 = vld [vmem:[%s7030 + $0x18] sm:$0xff]
    %v7035 = vld [vmem:[%s7030 + $0x20] sm:$0xff]
    %v7036 = vld [vmem:[%s7030 + $0x28] sm:$0xff]
    %v7037 = vld [vmem:[%s7030 + $0x30] sm:$0xff]
    %v7038 = vld [vmem:[%s7030 + $0x38] sm:$0xff]
    %v7039 = vld [vmem:[%s7030 + $0x40] sm:$0xff]
    %v7040 = vld [vmem:[%s7030 + $0x48] sm:$0xff]
    %v7041 = vld [vmem:[%s7030 + $0x50] sm:$0xff]
    %v7042 = vld [vmem:[%s7030 + $0x58] sm:$0xff]
    %v7043 = vld [vmem:[%s7030 + $0x60] sm:$0xff]
    %v7044 = vld [vmem:[%s7030 + $0x68] sm:$0xff]
    %v7045 = vld [vmem:[%s7030 + $0x70] sm:$0xff]
    %v7046 = vld [vmem:[%s7030 + $0x78] sm:$0xff]
    %v7063 = vunpack.c.l.b16 %v7031
    %v7064 = vunpack.c.h.b16 %v7031
    %v7065 = vunpack.c.l.b16 %v7032
    %v7066 = vunpack.c.h.b16 %v7032
    %v7067 = vunpack.c.l.b16 %v7033
    %v7068 = vunpack.c.h.b16 %v7033
    %v7069 = vunpack.c.l.b16 %v7034
    %v7070 = vunpack.c.h.b16 %v7034
    %v7071 = vunpack.c.l.b16 %v7035
    %v7072 = vunpack.c.h.b16 %v7035
    %v7073 = vunpack.c.l.b16 %v7036
    %v7074 = vunpack.c.h.b16 %v7036
    %v7075 = vunpack.c.l.b16 %v7037
    %v7076 = vunpack.c.h.b16 %v7037
    %v7077 = vunpack.c.l.b16 %v7038
    %v7078 = vunpack.c.h.b16 %v7038
    %v7079 = vunpack.c.l.b16 %v7039
    %v7080 = vunpack.c.h.b16 %v7039
    %v7081 = vunpack.c.l.b16 %v7040
    %v7082 = vunpack.c.h.b16 %v7040
    %v7083 = vunpack.c.l.b16 %v7041
    %v7084 = vunpack.c.h.b16 %v7041
    %v7085 = vunpack.c.l.b16 %v7042
    %v7086 = vunpack.c.h.b16 %v7042
    %v7087 = vunpack.c.l.b16 %v7043
    %v7088 = vunpack.c.h.b16 %v7043
    %v7089 = vunpack.c.l.b16 %v7044
    %v7090 = vunpack.c.h.b16 %v7044
    %v7091 = vunpack.c.l.b16 %v7045
    %v7092 = vunpack.c.h.b16 %v7045
    %v7093 = vunpack.c.l.b16 %v7046
    %v7094 = vunpack.c.h.b16 %v7046
    %v7095 = vpack.c.b16 %v7065, %v7063
    %v7096 = vpack.c.b16 %v7066, %v7064
    %v7097 = vpack.c.b16 %v7069, %v7067
    %v7098 = vpack.c.b16 %v7070, %v7068
    %v7099 = vpack.c.b16 %v7073, %v7071
    %v7100 = vpack.c.b16 %v7074, %v7072
    %v7101 = vpack.c.b16 %v7077, %v7075
    %v7102 = vpack.c.b16 %v7078, %v7076
    %v7103 = vpack.c.b16 %v7081, %v7079
    %v7104 = vpack.c.b16 %v7082, %v7080
    %v7105 = vpack.c.b16 %v7085, %v7083
    %v7106 = vpack.c.b16 %v7086, %v7084
    %v7107 = vpack.c.b16 %v7089, %v7087
    %v7108 = vpack.c.b16 %v7090, %v7088
    %v7109 = vpack.c.b16 %v7093, %v7091
    %v7110 = vpack.c.b16 %v7094, %v7092
    %7127 = vmatprep.subr.bf16.mxu0 %v7110
    %7128 = vmatpush1.bf16.msra.mxu0 %v7109
    %7129 = vmatprep.subr.bf16.mxu0 %v7108
    %7130 = vmatpush1.bf16.msra.mxu0 %v7107
    %7131 = vmatprep.subr.bf16.mxu0 %v7106
    %7132 = vmatpush1.bf16.msra.mxu0 %v7105
    %7133 = vmatprep.subr.bf16.mxu0 %v7104
    %7134 = vmatpush1.bf16.msra.mxu0 %v7103
    %7135 = vmatprep.subr.bf16.mxu0 %v7102
    %7136 = vmatpush1.bf16.msra.mxu0 %v7101
    %7137 = vmatprep.subr.bf16.mxu0 %v7100
    %7138 = vmatpush1.bf16.msra.mxu0 %v7099
    %7139 = vmatprep.subr.bf16.mxu0 %v7098
    %7140 = vmatpush1.bf16.msra.mxu0 %v7097
    %7141 = vmatprep.subr.bf16.mxu0 %v7096
    %7142 = vmatpush1.bf16.msra.mxu0 %v7095
    %7143 = vmatprep.subr.bf16.mxu0 0
    %7144 = vmatpush2.bf16.msra.mxu0 0
    %7145 = vmatprep.subr.bf16.mxu0 0
    %7146 = vmatpush2.bf16.msra.mxu0 0
    %7147 = vmatprep.subr.bf16.mxu0 0
    %7148 = vmatpush2.bf16.msra.mxu0 0
    %7149 = vmatprep.subr.bf16.mxu0 0
    %7150 = vmatpush2.bf16.msra.mxu0 0
    %7151 = vmatprep.subr.bf16.mxu0 0
    %7152 = vmatpush2.bf16.msra.mxu0 0
    %7153 = vmatprep.subr.bf16.mxu0 0
    %7154 = vmatpush2.bf16.msra.mxu0 0
    %7155 = vmatprep.subr.bf16.mxu0 0
    %7156 = vmatpush2.bf16.msra.mxu0 0
    %7157 = vmatprep.subr.bf16.mxu0 0
    %7158 = vmatpush2.bf16.msra.mxu0 0
    %7159 = vmatprep.mubr.bf16.mxu0 0
    %7160 = vmatmul.mubr.bf16.gmra.mxu0 %v7028
    %v7161 = vpop.f32.mrf.mxu0
    %v7162 = vadd.f32 0.0, %v7161
    %v7163 = vpop.f32.mrf.mxu0
    %v7164 = vadd.f32 0.0, %v7163
    %v7165 = vpop.f32.mrf.mxu0
    %v7166 = vadd.f32 0.0, %v7165
    %v7167 = vpop.f32.mrf.mxu0
    %v7168 = vadd.f32 0.0, %v7167
    %7169 = vmatprep.mubr.bf16.mxu0 0
    %7170 = vmatmul.mubr.bf16.gmra.mxu0 %v7029
    %v7171 = vpop.f32.mrf.mxu0
    %v7172 = vadd.f32 0.0, %v7171
    %v7173 = vpop.f32.mrf.mxu0
    %v7174 = vadd.f32 0.0, %v7173
    %v7175 = vpop.f32.mrf.mxu0
    %v7176 = vadd.f32 0.0, %v7175
    %v7177 = vpop.f32.mrf.mxu0
    %v7178 = vadd.f32 0.0, %v7177
    %7179 = vdwg.mxu0
    %v7180 = vadd.f32 %v6950, %v7162
    %v7181 = vadd.f32 %v6951, %v7164
    %v7182 = vadd.f32 %v6952, %v7166
    %v7183 = vadd.f32 %v6953, %v7168
    %v7184 = vadd.f32 %v6954, %v7172
    %v7185 = vadd.f32 %v6955, %v7174
    %v7186 = vadd.f32 %v6956, %v7176
    %v7187 = vadd.f32 %v6957, %v7178
    %s7188 = scalar_lea.vmem %s9, 128
    %v7189 = vld [vmem:[%s7188] sm:$0xf]
    %v7190 = vld [vmem:[%s7188 + $0x4] sm:$0xf]
    %v7191 = vld [vmem:[%s7188 + $0x8] sm:$0xf]
    %v7192 = vld [vmem:[%s7188 + $0xc] sm:$0xf]
    %v7197 = vunpack.c.l.b16 %v7189
    %v7198 = vunpack.c.l.b16 %v7190
    %v7199 = vunpack.c.l.b16 %v7191
    %v7200 = vunpack.c.l.b16 %v7192
    %v7201 = vpack.c.b16 %v7198, %v7197
    %v7202 = vpack.c.b16 %v7200, %v7199
    %v7204 = vsel %vm5376, %v7201, 0
    %v7207 = vsel %vm5376, %v7202, 0
    %7209 = vmatprep.subr.bf16.mxu0 0
    %7210 = vmatpush1.bf16.msra.mxu0 0
    %7211 = vmatprep.subr.bf16.mxu0 0
    %7212 = vmatpush1.bf16.msra.mxu0 0
    %7213 = vmatprep.subr.bf16.mxu0 0
    %7214 = vmatpush1.bf16.msra.mxu0 0
    %7215 = vmatprep.subr.bf16.mxu0 0
    %7216 = vmatpush1.bf16.msra.mxu0 0
    %7217 = vmatprep.subr.bf16.mxu0 0
    %7218 = vmatpush1.bf16.msra.mxu0 0
    %7219 = vmatprep.subr.bf16.mxu0 0
    %7220 = vmatpush1.bf16.msra.mxu0 0
    %7221 = vmatprep.subr.bf16.mxu0 0
    %7222 = vmatpush1.bf16.msra.mxu0 0
    %7223 = vmatprep.subr.bf16.mxu0 0
    %7224 = vmatpush1.bf16.msra.mxu0 %v5384
    %7225 = vmatprep.subr.bf16.mxu0 0
    %7226 = vmatpush2.bf16.msra.mxu0 0
    %7227 = vmatprep.subr.bf16.mxu0 0
    %7228 = vmatpush2.bf16.msra.mxu0 0
    %7229 = vmatprep.subr.bf16.mxu0 0
    %7230 = vmatpush2.bf16.msra.mxu0 0
    %7231 = vmatprep.subr.bf16.mxu0 0
    %7232 = vmatpush2.bf16.msra.mxu0 0
    %7233 = vmatprep.subr.bf16.mxu0 0
    %7234 = vmatpush2.bf16.msra.mxu0 0
    %7235 = vmatprep.subr.bf16.mxu0 0
    %7236 = vmatpush2.bf16.msra.mxu0 0
    %7237 = vmatprep.subr.bf16.mxu0 0
    %7238 = vmatpush2.bf16.msra.mxu0 0
    %7239 = vmatprep.subr.bf16.mxu0 0
    %7240 = vmatpush2.bf16.msra.mxu0 0
    %7241 = vmatprep.mubr.bf16.mxu0 0
    %7242 = vmatmul.mubr.bf16.gmra.mxu0 %v7204
    %v7243 = vpop.f32.mrf.mxu0
    %v7244 = vadd.f32 0.0, %v7243
    %v7245 = vpop.f32.mrf.mxu0
    %v7246 = vpop.f32.mrf.mxu0
    %v7247 = vadd.f32 0.0, %v7246
    %v7248 = vpop.f32.mrf.mxu0
    %7249 = vmatprep.mubr.bf16.mxu0 0
    %7250 = vmatmul.mubr.bf16.gmra.mxu0 %v7207
    %v7251 = vpop.f32.mrf.mxu0
    %v7252 = vadd.f32 0.0, %v7251
    %v7253 = vpop.f32.mrf.mxu0
    %v7254 = vpop.f32.mrf.mxu0
    %v7255 = vadd.f32 0.0, %v7254
    %v7256 = vpop.f32.mrf.mxu0
    %7257 = vdwg.mxu0
    %v7258 = vpack.c.bf16 %v7247, %v7244
    %v7259 = vpack.c.bf16 %v7255, %v7252
    %s7260 = scalar_lea.vmem %s10, 1024
    %v7261 = vld [vmem:[%s7260] sm:$0xff]
    %v7262 = vld [vmem:[%s7260 + $0x8] sm:$0xff]
    %v7263 = vld [vmem:[%s7260 + $0x10] sm:$0xff]
    %v7264 = vld [vmem:[%s7260 + $0x18] sm:$0xff]
    %v7265 = vld [vmem:[%s7260 + $0x20] sm:$0xff]
    %v7266 = vld [vmem:[%s7260 + $0x28] sm:$0xff]
    %v7267 = vld [vmem:[%s7260 + $0x30] sm:$0xff]
    %v7268 = vld [vmem:[%s7260 + $0x38] sm:$0xff]
    %v7269 = vld [vmem:[%s7260 + $0x40] sm:$0xff]
    %v7270 = vld [vmem:[%s7260 + $0x48] sm:$0xff]
    %v7271 = vld [vmem:[%s7260 + $0x50] sm:$0xff]
    %v7272 = vld [vmem:[%s7260 + $0x58] sm:$0xff]
    %v7273 = vld [vmem:[%s7260 + $0x60] sm:$0xff]
    %v7274 = vld [vmem:[%s7260 + $0x68] sm:$0xff]
    %v7275 = vld [vmem:[%s7260 + $0x70] sm:$0xff]
    %v7276 = vld [vmem:[%s7260 + $0x78] sm:$0xff]
    %v7293 = vunpack.c.l.b16 %v7261
    %v7294 = vunpack.c.h.b16 %v7261
    %v7295 = vunpack.c.l.b16 %v7262
    %v7296 = vunpack.c.h.b16 %v7262
    %v7297 = vunpack.c.l.b16 %v7263
    %v7298 = vunpack.c.h.b16 %v7263
    %v7299 = vunpack.c.l.b16 %v7264
    %v7300 = vunpack.c.h.b16 %v7264
    %v7301 = vunpack.c.l.b16 %v7265
    %v7302 = vunpack.c.h.b16 %v7265
    %v7303 = vunpack.c.l.b16 %v7266
    %v7304 = vunpack.c.h.b16 %v7266
    %v7305 = vunpack.c.l.b16 %v7267
    %v7306 = vunpack.c.h.b16 %v7267
    %v7307 = vunpack.c.l.b16 %v7268
    %v7308 = vunpack.c.h.b16 %v7268
    %v7309 = vunpack.c.l.b16 %v7269
    %v7310 = vunpack.c.h.b16 %v7269
    %v7311 = vunpack.c.l.b16 %v7270
    %v7312 = vunpack.c.h.b16 %v7270
    %v7313 = vunpack.c.l.b16 %v7271
    %v7314 = vunpack.c.h.b16 %v7271
    %v7315 = vunpack.c.l.b16 %v7272
    %v7316 = vunpack.c.h.b16 %v7272
    %v7317 = vunpack.c.l.b16 %v7273
    %v7318 = vunpack.c.h.b16 %v7273
    %v7319 = vunpack.c.l.b16 %v7274
    %v7320 = vunpack.c.h.b16 %v7274
    %v7321 = vunpack.c.l.b16 %v7275
    %v7322 = vunpack.c.h.b16 %v7275
    %v7323 = vunpack.c.l.b16 %v7276
    %v7324 = vunpack.c.h.b16 %v7276
    %v7325 = vpack.c.b16 %v7295, %v7293
    %v7326 = vpack.c.b16 %v7296, %v7294
    %v7327 = vpack.c.b16 %v7299, %v7297
    %v7328 = vpack.c.b16 %v7300, %v7298
    %v7329 = vpack.c.b16 %v7303, %v7301
    %v7330 = vpack.c.b16 %v7304, %v7302
    %v7331 = vpack.c.b16 %v7307, %v7305
    %v7332 = vpack.c.b16 %v7308, %v7306
    %v7333 = vpack.c.b16 %v7311, %v7309
    %v7334 = vpack.c.b16 %v7312, %v7310
    %v7335 = vpack.c.b16 %v7315, %v7313
    %v7336 = vpack.c.b16 %v7316, %v7314
    %v7337 = vpack.c.b16 %v7319, %v7317
    %v7338 = vpack.c.b16 %v7320, %v7318
    %v7339 = vpack.c.b16 %v7323, %v7321
    %v7340 = vpack.c.b16 %v7324, %v7322
    %7357 = vmatprep.subr.bf16.mxu0 %v7340
    %7358 = vmatpush1.bf16.msra.mxu0 %v7339
    %7359 = vmatprep.subr.bf16.mxu0 %v7338
    %7360 = vmatpush1.bf16.msra.mxu0 %v7337
    %7361 = vmatprep.subr.bf16.mxu0 %v7336
    %7362 = vmatpush1.bf16.msra.mxu0 %v7335
    %7363 = vmatprep.subr.bf16.mxu0 %v7334
    %7364 = vmatpush1.bf16.msra.mxu0 %v7333
    %7365 = vmatprep.subr.bf16.mxu0 %v7332
    %7366 = vmatpush1.bf16.msra.mxu0 %v7331
    %7367 = vmatprep.subr.bf16.mxu0 %v7330
    %7368 = vmatpush1.bf16.msra.mxu0 %v7329
    %7369 = vmatprep.subr.bf16.mxu0 %v7328
    %7370 = vmatpush1.bf16.msra.mxu0 %v7327
    %7371 = vmatprep.subr.bf16.mxu0 %v7326
    %7372 = vmatpush1.bf16.msra.mxu0 %v7325
    %7373 = vmatprep.subr.bf16.mxu0 0
    %7374 = vmatpush2.bf16.msra.mxu0 0
    %7375 = vmatprep.subr.bf16.mxu0 0
    %7376 = vmatpush2.bf16.msra.mxu0 0
    %7377 = vmatprep.subr.bf16.mxu0 0
    %7378 = vmatpush2.bf16.msra.mxu0 0
    %7379 = vmatprep.subr.bf16.mxu0 0
    %7380 = vmatpush2.bf16.msra.mxu0 0
    %7381 = vmatprep.subr.bf16.mxu0 0
    %7382 = vmatpush2.bf16.msra.mxu0 0
    %7383 = vmatprep.subr.bf16.mxu0 0
    %7384 = vmatpush2.bf16.msra.mxu0 0
    %7385 = vmatprep.subr.bf16.mxu0 0
    %7386 = vmatpush2.bf16.msra.mxu0 0
    %7387 = vmatprep.subr.bf16.mxu0 0
    %7388 = vmatpush2.bf16.msra.mxu0 0
    %7389 = vmatprep.mubr.bf16.mxu0 0
    %7390 = vmatmul.mubr.bf16.gmra.mxu0 %v7258
    %v7391 = vpop.f32.mrf.mxu0
    %v7392 = vadd.f32 0.0, %v7391
    %v7393 = vpop.f32.mrf.mxu0
    %v7394 = vadd.f32 0.0, %v7393
    %v7395 = vpop.f32.mrf.mxu0
    %v7396 = vadd.f32 0.0, %v7395
    %v7397 = vpop.f32.mrf.mxu0
    %v7398 = vadd.f32 0.0, %v7397
    %7399 = vmatprep.mubr.bf16.mxu0 0
    %7400 = vmatmul.mubr.bf16.gmra.mxu0 %v7259
    %v7401 = vpop.f32.mrf.mxu0
    %v7402 = vadd.f32 0.0, %v7401
    %v7403 = vpop.f32.mrf.mxu0
    %v7404 = vadd.f32 0.0, %v7403
    %v7405 = vpop.f32.mrf.mxu0
    %v7406 = vadd.f32 0.0, %v7405
    %v7407 = vpop.f32.mrf.mxu0
    %v7408 = vadd.f32 0.0, %v7407
    %7409 = vdwg.mxu0
    %v7410 = vadd.f32 %v7180, %v7392
    %v7411 = vadd.f32 %v7181, %v7394
    %v7412 = vadd.f32 %v7182, %v7396
    %v7413 = vadd.f32 %v7183, %v7398
    %v7414 = vadd.f32 %v7184, %v7402
    %v7415 = vadd.f32 %v7185, %v7404
    %v7416 = vadd.f32 %v7186, %v7406
    %v7417 = vadd.f32 %v7187, %v7408
    %v7418 = vld [vmem:[#allocation13] sm:$0x3]
    %v7419 = vmax.f32 %v7410, %v7412
    %v7420 = vmax.f32 %v7411, %v7413
    %v7421 = vmax.f32 %v7414, %v7416
    %v7422 = vmax.f32 %v7415, %v7417
    %v7423 = vmax.f32 %v7419, %v7421
    %v7424 = vmax.f32 %v7420, %v7422
    %v7426 = vlaneseq
    %v7427 = vshrl.u32 %v7426, 7
    %v7428 = vsub.s32 0, %v7427
    %v7429 = vrot.slane %v7418, %v7428
    %v7430 = vlaneseq
    %v7431 = vshrl.u32 %v7430, 7
    %v7432 = vsub.s32 1, %v7431
    %v7433 = vrot.slane %v7418, %v7432
    %v7436 = vadd.f32 %v7423, %v7429
    %v7437 = vadd.f32 %v7424, %v7433
    %v7438 = vmax.f32 %v7436, 0.0
    %v7439 = vmax.f32 %v7437, 0.0
    %v7440 = vpack.c.bf16 %v7438, %v7438
    %v7441 = vpack.c.bf16 %v7439, %v7439
    %v7442 = vld [vmem:[#allocation15] sm:$0xff]
    %v7443 = vld [vmem:[#allocation15 + $0x8] sm:$0xff]
    %v7444 = vld [vmem:[#allocation15 + $0x10] sm:$0xff]
    %v7445 = vld [vmem:[#allocation15 + $0x18] sm:$0xff]
    %v7446 = vld [vmem:[#allocation15 + $0x20] sm:$0xff]
    %v7447 = vld [vmem:[#allocation15 + $0x28] sm:$0xff]
    %v7448 = vld [vmem:[#allocation15 + $0x30] sm:$0xff]
    %v7449 = vld [vmem:[#allocation15 + $0x38] sm:$0xff]
    %v7450 = vld [vmem:[#allocation15 + $0x40] sm:$0xff]
    %v7451 = vld [vmem:[#allocation15 + $0x48] sm:$0xff]
    %v7452 = vld [vmem:[#allocation15 + $0x50] sm:$0xff]
    %v7453 = vld [vmem:[#allocation15 + $0x58] sm:$0xff]
    %v7454 = vld [vmem:[#allocation15 + $0x60] sm:$0xff]
    %v7455 = vld [vmem:[#allocation15 + $0x68] sm:$0xff]
    %v7456 = vld [vmem:[#allocation15 + $0x70] sm:$0xff]
    %v7457 = vld [vmem:[#allocation15 + $0x78] sm:$0xff]
    %v7458 = vld [vmem:[#allocation15 + $0x80] sm:$0xff]
    %v7459 = vld [vmem:[#allocation15 + $0x88] sm:$0xff]
    %v7460 = vld [vmem:[#allocation15 + $0x90] sm:$0xff]
    %v7461 = vld [vmem:[#allocation15 + $0x98] sm:$0xff]
    %v7462 = vld [vmem:[#allocation15 + $0xa0] sm:$0xff]
    %v7463 = vld [vmem:[#allocation15 + $0xa8] sm:$0xff]
    %v7464 = vld [vmem:[#allocation15 + $0xb0] sm:$0xff]
    %v7465 = vld [vmem:[#allocation15 + $0xb8] sm:$0xff]
    %v7466 = vld [vmem:[#allocation15 + $0xc0] sm:$0xff]
    %v7467 = vld [vmem:[#allocation15 + $0xc8] sm:$0xff]
    %v7468 = vld [vmem:[#allocation15 + $0xd0] sm:$0xff]
    %v7469 = vld [vmem:[#allocation15 + $0xd8] sm:$0xff]
    %v7470 = vld [vmem:[#allocation15 + $0xe0] sm:$0xff]
    %v7471 = vld [vmem:[#allocation15 + $0xe8] sm:$0xff]
    %v7472 = vld [vmem:[#allocation15 + $0xf0] sm:$0xff]
    %v7473 = vld [vmem:[#allocation15 + $0xf8] sm:$0xff]
    %v7474 = vld [vmem:[#allocation15 + $0x100] sm:$0xff]
    %v7475 = vld [vmem:[#allocation15 + $0x108] sm:$0xff]
    %v7476 = vld [vmem:[#allocation15 + $0x110] sm:$0xff]
    %v7477 = vld [vmem:[#allocation15 + $0x118] sm:$0xff]
    %v7478 = vld [vmem:[#allocation15 + $0x120] sm:$0xff]
    %v7479 = vld [vmem:[#allocation15 + $0x128] sm:$0xff]
    %v7480 = vld [vmem:[#allocation15 + $0x130] sm:$0xff]
    %v7481 = vld [vmem:[#allocation15 + $0x138] sm:$0xff]
    %v7482 = vld [vmem:[#allocation15 + $0x140] sm:$0xff]
    %v7483 = vld [vmem:[#allocation15 + $0x148] sm:$0xff]
    %v7484 = vld [vmem:[#allocation15 + $0x150] sm:$0xff]
    %v7485 = vld [vmem:[#allocation15 + $0x158] sm:$0xff]
    %v7486 = vld [vmem:[#allocation15 + $0x160] sm:$0xff]
    %v7487 = vld [vmem:[#allocation15 + $0x168] sm:$0xff]
    %v7488 = vld [vmem:[#allocation15 + $0x170] sm:$0xff]
    %v7489 = vld [vmem:[#allocation15 + $0x178] sm:$0xff]
    %v7490 = vld [vmem:[#allocation15 + $0x180] sm:$0xff]
    %v7491 = vld [vmem:[#allocation15 + $0x188] sm:$0xff]
    %v7492 = vld [vmem:[#allocation15 + $0x190] sm:$0xff]
    %v7493 = vld [vmem:[#allocation15 + $0x198] sm:$0xff]
    %v7494 = vld [vmem:[#allocation15 + $0x1a0] sm:$0xff]
    %v7495 = vld [vmem:[#allocation15 + $0x1a8] sm:$0xff]
    %v7496 = vld [vmem:[#allocation15 + $0x1b0] sm:$0xff]
    %v7497 = vld [vmem:[#allocation15 + $0x1b8] sm:$0xff]
    %v7498 = vld [vmem:[#allocation15 + $0x1c0] sm:$0xff]
    %v7499 = vld [vmem:[#allocation15 + $0x1c8] sm:$0xff]
    %v7500 = vld [vmem:[#allocation15 + $0x1d0] sm:$0xff]
    %v7501 = vld [vmem:[#allocation15 + $0x1d8] sm:$0xff]
    %v7502 = vld [vmem:[#allocation15 + $0x1e0] sm:$0xff]
    %v7503 = vld [vmem:[#allocation15 + $0x1e8] sm:$0xff]
    %v7504 = vld [vmem:[#allocation15 + $0x1f0] sm:$0xff]
    %v7505 = vld [vmem:[#allocation15 + $0x1f8] sm:$0xff]
    %v7506 = vld [vmem:[%s13] sm:$0xf]
    %v7508 = vlaneseq
    %v7509 = vshrl.u32 %v7508, 7
    %v7510 = vsub.s32 0, %v7509
    %v7511 = vrot.slane %v7506, %v7510
    %v7512 = vlaneseq
    %v7513 = vshrl.u32 %v7512, 7
    %v7514 = vsub.s32 1, %v7513
    %v7515 = vrot.slane %v7506, %v7514
    %v7516 = vlaneseq
    %v7517 = vshrl.u32 %v7516, 7
    %v7518 = vsub.s32 2, %v7517
    %v7519 = vrot.slane %v7506, %v7518
    %v7520 = vlaneseq
    %v7521 = vshrl.u32 %v7520, 7
    %v7522 = vsub.s32 3, %v7521
    %v7523 = vrot.slane %v7506, %v7522
    %v7592 = vunpack.c.l.b16 %v7442
    %v7593 = vunpack.c.h.b16 %v7442
    %v7594 = vunpack.c.l.b16 %v7443
    %v7595 = vunpack.c.h.b16 %v7443
    %v7596 = vunpack.c.l.b16 %v7444
    %v7597 = vunpack.c.h.b16 %v7444
    %v7598 = vunpack.c.l.b16 %v7445
    %v7599 = vunpack.c.h.b16 %v7445
    %v7600 = vunpack.c.l.b16 %v7446
    %v7601 = vunpack.c.h.b16 %v7446
    %v7602 = vunpack.c.l.b16 %v7447
    %v7603 = vunpack.c.h.b16 %v7447
    %v7604 = vunpack.c.l.b16 %v7448
    %v7605 = vunpack.c.h.b16 %v7448
    %v7606 = vunpack.c.l.b16 %v7449
    %v7607 = vunpack.c.h.b16 %v7449
    %v7608 = vunpack.c.l.b16 %v7450
    %v7609 = vunpack.c.h.b16 %v7450
    %v7610 = vunpack.c.l.b16 %v7451
    %v7611 = vunpack.c.h.b16 %v7451
    %v7612 = vunpack.c.l.b16 %v7452
    %v7613 = vunpack.c.h.b16 %v7452
    %v7614 = vunpack.c.l.b16 %v7453
    %v7615 = vunpack.c.h.b16 %v7453
    %v7616 = vunpack.c.l.b16 %v7454
    %v7617 = vunpack.c.h.b16 %v7454
    %v7618 = vunpack.c.l.b16 %v7455
    %v7619 = vunpack.c.h.b16 %v7455
    %v7620 = vunpack.c.l.b16 %v7456
    %v7621 = vunpack.c.h.b16 %v7456
    %v7622 = vunpack.c.l.b16 %v7457
    %v7623 = vunpack.c.h.b16 %v7457
    %v7624 = vunpack.c.l.b16 %v7458
    %v7625 = vunpack.c.h.b16 %v7458
    %v7626 = vunpack.c.l.b16 %v7459
    %v7627 = vunpack.c.h.b16 %v7459
    %v7628 = vunpack.c.l.b16 %v7460
    %v7629 = vunpack.c.h.b16 %v7460
    %v7630 = vunpack.c.l.b16 %v7461
    %v7631 = vunpack.c.h.b16 %v7461
    %v7632 = vunpack.c.l.b16 %v7462
    %v7633 = vunpack.c.h.b16 %v7462
    %v7634 = vunpack.c.l.b16 %v7463
    %v7635 = vunpack.c.h.b16 %v7463
    %v7636 = vunpack.c.l.b16 %v7464
    %v7637 = vunpack.c.h.b16 %v7464
    %v7638 = vunpack.c.l.b16 %v7465
    %v7639 = vunpack.c.h.b16 %v7465
    %v7640 = vunpack.c.l.b16 %v7466
    %v7641 = vunpack.c.h.b16 %v7466
    %v7642 = vunpack.c.l.b16 %v7467
    %v7643 = vunpack.c.h.b16 %v7467
    %v7644 = vunpack.c.l.b16 %v7468
    %v7645 = vunpack.c.h.b16 %v7468
    %v7646 = vunpack.c.l.b16 %v7469
    %v7647 = vunpack.c.h.b16 %v7469
    %v7648 = vunpack.c.l.b16 %v7470
    %v7649 = vunpack.c.h.b16 %v7470
    %v7650 = vunpack.c.l.b16 %v7471
    %v7651 = vunpack.c.h.b16 %v7471
    %v7652 = vunpack.c.l.b16 %v7472
    %v7653 = vunpack.c.h.b16 %v7472
    %v7654 = vunpack.c.l.b16 %v7473
    %v7655 = vunpack.c.h.b16 %v7473
    %v7656 = vunpack.c.l.b16 %v7474
    %v7657 = vunpack.c.h.b16 %v7474
    %v7658 = vunpack.c.l.b16 %v7475
    %v7659 = vunpack.c.h.b16 %v7475
    %v7660 = vunpack.c.l.b16 %v7476
    %v7661 = vunpack.c.h.b16 %v7476
    %v7662 = vunpack.c.l.b16 %v7477
    %v7663 = vunpack.c.h.b16 %v7477
    %v7664 = vunpack.c.l.b16 %v7478
    %v7665 = vunpack.c.h.b16 %v7478
    %v7666 = vunpack.c.l.b16 %v7479
    %v7667 = vunpack.c.h.b16 %v7479
    %v7668 = vunpack.c.l.b16 %v7480
    %v7669 = vunpack.c.h.b16 %v7480
    %v7670 = vunpack.c.l.b16 %v7481
    %v7671 = vunpack.c.h.b16 %v7481
    %v7672 = vunpack.c.l.b16 %v7482
    %v7673 = vunpack.c.h.b16 %v7482
    %v7674 = vunpack.c.l.b16 %v7483
    %v7675 = vunpack.c.h.b16 %v7483
    %v7676 = vunpack.c.l.b16 %v7484
    %v7677 = vunpack.c.h.b16 %v7484
    %v7678 = vunpack.c.l.b16 %v7485
    %v7679 = vunpack.c.h.b16 %v7485
    %v7680 = vunpack.c.l.b16 %v7486
    %v7681 = vunpack.c.h.b16 %v7486
    %v7682 = vunpack.c.l.b16 %v7487
    %v7683 = vunpack.c.h.b16 %v7487
    %v7684 = vunpack.c.l.b16 %v7488
    %v7685 = vunpack.c.h.b16 %v7488
    %v7686 = vunpack.c.l.b16 %v7489
    %v7687 = vunpack.c.h.b16 %v7489
    %v7688 = vunpack.c.l.b16 %v7490
    %v7689 = vunpack.c.h.b16 %v7490
    %v7690 = vunpack.c.l.b16 %v7491
    %v7691 = vunpack.c.h.b16 %v7491
    %v7692 = vunpack.c.l.b16 %v7492
    %v7693 = vunpack.c.h.b16 %v7492
    %v7694 = vunpack.c.l.b16 %v7493
    %v7695 = vunpack.c.h.b16 %v7493
    %v7696 = vunpack.c.l.b16 %v7494
    %v7697 = vunpack.c.h.b16 %v7494
    %v7698 = vunpack.c.l.b16 %v7495
    %v7699 = vunpack.c.h.b16 %v7495
    %v7700 = vunpack.c.l.b16 %v7496
    %v7701 = vunpack.c.h.b16 %v7496
    %v7702 = vunpack.c.l.b16 %v7497
    %v7703 = vunpack.c.h.b16 %v7497
    %v7704 = vunpack.c.l.b16 %v7498
    %v7705 = vunpack.c.h.b16 %v7498
    %v7706 = vunpack.c.l.b16 %v7499
    %v7707 = vunpack.c.h.b16 %v7499
    %v7708 = vunpack.c.l.b16 %v7500
    %v7709 = vunpack.c.h.b16 %v7500
    %v7710 = vunpack.c.l.b16 %v7501
    %v7711 = vunpack.c.h.b16 %v7501
    %v7712 = vunpack.c.l.b16 %v7502
    %v7713 = vunpack.c.h.b16 %v7502
    %v7714 = vunpack.c.l.b16 %v7503
    %v7715 = vunpack.c.h.b16 %v7503
    %v7716 = vunpack.c.l.b16 %v7504
    %v7717 = vunpack.c.h.b16 %v7504
    %v7718 = vunpack.c.l.b16 %v7505
    %v7719 = vunpack.c.h.b16 %v7505
    %v7720 = vpack.c.b16 %v7596, %v7592
    %v7721 = vpack.c.b16 %v7597, %v7593
    %v7722 = vpack.c.b16 %v7598, %v7594
    %v7723 = vpack.c.b16 %v7599, %v7595
    %v7724 = vpack.c.b16 %v7604, %v7600
    %v7725 = vpack.c.b16 %v7605, %v7601
    %v7726 = vpack.c.b16 %v7606, %v7602
    %v7727 = vpack.c.b16 %v7607, %v7603
    %v7728 = vpack.c.b16 %v7612, %v7608
    %v7729 = vpack.c.b16 %v7613, %v7609
    %v7730 = vpack.c.b16 %v7614, %v7610
    %v7731 = vpack.c.b16 %v7615, %v7611
    %v7732 = vpack.c.b16 %v7620, %v7616
    %v7733 = vpack.c.b16 %v7621, %v7617
    %v7734 = vpack.c.b16 %v7622, %v7618
    %v7735 = vpack.c.b16 %v7623, %v7619
    %v7736 = vpack.c.b16 %v7628, %v7624
    %v7737 = vpack.c.b16 %v7629, %v7625
    %v7738 = vpack.c.b16 %v7630, %v7626
    %v7739 = vpack.c.b16 %v7631, %v7627
    %v7740 = vpack.c.b16 %v7636, %v7632
    %v7741 = vpack.c.b16 %v7637, %v7633
    %v7742 = vpack.c.b16 %v7638, %v7634
    %v7743 = vpack.c.b16 %v7639, %v7635
    %v7744 = vpack.c.b16 %v7644, %v7640
    %v7745 = vpack.c.b16 %v7645, %v7641
    %v7746 = vpack.c.b16 %v7646, %v7642
    %v7747 = vpack.c.b16 %v7647, %v7643
    %v7748 = vpack.c.b16 %v7652, %v7648
    %v7749 = vpack.c.b16 %v7653, %v7649
    %v7750 = vpack.c.b16 %v7654, %v7650
    %v7751 = vpack.c.b16 %v7655, %v7651
    %v7752 = vpack.c.b16 %v7660, %v7656
    %v7753 = vpack.c.b16 %v7661, %v7657
    %v7754 = vpack.c.b16 %v7662, %v7658
    %v7755 = vpack.c.b16 %v7663, %v7659
    %v7756 = vpack.c.b16 %v7668, %v7664
    %v7757 = vpack.c.b16 %v7669, %v7665
    %v7758 = vpack.c.b16 %v7670, %v7666
    %v7759 = vpack.c.b16 %v7671, %v7667
    %v7760 = vpack.c.b16 %v7676, %v7672
    %v7761 = vpack.c.b16 %v7677, %v7673
    %v7762 = vpack.c.b16 %v7678, %v7674
    %v7763 = vpack.c.b16 %v7679, %v7675
    %v7764 = vpack.c.b16 %v7684, %v7680
    %v7765 = vpack.c.b16 %v7685, %v7681
    %v7766 = vpack.c.b16 %v7686, %v7682
    %v7767 = vpack.c.b16 %v7687, %v7683
    %v7768 = vpack.c.b16 %v7692, %v7688
    %v7769 = vpack.c.b16 %v7693, %v7689
    %v7770 = vpack.c.b16 %v7694, %v7690
    %v7771 = vpack.c.b16 %v7695, %v7691
    %v7772 = vpack.c.b16 %v7700, %v7696
    %v7773 = vpack.c.b16 %v7701, %v7697
    %v7774 = vpack.c.b16 %v7702, %v7698
    %v7775 = vpack.c.b16 %v7703, %v7699
    %v7776 = vpack.c.b16 %v7708, %v7704
    %v7777 = vpack.c.b16 %v7709, %v7705
    %v7778 = vpack.c.b16 %v7710, %v7706
    %v7779 = vpack.c.b16 %v7711, %v7707
    %v7780 = vpack.c.b16 %v7716, %v7712
    %v7781 = vpack.c.b16 %v7717, %v7713
    %v7782 = vpack.c.b16 %v7718, %v7714
    %v7783 = vpack.c.b16 %v7719, %v7715
    %7848 = vmatprep.subr.bf16.mxu0 %v7749
    %7849 = vmatpush1.bf16.msra.mxu0 %v7748
    %7850 = vmatprep.subr.bf16.mxu0 %v7745
    %7851 = vmatpush1.bf16.msra.mxu0 %v7744
    %7852 = vmatprep.subr.bf16.mxu0 %v7741
    %7853 = vmatpush1.bf16.msra.mxu0 %v7740
    %7854 = vmatprep.subr.bf16.mxu0 %v7737
    %7855 = vmatpush1.bf16.msra.mxu0 %v7736
    %7856 = vmatprep.subr.bf16.mxu0 %v7733
    %7857 = vmatpush1.bf16.msra.mxu0 %v7732
    %7858 = vmatprep.subr.bf16.mxu0 %v7729
    %7859 = vmatpush1.bf16.msra.mxu0 %v7728
    %7860 = vmatprep.subr.bf16.mxu0 %v7725
    %7861 = vmatpush1.bf16.msra.mxu0 %v7724
    %7862 = vmatprep.subr.bf16.mxu0 %v7721
    %7863 = vmatpush1.bf16.msra.mxu0 %v7720
    %7864 = vmatprep.subr.bf16.mxu0 %v7781
    %7865 = vmatpush2.bf16.msra.mxu0 %v7780
    %7866 = vmatprep.subr.bf16.mxu0 %v7777
    %7867 = vmatpush2.bf16.msra.mxu0 %v7776
    %7868 = vmatprep.subr.bf16.mxu0 %v7773
    %7869 = vmatpush2.bf16.msra.mxu0 %v7772
    %7870 = vmatprep.subr.bf16.mxu0 %v7769
    %7871 = vmatpush2.bf16.msra.mxu0 %v7768
    %7872 = vmatprep.subr.bf16.mxu0 %v7765
    %7873 = vmatpush2.bf16.msra.mxu0 %v7764
    %7874 = vmatprep.subr.bf16.mxu0 %v7761
    %7875 = vmatpush2.bf16.msra.mxu0 %v7760
    %7876 = vmatprep.subr.bf16.mxu0 %v7757
    %7877 = vmatpush2.bf16.msra.mxu0 %v7756
    %7878 = vmatprep.subr.bf16.mxu0 %v7753
    %7879 = vmatpush2.bf16.msra.mxu0 %v7752
    %7880 = vmatprep.mubr.bf16.mxu0 %v7441
    %7881 = vmatmul.mubr.bf16.gmra.mxu0 %v7440
    %v7882 = vpop.f32.mrf.mxu0
    %v7883 = vadd.f32 %v7511, %v7882
    %v7884 = vpop.f32.mrf.mxu0
    %v7885 = vadd.f32 %v7515, %v7884
    %v7886 = vpop.f32.mrf.mxu0
    %v7887 = vpop.f32.mrf.mxu0
    %7888 = vdwg.mxu0
    %7889 = vmatprep.subr.bf16.mxu0 %v7751
    %7890 = vmatpush1.bf16.msra.mxu0 %v7750
    %7891 = vmatprep.subr.bf16.mxu0 %v7747
    %7892 = vmatpush1.bf16.msra.mxu0 %v7746
    %7893 = vmatprep.subr.bf16.mxu0 %v7743
    %7894 = vmatpush1.bf16.msra.mxu0 %v7742
    %7895 = vmatprep.subr.bf16.mxu0 %v7739
    %7896 = vmatpush1.bf16.msra.mxu0 %v7738
    %7897 = vmatprep.subr.bf16.mxu0 %v7735
    %7898 = vmatpush1.bf16.msra.mxu0 %v7734
    %7899 = vmatprep.subr.bf16.mxu0 %v7731
    %7900 = vmatpush1.bf16.msra.mxu0 %v7730
    %7901 = vmatprep.subr.bf16.mxu0 %v7727
    %7902 = vmatpush1.bf16.msra.mxu0 %v7726
    %7903 = vmatprep.subr.bf16.mxu0 %v7723
    %7904 = vmatpush1.bf16.msra.mxu0 %v7722
    %7905 = vmatprep.subr.bf16.mxu0 %v7783
    %7906 = vmatpush2.bf16.msra.mxu0 %v7782
    %7907 = vmatprep.subr.bf16.mxu0 %v7779
    %7908 = vmatpush2.bf16.msra.mxu0 %v7778
    %7909 = vmatprep.subr.bf16.mxu0 %v7775
    %7910 = vmatpush2.bf16.msra.mxu0 %v7774
    %7911 = vmatprep.subr.bf16.mxu0 %v7771
    %7912 = vmatpush2.bf16.msra.mxu0 %v7770
    %7913 = vmatprep.subr.bf16.mxu0 %v7767
    %7914 = vmatpush2.bf16.msra.mxu0 %v7766
    %7915 = vmatprep.subr.bf16.mxu0 %v7763
    %7916 = vmatpush2.bf16.msra.mxu0 %v7762
    %7917 = vmatprep.subr.bf16.mxu0 %v7759
    %7918 = vmatpush2.bf16.msra.mxu0 %v7758
    %7919 = vmatprep.subr.bf16.mxu0 %v7755
    %7920 = vmatpush2.bf16.msra.mxu0 %v7754
    %7921 = vmatprep.mubr.bf16.mxu0 %v7441
    %7922 = vmatmul.mubr.bf16.gmra.mxu0 %v7440
    %v7923 = vpop.f32.mrf.mxu0
    %v7924 = vadd.f32 %v7519, %v7923
    %v7925 = vpop.f32.mrf.mxu0
    %v7926 = vadd.f32 %v7523, %v7925
    %v7927 = vpop.f32.mrf.mxu0
    %v7928 = vpop.f32.mrf.mxu0
    %7929 = vdwg.mxu0
    %v7930 = vmax.f32 %v7883, 0.0
    %v7931 = vmax.f32 %v7885, 0.0
    %v7932 = vmax.f32 %v7924, 0.0
    %v7933 = vmax.f32 %v7926, 0.0
    %s7934 = smul.u32 4, 64
    %s7935 = smul.u32 %s7934, 8
    %s7936 = sshll.u32 %s7935, 4
    %7937 = dma.done [#allocation4], %s7936
    %v7938 = vpack.c.bf16 %v7930, %v7930
    %v7939 = vpack.c.bf16 %v7931, %v7931
    %v7940 = vpack.c.bf16 %v7932, %v7932
    %v7941 = vpack.c.bf16 %v7933, %v7933
    %v7942 = vld [vmem:[#allocation2] sm:$0xff]
    %v7943 = vld [vmem:[#allocation2 + $0x8] sm:$0xff]
    %v7944 = vld [vmem:[#allocation2 + $0x10] sm:$0xff]
    %v7945 = vld [vmem:[#allocation2 + $0x18] sm:$0xff]
    %v7946 = vld [vmem:[#allocation2 + $0x20] sm:$0xff]
    %v7947 = vld [vmem:[#allocation2 + $0x28] sm:$0xff]
    %v7948 = vld [vmem:[#allocation2 + $0x30] sm:$0xff]
    %v7949 = vld [vmem:[#allocation2 + $0x38] sm:$0xff]
    %v7950 = vld [vmem:[#allocation2 + $0x40] sm:$0xff]
    %v7951 = vld [vmem:[#allocation2 + $0x48] sm:$0xff]
    %v7952 = vld [vmem:[#allocation2 + $0x50] sm:$0xff]
    %v7953 = vld [vmem:[#allocation2 + $0x58] sm:$0xff]
    %v7954 = vld [vmem:[#allocation2 + $0x60] sm:$0xff]
    %v7955 = vld [vmem:[#allocation2 + $0x68] sm:$0xff]
    %v7956 = vld [vmem:[#allocation2 + $0x70] sm:$0xff]
    %v7957 = vld [vmem:[#allocation2 + $0x78] sm:$0xff]
    %v7958 = vld [vmem:[#allocation2 + $0x80] sm:$0xff]
    %v7959 = vld [vmem:[#allocation2 + $0x88] sm:$0xff]
    %v7960 = vld [vmem:[#allocation2 + $0x90] sm:$0xff]
    %v7961 = vld [vmem:[#allocation2 + $0x98] sm:$0xff]
    %v7962 = vld [vmem:[#allocation2 + $0xa0] sm:$0xff]
    %v7963 = vld [vmem:[#allocation2 + $0xa8] sm:$0xff]
    %v7964 = vld [vmem:[#allocation2 + $0xb0] sm:$0xff]
    %v7965 = vld [vmem:[#allocation2 + $0xb8] sm:$0xff]
    %v7966 = vld [vmem:[#allocation2 + $0xc0] sm:$0xff]
    %v7967 = vld [vmem:[#allocation2 + $0xc8] sm:$0xff]
    %v7968 = vld [vmem:[#allocation2 + $0xd0] sm:$0xff]
    %v7969 = vld [vmem:[#allocation2 + $0xd8] sm:$0xff]
    %v7970 = vld [vmem:[#allocation2 + $0xe0] sm:$0xff]
    %v7971 = vld [vmem:[#allocation2 + $0xe8] sm:$0xff]
    %v7972 = vld [vmem:[#allocation2 + $0xf0] sm:$0xff]
    %v7973 = vld [vmem:[#allocation2 + $0xf8] sm:$0xff]
    %v7974 = vld [vmem:[#allocation2 + $0x100] sm:$0xff]
    %v7975 = vld [vmem:[#allocation2 + $0x108] sm:$0xff]
    %v7976 = vld [vmem:[#allocation2 + $0x110] sm:$0xff]
    %v7977 = vld [vmem:[#allocation2 + $0x118] sm:$0xff]
    %v7978 = vld [vmem:[#allocation2 + $0x120] sm:$0xff]
    %v7979 = vld [vmem:[#allocation2 + $0x128] sm:$0xff]
    %v7980 = vld [vmem:[#allocation2 + $0x130] sm:$0xff]
    %v7981 = vld [vmem:[#allocation2 + $0x138] sm:$0xff]
    %v7982 = vld [vmem:[#allocation2 + $0x140] sm:$0xff]
    %v7983 = vld [vmem:[#allocation2 + $0x148] sm:$0xff]
    %v7984 = vld [vmem:[#allocation2 + $0x150] sm:$0xff]
    %v7985 = vld [vmem:[#allocation2 + $0x158] sm:$0xff]
    %v7986 = vld [vmem:[#allocation2 + $0x160] sm:$0xff]
    %v7987 = vld [vmem:[#allocation2 + $0x168] sm:$0xff]
    %v7988 = vld [vmem:[#allocation2 + $0x170] sm:$0xff]
    %v7989 = vld [vmem:[#allocation2 + $0x178] sm:$0xff]
    %v7990 = vld [vmem:[#allocation2 + $0x180] sm:$0xff]
    %v7991 = vld [vmem:[#allocation2 + $0x188] sm:$0xff]
    %v7992 = vld [vmem:[#allocation2 + $0x190] sm:$0xff]
    %v7993 = vld [vmem:[#allocation2 + $0x198] sm:$0xff]
    %v7994 = vld [vmem:[#allocation2 + $0x1a0] sm:$0xff]
    %v7995 = vld [vmem:[#allocation2 + $0x1a8] sm:$0xff]
    %v7996 = vld [vmem:[#allocation2 + $0x1b0] sm:$0xff]
    %v7997 = vld [vmem:[#allocation2 + $0x1b8] sm:$0xff]
    %v7998 = vld [vmem:[#allocation2 + $0x1c0] sm:$0xff]
    %v7999 = vld [vmem:[#allocation2 + $0x1c8] sm:$0xff]
    %v8000 = vld [vmem:[#allocation2 + $0x1d0] sm:$0xff]
    %v8001 = vld [vmem:[#allocation2 + $0x1d8] sm:$0xff]
    %v8002 = vld [vmem:[#allocation2 + $0x1e0] sm:$0xff]
    %v8003 = vld [vmem:[#allocation2 + $0x1e8] sm:$0xff]
    %v8004 = vld [vmem:[#allocation2 + $0x1f0] sm:$0xff]
    %v8005 = vld [vmem:[#allocation2 + $0x1f8] sm:$0xff]
    %v8006 = vld [vmem:[#allocation2 + $0x200] sm:$0xff]
    %v8007 = vld [vmem:[#allocation2 + $0x208] sm:$0xff]
    %v8008 = vld [vmem:[#allocation2 + $0x210] sm:$0xff]
    %v8009 = vld [vmem:[#allocation2 + $0x218] sm:$0xff]
    %v8010 = vld [vmem:[#allocation2 + $0x220] sm:$0xff]
    %v8011 = vld [vmem:[#allocation2 + $0x228] sm:$0xff]
    %v8012 = vld [vmem:[#allocation2 + $0x230] sm:$0xff]
    %v8013 = vld [vmem:[#allocation2 + $0x238] sm:$0xff]
    %v8014 = vld [vmem:[#allocation2 + $0x240] sm:$0xff]
    %v8015 = vld [vmem:[#allocation2 + $0x248] sm:$0xff]
    %v8016 = vld [vmem:[#allocation2 + $0x250] sm:$0xff]
    %v8017 = vld [vmem:[#allocation2 + $0x258] sm:$0xff]
    %v8018 = vld [vmem:[#allocation2 + $0x260] sm:$0xff]
    %v8019 = vld [vmem:[#allocation2 + $0x268] sm:$0xff]
    %v8020 = vld [vmem:[#allocation2 + $0x270] sm:$0xff]
    %v8021 = vld [vmem:[#allocation2 + $0x278] sm:$0xff]
    %v8022 = vld [vmem:[#allocation2 + $0x280] sm:$0xff]
    %v8023 = vld [vmem:[#allocation2 + $0x288] sm:$0xff]
    %v8024 = vld [vmem:[#allocation2 + $0x290] sm:$0xff]
    %v8025 = vld [vmem:[#allocation2 + $0x298] sm:$0xff]
    %v8026 = vld [vmem:[#allocation2 + $0x2a0] sm:$0xff]
    %v8027 = vld [vmem:[#allocation2 + $0x2a8] sm:$0xff]
    %v8028 = vld [vmem:[#allocation2 + $0x2b0] sm:$0xff]
    %v8029 = vld [vmem:[#allocation2 + $0x2b8] sm:$0xff]
    %v8030 = vld [vmem:[#allocation2 + $0x2c0] sm:$0xff]
    %v8031 = vld [vmem:[#allocation2 + $0x2c8] sm:$0xff]
    %v8032 = vld [vmem:[#allocation2 + $0x2d0] sm:$0xff]
    %v8033 = vld [vmem:[#allocation2 + $0x2d8] sm:$0xff]
    %v8034 = vld [vmem:[#allocation2 + $0x2e0] sm:$0xff]
    %v8035 = vld [vmem:[#allocation2 + $0x2e8] sm:$0xff]
    %v8036 = vld [vmem:[#allocation2 + $0x2f0] sm:$0xff]
    %v8037 = vld [vmem:[#allocation2 + $0x2f8] sm:$0xff]
    %v8038 = vld [vmem:[#allocation2 + $0x300] sm:$0xff]
    %v8039 = vld [vmem:[#allocation2 + $0x308] sm:$0xff]
    %v8040 = vld [vmem:[#allocation2 + $0x310] sm:$0xff]
    %v8041 = vld [vmem:[#allocation2 + $0x318] sm:$0xff]
    %v8042 = vld [vmem:[#allocation2 + $0x320] sm:$0xff]
    %v8043 = vld [vmem:[#allocation2 + $0x328] sm:$0xff]
    %v8044 = vld [vmem:[#allocation2 + $0x330] sm:$0xff]
    %v8045 = vld [vmem:[#allocation2 + $0x338] sm:$0xff]
    %v8046 = vld [vmem:[#allocation2 + $0x340] sm:$0xff]
    %v8047 = vld [vmem:[#allocation2 + $0x348] sm:$0xff]
    %v8048 = vld [vmem:[#allocation2 + $0x350] sm:$0xff]
    %v8049 = vld [vmem:[#allocation2 + $0x358] sm:$0xff]
    %v8050 = vld [vmem:[#allocation2 + $0x360] sm:$0xff]
    %v8051 = vld [vmem:[#allocation2 + $0x368] sm:$0xff]
    %v8052 = vld [vmem:[#allocation2 + $0x370] sm:$0xff]
    %v8053 = vld [vmem:[#allocation2 + $0x378] sm:$0xff]
    %v8054 = vld [vmem:[#allocation2 + $0x380] sm:$0xff]
    %v8055 = vld [vmem:[#allocation2 + $0x388] sm:$0xff]
    %v8056 = vld [vmem:[#allocation2 + $0x390] sm:$0xff]
    %v8057 = vld [vmem:[#allocation2 + $0x398] sm:$0xff]
    %v8058 = vld [vmem:[#allocation2 + $0x3a0] sm:$0xff]
    %v8059 = vld [vmem:[#allocation2 + $0x3a8] sm:$0xff]
    %v8060 = vld [vmem:[#allocation2 + $0x3b0] sm:$0xff]
    %v8061 = vld [vmem:[#allocation2 + $0x3b8] sm:$0xff]
    %v8062 = vld [vmem:[#allocation2 + $0x3c0] sm:$0xff]
    %v8063 = vld [vmem:[#allocation2 + $0x3c8] sm:$0xff]
    %v8064 = vld [vmem:[#allocation2 + $0x3d0] sm:$0xff]
    %v8065 = vld [vmem:[#allocation2 + $0x3d8] sm:$0xff]
    %v8066 = vld [vmem:[#allocation2 + $0x3e0] sm:$0xff]
    %v8067 = vld [vmem:[#allocation2 + $0x3e8] sm:$0xff]
    %v8068 = vld [vmem:[#allocation2 + $0x3f0] sm:$0xff]
    %v8069 = vld [vmem:[#allocation2 + $0x3f8] sm:$0xff]
    %v8070 = vld [vmem:[#allocation2 + $0x400] sm:$0xff]
    %v8071 = vld [vmem:[#allocation2 + $0x408] sm:$0xff]
    %v8072 = vld [vmem:[#allocation2 + $0x410] sm:$0xff]
    %v8073 = vld [vmem:[#allocation2 + $0x418] sm:$0xff]
    %v8074 = vld [vmem:[#allocation2 + $0x420] sm:$0xff]
    %v8075 = vld [vmem:[#allocation2 + $0x428] sm:$0xff]
    %v8076 = vld [vmem:[#allocation2 + $0x430] sm:$0xff]
    %v8077 = vld [vmem:[#allocation2 + $0x438] sm:$0xff]
    %v8078 = vld [vmem:[#allocation2 + $0x440] sm:$0xff]
    %v8079 = vld [vmem:[#allocation2 + $0x448] sm:$0xff]
    %v8080 = vld [vmem:[#allocation2 + $0x450] sm:$0xff]
    %v8081 = vld [vmem:[#allocation2 + $0x458] sm:$0xff]
    %v8082 = vld [vmem:[#allocation2 + $0x460] sm:$0xff]
    %v8083 = vld [vmem:[#allocation2 + $0x468] sm:$0xff]
    %v8084 = vld [vmem:[#allocation2 + $0x470] sm:$0xff]
    %v8085 = vld [vmem:[#allocation2 + $0x478] sm:$0xff]
    %v8086 = vld [vmem:[#allocation2 + $0x480] sm:$0xff]
    %v8087 = vld [vmem:[#allocation2 + $0x488] sm:$0xff]
    %v8088 = vld [vmem:[#allocation2 + $0x490] sm:$0xff]
    %v8089 = vld [vmem:[#allocation2 + $0x498] sm:$0xff]
    %v8090 = vld [vmem:[#allocation2 + $0x4a0] sm:$0xff]
    %v8091 = vld [vmem:[#allocation2 + $0x4a8] sm:$0xff]
    %v8092 = vld [vmem:[#allocation2 + $0x4b0] sm:$0xff]
    %v8093 = vld [vmem:[#allocation2 + $0x4b8] sm:$0xff]
    %v8094 = vld [vmem:[#allocation2 + $0x4c0] sm:$0xff]
    %v8095 = vld [vmem:[#allocation2 + $0x4c8] sm:$0xff]
    %v8096 = vld [vmem:[#allocation2 + $0x4d0] sm:$0xff]
    %v8097 = vld [vmem:[#allocation2 + $0x4d8] sm:$0xff]
    %v8098 = vld [vmem:[#allocation2 + $0x4e0] sm:$0xff]
    %v8099 = vld [vmem:[#allocation2 + $0x4e8] sm:$0xff]
    %v8100 = vld [vmem:[#allocation2 + $0x4f0] sm:$0xff]
    %v8101 = vld [vmem:[#allocation2 + $0x4f8] sm:$0xff]
    %v8102 = vld [vmem:[#allocation2 + $0x500] sm:$0xff]
    %v8103 = vld [vmem:[#allocation2 + $0x508] sm:$0xff]
    %v8104 = vld [vmem:[#allocation2 + $0x510] sm:$0xff]
    %v8105 = vld [vmem:[#allocation2 + $0x518] sm:$0xff]
    %v8106 = vld [vmem:[#allocation2 + $0x520] sm:$0xff]
    %v8107 = vld [vmem:[#allocation2 + $0x528] sm:$0xff]
    %v8108 = vld [vmem:[#allocation2 + $0x530] sm:$0xff]
    %v8109 = vld [vmem:[#allocation2 + $0x538] sm:$0xff]
    %v8110 = vld [vmem:[#allocation2 + $0x540] sm:$0xff]
    %v8111 = vld [vmem:[#allocation2 + $0x548] sm:$0xff]
    %v8112 = vld [vmem:[#allocation2 + $0x550] sm:$0xff]
    %v8113 = vld [vmem:[#allocation2 + $0x558] sm:$0xff]
    %v8114 = vld [vmem:[#allocation2 + $0x560] sm:$0xff]
    %v8115 = vld [vmem:[#allocation2 + $0x568] sm:$0xff]
    %v8116 = vld [vmem:[#allocation2 + $0x570] sm:$0xff]
    %v8117 = vld [vmem:[#allocation2 + $0x578] sm:$0xff]
    %v8118 = vld [vmem:[#allocation2 + $0x580] sm:$0xff]
    %v8119 = vld [vmem:[#allocation2 + $0x588] sm:$0xff]
    %v8120 = vld [vmem:[#allocation2 + $0x590] sm:$0xff]
    %v8121 = vld [vmem:[#allocation2 + $0x598] sm:$0xff]
    %v8122 = vld [vmem:[#allocation2 + $0x5a0] sm:$0xff]
    %v8123 = vld [vmem:[#allocation2 + $0x5a8] sm:$0xff]
    %v8124 = vld [vmem:[#allocation2 + $0x5b0] sm:$0xff]
    %v8125 = vld [vmem:[#allocation2 + $0x5b8] sm:$0xff]
    %v8126 = vld [vmem:[#allocation2 + $0x5c0] sm:$0xff]
    %v8127 = vld [vmem:[#allocation2 + $0x5c8] sm:$0xff]
    %v8128 = vld [vmem:[#allocation2 + $0x5d0] sm:$0xff]
    %v8129 = vld [vmem:[#allocation2 + $0x5d8] sm:$0xff]
    %v8130 = vld [vmem:[#allocation2 + $0x5e0] sm:$0xff]
    %v8131 = vld [vmem:[#allocation2 + $0x5e8] sm:$0xff]
    %v8132 = vld [vmem:[#allocation2 + $0x5f0] sm:$0xff]
    %v8133 = vld [vmem:[#allocation2 + $0x5f8] sm:$0xff]
    %v8134 = vld [vmem:[#allocation2 + $0x600] sm:$0xff]
    %v8135 = vld [vmem:[#allocation2 + $0x608] sm:$0xff]
    %v8136 = vld [vmem:[#allocation2 + $0x610] sm:$0xff]
    %v8137 = vld [vmem:[#allocation2 + $0x618] sm:$0xff]
    %v8138 = vld [vmem:[#allocation2 + $0x620] sm:$0xff]
    %v8139 = vld [vmem:[#allocation2 + $0x628] sm:$0xff]
    %v8140 = vld [vmem:[#allocation2 + $0x630] sm:$0xff]
    %v8141 = vld [vmem:[#allocation2 + $0x638] sm:$0xff]
    %v8142 = vld [vmem:[#allocation2 + $0x640] sm:$0xff]
    %v8143 = vld [vmem:[#allocation2 + $0x648] sm:$0xff]
    %v8144 = vld [vmem:[#allocation2 + $0x650] sm:$0xff]
    %v8145 = vld [vmem:[#allocation2 + $0x658] sm:$0xff]
    %v8146 = vld [vmem:[#allocation2 + $0x660] sm:$0xff]
    %v8147 = vld [vmem:[#allocation2 + $0x668] sm:$0xff]
    %v8148 = vld [vmem:[#allocation2 + $0x670] sm:$0xff]
    %v8149 = vld [vmem:[#allocation2 + $0x678] sm:$0xff]
    %v8150 = vld [vmem:[#allocation2 + $0x680] sm:$0xff]
    %v8151 = vld [vmem:[#allocation2 + $0x688] sm:$0xff]
    %v8152 = vld [vmem:[#allocation2 + $0x690] sm:$0xff]
    %v8153 = vld [vmem:[#allocation2 + $0x698] sm:$0xff]
    %v8154 = vld [vmem:[#allocation2 + $0x6a0] sm:$0xff]
    %v8155 = vld [vmem:[#allocation2 + $0x6a8] sm:$0xff]
    %v8156 = vld [vmem:[#allocation2 + $0x6b0] sm:$0xff]
    %v8157 = vld [vmem:[#allocation2 + $0x6b8] sm:$0xff]
    %v8158 = vld [vmem:[#allocation2 + $0x6c0] sm:$0xff]
    %v8159 = vld [vmem:[#allocation2 + $0x6c8] sm:$0xff]
    %v8160 = vld [vmem:[#allocation2 + $0x6d0] sm:$0xff]
    %v8161 = vld [vmem:[#allocation2 + $0x6d8] sm:$0xff]
    %v8162 = vld [vmem:[#allocation2 + $0x6e0] sm:$0xff]
    %v8163 = vld [vmem:[#allocation2 + $0x6e8] sm:$0xff]
    %v8164 = vld [vmem:[#allocation2 + $0x6f0] sm:$0xff]
    %v8165 = vld [vmem:[#allocation2 + $0x6f8] sm:$0xff]
    %v8166 = vld [vmem:[#allocation2 + $0x700] sm:$0xff]
    %v8167 = vld [vmem:[#allocation2 + $0x708] sm:$0xff]
    %v8168 = vld [vmem:[#allocation2 + $0x710] sm:$0xff]
    %v8169 = vld [vmem:[#allocation2 + $0x718] sm:$0xff]
    %v8170 = vld [vmem:[#allocation2 + $0x720] sm:$0xff]
    %v8171 = vld [vmem:[#allocation2 + $0x728] sm:$0xff]
    %v8172 = vld [vmem:[#allocation2 + $0x730] sm:$0xff]
    %v8173 = vld [vmem:[#allocation2 + $0x738] sm:$0xff]
    %v8174 = vld [vmem:[#allocation2 + $0x740] sm:$0xff]
    %v8175 = vld [vmem:[#allocation2 + $0x748] sm:$0xff]
    %v8176 = vld [vmem:[#allocation2 + $0x750] sm:$0xff]
    %v8177 = vld [vmem:[#allocation2 + $0x758] sm:$0xff]
    %v8178 = vld [vmem:[#allocation2 + $0x760] sm:$0xff]
    %v8179 = vld [vmem:[#allocation2 + $0x768] sm:$0xff]
    %v8180 = vld [vmem:[#allocation2 + $0x770] sm:$0xff]
    %v8181 = vld [vmem:[#allocation2 + $0x778] sm:$0xff]
    %v8182 = vld [vmem:[#allocation2 + $0x780] sm:$0xff]
    %v8183 = vld [vmem:[#allocation2 + $0x788] sm:$0xff]
    %v8184 = vld [vmem:[#allocation2 + $0x790] sm:$0xff]
    %v8185 = vld [vmem:[#allocation2 + $0x798] sm:$0xff]
    %v8186 = vld [vmem:[#allocation2 + $0x7a0] sm:$0xff]
    %v8187 = vld [vmem:[#allocation2 + $0x7a8] sm:$0xff]
    %v8188 = vld [vmem:[#allocation2 + $0x7b0] sm:$0xff]
    %v8189 = vld [vmem:[#allocation2 + $0x7b8] sm:$0xff]
    %v8190 = vld [vmem:[#allocation2 + $0x7c0] sm:$0xff]
    %v8191 = vld [vmem:[#allocation2 + $0x7c8] sm:$0xff]
    %v8192 = vld [vmem:[#allocation2 + $0x7d0] sm:$0xff]
    %v8193 = vld [vmem:[#allocation2 + $0x7d8] sm:$0xff]
    %v8194 = vld [vmem:[#allocation2 + $0x7e0] sm:$0xff]
    %v8195 = vld [vmem:[#allocation2 + $0x7e8] sm:$0xff]
    %v8196 = vld [vmem:[#allocation2 + $0x7f0] sm:$0xff]
    %v8197 = vld [vmem:[#allocation2 + $0x7f8] sm:$0xff]
    %v8198 = vld [vmem:[#allocation16] sm:$0xff]
    %v8200 = vlaneseq
    %v8201 = vshrl.u32 %v8200, 7
    %v8202 = vsub.s32 0, %v8201
    %v8203 = vrot.slane %v8198, %v8202
    %v8204 = vlaneseq
    %v8205 = vshrl.u32 %v8204, 7
    %v8206 = vsub.s32 1, %v8205
    %v8207 = vrot.slane %v8198, %v8206
    %v8208 = vlaneseq
    %v8209 = vshrl.u32 %v8208, 7
    %v8210 = vsub.s32 2, %v8209
    %v8211 = vrot.slane %v8198, %v8210
    %v8212 = vlaneseq
    %v8213 = vshrl.u32 %v8212, 7
    %v8214 = vsub.s32 3, %v8213
    %v8215 = vrot.slane %v8198, %v8214
    %v8216 = vlaneseq
    %v8217 = vshrl.u32 %v8216, 7
    %v8218 = vsub.s32 4, %v8217
    %v8219 = vrot.slane %v8198, %v8218
    %v8220 = vlaneseq
    %v8221 = vshrl.u32 %v8220, 7
    %v8222 = vsub.s32 5, %v8221
    %v8223 = vrot.slane %v8198, %v8222
    %v8224 = vlaneseq
    %v8225 = vshrl.u32 %v8224, 7
    %v8226 = vsub.s32 6, %v8225
    %v8227 = vrot.slane %v8198, %v8226
    %v8228 = vlaneseq
    %v8229 = vshrl.u32 %v8228, 7
    %v8230 = vsub.s32 7, %v8229
    %v8231 = vrot.slane %v8198, %v8230
    %v8496 = vunpack.c.l.b16 %v7942
    %v8497 = vunpack.c.h.b16 %v7942
    %v8498 = vunpack.c.l.b16 %v7943
    %v8499 = vunpack.c.h.b16 %v7943
    %v8500 = vunpack.c.l.b16 %v7944
    %v8501 = vunpack.c.h.b16 %v7944
    %v8502 = vunpack.c.l.b16 %v7945
    %v8503 = vunpack.c.h.b16 %v7945
    %v8504 = vunpack.c.l.b16 %v7946
    %v8505 = vunpack.c.h.b16 %v7946
    %v8506 = vunpack.c.l.b16 %v7947
    %v8507 = vunpack.c.h.b16 %v7947
    %v8508 = vunpack.c.l.b16 %v7948
    %v8509 = vunpack.c.h.b16 %v7948
    %v8510 = vunpack.c.l.b16 %v7949
    %v8511 = vunpack.c.h.b16 %v7949
    %v8512 = vunpack.c.l.b16 %v7950
    %v8513 = vunpack.c.h.b16 %v7950
    %v8514 = vunpack.c.l.b16 %v7951
    %v8515 = vunpack.c.h.b16 %v7951
    %v8516 = vunpack.c.l.b16 %v7952
    %v8517 = vunpack.c.h.b16 %v7952
    %v8518 = vunpack.c.l.b16 %v7953
    %v8519 = vunpack.c.h.b16 %v7953
    %v8520 = vunpack.c.l.b16 %v7954
    %v8521 = vunpack.c.h.b16 %v7954
    %v8522 = vunpack.c.l.b16 %v7955
    %v8523 = vunpack.c.h.b16 %v7955
    %v8524 = vunpack.c.l.b16 %v7956
    %v8525 = vunpack.c.h.b16 %v7956
    %v8526 = vunpack.c.l.b16 %v7957
    %v8527 = vunpack.c.h.b16 %v7957
    %v8528 = vunpack.c.l.b16 %v7958
    %v8529 = vunpack.c.h.b16 %v7958
    %v8530 = vunpack.c.l.b16 %v7959
    %v8531 = vunpack.c.h.b16 %v7959
    %v8532 = vunpack.c.l.b16 %v7960
    %v8533 = vunpack.c.h.b16 %v7960
    %v8534 = vunpack.c.l.b16 %v7961
    %v8535 = vunpack.c.h.b16 %v7961
    %v8536 = vunpack.c.l.b16 %v7962
    %v8537 = vunpack.c.h.b16 %v7962
    %v8538 = vunpack.c.l.b16 %v7963
    %v8539 = vunpack.c.h.b16 %v7963
    %v8540 = vunpack.c.l.b16 %v7964
    %v8541 = vunpack.c.h.b16 %v7964
    %v8542 = vunpack.c.l.b16 %v7965
    %v8543 = vunpack.c.h.b16 %v7965
    %v8544 = vunpack.c.l.b16 %v7966
    %v8545 = vunpack.c.h.b16 %v7966
    %v8546 = vunpack.c.l.b16 %v7967
    %v8547 = vunpack.c.h.b16 %v7967
    %v8548 = vunpack.c.l.b16 %v7968
    %v8549 = vunpack.c.h.b16 %v7968
    %v8550 = vunpack.c.l.b16 %v7969
    %v8551 = vunpack.c.h.b16 %v7969
    %v8552 = vunpack.c.l.b16 %v7970
    %v8553 = vunpack.c.h.b16 %v7970
    %v8554 = vunpack.c.l.b16 %v7971
    %v8555 = vunpack.c.h.b16 %v7971
    %v8556 = vunpack.c.l.b16 %v7972
    %v8557 = vunpack.c.h.b16 %v7972
    %v8558 = vunpack.c.l.b16 %v7973
    %v8559 = vunpack.c.h.b16 %v7973
    %v8560 = vunpack.c.l.b16 %v7974
    %v8561 = vunpack.c.h.b16 %v7974
    %v8562 = vunpack.c.l.b16 %v7975
    %v8563 = vunpack.c.h.b16 %v7975
    %v8564 = vunpack.c.l.b16 %v7976
    %v8565 = vunpack.c.h.b16 %v7976
    %v8566 = vunpack.c.l.b16 %v7977
    %v8567 = vunpack.c.h.b16 %v7977
    %v8568 = vunpack.c.l.b16 %v7978
    %v8569 = vunpack.c.h.b16 %v7978
    %v8570 = vunpack.c.l.b16 %v7979
    %v8571 = vunpack.c.h.b16 %v7979
    %v8572 = vunpack.c.l.b16 %v7980
    %v8573 = vunpack.c.h.b16 %v7980
    %v8574 = vunpack.c.l.b16 %v7981
    %v8575 = vunpack.c.h.b16 %v7981
    %v8576 = vunpack.c.l.b16 %v7982
    %v8577 = vunpack.c.h.b16 %v7982
    %v8578 = vunpack.c.l.b16 %v7983
    %v8579 = vunpack.c.h.b16 %v7983
    %v8580 = vunpack.c.l.b16 %v7984
    %v8581 = vunpack.c.h.b16 %v7984
    %v8582 = vunpack.c.l.b16 %v7985
    %v8583 = vunpack.c.h.b16 %v7985
    %v8584 = vunpack.c.l.b16 %v7986
    %v8585 = vunpack.c.h.b16 %v7986
    %v8586 = vunpack.c.l.b16 %v7987
    %v8587 = vunpack.c.h.b16 %v7987
    %v8588 = vunpack.c.l.b16 %v7988
    %v8589 = vunpack.c.h.b16 %v7988
    %v8590 = vunpack.c.l.b16 %v7989
    %v8591 = vunpack.c.h.b16 %v7989
    %v8592 = vunpack.c.l.b16 %v7990
    %v8593 = vunpack.c.h.b16 %v7990
    %v8594 = vunpack.c.l.b16 %v7991
    %v8595 = vunpack.c.h.b16 %v7991
    %v8596 = vunpack.c.l.b16 %v7992
    %v8597 = vunpack.c.h.b16 %v7992
    %v8598 = vunpack.c.l.b16 %v7993
    %v8599 = vunpack.c.h.b16 %v7993
    %v8600 = vunpack.c.l.b16 %v7994
    %v8601 = vunpack.c.h.b16 %v7994
    %v8602 = vunpack.c.l.b16 %v7995
    %v8603 = vunpack.c.h.b16 %v7995
    %v8604 = vunpack.c.l.b16 %v7996
    %v8605 = vunpack.c.h.b16 %v7996
    %v8606 = vunpack.c.l.b16 %v7997
    %v8607 = vunpack.c.h.b16 %v7997
    %v8608 = vunpack.c.l.b16 %v7998
    %v8609 = vunpack.c.h.b16 %v7998
    %v8610 = vunpack.c.l.b16 %v7999
    %v8611 = vunpack.c.h.b16 %v7999
    %v8612 = vunpack.c.l.b16 %v8000
    %v8613 = vunpack.c.h.b16 %v8000
    %v8614 = vunpack.c.l.b16 %v8001
    %v8615 = vunpack.c.h.b16 %v8001
    %v8616 = vunpack.c.l.b16 %v8002
    %v8617 = vunpack.c.h.b16 %v8002
    %v8618 = vunpack.c.l.b16 %v8003
    %v8619 = vunpack.c.h.b16 %v8003
    %v8620 = vunpack.c.l.b16 %v8004
    %v8621 = vunpack.c.h.b16 %v8004
    %v8622 = vunpack.c.l.b16 %v8005
    %v8623 = vunpack.c.h.b16 %v8005
    %v8624 = vunpack.c.l.b16 %v8006
    %v8625 = vunpack.c.h.b16 %v8006
    %v8626 = vunpack.c.l.b16 %v8007
    %v8627 = vunpack.c.h.b16 %v8007
    %v8628 = vunpack.c.l.b16 %v8008
    %v8629 = vunpack.c.h.b16 %v8008
    %v8630 = vunpack.c.l.b16 %v8009
    %v8631 = vunpack.c.h.b16 %v8009
    %v8632 = vunpack.c.l.b16 %v8010
    %v8633 = vunpack.c.h.b16 %v8010
    %v8634 = vunpack.c.l.b16 %v8011
    %v8635 = vunpack.c.h.b16 %v8011
    %v8636 = vunpack.c.l.b16 %v8012
    %v8637 = vunpack.c.h.b16 %v8012
    %v8638 = vunpack.c.l.b16 %v8013
    %v8639 = vunpack.c.h.b16 %v8013
    %v8640 = vunpack.c.l.b16 %v8014
    %v8641 = vunpack.c.h.b16 %v8014
    %v8642 = vunpack.c.l.b16 %v8015
    %v8643 = vunpack.c.h.b16 %v8015
    %v8644 = vunpack.c.l.b16 %v8016
    %v8645 = vunpack.c.h.b16 %v8016
    %v8646 = vunpack.c.l.b16 %v8017
    %v8647 = vunpack.c.h.b16 %v8017
    %v8648 = vunpack.c.l.b16 %v8018
    %v8649 = vunpack.c.h.b16 %v8018
    %v8650 = vunpack.c.l.b16 %v8019
    %v8651 = vunpack.c.h.b16 %v8019
    %v8652 = vunpack.c.l.b16 %v8020
    %v8653 = vunpack.c.h.b16 %v8020
    %v8654 = vunpack.c.l.b16 %v8021
    %v8655 = vunpack.c.h.b16 %v8021
    %v8656 = vunpack.c.l.b16 %v8022
    %v8657 = vunpack.c.h.b16 %v8022
    %v8658 = vunpack.c.l.b16 %v8023
    %v8659 = vunpack.c.h.b16 %v8023
    %v8660 = vunpack.c.l.b16 %v8024
    %v8661 = vunpack.c.h.b16 %v8024
    %v8662 = vunpack.c.l.b16 %v8025
    %v8663 = vunpack.c.h.b16 %v8025
    %v8664 = vunpack.c.l.b16 %v8026
    %v8665 = vunpack.c.h.b16 %v8026
    %v8666 = vunpack.c.l.b16 %v8027
    %v8667 = vunpack.c.h.b16 %v8027
    %v8668 = vunpack.c.l.b16 %v8028
    %v8669 = vunpack.c.h.b16 %v8028
    %v8670 = vunpack.c.l.b16 %v8029
    %v8671 = vunpack.c.h.b16 %v8029
    %v8672 = vunpack.c.l.b16 %v8030
    %v8673 = vunpack.c.h.b16 %v8030
    %v8674 = vunpack.c.l.b16 %v8031
    %v8675 = vunpack.c.h.b16 %v8031
    %v8676 = vunpack.c.l.b16 %v8032
    %v8677 = vunpack.c.h.b16 %v8032
    %v8678 = vunpack.c.l.b16 %v8033
    %v8679 = vunpack.c.h.b16 %v8033
    %v8680 = vunpack.c.l.b16 %v8034
    %v8681 = vunpack.c.h.b16 %v8034
    %v8682 = vunpack.c.l.b16 %v8035
    %v8683 = vunpack.c.h.b16 %v8035
    %v8684 = vunpack.c.l.b16 %v8036
    %v8685 = vunpack.c.h.b16 %v8036
    %v8686 = vunpack.c.l.b16 %v8037
    %v8687 = vunpack.c.h.b16 %v8037
    %v8688 = vunpack.c.l.b16 %v8038
    %v8689 = vunpack.c.h.b16 %v8038
    %v8690 = vunpack.c.l.b16 %v8039
    %v8691 = vunpack.c.h.b16 %v8039
    %v8692 = vunpack.c.l.b16 %v8040
    %v8693 = vunpack.c.h.b16 %v8040
    %v8694 = vunpack.c.l.b16 %v8041
    %v8695 = vunpack.c.h.b16 %v8041
    %v8696 = vunpack.c.l.b16 %v8042
    %v8697 = vunpack.c.h.b16 %v8042
    %v8698 = vunpack.c.l.b16 %v8043
    %v8699 = vunpack.c.h.b16 %v8043
    %v8700 = vunpack.c.l.b16 %v8044
    %v8701 = vunpack.c.h.b16 %v8044
    %v8702 = vunpack.c.l.b16 %v8045
    %v8703 = vunpack.c.h.b16 %v8045
    %v8704 = vunpack.c.l.b16 %v8046
    %v8705 = vunpack.c.h.b16 %v8046
    %v8706 = vunpack.c.l.b16 %v8047
    %v8707 = vunpack.c.h.b16 %v8047
    %v8708 = vunpack.c.l.b16 %v8048
    %v8709 = vunpack.c.h.b16 %v8048
    %v8710 = vunpack.c.l.b16 %v8049
    %v8711 = vunpack.c.h.b16 %v8049
    %v8712 = vunpack.c.l.b16 %v8050
    %v8713 = vunpack.c.h.b16 %v8050
    %v8714 = vunpack.c.l.b16 %v8051
    %v8715 = vunpack.c.h.b16 %v8051
    %v8716 = vunpack.c.l.b16 %v8052
    %v8717 = vunpack.c.h.b16 %v8052
    %v8718 = vunpack.c.l.b16 %v8053
    %v8719 = vunpack.c.h.b16 %v8053
    %v8720 = vunpack.c.l.b16 %v8054
    %v8721 = vunpack.c.h.b16 %v8054
    %v8722 = vunpack.c.l.b16 %v8055
    %v8723 = vunpack.c.h.b16 %v8055
    %v8724 = vunpack.c.l.b16 %v8056
    %v8725 = vunpack.c.h.b16 %v8056
    %v8726 = vunpack.c.l.b16 %v8057
    %v8727 = vunpack.c.h.b16 %v8057
    %v8728 = vunpack.c.l.b16 %v8058
    %v8729 = vunpack.c.h.b16 %v8058
    %v8730 = vunpack.c.l.b16 %v8059
    %v8731 = vunpack.c.h.b16 %v8059
    %v8732 = vunpack.c.l.b16 %v8060
    %v8733 = vunpack.c.h.b16 %v8060
    %v8734 = vunpack.c.l.b16 %v8061
    %v8735 = vunpack.c.h.b16 %v8061
    %v8736 = vunpack.c.l.b16 %v8062
    %v8737 = vunpack.c.h.b16 %v8062
    %v8738 = vunpack.c.l.b16 %v8063
    %v8739 = vunpack.c.h.b16 %v8063
    %v8740 = vunpack.c.l.b16 %v8064
    %v8741 = vunpack.c.h.b16 %v8064
    %v8742 = vunpack.c.l.b16 %v8065
    %v8743 = vunpack.c.h.b16 %v8065
    %v8744 = vunpack.c.l.b16 %v8066
    %v8745 = vunpack.c.h.b16 %v8066
    %v8746 = vunpack.c.l.b16 %v8067
    %v8747 = vunpack.c.h.b16 %v8067
    %v8748 = vunpack.c.l.b16 %v8068
    %v8749 = vunpack.c.h.b16 %v8068
    %v8750 = vunpack.c.l.b16 %v8069
    %v8751 = vunpack.c.h.b16 %v8069
    %v8752 = vunpack.c.l.b16 %v8070
    %v8753 = vunpack.c.h.b16 %v8070
    %v8754 = vunpack.c.l.b16 %v8071
    %v8755 = vunpack.c.h.b16 %v8071
    %v8756 = vunpack.c.l.b16 %v8072
    %v8757 = vunpack.c.h.b16 %v8072
    %v8758 = vunpack.c.l.b16 %v8073
    %v8759 = vunpack.c.h.b16 %v8073
    %v8760 = vunpack.c.l.b16 %v8074
    %v8761 = vunpack.c.h.b16 %v8074
    %v8762 = vunpack.c.l.b16 %v8075
    %v8763 = vunpack.c.h.b16 %v8075
    %v8764 = vunpack.c.l.b16 %v8076
    %v8765 = vunpack.c.h.b16 %v8076
    %v8766 = vunpack.c.l.b16 %v8077
    %v8767 = vunpack.c.h.b16 %v8077
    %v8768 = vunpack.c.l.b16 %v8078
    %v8769 = vunpack.c.h.b16 %v8078
    %v8770 = vunpack.c.l.b16 %v8079
    %v8771 = vunpack.c.h.b16 %v8079
    %v8772 = vunpack.c.l.b16 %v8080
    %v8773 = vunpack.c.h.b16 %v8080
    %v8774 = vunpack.c.l.b16 %v8081
    %v8775 = vunpack.c.h.b16 %v8081
    %v8776 = vunpack.c.l.b16 %v8082
    %v8777 = vunpack.c.h.b16 %v8082
    %v8778 = vunpack.c.l.b16 %v8083
    %v8779 = vunpack.c.h.b16 %v8083
    %v8780 = vunpack.c.l.b16 %v8084
    %v8781 = vunpack.c.h.b16 %v8084
    %v8782 = vunpack.c.l.b16 %v8085
    %v8783 = vunpack.c.h.b16 %v8085
    %v8784 = vunpack.c.l.b16 %v8086
    %v8785 = vunpack.c.h.b16 %v8086
    %v8786 = vunpack.c.l.b16 %v8087
    %v8787 = vunpack.c.h.b16 %v8087
    %v8788 = vunpack.c.l.b16 %v8088
    %v8789 = vunpack.c.h.b16 %v8088
    %v8790 = vunpack.c.l.b16 %v8089
    %v8791 = vunpack.c.h.b16 %v8089
    %v8792 = vunpack.c.l.b16 %v8090
    %v8793 = vunpack.c.h.b16 %v8090
    %v8794 = vunpack.c.l.b16 %v8091
    %v8795 = vunpack.c.h.b16 %v8091
    %v8796 = vunpack.c.l.b16 %v8092
    %v8797 = vunpack.c.h.b16 %v8092
    %v8798 = vunpack.c.l.b16 %v8093
    %v8799 = vunpack.c.h.b16 %v8093
    %v8800 = vunpack.c.l.b16 %v8094
    %v8801 = vunpack.c.h.b16 %v8094
    %v8802 = vunpack.c.l.b16 %v8095
    %v8803 = vunpack.c.h.b16 %v8095
    %v8804 = vunpack.c.l.b16 %v8096
    %v8805 = vunpack.c.h.b16 %v8096
    %v8806 = vunpack.c.l.b16 %v8097
    %v8807 = vunpack.c.h.b16 %v8097
    %v8808 = vunpack.c.l.b16 %v8098
    %v8809 = vunpack.c.h.b16 %v8098
    %v8810 = vunpack.c.l.b16 %v8099
    %v8811 = vunpack.c.h.b16 %v8099
    %v8812 = vunpack.c.l.b16 %v8100
    %v8813 = vunpack.c.h.b16 %v8100
    %v8814 = vunpack.c.l.b16 %v8101
    %v8815 = vunpack.c.h.b16 %v8101
    %v8816 = vunpack.c.l.b16 %v8102
    %v8817 = vunpack.c.h.b16 %v8102
    %v8818 = vunpack.c.l.b16 %v8103
    %v8819 = vunpack.c.h.b16 %v8103
    %v8820 = vunpack.c.l.b16 %v8104
    %v8821 = vunpack.c.h.b16 %v8104
    %v8822 = vunpack.c.l.b16 %v8105
    %v8823 = vunpack.c.h.b16 %v8105
    %v8824 = vunpack.c.l.b16 %v8106
    %v8825 = vunpack.c.h.b16 %v8106
    %v8826 = vunpack.c.l.b16 %v8107
    %v8827 = vunpack.c.h.b16 %v8107
    %v8828 = vunpack.c.l.b16 %v8108
    %v8829 = vunpack.c.h.b16 %v8108
    %v8830 = vunpack.c.l.b16 %v8109
    %v8831 = vunpack.c.h.b16 %v8109
    %v8832 = vunpack.c.l.b16 %v8110
    %v8833 = vunpack.c.h.b16 %v8110
    %v8834 = vunpack.c.l.b16 %v8111
    %v8835 = vunpack.c.h.b16 %v8111
    %v8836 = vunpack.c.l.b16 %v8112
    %v8837 = vunpack.c.h.b16 %v8112
    %v8838 = vunpack.c.l.b16 %v8113
    %v8839 = vunpack.c.h.b16 %v8113
    %v8840 = vunpack.c.l.b16 %v8114
    %v8841 = vunpack.c.h.b16 %v8114
    %v8842 = vunpack.c.l.b16 %v8115
    %v8843 = vunpack.c.h.b16 %v8115
    %v8844 = vunpack.c.l.b16 %v8116
    %v8845 = vunpack.c.h.b16 %v8116
    %v8846 = vunpack.c.l.b16 %v8117
    %v8847 = vunpack.c.h.b16 %v8117
    %v8848 = vunpack.c.l.b16 %v8118
    %v8849 = vunpack.c.h.b16 %v8118
    %v8850 = vunpack.c.l.b16 %v8119
    %v8851 = vunpack.c.h.b16 %v8119
    %v8852 = vunpack.c.l.b16 %v8120
    %v8853 = vunpack.c.h.b16 %v8120
    %v8854 = vunpack.c.l.b16 %v8121
    %v8855 = vunpack.c.h.b16 %v8121
    %v8856 = vunpack.c.l.b16 %v8122
    %v8857 = vunpack.c.h.b16 %v8122
    %v8858 = vunpack.c.l.b16 %v8123
    %v8859 = vunpack.c.h.b16 %v8123
    %v8860 = vunpack.c.l.b16 %v8124
    %v8861 = vunpack.c.h.b16 %v8124
    %v8862 = vunpack.c.l.b16 %v8125
    %v8863 = vunpack.c.h.b16 %v8125
    %v8864 = vunpack.c.l.b16 %v8126
    %v8865 = vunpack.c.h.b16 %v8126
    %v8866 = vunpack.c.l.b16 %v8127
    %v8867 = vunpack.c.h.b16 %v8127
    %v8868 = vunpack.c.l.b16 %v8128
    %v8869 = vunpack.c.h.b16 %v8128
    %v8870 = vunpack.c.l.b16 %v8129
    %v8871 = vunpack.c.h.b16 %v8129
    %v8872 = vunpack.c.l.b16 %v8130
    %v8873 = vunpack.c.h.b16 %v8130
    %v8874 = vunpack.c.l.b16 %v8131
    %v8875 = vunpack.c.h.b16 %v8131
    %v8876 = vunpack.c.l.b16 %v8132
    %v8877 = vunpack.c.h.b16 %v8132
    %v8878 = vunpack.c.l.b16 %v8133
    %v8879 = vunpack.c.h.b16 %v8133
    %v8880 = vunpack.c.l.b16 %v8134
    %v8881 = vunpack.c.h.b16 %v8134
    %v8882 = vunpack.c.l.b16 %v8135
    %v8883 = vunpack.c.h.b16 %v8135
    %v8884 = vunpack.c.l.b16 %v8136
    %v8885 = vunpack.c.h.b16 %v8136
    %v8886 = vunpack.c.l.b16 %v8137
    %v8887 = vunpack.c.h.b16 %v8137
    %v8888 = vunpack.c.l.b16 %v8138
    %v8889 = vunpack.c.h.b16 %v8138
    %v8890 = vunpack.c.l.b16 %v8139
    %v8891 = vunpack.c.h.b16 %v8139
    %v8892 = vunpack.c.l.b16 %v8140
    %v8893 = vunpack.c.h.b16 %v8140
    %v8894 = vunpack.c.l.b16 %v8141
    %v8895 = vunpack.c.h.b16 %v8141
    %v8896 = vunpack.c.l.b16 %v8142
    %v8897 = vunpack.c.h.b16 %v8142
    %v8898 = vunpack.c.l.b16 %v8143
    %v8899 = vunpack.c.h.b16 %v8143
    %v8900 = vunpack.c.l.b16 %v8144
    %v8901 = vunpack.c.h.b16 %v8144
    %v8902 = vunpack.c.l.b16 %v8145
    %v8903 = vunpack.c.h.b16 %v8145
    %v8904 = vunpack.c.l.b16 %v8146
    %v8905 = vunpack.c.h.b16 %v8146
    %v8906 = vunpack.c.l.b16 %v8147
    %v8907 = vunpack.c.h.b16 %v8147
    %v8908 = vunpack.c.l.b16 %v8148
    %v8909 = vunpack.c.h.b16 %v8148
    %v8910 = vunpack.c.l.b16 %v8149
    %v8911 = vunpack.c.h.b16 %v8149
    %v8912 = vunpack.c.l.b16 %v8150
    %v8913 = vunpack.c.h.b16 %v8150
    %v8914 = vunpack.c.l.b16 %v8151
    %v8915 = vunpack.c.h.b16 %v8151
    %v8916 = vunpack.c.l.b16 %v8152
    %v8917 = vunpack.c.h.b16 %v8152
    %v8918 = vunpack.c.l.b16 %v8153
    %v8919 = vunpack.c.h.b16 %v8153
    %v8920 = vunpack.c.l.b16 %v8154
    %v8921 = vunpack.c.h.b16 %v8154
    %v8922 = vunpack.c.l.b16 %v8155
    %v8923 = vunpack.c.h.b16 %v8155
    %v8924 = vunpack.c.l.b16 %v8156
    %v8925 = vunpack.c.h.b16 %v8156
    %v8926 = vunpack.c.l.b16 %v8157
    %v8927 = vunpack.c.h.b16 %v8157
    %v8928 = vunpack.c.l.b16 %v8158
    %v8929 = vunpack.c.h.b16 %v8158
    %v8930 = vunpack.c.l.b16 %v8159
    %v8931 = vunpack.c.h.b16 %v8159
    %v8932 = vunpack.c.l.b16 %v8160
    %v8933 = vunpack.c.h.b16 %v8160
    %v8934 = vunpack.c.l.b16 %v8161
    %v8935 = vunpack.c.h.b16 %v8161
    %v8936 = vunpack.c.l.b16 %v8162
    %v8937 = vunpack.c.h.b16 %v8162
    %v8938 = vunpack.c.l.b16 %v8163
    %v8939 = vunpack.c.h.b16 %v8163
    %v8940 = vunpack.c.l.b16 %v8164
    %v8941 = vunpack.c.h.b16 %v8164
    %v8942 = vunpack.c.l.b16 %v8165
    %v8943 = vunpack.c.h.b16 %v8165
    %v8944 = vunpack.c.l.b16 %v8166
    %v8945 = vunpack.c.h.b16 %v8166
    %v8946 = vunpack.c.l.b16 %v8167
    %v8947 = vunpack.c.h.b16 %v8167
    %v8948 = vunpack.c.l.b16 %v8168
    %v8949 = vunpack.c.h.b16 %v8168
    %v8950 = vunpack.c.l.b16 %v8169
    %v8951 = vunpack.c.h.b16 %v8169
    %v8952 = vunpack.c.l.b16 %v8170
    %v8953 = vunpack.c.h.b16 %v8170
    %v8954 = vunpack.c.l.b16 %v8171
    %v8955 = vunpack.c.h.b16 %v8171
    %v8956 = vunpack.c.l.b16 %v8172
    %v8957 = vunpack.c.h.b16 %v8172
    %v8958 = vunpack.c.l.b16 %v8173
    %v8959 = vunpack.c.h.b16 %v8173
    %v8960 = vunpack.c.l.b16 %v8174
    %v8961 = vunpack.c.h.b16 %v8174
    %v8962 = vunpack.c.l.b16 %v8175
    %v8963 = vunpack.c.h.b16 %v8175
    %v8964 = vunpack.c.l.b16 %v8176
    %v8965 = vunpack.c.h.b16 %v8176
    %v8966 = vunpack.c.l.b16 %v8177
    %v8967 = vunpack.c.h.b16 %v8177
    %v8968 = vunpack.c.l.b16 %v8178
    %v8969 = vunpack.c.h.b16 %v8178
    %v8970 = vunpack.c.l.b16 %v8179
    %v8971 = vunpack.c.h.b16 %v8179
    %v8972 = vunpack.c.l.b16 %v8180
    %v8973 = vunpack.c.h.b16 %v8180
    %v8974 = vunpack.c.l.b16 %v8181
    %v8975 = vunpack.c.h.b16 %v8181
    %v8976 = vunpack.c.l.b16 %v8182
    %v8977 = vunpack.c.h.b16 %v8182
    %v8978 = vunpack.c.l.b16 %v8183
    %v8979 = vunpack.c.h.b16 %v8183
    %v8980 = vunpack.c.l.b16 %v8184
    %v8981 = vunpack.c.h.b16 %v8184
    %v8982 = vunpack.c.l.b16 %v8185
    %v8983 = vunpack.c.h.b16 %v8185
    %v8984 = vunpack.c.l.b16 %v8186
    %v8985 = vunpack.c.h.b16 %v8186
    %v8986 = vunpack.c.l.b16 %v8187
    %v8987 = vunpack.c.h.b16 %v8187
    %v8988 = vunpack.c.l.b16 %v8188
    %v8989 = vunpack.c.h.b16 %v8188
    %v8990 = vunpack.c.l.b16 %v8189
    %v8991 = vunpack.c.h.b16 %v8189
    %v8992 = vunpack.c.l.b16 %v8190
    %v8993 = vunpack.c.h.b16 %v8190
    %v8994 = vunpack.c.l.b16 %v8191
    %v8995 = vunpack.c.h.b16 %v8191
    %v8996 = vunpack.c.l.b16 %v8192
    %v8997 = vunpack.c.h.b16 %v8192
    %v8998 = vunpack.c.l.b16 %v8193
    %v8999 = vunpack.c.h.b16 %v8193
    %v9000 = vunpack.c.l.b16 %v8194
    %v9001 = vunpack.c.h.b16 %v8194
    %v9002 = vunpack.c.l.b16 %v8195
    %v9003 = vunpack.c.h.b16 %v8195
    %v9004 = vunpack.c.l.b16 %v8196
    %v9005 = vunpack.c.h.b16 %v8196
    %v9006 = vunpack.c.l.b16 %v8197
    %v9007 = vunpack.c.h.b16 %v8197
    %v9008 = vpack.c.b16 %v8504, %v8496
    %v9009 = vpack.c.b16 %v8505, %v8497
    %v9010 = vpack.c.b16 %v8506, %v8498
    %v9011 = vpack.c.b16 %v8507, %v8499
    %v9012 = vpack.c.b16 %v8508, %v8500
    %v9013 = vpack.c.b16 %v8509, %v8501
    %v9014 = vpack.c.b16 %v8510, %v8502
    %v9015 = vpack.c.b16 %v8511, %v8503
    %v9016 = vpack.c.b16 %v8520, %v8512
    %v9017 = vpack.c.b16 %v8521, %v8513
    %v9018 = vpack.c.b16 %v8522, %v8514
    %v9019 = vpack.c.b16 %v8523, %v8515
    %v9020 = vpack.c.b16 %v8524, %v8516
    %v9021 = vpack.c.b16 %v8525, %v8517
    %v9022 = vpack.c.b16 %v8526, %v8518
    %v9023 = vpack.c.b16 %v8527, %v8519
    %v9024 = vpack.c.b16 %v8536, %v8528
    %v9025 = vpack.c.b16 %v8537, %v8529
    %v9026 = vpack.c.b16 %v8538, %v8530
    %v9027 = vpack.c.b16 %v8539, %v8531
    %v9028 = vpack.c.b16 %v8540, %v8532
    %v9029 = vpack.c.b16 %v8541, %v8533
    %v9030 = vpack.c.b16 %v8542, %v8534
    %v9031 = vpack.c.b16 %v8543, %v8535
    %v9032 = vpack.c.b16 %v8552, %v8544
    %v9033 = vpack.c.b16 %v8553, %v8545
    %v9034 = vpack.c.b16 %v8554, %v8546
    %v9035 = vpack.c.b16 %v8555, %v8547
    %v9036 = vpack.c.b16 %v8556, %v8548
    %v9037 = vpack.c.b16 %v8557, %v8549
    %v9038 = vpack.c.b16 %v8558, %v8550
    %v9039 = vpack.c.b16 %v8559, %v8551
    %v9040 = vpack.c.b16 %v8568, %v8560
    %v9041 = vpack.c.b16 %v8569, %v8561
    %v9042 = vpack.c.b16 %v8570, %v8562
    %v9043 = vpack.c.b16 %v8571, %v8563
    %v9044 = vpack.c.b16 %v8572, %v8564
    %v9045 = vpack.c.b16 %v8573, %v8565
    %v9046 = vpack.c.b16 %v8574, %v8566
    %v9047 = vpack.c.b16 %v8575, %v8567
    %v9048 = vpack.c.b16 %v8584, %v8576
    %v9049 = vpack.c.b16 %v8585, %v8577
    %v9050 = vpack.c.b16 %v8586, %v8578
    %v9051 = vpack.c.b16 %v8587, %v8579
    %v9052 = vpack.c.b16 %v8588, %v8580
    %v9053 = vpack.c.b16 %v8589, %v8581
    %v9054 = vpack.c.b16 %v8590, %v8582
    %v9055 = vpack.c.b16 %v8591, %v8583
    %v9056 = vpack.c.b16 %v8600, %v8592
    %v9057 = vpack.c.b16 %v8601, %v8593
    %v9058 = vpack.c.b16 %v8602, %v8594
    %v9059 = vpack.c.b16 %v8603, %v8595
    %v9060 = vpack.c.b16 %v8604, %v8596
    %v9061 = vpack.c.b16 %v8605, %v8597
    %v9062 = vpack.c.b16 %v8606, %v8598
    %v9063 = vpack.c.b16 %v8607, %v8599
    %v9064 = vpack.c.b16 %v8616, %v8608
    %v9065 = vpack.c.b16 %v8617, %v8609
    %v9066 = vpack.c.b16 %v8618, %v8610
    %v9067 = vpack.c.b16 %v8619, %v8611
    %v9068 = vpack.c.b16 %v8620, %v8612
    %v9069 = vpack.c.b16 %v8621, %v8613
    %v9070 = vpack.c.b16 %v8622, %v8614
    %v9071 = vpack.c.b16 %v8623, %v8615
    %v9072 = vpack.c.b16 %v8632, %v8624
    %v9073 = vpack.c.b16 %v8633, %v8625
    %v9074 = vpack.c.b16 %v8634, %v8626
    %v9075 = vpack.c.b16 %v8635, %v8627
    %v9076 = vpack.c.b16 %v8636, %v8628
    %v9077 = vpack.c.b16 %v8637, %v8629
    %v9078 = vpack.c.b16 %v8638, %v8630
    %v9079 = vpack.c.b16 %v8639, %v8631
    %v9080 = vpack.c.b16 %v8648, %v8640
    %v9081 = vpack.c.b16 %v8649, %v8641
    %v9082 = vpack.c.b16 %v8650, %v8642
    %v9083 = vpack.c.b16 %v8651, %v8643
    %v9084 = vpack.c.b16 %v8652, %v8644
    %v9085 = vpack.c.b16 %v8653, %v8645
    %v9086 = vpack.c.b16 %v8654, %v8646
    %v9087 = vpack.c.b16 %v8655, %v8647
    %v9088 = vpack.c.b16 %v8664, %v8656
    %v9089 = vpack.c.b16 %v8665, %v8657
    %v9090 = vpack.c.b16 %v8666, %v8658
    %v9091 = vpack.c.b16 %v8667, %v8659
    %v9092 = vpack.c.b16 %v8668, %v8660
    %v9093 = vpack.c.b16 %v8669, %v8661
    %v9094 = vpack.c.b16 %v8670, %v8662
    %v9095 = vpack.c.b16 %v8671, %v8663
    %v9096 = vpack.c.b16 %v8680, %v8672
    %v9097 = vpack.c.b16 %v8681, %v8673
    %v9098 = vpack.c.b16 %v8682, %v8674
    %v9099 = vpack.c.b16 %v8683, %v8675
    %v9100 = vpack.c.b16 %v8684, %v8676
    %v9101 = vpack.c.b16 %v8685, %v8677
    %v9102 = vpack.c.b16 %v8686, %v8678
    %v9103 = vpack.c.b16 %v8687, %v8679
    %v9104 = vpack.c.b16 %v8696, %v8688
    %v9105 = vpack.c.b16 %v8697, %v8689
    %v9106 = vpack.c.b16 %v8698, %v8690
    %v9107 = vpack.c.b16 %v8699, %v8691
    %v9108 = vpack.c.b16 %v8700, %v8692
    %v9109 = vpack.c.b16 %v8701, %v8693
    %v9110 = vpack.c.b16 %v8702, %v8694
    %v9111 = vpack.c.b16 %v8703, %v8695
    %v9112 = vpack.c.b16 %v8712, %v8704
    %v9113 = vpack.c.b16 %v8713, %v8705
    %v9114 = vpack.c.b16 %v8714, %v8706
    %v9115 = vpack.c.b16 %v8715, %v8707
    %v9116 = vpack.c.b16 %v8716, %v8708
    %v9117 = vpack.c.b16 %v8717, %v8709
    %v9118 = vpack.c.b16 %v8718, %v8710
    %v9119 = vpack.c.b16 %v8719, %v8711
    %v9120 = vpack.c.b16 %v8728, %v8720
    %v9121 = vpack.c.b16 %v8729, %v8721
    %v9122 = vpack.c.b16 %v8730, %v8722
    %v9123 = vpack.c.b16 %v8731, %v8723
    %v9124 = vpack.c.b16 %v8732, %v8724
    %v9125 = vpack.c.b16 %v8733, %v8725
    %v9126 = vpack.c.b16 %v8734, %v8726
    %v9127 = vpack.c.b16 %v8735, %v8727
    %v9128 = vpack.c.b16 %v8744, %v8736
    %v9129 = vpack.c.b16 %v8745, %v8737
    %v9130 = vpack.c.b16 %v8746, %v8738
    %v9131 = vpack.c.b16 %v8747, %v8739
    %v9132 = vpack.c.b16 %v8748, %v8740
    %v9133 = vpack.c.b16 %v8749, %v8741
    %v9134 = vpack.c.b16 %v8750, %v8742
    %v9135 = vpack.c.b16 %v8751, %v8743
    %v9136 = vpack.c.b16 %v8760, %v8752
    %v9137 = vpack.c.b16 %v8761, %v8753
    %v9138 = vpack.c.b16 %v8762, %v8754
    %v9139 = vpack.c.b16 %v8763, %v8755
    %v9140 = vpack.c.b16 %v8764, %v8756
    %v9141 = vpack.c.b16 %v8765, %v8757
    %v9142 = vpack.c.b16 %v8766, %v8758
    %v9143 = vpack.c.b16 %v8767, %v8759
    %v9144 = vpack.c.b16 %v8776, %v8768
    %v9145 = vpack.c.b16 %v8777, %v8769
    %v9146 = vpack.c.b16 %v8778, %v8770
    %v9147 = vpack.c.b16 %v8779, %v8771
    %v9148 = vpack.c.b16 %v8780, %v8772
    %v9149 = vpack.c.b16 %v8781, %v8773
    %v9150 = vpack.c.b16 %v8782, %v8774
    %v9151 = vpack.c.b16 %v8783, %v8775
    %v9152 = vpack.c.b16 %v8792, %v8784
    %v9153 = vpack.c.b16 %v8793, %v8785
    %v9154 = vpack.c.b16 %v8794, %v8786
    %v9155 = vpack.c.b16 %v8795, %v8787
    %v9156 = vpack.c.b16 %v8796, %v8788
    %v9157 = vpack.c.b16 %v8797, %v8789
    %v9158 = vpack.c.b16 %v8798, %v8790
    %v9159 = vpack.c.b16 %v8799, %v8791
    %v9160 = vpack.c.b16 %v8808, %v8800
    %v9161 = vpack.c.b16 %v8809, %v8801
    %v9162 = vpack.c.b16 %v8810, %v8802
    %v9163 = vpack.c.b16 %v8811, %v8803
    %v9164 = vpack.c.b16 %v8812, %v8804
    %v9165 = vpack.c.b16 %v8813, %v8805
    %v9166 = vpack.c.b16 %v8814, %v8806
    %v9167 = vpack.c.b16 %v8815, %v8807
    %v9168 = vpack.c.b16 %v8824, %v8816
    %v9169 = vpack.c.b16 %v8825, %v8817
    %v9170 = vpack.c.b16 %v8826, %v8818
    %v9171 = vpack.c.b16 %v8827, %v8819
    %v9172 = vpack.c.b16 %v8828, %v8820
    %v9173 = vpack.c.b16 %v8829, %v8821
    %v9174 = vpack.c.b16 %v8830, %v8822
    %v9175 = vpack.c.b16 %v8831, %v8823
    %v9176 = vpack.c.b16 %v8840, %v8832
    %v9177 = vpack.c.b16 %v8841, %v8833
    %v9178 = vpack.c.b16 %v8842, %v8834
    %v9179 = vpack.c.b16 %v8843, %v8835
    %v9180 = vpack.c.b16 %v8844, %v8836
    %v9181 = vpack.c.b16 %v8845, %v8837
    %v9182 = vpack.c.b16 %v8846, %v8838
    %v9183 = vpack.c.b16 %v8847, %v8839
    %v9184 = vpack.c.b16 %v8856, %v8848
    %v9185 = vpack.c.b16 %v8857, %v8849
    %v9186 = vpack.c.b16 %v8858, %v8850
    %v9187 = vpack.c.b16 %v8859, %v8851
    %v9188 = vpack.c.b16 %v8860, %v8852
    %v9189 = vpack.c.b16 %v8861, %v8853
    %v9190 = vpack.c.b16 %v8862, %v8854
    %v9191 = vpack.c.b16 %v8863, %v8855
    %v9192 = vpack.c.b16 %v8872, %v8864
    %v9193 = vpack.c.b16 %v8873, %v8865
    %v9194 = vpack.c.b16 %v8874, %v8866
    %v9195 = vpack.c.b16 %v8875, %v8867
    %v9196 = vpack.c.b16 %v8876, %v8868
    %v9197 = vpack.c.b16 %v8877, %v8869
    %v9198 = vpack.c.b16 %v8878, %v8870
    %v9199 = vpack.c.b16 %v8879, %v8871
    %v9200 = vpack.c.b16 %v8888, %v8880
    %v9201 = vpack.c.b16 %v8889, %v8881
    %v9202 = vpack.c.b16 %v8890, %v8882
    %v9203 = vpack.c.b16 %v8891, %v8883
    %v9204 = vpack.c.b16 %v8892, %v8884
    %v9205 = vpack.c.b16 %v8893, %v8885
    %v9206 = vpack.c.b16 %v8894, %v8886
    %v9207 = vpack.c.b16 %v8895, %v8887
    %v9208 = vpack.c.b16 %v8904, %v8896
    %v9209 = vpack.c.b16 %v8905, %v8897
    %v9210 = vpack.c.b16 %v8906, %v8898
    %v9211 = vpack.c.b16 %v8907, %v8899
    %v9212 = vpack.c.b16 %v8908, %v8900
    %v9213 = vpack.c.b16 %v8909, %v8901
    %v9214 = vpack.c.b16 %v8910, %v8902
    %v9215 = vpack.c.b16 %v8911, %v8903
    %v9216 = vpack.c.b16 %v8920, %v8912
    %v9217 = vpack.c.b16 %v8921, %v8913
    %v9218 = vpack.c.b16 %v8922, %v8914
    %v9219 = vpack.c.b16 %v8923, %v8915
    %v9220 = vpack.c.b16 %v8924, %v8916
    %v9221 = vpack.c.b16 %v8925, %v8917
    %v9222 = vpack.c.b16 %v8926, %v8918
    %v9223 = vpack.c.b16 %v8927, %v8919
    %v9224 = vpack.c.b16 %v8936, %v8928
    %v9225 = vpack.c.b16 %v8937, %v8929
    %v9226 = vpack.c.b16 %v8938, %v8930
    %v9227 = vpack.c.b16 %v8939, %v8931
    %v9228 = vpack.c.b16 %v8940, %v8932
    %v9229 = vpack.c.b16 %v8941, %v8933
    %v9230 = vpack.c.b16 %v8942, %v8934
    %v9231 = vpack.c.b16 %v8943, %v8935
    %v9232 = vpack.c.b16 %v8952, %v8944
    %v9233 = vpack.c.b16 %v8953, %v8945
    %v9234 = vpack.c.b16 %v8954, %v8946
    %v9235 = vpack.c.b16 %v8955, %v8947
    %v9236 = vpack.c.b16 %v8956, %v8948
    %v9237 = vpack.c.b16 %v8957, %v8949
    %v9238 = vpack.c.b16 %v8958, %v8950
    %v9239 = vpack.c.b16 %v8959, %v8951
    %v9240 = vpack.c.b16 %v8968, %v8960
    %v9241 = vpack.c.b16 %v8969, %v8961
    %v9242 = vpack.c.b16 %v8970, %v8962
    %v9243 = vpack.c.b16 %v8971, %v8963
    %v9244 = vpack.c.b16 %v8972, %v8964
    %v9245 = vpack.c.b16 %v8973, %v8965
    %v9246 = vpack.c.b16 %v8974, %v8966
    %v9247 = vpack.c.b16 %v8975, %v8967
    %v9248 = vpack.c.b16 %v8984, %v8976
    %v9249 = vpack.c.b16 %v8985, %v8977
    %v9250 = vpack.c.b16 %v8986, %v8978
    %v9251 = vpack.c.b16 %v8987, %v8979
    %v9252 = vpack.c.b16 %v8988, %v8980
    %v9253 = vpack.c.b16 %v8989, %v8981
    %v9254 = vpack.c.b16 %v8990, %v8982
    %v9255 = vpack.c.b16 %v8991, %v8983
    %v9256 = vpack.c.b16 %v9000, %v8992
    %v9257 = vpack.c.b16 %v9001, %v8993
    %v9258 = vpack.c.b16 %v9002, %v8994
    %v9259 = vpack.c.b16 %v9003, %v8995
    %v9260 = vpack.c.b16 %v9004, %v8996
    %v9261 = vpack.c.b16 %v9005, %v8997
    %v9262 = vpack.c.b16 %v9006, %v8998
    %v9263 = vpack.c.b16 %v9007, %v8999
    %9520 = vmatprep.subr.bf16.mxu0 %v9065
    %9521 = vmatpush1.bf16.msra.mxu0 %v9064
    %9522 = vmatprep.subr.bf16.mxu0 %v9057
    %9523 = vmatpush1.bf16.msra.mxu0 %v9056
    %9524 = vmatprep.subr.bf16.mxu0 %v9049
    %9525 = vmatpush1.bf16.msra.mxu0 %v9048
    %9526 = vmatprep.subr.bf16.mxu0 %v9041
    %9527 = vmatpush1.bf16.msra.mxu0 %v9040
    %9528 = vmatprep.subr.bf16.mxu0 %v9033
    %9529 = vmatpush1.bf16.msra.mxu0 %v9032
    %9530 = vmatprep.subr.bf16.mxu0 %v9025
    %9531 = vmatpush1.bf16.msra.mxu0 %v9024
    %9532 = vmatprep.subr.bf16.mxu0 %v9017
    %9533 = vmatpush1.bf16.msra.mxu0 %v9016
    %9534 = vmatprep.subr.bf16.mxu0 %v9009
    %9535 = vmatpush1.bf16.msra.mxu0 %v9008
    %9536 = vmatprep.subr.bf16.mxu0 %v9129
    %9537 = vmatpush2.bf16.msra.mxu0 %v9128
    %9538 = vmatprep.subr.bf16.mxu0 %v9121
    %9539 = vmatpush2.bf16.msra.mxu0 %v9120
    %9540 = vmatprep.subr.bf16.mxu0 %v9113
    %9541 = vmatpush2.bf16.msra.mxu0 %v9112
    %9542 = vmatprep.subr.bf16.mxu0 %v9105
    %9543 = vmatpush2.bf16.msra.mxu0 %v9104
    %9544 = vmatprep.subr.bf16.mxu0 %v9097
    %9545 = vmatpush2.bf16.msra.mxu0 %v9096
    %9546 = vmatprep.subr.bf16.mxu0 %v9089
    %9547 = vmatpush2.bf16.msra.mxu0 %v9088
    %9548 = vmatprep.subr.bf16.mxu0 %v9081
    %9549 = vmatpush2.bf16.msra.mxu0 %v9080
    %9550 = vmatprep.subr.bf16.mxu0 %v9073
    %9551 = vmatpush2.bf16.msra.mxu0 %v9072
    %9552 = vmatprep.mubr.bf16.mxu0 %v7939
    %9553 = vmatmul.mubr.bf16.gmra.mxu0 %v7938
    %v9554 = vpop.f32.mrf.mxu0
    %v9555 = vadd.f32 %v8203, %v9554
    %v9556 = vpop.f32.mrf.mxu0
    %v9557 = vadd.f32 %v8207, %v9556
    %v9558 = vpop.f32.mrf.mxu0
    %v9559 = vpop.f32.mrf.mxu0
    %9560 = vdwg.mxu0
    %9561 = vmatprep.subr.bf16.mxu0 %v9193
    %9562 = vmatpush1.bf16.msra.mxu0 %v9192
    %9563 = vmatprep.subr.bf16.mxu0 %v9185
    %9564 = vmatpush1.bf16.msra.mxu0 %v9184
    %9565 = vmatprep.subr.bf16.mxu0 %v9177
    %9566 = vmatpush1.bf16.msra.mxu0 %v9176
    %9567 = vmatprep.subr.bf16.mxu0 %v9169
    %9568 = vmatpush1.bf16.msra.mxu0 %v9168
    %9569 = vmatprep.subr.bf16.mxu0 %v9161
    %9570 = vmatpush1.bf16.msra.mxu0 %v9160
    %9571 = vmatprep.subr.bf16.mxu0 %v9153
    %9572 = vmatpush1.bf16.msra.mxu0 %v9152
    %9573 = vmatprep.subr.bf16.mxu0 %v9145
    %9574 = vmatpush1.bf16.msra.mxu0 %v9144
    %9575 = vmatprep.subr.bf16.mxu0 %v9137
    %9576 = vmatpush1.bf16.msra.mxu0 %v9136
    %9577 = vmatprep.subr.bf16.mxu0 %v9257
    %9578 = vmatpush2.bf16.msra.mxu0 %v9256
    %9579 = vmatprep.subr.bf16.mxu0 %v9249
    %9580 = vmatpush2.bf16.msra.mxu0 %v9248
    %9581 = vmatprep.subr.bf16.mxu0 %v9241
    %9582 = vmatpush2.bf16.msra.mxu0 %v9240
    %9583 = vmatprep.subr.bf16.mxu0 %v9233
    %9584 = vmatpush2.bf16.msra.mxu0 %v9232
    %9585 = vmatprep.subr.bf16.mxu0 %v9225
    %9586 = vmatpush2.bf16.msra.mxu0 %v9224
    %9587 = vmatprep.subr.bf16.mxu0 %v9217
    %9588 = vmatpush2.bf16.msra.mxu0 %v9216
    %9589 = vmatprep.subr.bf16.mxu0 %v9209
    %9590 = vmatpush2.bf16.msra.mxu0 %v9208
    %9591 = vmatprep.subr.bf16.mxu0 %v9201
    %9592 = vmatpush2.bf16.msra.mxu0 %v9200
    %9593 = vmatprep.mubr.bf16.mxu0 %v7941
    %9594 = vmatmul.mubr.bf16.gmra.mxu0 %v7940
    %v9595 = vpop.f32.mrf.mxu0
    %v9596 = vadd.f32 %v9555, %v9595
    %v9597 = vpop.f32.mrf.mxu0
    %v9598 = vadd.f32 %v9557, %v9597
    %v9599 = vpop.f32.mrf.mxu0
    %v9600 = vpop.f32.mrf.mxu0
    %9601 = vdwg.mxu0
    %9602 = vmatprep.subr.bf16.mxu0 %v9067
    %9603 = vmatpush1.bf16.msra.mxu0 %v9066
    %9604 = vmatprep.subr.bf16.mxu0 %v9059
    %9605 = vmatpush1.bf16.msra.mxu0 %v9058
    %9606 = vmatprep.subr.bf16.mxu0 %v9051
    %9607 = vmatpush1.bf16.msra.mxu0 %v9050
    %9608 = vmatprep.subr.bf16.mxu0 %v9043
    %9609 = vmatpush1.bf16.msra.mxu0 %v9042
    %9610 = vmatprep.subr.bf16.mxu0 %v9035
    %9611 = vmatpush1.bf16.msra.mxu0 %v9034
    %9612 = vmatprep.subr.bf16.mxu0 %v9027
    %9613 = vmatpush1.bf16.msra.mxu0 %v9026
    %9614 = vmatprep.subr.bf16.mxu0 %v9019
    %9615 = vmatpush1.bf16.msra.mxu0 %v9018
    %9616 = vmatprep.subr.bf16.mxu0 %v9011
    %9617 = vmatpush1.bf16.msra.mxu0 %v9010
    %9618 = vmatprep.subr.bf16.mxu0 %v9131
    %9619 = vmatpush2.bf16.msra.mxu0 %v9130
    %9620 = vmatprep.subr.bf16.mxu0 %v9123
    %9621 = vmatpush2.bf16.msra.mxu0 %v9122
    %9622 = vmatprep.subr.bf16.mxu0 %v9115
    %9623 = vmatpush2.bf16.msra.mxu0 %v9114
    %9624 = vmatprep.subr.bf16.mxu0 %v9107
    %9625 = vmatpush2.bf16.msra.mxu0 %v9106
    %9626 = vmatprep.subr.bf16.mxu0 %v9099
    %9627 = vmatpush2.bf16.msra.mxu0 %v9098
    %9628 = vmatprep.subr.bf16.mxu0 %v9091
    %9629 = vmatpush2.bf16.msra.mxu0 %v9090
    %9630 = vmatprep.subr.bf16.mxu0 %v9083
    %9631 = vmatpush2.bf16.msra.mxu0 %v9082
    %9632 = vmatprep.subr.bf16.mxu0 %v9075
    %9633 = vmatpush2.bf16.msra.mxu0 %v9074
    %9634 = vmatprep.mubr.bf16.mxu0 %v7939
    %9635 = vmatmul.mubr.bf16.gmra.mxu0 %v7938
    %v9636 = vpop.f32.mrf.mxu0
    %v9637 = vadd.f32 %v8211, %v9636
    %v9638 = vpop.f32.mrf.mxu0
    %v9639 = vadd.f32 %v8215, %v9638
    %v9640 = vpop.f32.mrf.mxu0
    %v9641 = vpop.f32.mrf.mxu0
    %9642 = vdwg.mxu0
    %9643 = vmatprep.subr.bf16.mxu0 %v9195
    %9644 = vmatpush1.bf16.msra.mxu0 %v9194
    %9645 = vmatprep.subr.bf16.mxu0 %v9187
    %9646 = vmatpush1.bf16.msra.mxu0 %v9186
    %9647 = vmatprep.subr.bf16.mxu0 %v9179
    %9648 = vmatpush1.bf16.msra.mxu0 %v9178
    %9649 = vmatprep.subr.bf16.mxu0 %v9171
    %9650 = vmatpush1.bf16.msra.mxu0 %v9170
    %9651 = vmatprep.subr.bf16.mxu0 %v9163
    %9652 = vmatpush1.bf16.msra.mxu0 %v9162
    %9653 = vmatprep.subr.bf16.mxu0 %v9155
    %9654 = vmatpush1.bf16.msra.mxu0 %v9154
    %9655 = vmatprep.subr.bf16.mxu0 %v9147
    %9656 = vmatpush1.bf16.msra.mxu0 %v9146
    %9657 = vmatprep.subr.bf16.mxu0 %v9139
    %9658 = vmatpush1.bf16.msra.mxu0 %v9138
    %9659 = vmatprep.subr.bf16.mxu0 %v9259
    %9660 = vmatpush2.bf16.msra.mxu0 %v9258
    %9661 = vmatprep.subr.bf16.mxu0 %v9251
    %9662 = vmatpush2.bf16.msra.mxu0 %v9250
    %9663 = vmatprep.subr.bf16.mxu0 %v9243
    %9664 = vmatpush2.bf16.msra.mxu0 %v9242
    %9665 = vmatprep.subr.bf16.mxu0 %v9235
    %9666 = vmatpush2.bf16.msra.mxu0 %v9234
    %9667 = vmatprep.subr.bf16.mxu0 %v9227
    %9668 = vmatpush2.bf16.msra.mxu0 %v9226
    %9669 = vmatprep.subr.bf16.mxu0 %v9219
    %9670 = vmatpush2.bf16.msra.mxu0 %v9218
    %9671 = vmatprep.subr.bf16.mxu0 %v9211
    %9672 = vmatpush2.bf16.msra.mxu0 %v9210
    %9673 = vmatprep.subr.bf16.mxu0 %v9203
    %9674 = vmatpush2.bf16.msra.mxu0 %v9202
    %9675 = vmatprep.mubr.bf16.mxu0 %v7941
    %9676 = vmatmul.mubr.bf16.gmra.mxu0 %v7940
    %v9677 = vpop.f32.mrf.mxu0
    %v9678 = vadd.f32 %v9637, %v9677
    %v9679 = vpop.f32.mrf.mxu0
    %v9680 = vadd.f32 %v9639, %v9679
    %v9681 = vpop.f32.mrf.mxu0
    %v9682 = vpop.f32.mrf.mxu0
    %9683 = vdwg.mxu0
    %9684 = vmatprep.subr.bf16.mxu0 %v9069
    %9685 = vmatpush1.bf16.msra.mxu0 %v9068
    %9686 = vmatprep.subr.bf16.mxu0 %v9061
    %9687 = vmatpush1.bf16.msra.mxu0 %v9060
    %9688 = vmatprep.subr.bf16.mxu0 %v9053
    %9689 = vmatpush1.bf16.msra.mxu0 %v9052
    %9690 = vmatprep.subr.bf16.mxu0 %v9045
    %9691 = vmatpush1.bf16.msra.mxu0 %v9044
    %9692 = vmatprep.subr.bf16.mxu0 %v9037
    %9693 = vmatpush1.bf16.msra.mxu0 %v9036
    %9694 = vmatprep.subr.bf16.mxu0 %v9029
    %9695 = vmatpush1.bf16.msra.mxu0 %v9028
    %9696 = vmatprep.subr.bf16.mxu0 %v9021
    %9697 = vmatpush1.bf16.msra.mxu0 %v9020
    %9698 = vmatprep.subr.bf16.mxu0 %v9013
    %9699 = vmatpush1.bf16.msra.mxu0 %v9012
    %9700 = vmatprep.subr.bf16.mxu0 %v9133
    %9701 = vmatpush2.bf16.msra.mxu0 %v9132
    %9702 = vmatprep.subr.bf16.mxu0 %v9125
    %9703 = vmatpush2.bf16.msra.mxu0 %v9124
    %9704 = vmatprep.subr.bf16.mxu0 %v9117
    %9705 = vmatpush2.bf16.msra.mxu0 %v9116
    %9706 = vmatprep.subr.bf16.mxu0 %v9109
    %9707 = vmatpush2.bf16.msra.mxu0 %v9108
    %9708 = vmatprep.subr.bf16.mxu0 %v9101
    %9709 = vmatpush2.bf16.msra.mxu0 %v9100
    %9710 = vmatprep.subr.bf16.mxu0 %v9093
    %9711 = vmatpush2.bf16.msra.mxu0 %v9092
    %9712 = vmatprep.subr.bf16.mxu0 %v9085
    %9713 = vmatpush2.bf16.msra.mxu0 %v9084
    %9714 = vmatprep.subr.bf16.mxu0 %v9077
    %9715 = vmatpush2.bf16.msra.mxu0 %v9076
    %9716 = vmatprep.mubr.bf16.mxu0 %v7939
    %9717 = vmatmul.mubr.bf16.gmra.mxu0 %v7938
    %v9718 = vpop.f32.mrf.mxu0
    %v9719 = vadd.f32 %v8219, %v9718
    %v9720 = vpop.f32.mrf.mxu0
    %v9721 = vadd.f32 %v8223, %v9720
    %v9722 = vpop.f32.mrf.mxu0
    %v9723 = vpop.f32.mrf.mxu0
    %9724 = vdwg.mxu0
    %9725 = vmatprep.subr.bf16.mxu0 %v9197
    %9726 = vmatpush1.bf16.msra.mxu0 %v9196
    %9727 = vmatprep.subr.bf16.mxu0 %v9189
    %9728 = vmatpush1.bf16.msra.mxu0 %v9188
    %9729 = vmatprep.subr.bf16.mxu0 %v9181
    %9730 = vmatpush1.bf16.msra.mxu0 %v9180
    %9731 = vmatprep.subr.bf16.mxu0 %v9173
    %9732 = vmatpush1.bf16.msra.mxu0 %v9172
    %9733 = vmatprep.subr.bf16.mxu0 %v9165
    %9734 = vmatpush1.bf16.msra.mxu0 %v9164
    %9735 = vmatprep.subr.bf16.mxu0 %v9157
    %9736 = vmatpush1.bf16.msra.mxu0 %v9156
    %9737 = vmatprep.subr.bf16.mxu0 %v9149
    %9738 = vmatpush1.bf16.msra.mxu0 %v9148
    %9739 = vmatprep.subr.bf16.mxu0 %v9141
    %9740 = vmatpush1.bf16.msra.mxu0 %v9140
    %9741 = vmatprep.subr.bf16.mxu0 %v9261
    %9742 = vmatpush2.bf16.msra.mxu0 %v9260
    %9743 = vmatprep.subr.bf16.mxu0 %v9253
    %9744 = vmatpush2.bf16.msra.mxu0 %v9252
    %9745 = vmatprep.subr.bf16.mxu0 %v9245
    %9746 = vmatpush2.bf16.msra.mxu0 %v9244
    %9747 = vmatprep.subr.bf16.mxu0 %v9237
    %9748 = vmatpush2.bf16.msra.mxu0 %v9236
    %9749 = vmatprep.subr.bf16.mxu0 %v9229
    %9750 = vmatpush2.bf16.msra.mxu0 %v9228
    %9751 = vmatprep.subr.bf16.mxu0 %v9221
    %9752 = vmatpush2.bf16.msra.mxu0 %v9220
    %9753 = vmatprep.subr.bf16.mxu0 %v9213
    %9754 = vmatpush2.bf16.msra.mxu0 %v9212
    %9755 = vmatprep.subr.bf16.mxu0 %v9205
    %9756 = vmatpush2.bf16.msra.mxu0 %v9204
    %9757 = vmatprep.mubr.bf16.mxu0 %v7941
    %9758 = vmatmul.mubr.bf16.gmra.mxu0 %v7940
    %v9759 = vpop.f32.mrf.mxu0
    %v9760 = vadd.f32 %v9719, %v9759
    %v9761 = vpop.f32.mrf.mxu0
    %v9762 = vadd.f32 %v9721, %v9761
    %v9763 = vpop.f32.mrf.mxu0
    %v9764 = vpop.f32.mrf.mxu0
    %9765 = vdwg.mxu0
    %9766 = vmatprep.subr.bf16.mxu0 %v9071
    %9767 = vmatpush1.bf16.msra.mxu0 %v9070
    %9768 = vmatprep.subr.bf16.mxu0 %v9063
    %9769 = vmatpush1.bf16.msra.mxu0 %v9062
    %9770 = vmatprep.subr.bf16.mxu0 %v9055
    %9771 = vmatpush1.bf16.msra.mxu0 %v9054
    %9772 = vmatprep.subr.bf16.mxu0 %v9047
    %9773 = vmatpush1.bf16.msra.mxu0 %v9046
    %9774 = vmatprep.subr.bf16.mxu0 %v9039
    %9775 = vmatpush1.bf16.msra.mxu0 %v9038
    %9776 = vmatprep.subr.bf16.mxu0 %v9031
    %9777 = vmatpush1.bf16.msra.mxu0 %v9030
    %9778 = vmatprep.subr.bf16.mxu0 %v9023
    %9779 = vmatpush1.bf16.msra.mxu0 %v9022
    %9780 = vmatprep.subr.bf16.mxu0 %v9015
    %9781 = vmatpush1.bf16.msra.mxu0 %v9014
    %9782 = vmatprep.subr.bf16.mxu0 %v9135
    %9783 = vmatpush2.bf16.msra.mxu0 %v9134
    %9784 = vmatprep.subr.bf16.mxu0 %v9127
    %9785 = vmatpush2.bf16.msra.mxu0 %v9126
    %9786 = vmatprep.subr.bf16.mxu0 %v9119
    %9787 = vmatpush2.bf16.msra.mxu0 %v9118
    %9788 = vmatprep.subr.bf16.mxu0 %v9111
    %9789 = vmatpush2.bf16.msra.mxu0 %v9110
    %9790 = vmatprep.subr.bf16.mxu0 %v9103
    %9791 = vmatpush2.bf16.msra.mxu0 %v9102
    %9792 = vmatprep.subr.bf16.mxu0 %v9095
    %9793 = vmatpush2.bf16.msra.mxu0 %v9094
    %9794 = vmatprep.subr.bf16.mxu0 %v9087
    %9795 = vmatpush2.bf16.msra.mxu0 %v9086
    %9796 = vmatprep.subr.bf16.mxu0 %v9079
    %9797 = vmatpush2.bf16.msra.mxu0 %v9078
    %9798 = vmatprep.mubr.bf16.mxu0 %v7939
    %9799 = vmatmul.mubr.bf16.gmra.mxu0 %v7938
    %v9800 = vpop.f32.mrf.mxu0
    %v9801 = vadd.f32 %v8227, %v9800
    %v9802 = vpop.f32.mrf.mxu0
    %v9803 = vadd.f32 %v8231, %v9802
    %v9804 = vpop.f32.mrf.mxu0
    %v9805 = vpop.f32.mrf.mxu0
    %9806 = vdwg.mxu0
    %9807 = vmatprep.subr.bf16.mxu0 %v9199
    %9808 = vmatpush1.bf16.msra.mxu0 %v9198
    %9809 = vmatprep.subr.bf16.mxu0 %v9191
    %9810 = vmatpush1.bf16.msra.mxu0 %v9190
    %9811 = vmatprep.subr.bf16.mxu0 %v9183
    %9812 = vmatpush1.bf16.msra.mxu0 %v9182
    %9813 = vmatprep.subr.bf16.mxu0 %v9175
    %9814 = vmatpush1.bf16.msra.mxu0 %v9174
    %9815 = vmatprep.subr.bf16.mxu0 %v9167
    %9816 = vmatpush1.bf16.msra.mxu0 %v9166
    %9817 = vmatprep.subr.bf16.mxu0 %v9159
    %9818 = vmatpush1.bf16.msra.mxu0 %v9158
    %9819 = vmatprep.subr.bf16.mxu0 %v9151
    %9820 = vmatpush1.bf16.msra.mxu0 %v9150
    %9821 = vmatprep.subr.bf16.mxu0 %v9143
    %9822 = vmatpush1.bf16.msra.mxu0 %v9142
    %9823 = vmatprep.subr.bf16.mxu0 %v9263
    %9824 = vmatpush2.bf16.msra.mxu0 %v9262
    %9825 = vmatprep.subr.bf16.mxu0 %v9255
    %9826 = vmatpush2.bf16.msra.mxu0 %v9254
    %9827 = vmatprep.subr.bf16.mxu0 %v9247
    %9828 = vmatpush2.bf16.msra.mxu0 %v9246
    %9829 = vmatprep.subr.bf16.mxu0 %v9239
    %9830 = vmatpush2.bf16.msra.mxu0 %v9238
    %9831 = vmatprep.subr.bf16.mxu0 %v9231
    %9832 = vmatpush2.bf16.msra.mxu0 %v9230
    %9833 = vmatprep.subr.bf16.mxu0 %v9223
    %9834 = vmatpush2.bf16.msra.mxu0 %v9222
    %9835 = vmatprep.subr.bf16.mxu0 %v9215
    %9836 = vmatpush2.bf16.msra.mxu0 %v9214
    %9837 = vmatprep.subr.bf16.mxu0 %v9207
    %9838 = vmatpush2.bf16.msra.mxu0 %v9206
    %9839 = vmatprep.mubr.bf16.mxu0 %v7941
    %9840 = vmatmul.mubr.bf16.gmra.mxu0 %v7940
    %v9841 = vpop.f32.mrf.mxu0
    %v9842 = vadd.f32 %v9801, %v9841
    %v9843 = vpop.f32.mrf.mxu0
    %v9844 = vadd.f32 %v9803, %v9843
    %v9845 = vpop.f32.mrf.mxu0
    %v9846 = vpop.f32.mrf.mxu0
    %9847 = vdwg.mxu0
    %v9848 = vmax.f32 %v9596, 0.0
    %v9849 = vmax.f32 %v9598, 0.0
    %v9850 = vmax.f32 %v9678, 0.0
    %v9851 = vmax.f32 %v9680, 0.0
    %v9852 = vmax.f32 %v9760, 0.0
    %v9853 = vmax.f32 %v9762, 0.0
    %v9854 = vmax.f32 %v9842, 0.0
    %v9855 = vmax.f32 %v9844, 0.0
    %s9856 = smul.u32 4, 128
    %s9857 = smul.u32 %s9856, 4
    %s9858 = sshll.u32 %s9857, 4
    %9859 = dma.done %s239, %s9858
    %v9860 = vpack.c.bf16 %v9848, %v9848
    %v9861 = vpack.c.bf16 %v9849, %v9849
    %v9862 = vpack.c.bf16 %v9850, %v9850
    %v9863 = vpack.c.bf16 %v9851, %v9851
    %v9864 = vpack.c.bf16 %v9852, %v9852
    %v9865 = vpack.c.bf16 %v9853, %v9853
    %v9866 = vpack.c.bf16 %v9854, %v9854
    %v9867 = vpack.c.bf16 %v9855, %v9855
    %v9868 = vld [vmem:[#allocation3] sm:$0xff]
    %v9869 = vld [vmem:[#allocation3 + $0x8] sm:$0xff]
    %v9870 = vld [vmem:[#allocation3 + $0x10] sm:$0xff]
    %v9871 = vld [vmem:[#allocation3 + $0x18] sm:$0xff]
    %v9872 = vld [vmem:[#allocation3 + $0x20] sm:$0xff]
    %v9873 = vld [vmem:[#allocation3 + $0x28] sm:$0xff]
    %v9874 = vld [vmem:[#allocation3 + $0x30] sm:$0xff]
    %v9875 = vld [vmem:[#allocation3 + $0x38] sm:$0xff]
    %v9876 = vld [vmem:[#allocation3 + $0x40] sm:$0xff]
    %v9877 = vld [vmem:[#allocation3 + $0x48] sm:$0xff]
    %v9878 = vld [vmem:[#allocation3 + $0x50] sm:$0xff]
    %v9879 = vld [vmem:[#allocation3 + $0x58] sm:$0xff]
    %v9880 = vld [vmem:[#allocation3 + $0x60] sm:$0xff]
    %v9881 = vld [vmem:[#allocation3 + $0x68] sm:$0xff]
    %v9882 = vld [vmem:[#allocation3 + $0x70] sm:$0xff]
    %v9883 = vld [vmem:[#allocation3 + $0x78] sm:$0xff]
    %v9884 = vld [vmem:[#allocation3 + $0x80] sm:$0xff]
    %v9885 = vld [vmem:[#allocation3 + $0x88] sm:$0xff]
    %v9886 = vld [vmem:[#allocation3 + $0x90] sm:$0xff]
    %v9887 = vld [vmem:[#allocation3 + $0x98] sm:$0xff]
    %v9888 = vld [vmem:[#allocation3 + $0xa0] sm:$0xff]
    %v9889 = vld [vmem:[#allocation3 + $0xa8] sm:$0xff]
    %v9890 = vld [vmem:[#allocation3 + $0xb0] sm:$0xff]
    %v9891 = vld [vmem:[#allocation3 + $0xb8] sm:$0xff]
    %v9892 = vld [vmem:[#allocation3 + $0xc0] sm:$0xff]
    %v9893 = vld [vmem:[#allocation3 + $0xc8] sm:$0xff]
    %v9894 = vld [vmem:[#allocation3 + $0xd0] sm:$0xff]
    %v9895 = vld [vmem:[#allocation3 + $0xd8] sm:$0xff]
    %v9896 = vld [vmem:[#allocation3 + $0xe0] sm:$0xff]
    %v9897 = vld [vmem:[#allocation3 + $0xe8] sm:$0xff]
    %v9898 = vld [vmem:[#allocation3 + $0xf0] sm:$0xff]
    %v9899 = vld [vmem:[#allocation3 + $0xf8] sm:$0xff]
    %v9900 = vld [vmem:[#allocation3 + $0x100] sm:$0xff]
    %v9901 = vld [vmem:[#allocation3 + $0x108] sm:$0xff]
    %v9902 = vld [vmem:[#allocation3 + $0x110] sm:$0xff]
    %v9903 = vld [vmem:[#allocation3 + $0x118] sm:$0xff]
    %v9904 = vld [vmem:[#allocation3 + $0x120] sm:$0xff]
    %v9905 = vld [vmem:[#allocation3 + $0x128] sm:$0xff]
    %v9906 = vld [vmem:[#allocation3 + $0x130] sm:$0xff]
    %v9907 = vld [vmem:[#allocation3 + $0x138] sm:$0xff]
    %v9908 = vld [vmem:[#allocation3 + $0x140] sm:$0xff]
    %v9909 = vld [vmem:[#allocation3 + $0x148] sm:$0xff]
    %v9910 = vld [vmem:[#allocation3 + $0x150] sm:$0xff]
    %v9911 = vld [vmem:[#allocation3 + $0x158] sm:$0xff]
    %v9912 = vld [vmem:[#allocation3 + $0x160] sm:$0xff]
    %v9913 = vld [vmem:[#allocation3 + $0x168] sm:$0xff]
    %v9914 = vld [vmem:[#allocation3 + $0x170] sm:$0xff]
    %v9915 = vld [vmem:[#allocation3 + $0x178] sm:$0xff]
    %v9916 = vld [vmem:[#allocation3 + $0x180] sm:$0xff]
    %v9917 = vld [vmem:[#allocation3 + $0x188] sm:$0xff]
    %v9918 = vld [vmem:[#allocation3 + $0x190] sm:$0xff]
    %v9919 = vld [vmem:[#allocation3 + $0x198] sm:$0xff]
    %v9920 = vld [vmem:[#allocation3 + $0x1a0] sm:$0xff]
    %v9921 = vld [vmem:[#allocation3 + $0x1a8] sm:$0xff]
    %v9922 = vld [vmem:[#allocation3 + $0x1b0] sm:$0xff]
    %v9923 = vld [vmem:[#allocation3 + $0x1b8] sm:$0xff]
    %v9924 = vld [vmem:[#allocation3 + $0x1c0] sm:$0xff]
    %v9925 = vld [vmem:[#allocation3 + $0x1c8] sm:$0xff]
    %v9926 = vld [vmem:[#allocation3 + $0x1d0] sm:$0xff]
    %v9927 = vld [vmem:[#allocation3 + $0x1d8] sm:$0xff]
    %v9928 = vld [vmem:[#allocation3 + $0x1e0] sm:$0xff]
    %v9929 = vld [vmem:[#allocation3 + $0x1e8] sm:$0xff]
    %v9930 = vld [vmem:[#allocation3 + $0x1f0] sm:$0xff]
    %v9931 = vld [vmem:[#allocation3 + $0x1f8] sm:$0xff]
    %v9932 = vld [vmem:[#allocation3 + $0x200] sm:$0xff]
    %v9933 = vld [vmem:[#allocation3 + $0x208] sm:$0xff]
    %v9934 = vld [vmem:[#allocation3 + $0x210] sm:$0xff]
    %v9935 = vld [vmem:[#allocation3 + $0x218] sm:$0xff]
    %v9936 = vld [vmem:[#allocation3 + $0x220] sm:$0xff]
    %v9937 = vld [vmem:[#allocation3 + $0x228] sm:$0xff]
    %v9938 = vld [vmem:[#allocation3 + $0x230] sm:$0xff]
    %v9939 = vld [vmem:[#allocation3 + $0x238] sm:$0xff]
    %v9940 = vld [vmem:[#allocation3 + $0x240] sm:$0xff]
    %v9941 = vld [vmem:[#allocation3 + $0x248] sm:$0xff]
    %v9942 = vld [vmem:[#allocation3 + $0x250] sm:$0xff]
    %v9943 = vld [vmem:[#allocation3 + $0x258] sm:$0xff]
    %v9944 = vld [vmem:[#allocation3 + $0x260] sm:$0xff]
    %v9945 = vld [vmem:[#allocation3 + $0x268] sm:$0xff]
    %v9946 = vld [vmem:[#allocation3 + $0x270] sm:$0xff]
    %v9947 = vld [vmem:[#allocation3 + $0x278] sm:$0xff]
    %v9948 = vld [vmem:[#allocation3 + $0x280] sm:$0xff]
    %v9949 = vld [vmem:[#allocation3 + $0x288] sm:$0xff]
    %v9950 = vld [vmem:[#allocation3 + $0x290] sm:$0xff]
    %v9951 = vld [vmem:[#allocation3 + $0x298] sm:$0xff]
    %v9952 = vld [vmem:[#allocation3 + $0x2a0] sm:$0xff]
    %v9953 = vld [vmem:[#allocation3 + $0x2a8] sm:$0xff]
    %v9954 = vld [vmem:[#allocation3 + $0x2b0] sm:$0xff]
    %v9955 = vld [vmem:[#allocation3 + $0x2b8] sm:$0xff]
    %v9956 = vld [vmem:[#allocation3 + $0x2c0] sm:$0xff]
    %v9957 = vld [vmem:[#allocation3 + $0x2c8] sm:$0xff]
    %v9958 = vld [vmem:[#allocation3 + $0x2d0] sm:$0xff]
    %v9959 = vld [vmem:[#allocation3 + $0x2d8] sm:$0xff]
    %v9960 = vld [vmem:[#allocation3 + $0x2e0] sm:$0xff]
    %v9961 = vld [vmem:[#allocation3 + $0x2e8] sm:$0xff]
    %v9962 = vld [vmem:[#allocation3 + $0x2f0] sm:$0xff]
    %v9963 = vld [vmem:[#allocation3 + $0x2f8] sm:$0xff]
    %v9964 = vld [vmem:[#allocation3 + $0x300] sm:$0xff]
    %v9965 = vld [vmem:[#allocation3 + $0x308] sm:$0xff]
    %v9966 = vld [vmem:[#allocation3 + $0x310] sm:$0xff]
    %v9967 = vld [vmem:[#allocation3 + $0x318] sm:$0xff]
    %v9968 = vld [vmem:[#allocation3 + $0x320] sm:$0xff]
    %v9969 = vld [vmem:[#allocation3 + $0x328] sm:$0xff]
    %v9970 = vld [vmem:[#allocation3 + $0x330] sm:$0xff]
    %v9971 = vld [vmem:[#allocation3 + $0x338] sm:$0xff]
    %v9972 = vld [vmem:[#allocation3 + $0x340] sm:$0xff]
    %v9973 = vld [vmem:[#allocation3 + $0x348] sm:$0xff]
    %v9974 = vld [vmem:[#allocation3 + $0x350] sm:$0xff]
    %v9975 = vld [vmem:[#allocation3 + $0x358] sm:$0xff]
    %v9976 = vld [vmem:[#allocation3 + $0x360] sm:$0xff]
    %v9977 = vld [vmem:[#allocation3 + $0x368] sm:$0xff]
    %v9978 = vld [vmem:[#allocation3 + $0x370] sm:$0xff]
    %v9979 = vld [vmem:[#allocation3 + $0x378] sm:$0xff]
    %v9980 = vld [vmem:[#allocation3 + $0x380] sm:$0xff]
    %v9981 = vld [vmem:[#allocation3 + $0x388] sm:$0xff]
    %v9982 = vld [vmem:[#allocation3 + $0x390] sm:$0xff]
    %v9983 = vld [vmem:[#allocation3 + $0x398] sm:$0xff]
    %v9984 = vld [vmem:[#allocation3 + $0x3a0] sm:$0xff]
    %v9985 = vld [vmem:[#allocation3 + $0x3a8] sm:$0xff]
    %v9986 = vld [vmem:[#allocation3 + $0x3b0] sm:$0xff]
    %v9987 = vld [vmem:[#allocation3 + $0x3b8] sm:$0xff]
    %v9988 = vld [vmem:[#allocation3 + $0x3c0] sm:$0xff]
    %v9989 = vld [vmem:[#allocation3 + $0x3c8] sm:$0xff]
    %v9990 = vld [vmem:[#allocation3 + $0x3d0] sm:$0xff]
    %v9991 = vld [vmem:[#allocation3 + $0x3d8] sm:$0xff]
    %v9992 = vld [vmem:[#allocation3 + $0x3e0] sm:$0xff]
    %v9993 = vld [vmem:[#allocation3 + $0x3e8] sm:$0xff]
    %v9994 = vld [vmem:[#allocation3 + $0x3f0] sm:$0xff]
    %v9995 = vld [vmem:[#allocation3 + $0x3f8] sm:$0xff]
    %v9996 = vld [vmem:[#allocation3 + $0x400] sm:$0xff]
    %v9997 = vld [vmem:[#allocation3 + $0x408] sm:$0xff]
    %v9998 = vld [vmem:[#allocation3 + $0x410] sm:$0xff]
    %v9999 = vld [vmem:[#allocation3 + $0x418] sm:$0xff]
    %v10000 = vld [vmem:[#allocation3 + $0x420] sm:$0xff]
    %v10001 = vld [vmem:[#allocation3 + $0x428] sm:$0xff]
    %v10002 = vld [vmem:[#allocation3 + $0x430] sm:$0xff]
    %v10003 = vld [vmem:[#allocation3 + $0x438] sm:$0xff]
    %v10004 = vld [vmem:[#allocation3 + $0x440] sm:$0xff]
    %v10005 = vld [vmem:[#allocation3 + $0x448] sm:$0xff]
    %v10006 = vld [vmem:[#allocation3 + $0x450] sm:$0xff]
    %v10007 = vld [vmem:[#allocation3 + $0x458] sm:$0xff]
    %v10008 = vld [vmem:[#allocation3 + $0x460] sm:$0xff]
    %v10009 = vld [vmem:[#allocation3 + $0x468] sm:$0xff]
    %v10010 = vld [vmem:[#allocation3 + $0x470] sm:$0xff]
    %v10011 = vld [vmem:[#allocation3 + $0x478] sm:$0xff]
    %v10012 = vld [vmem:[#allocation3 + $0x480] sm:$0xff]
    %v10013 = vld [vmem:[#allocation3 + $0x488] sm:$0xff]
    %v10014 = vld [vmem:[#allocation3 + $0x490] sm:$0xff]
    %v10015 = vld [vmem:[#allocation3 + $0x498] sm:$0xff]
    %v10016 = vld [vmem:[#allocation3 + $0x4a0] sm:$0xff]
    %v10017 = vld [vmem:[#allocation3 + $0x4a8] sm:$0xff]
    %v10018 = vld [vmem:[#allocation3 + $0x4b0] sm:$0xff]
    %v10019 = vld [vmem:[#allocation3 + $0x4b8] sm:$0xff]
    %v10020 = vld [vmem:[#allocation3 + $0x4c0] sm:$0xff]
    %v10021 = vld [vmem:[#allocation3 + $0x4c8] sm:$0xff]
    %v10022 = vld [vmem:[#allocation3 + $0x4d0] sm:$0xff]
    %v10023 = vld [vmem:[#allocation3 + $0x4d8] sm:$0xff]
    %v10024 = vld [vmem:[#allocation3 + $0x4e0] sm:$0xff]
    %v10025 = vld [vmem:[#allocation3 + $0x4e8] sm:$0xff]
    %v10026 = vld [vmem:[#allocation3 + $0x4f0] sm:$0xff]
    %v10027 = vld [vmem:[#allocation3 + $0x4f8] sm:$0xff]
    %v10028 = vld [vmem:[#allocation3 + $0x500] sm:$0xff]
    %v10029 = vld [vmem:[#allocation3 + $0x508] sm:$0xff]
    %v10030 = vld [vmem:[#allocation3 + $0x510] sm:$0xff]
    %v10031 = vld [vmem:[#allocation3 + $0x518] sm:$0xff]
    %v10032 = vld [vmem:[#allocation3 + $0x520] sm:$0xff]
    %v10033 = vld [vmem:[#allocation3 + $0x528] sm:$0xff]
    %v10034 = vld [vmem:[#allocation3 + $0x530] sm:$0xff]
    %v10035 = vld [vmem:[#allocation3 + $0x538] sm:$0xff]
    %v10036 = vld [vmem:[#allocation3 + $0x540] sm:$0xff]
    %v10037 = vld [vmem:[#allocation3 + $0x548] sm:$0xff]
    %v10038 = vld [vmem:[#allocation3 + $0x550] sm:$0xff]
    %v10039 = vld [vmem:[#allocation3 + $0x558] sm:$0xff]
    %v10040 = vld [vmem:[#allocation3 + $0x560] sm:$0xff]
    %v10041 = vld [vmem:[#allocation3 + $0x568] sm:$0xff]
    %v10042 = vld [vmem:[#allocation3 + $0x570] sm:$0xff]
    %v10043 = vld [vmem:[#allocation3 + $0x578] sm:$0xff]
    %v10044 = vld [vmem:[#allocation3 + $0x580] sm:$0xff]
    %v10045 = vld [vmem:[#allocation3 + $0x588] sm:$0xff]
    %v10046 = vld [vmem:[#allocation3 + $0x590] sm:$0xff]
    %v10047 = vld [vmem:[#allocation3 + $0x598] sm:$0xff]
    %v10048 = vld [vmem:[#allocation3 + $0x5a0] sm:$0xff]
    %v10049 = vld [vmem:[#allocation3 + $0x5a8] sm:$0xff]
    %v10050 = vld [vmem:[#allocation3 + $0x5b0] sm:$0xff]
    %v10051 = vld [vmem:[#allocation3 + $0x5b8] sm:$0xff]
    %v10052 = vld [vmem:[#allocation3 + $0x5c0] sm:$0xff]
    %v10053 = vld [vmem:[#allocation3 + $0x5c8] sm:$0xff]
    %v10054 = vld [vmem:[#allocation3 + $0x5d0] sm:$0xff]
    %v10055 = vld [vmem:[#allocation3 + $0x5d8] sm:$0xff]
    %v10056 = vld [vmem:[#allocation3 + $0x5e0] sm:$0xff]
    %v10057 = vld [vmem:[#allocation3 + $0x5e8] sm:$0xff]
    %v10058 = vld [vmem:[#allocation3 + $0x5f0] sm:$0xff]
    %v10059 = vld [vmem:[#allocation3 + $0x5f8] sm:$0xff]
    %v10060 = vld [vmem:[#allocation3 + $0x600] sm:$0xff]
    %v10061 = vld [vmem:[#allocation3 + $0x608] sm:$0xff]
    %v10062 = vld [vmem:[#allocation3 + $0x610] sm:$0xff]
    %v10063 = vld [vmem:[#allocation3 + $0x618] sm:$0xff]
    %v10064 = vld [vmem:[#allocation3 + $0x620] sm:$0xff]
    %v10065 = vld [vmem:[#allocation3 + $0x628] sm:$0xff]
    %v10066 = vld [vmem:[#allocation3 + $0x630] sm:$0xff]
    %v10067 = vld [vmem:[#allocation3 + $0x638] sm:$0xff]
    %v10068 = vld [vmem:[#allocation3 + $0x640] sm:$0xff]
    %v10069 = vld [vmem:[#allocation3 + $0x648] sm:$0xff]
    %v10070 = vld [vmem:[#allocation3 + $0x650] sm:$0xff]
    %v10071 = vld [vmem:[#allocation3 + $0x658] sm:$0xff]
    %v10072 = vld [vmem:[#allocation3 + $0x660] sm:$0xff]
    %v10073 = vld [vmem:[#allocation3 + $0x668] sm:$0xff]
    %v10074 = vld [vmem:[#allocation3 + $0x670] sm:$0xff]
    %v10075 = vld [vmem:[#allocation3 + $0x678] sm:$0xff]
    %v10076 = vld [vmem:[#allocation3 + $0x680] sm:$0xff]
    %v10077 = vld [vmem:[#allocation3 + $0x688] sm:$0xff]
    %v10078 = vld [vmem:[#allocation3 + $0x690] sm:$0xff]
    %v10079 = vld [vmem:[#allocation3 + $0x698] sm:$0xff]
    %v10080 = vld [vmem:[#allocation3 + $0x6a0] sm:$0xff]
    %v10081 = vld [vmem:[#allocation3 + $0x6a8] sm:$0xff]
    %v10082 = vld [vmem:[#allocation3 + $0x6b0] sm:$0xff]
    %v10083 = vld [vmem:[#allocation3 + $0x6b8] sm:$0xff]
    %v10084 = vld [vmem:[#allocation3 + $0x6c0] sm:$0xff]
    %v10085 = vld [vmem:[#allocation3 + $0x6c8] sm:$0xff]
    %v10086 = vld [vmem:[#allocation3 + $0x6d0] sm:$0xff]
    %v10087 = vld [vmem:[#allocation3 + $0x6d8] sm:$0xff]
    %v10088 = vld [vmem:[#allocation3 + $0x6e0] sm:$0xff]
    %v10089 = vld [vmem:[#allocation3 + $0x6e8] sm:$0xff]
    %v10090 = vld [vmem:[#allocation3 + $0x6f0] sm:$0xff]
    %v10091 = vld [vmem:[#allocation3 + $0x6f8] sm:$0xff]
    %v10092 = vld [vmem:[#allocation3 + $0x700] sm:$0xff]
    %v10093 = vld [vmem:[#allocation3 + $0x708] sm:$0xff]
    %v10094 = vld [vmem:[#allocation3 + $0x710] sm:$0xff]
    %v10095 = vld [vmem:[#allocation3 + $0x718] sm:$0xff]
    %v10096 = vld [vmem:[#allocation3 + $0x720] sm:$0xff]
    %v10097 = vld [vmem:[#allocation3 + $0x728] sm:$0xff]
    %v10098 = vld [vmem:[#allocation3 + $0x730] sm:$0xff]
    %v10099 = vld [vmem:[#allocation3 + $0x738] sm:$0xff]
    %v10100 = vld [vmem:[#allocation3 + $0x740] sm:$0xff]
    %v10101 = vld [vmem:[#allocation3 + $0x748] sm:$0xff]
    %v10102 = vld [vmem:[#allocation3 + $0x750] sm:$0xff]
    %v10103 = vld [vmem:[#allocation3 + $0x758] sm:$0xff]
    %v10104 = vld [vmem:[#allocation3 + $0x760] sm:$0xff]
    %v10105 = vld [vmem:[#allocation3 + $0x768] sm:$0xff]
    %v10106 = vld [vmem:[#allocation3 + $0x770] sm:$0xff]
    %v10107 = vld [vmem:[#allocation3 + $0x778] sm:$0xff]
    %v10108 = vld [vmem:[#allocation3 + $0x780] sm:$0xff]
    %v10109 = vld [vmem:[#allocation3 + $0x788] sm:$0xff]
    %v10110 = vld [vmem:[#allocation3 + $0x790] sm:$0xff]
    %v10111 = vld [vmem:[#allocation3 + $0x798] sm:$0xff]
    %v10112 = vld [vmem:[#allocation3 + $0x7a0] sm:$0xff]
    %v10113 = vld [vmem:[#allocation3 + $0x7a8] sm:$0xff]
    %v10114 = vld [vmem:[#allocation3 + $0x7b0] sm:$0xff]
    %v10115 = vld [vmem:[#allocation3 + $0x7b8] sm:$0xff]
    %v10116 = vld [vmem:[#allocation3 + $0x7c0] sm:$0xff]
    %v10117 = vld [vmem:[#allocation3 + $0x7c8] sm:$0xff]
    %v10118 = vld [vmem:[#allocation3 + $0x7d0] sm:$0xff]
    %v10119 = vld [vmem:[#allocation3 + $0x7d8] sm:$0xff]
    %v10120 = vld [vmem:[#allocation3 + $0x7e0] sm:$0xff]
    %v10121 = vld [vmem:[#allocation3 + $0x7e8] sm:$0xff]
    %v10122 = vld [vmem:[#allocation3 + $0x7f0] sm:$0xff]
    %v10123 = vld [vmem:[#allocation3 + $0x7f8] sm:$0xff]
    %v10124 = vld [vmem:[#allocation18] sm:$0xf]
    %v10126 = vlaneseq
    %v10127 = vshrl.u32 %v10126, 7
    %v10128 = vsub.s32 0, %v10127
    %v10129 = vrot.slane %v10124, %v10128
    %v10130 = vlaneseq
    %v10131 = vshrl.u32 %v10130, 7
    %v10132 = vsub.s32 1, %v10131
    %v10133 = vrot.slane %v10124, %v10132
    %v10134 = vlaneseq
    %v10135 = vshrl.u32 %v10134, 7
    %v10136 = vsub.s32 2, %v10135
    %v10137 = vrot.slane %v10124, %v10136
    %v10138 = vlaneseq
    %v10139 = vshrl.u32 %v10138, 7
    %v10140 = vsub.s32 3, %v10139
    %v10141 = vrot.slane %v10124, %v10140
    %v10402 = vunpack.c.l.b16 %v9868
    %v10403 = vunpack.c.h.b16 %v9868
    %v10404 = vunpack.c.l.b16 %v9869
    %v10405 = vunpack.c.h.b16 %v9869
    %v10406 = vunpack.c.l.b16 %v9870
    %v10407 = vunpack.c.h.b16 %v9870
    %v10408 = vunpack.c.l.b16 %v9871
    %v10409 = vunpack.c.h.b16 %v9871
    %v10410 = vunpack.c.l.b16 %v9872
    %v10411 = vunpack.c.h.b16 %v9872
    %v10412 = vunpack.c.l.b16 %v9873
    %v10413 = vunpack.c.h.b16 %v9873
    %v10414 = vunpack.c.l.b16 %v9874
    %v10415 = vunpack.c.h.b16 %v9874
    %v10416 = vunpack.c.l.b16 %v9875
    %v10417 = vunpack.c.h.b16 %v9875
    %v10418 = vunpack.c.l.b16 %v9876
    %v10419 = vunpack.c.h.b16 %v9876
    %v10420 = vunpack.c.l.b16 %v9877
    %v10421 = vunpack.c.h.b16 %v9877
    %v10422 = vunpack.c.l.b16 %v9878
    %v10423 = vunpack.c.h.b16 %v9878
    %v10424 = vunpack.c.l.b16 %v9879
    %v10425 = vunpack.c.h.b16 %v9879
    %v10426 = vunpack.c.l.b16 %v9880
    %v10427 = vunpack.c.h.b16 %v9880
    %v10428 = vunpack.c.l.b16 %v9881
    %v10429 = vunpack.c.h.b16 %v9881
    %v10430 = vunpack.c.l.b16 %v9882
    %v10431 = vunpack.c.h.b16 %v9882
    %v10432 = vunpack.c.l.b16 %v9883
    %v10433 = vunpack.c.h.b16 %v9883
    %v10434 = vunpack.c.l.b16 %v9884
    %v10435 = vunpack.c.h.b16 %v9884
    %v10436 = vunpack.c.l.b16 %v9885
    %v10437 = vunpack.c.h.b16 %v9885
    %v10438 = vunpack.c.l.b16 %v9886
    %v10439 = vunpack.c.h.b16 %v9886
    %v10440 = vunpack.c.l.b16 %v9887
    %v10441 = vunpack.c.h.b16 %v9887
    %v10442 = vunpack.c.l.b16 %v9888
    %v10443 = vunpack.c.h.b16 %v9888
    %v10444 = vunpack.c.l.b16 %v9889
    %v10445 = vunpack.c.h.b16 %v9889
    %v10446 = vunpack.c.l.b16 %v9890
    %v10447 = vunpack.c.h.b16 %v9890
    %v10448 = vunpack.c.l.b16 %v9891
    %v10449 = vunpack.c.h.b16 %v9891
    %v10450 = vunpack.c.l.b16 %v9892
    %v10451 = vunpack.c.h.b16 %v9892
    %v10452 = vunpack.c.l.b16 %v9893
    %v10453 = vunpack.c.h.b16 %v9893
    %v10454 = vunpack.c.l.b16 %v9894
    %v10455 = vunpack.c.h.b16 %v9894
    %v10456 = vunpack.c.l.b16 %v9895
    %v10457 = vunpack.c.h.b16 %v9895
    %v10458 = vunpack.c.l.b16 %v9896
    %v10459 = vunpack.c.h.b16 %v9896
    %v10460 = vunpack.c.l.b16 %v9897
    %v10461 = vunpack.c.h.b16 %v9897
    %v10462 = vunpack.c.l.b16 %v9898
    %v10463 = vunpack.c.h.b16 %v9898
    %v10464 = vunpack.c.l.b16 %v9899
    %v10465 = vunpack.c.h.b16 %v9899
    %v10466 = vunpack.c.l.b16 %v9900
    %v10467 = vunpack.c.h.b16 %v9900
    %v10468 = vunpack.c.l.b16 %v9901
    %v10469 = vunpack.c.h.b16 %v9901
    %v10470 = vunpack.c.l.b16 %v9902
    %v10471 = vunpack.c.h.b16 %v9902
    %v10472 = vunpack.c.l.b16 %v9903
    %v10473 = vunpack.c.h.b16 %v9903
    %v10474 = vunpack.c.l.b16 %v9904
    %v10475 = vunpack.c.h.b16 %v9904
    %v10476 = vunpack.c.l.b16 %v9905
    %v10477 = vunpack.c.h.b16 %v9905
    %v10478 = vunpack.c.l.b16 %v9906
    %v10479 = vunpack.c.h.b16 %v9906
    %v10480 = vunpack.c.l.b16 %v9907
    %v10481 = vunpack.c.h.b16 %v9907
    %v10482 = vunpack.c.l.b16 %v9908
    %v10483 = vunpack.c.h.b16 %v9908
    %v10484 = vunpack.c.l.b16 %v9909
    %v10485 = vunpack.c.h.b16 %v9909
    %v10486 = vunpack.c.l.b16 %v9910
    %v10487 = vunpack.c.h.b16 %v9910
    %v10488 = vunpack.c.l.b16 %v9911
    %v10489 = vunpack.c.h.b16 %v9911
    %v10490 = vunpack.c.l.b16 %v9912
    %v10491 = vunpack.c.h.b16 %v9912
    %v10492 = vunpack.c.l.b16 %v9913
    %v10493 = vunpack.c.h.b16 %v9913
    %v10494 = vunpack.c.l.b16 %v9914
    %v10495 = vunpack.c.h.b16 %v9914
    %v10496 = vunpack.c.l.b16 %v9915
    %v10497 = vunpack.c.h.b16 %v9915
    %v10498 = vunpack.c.l.b16 %v9916
    %v10499 = vunpack.c.h.b16 %v9916
    %v10500 = vunpack.c.l.b16 %v9917
    %v10501 = vunpack.c.h.b16 %v9917
    %v10502 = vunpack.c.l.b16 %v9918
    %v10503 = vunpack.c.h.b16 %v9918
    %v10504 = vunpack.c.l.b16 %v9919
    %v10505 = vunpack.c.h.b16 %v9919
    %v10506 = vunpack.c.l.b16 %v9920
    %v10507 = vunpack.c.h.b16 %v9920
    %v10508 = vunpack.c.l.b16 %v9921
    %v10509 = vunpack.c.h.b16 %v9921
    %v10510 = vunpack.c.l.b16 %v9922
    %v10511 = vunpack.c.h.b16 %v9922
    %v10512 = vunpack.c.l.b16 %v9923
    %v10513 = vunpack.c.h.b16 %v9923
    %v10514 = vunpack.c.l.b16 %v9924
    %v10515 = vunpack.c.h.b16 %v9924
    %v10516 = vunpack.c.l.b16 %v9925
    %v10517 = vunpack.c.h.b16 %v9925
    %v10518 = vunpack.c.l.b16 %v9926
    %v10519 = vunpack.c.h.b16 %v9926
    %v10520 = vunpack.c.l.b16 %v9927
    %v10521 = vunpack.c.h.b16 %v9927
    %v10522 = vunpack.c.l.b16 %v9928
    %v10523 = vunpack.c.h.b16 %v9928
    %v10524 = vunpack.c.l.b16 %v9929
    %v10525 = vunpack.c.h.b16 %v9929
    %v10526 = vunpack.c.l.b16 %v9930
    %v10527 = vunpack.c.h.b16 %v9930
    %v10528 = vunpack.c.l.b16 %v9931
    %v10529 = vunpack.c.h.b16 %v9931
    %v10530 = vunpack.c.l.b16 %v9932
    %v10531 = vunpack.c.h.b16 %v9932
    %v10532 = vunpack.c.l.b16 %v9933
    %v10533 = vunpack.c.h.b16 %v9933
    %v10534 = vunpack.c.l.b16 %v9934
    %v10535 = vunpack.c.h.b16 %v9934
    %v10536 = vunpack.c.l.b16 %v9935
    %v10537 = vunpack.c.h.b16 %v9935
    %v10538 = vunpack.c.l.b16 %v9936
    %v10539 = vunpack.c.h.b16 %v9936
    %v10540 = vunpack.c.l.b16 %v9937
    %v10541 = vunpack.c.h.b16 %v9937
    %v10542 = vunpack.c.l.b16 %v9938
    %v10543 = vunpack.c.h.b16 %v9938
    %v10544 = vunpack.c.l.b16 %v9939
    %v10545 = vunpack.c.h.b16 %v9939
    %v10546 = vunpack.c.l.b16 %v9940
    %v10547 = vunpack.c.h.b16 %v9940
    %v10548 = vunpack.c.l.b16 %v9941
    %v10549 = vunpack.c.h.b16 %v9941
    %v10550 = vunpack.c.l.b16 %v9942
    %v10551 = vunpack.c.h.b16 %v9942
    %v10552 = vunpack.c.l.b16 %v9943
    %v10553 = vunpack.c.h.b16 %v9943
    %v10554 = vunpack.c.l.b16 %v9944
    %v10555 = vunpack.c.h.b16 %v9944
    %v10556 = vunpack.c.l.b16 %v9945
    %v10557 = vunpack.c.h.b16 %v9945
    %v10558 = vunpack.c.l.b16 %v9946
    %v10559 = vunpack.c.h.b16 %v9946
    %v10560 = vunpack.c.l.b16 %v9947
    %v10561 = vunpack.c.h.b16 %v9947
    %v10562 = vunpack.c.l.b16 %v9948
    %v10563 = vunpack.c.h.b16 %v9948
    %v10564 = vunpack.c.l.b16 %v9949
    %v10565 = vunpack.c.h.b16 %v9949
    %v10566 = vunpack.c.l.b16 %v9950
    %v10567 = vunpack.c.h.b16 %v9950
    %v10568 = vunpack.c.l.b16 %v9951
    %v10569 = vunpack.c.h.b16 %v9951
    %v10570 = vunpack.c.l.b16 %v9952
    %v10571 = vunpack.c.h.b16 %v9952
    %v10572 = vunpack.c.l.b16 %v9953
    %v10573 = vunpack.c.h.b16 %v9953
    %v10574 = vunpack.c.l.b16 %v9954
    %v10575 = vunpack.c.h.b16 %v9954
    %v10576 = vunpack.c.l.b16 %v9955
    %v10577 = vunpack.c.h.b16 %v9955
    %v10578 = vunpack.c.l.b16 %v9956
    %v10579 = vunpack.c.h.b16 %v9956
    %v10580 = vunpack.c.l.b16 %v9957
    %v10581 = vunpack.c.h.b16 %v9957
    %v10582 = vunpack.c.l.b16 %v9958
    %v10583 = vunpack.c.h.b16 %v9958
    %v10584 = vunpack.c.l.b16 %v9959
    %v10585 = vunpack.c.h.b16 %v9959
    %v10586 = vunpack.c.l.b16 %v9960
    %v10587 = vunpack.c.h.b16 %v9960
    %v10588 = vunpack.c.l.b16 %v9961
    %v10589 = vunpack.c.h.b16 %v9961
    %v10590 = vunpack.c.l.b16 %v9962
    %v10591 = vunpack.c.h.b16 %v9962
    %v10592 = vunpack.c.l.b16 %v9963
    %v10593 = vunpack.c.h.b16 %v9963
    %v10594 = vunpack.c.l.b16 %v9964
    %v10595 = vunpack.c.h.b16 %v9964
    %v10596 = vunpack.c.l.b16 %v9965
    %v10597 = vunpack.c.h.b16 %v9965
    %v10598 = vunpack.c.l.b16 %v9966
    %v10599 = vunpack.c.h.b16 %v9966
    %v10600 = vunpack.c.l.b16 %v9967
    %v10601 = vunpack.c.h.b16 %v9967
    %v10602 = vunpack.c.l.b16 %v9968
    %v10603 = vunpack.c.h.b16 %v9968
    %v10604 = vunpack.c.l.b16 %v9969
    %v10605 = vunpack.c.h.b16 %v9969
    %v10606 = vunpack.c.l.b16 %v9970
    %v10607 = vunpack.c.h.b16 %v9970
    %v10608 = vunpack.c.l.b16 %v9971
    %v10609 = vunpack.c.h.b16 %v9971
    %v10610 = vunpack.c.l.b16 %v9972
    %v10611 = vunpack.c.h.b16 %v9972
    %v10612 = vunpack.c.l.b16 %v9973
    %v10613 = vunpack.c.h.b16 %v9973
    %v10614 = vunpack.c.l.b16 %v9974
    %v10615 = vunpack.c.h.b16 %v9974
    %v10616 = vunpack.c.l.b16 %v9975
    %v10617 = vunpack.c.h.b16 %v9975
    %v10618 = vunpack.c.l.b16 %v9976
    %v10619 = vunpack.c.h.b16 %v9976
    %v10620 = vunpack.c.l.b16 %v9977
    %v10621 = vunpack.c.h.b16 %v9977
    %v10622 = vunpack.c.l.b16 %v9978
    %v10623 = vunpack.c.h.b16 %v9978
    %v10624 = vunpack.c.l.b16 %v9979
    %v10625 = vunpack.c.h.b16 %v9979
    %v10626 = vunpack.c.l.b16 %v9980
    %v10627 = vunpack.c.h.b16 %v9980
    %v10628 = vunpack.c.l.b16 %v9981
    %v10629 = vunpack.c.h.b16 %v9981
    %v10630 = vunpack.c.l.b16 %v9982
    %v10631 = vunpack.c.h.b16 %v9982
    %v10632 = vunpack.c.l.b16 %v9983
    %v10633 = vunpack.c.h.b16 %v9983
    %v10634 = vunpack.c.l.b16 %v9984
    %v10635 = vunpack.c.h.b16 %v9984
    %v10636 = vunpack.c.l.b16 %v9985
    %v10637 = vunpack.c.h.b16 %v9985
    %v10638 = vunpack.c.l.b16 %v9986
    %v10639 = vunpack.c.h.b16 %v9986
    %v10640 = vunpack.c.l.b16 %v9987
    %v10641 = vunpack.c.h.b16 %v9987
    %v10642 = vunpack.c.l.b16 %v9988
    %v10643 = vunpack.c.h.b16 %v9988
    %v10644 = vunpack.c.l.b16 %v9989
    %v10645 = vunpack.c.h.b16 %v9989
    %v10646 = vunpack.c.l.b16 %v9990
    %v10647 = vunpack.c.h.b16 %v9990
    %v10648 = vunpack.c.l.b16 %v9991
    %v10649 = vunpack.c.h.b16 %v9991
    %v10650 = vunpack.c.l.b16 %v9992
    %v10651 = vunpack.c.h.b16 %v9992
    %v10652 = vunpack.c.l.b16 %v9993
    %v10653 = vunpack.c.h.b16 %v9993
    %v10654 = vunpack.c.l.b16 %v9994
    %v10655 = vunpack.c.h.b16 %v9994
    %v10656 = vunpack.c.l.b16 %v9995
    %v10657 = vunpack.c.h.b16 %v9995
    %v10658 = vunpack.c.l.b16 %v9996
    %v10659 = vunpack.c.h.b16 %v9996
    %v10660 = vunpack.c.l.b16 %v9997
    %v10661 = vunpack.c.h.b16 %v9997
    %v10662 = vunpack.c.l.b16 %v9998
    %v10663 = vunpack.c.h.b16 %v9998
    %v10664 = vunpack.c.l.b16 %v9999
    %v10665 = vunpack.c.h.b16 %v9999
    %v10666 = vunpack.c.l.b16 %v10000
    %v10667 = vunpack.c.h.b16 %v10000
    %v10668 = vunpack.c.l.b16 %v10001
    %v10669 = vunpack.c.h.b16 %v10001
    %v10670 = vunpack.c.l.b16 %v10002
    %v10671 = vunpack.c.h.b16 %v10002
    %v10672 = vunpack.c.l.b16 %v10003
    %v10673 = vunpack.c.h.b16 %v10003
    %v10674 = vunpack.c.l.b16 %v10004
    %v10675 = vunpack.c.h.b16 %v10004
    %v10676 = vunpack.c.l.b16 %v10005
    %v10677 = vunpack.c.h.b16 %v10005
    %v10678 = vunpack.c.l.b16 %v10006
    %v10679 = vunpack.c.h.b16 %v10006
    %v10680 = vunpack.c.l.b16 %v10007
    %v10681 = vunpack.c.h.b16 %v10007
    %v10682 = vunpack.c.l.b16 %v10008
    %v10683 = vunpack.c.h.b16 %v10008
    %v10684 = vunpack.c.l.b16 %v10009
    %v10685 = vunpack.c.h.b16 %v10009
    %v10686 = vunpack.c.l.b16 %v10010
    %v10687 = vunpack.c.h.b16 %v10010
    %v10688 = vunpack.c.l.b16 %v10011
    %v10689 = vunpack.c.h.b16 %v10011
    %v10690 = vunpack.c.l.b16 %v10012
    %v10691 = vunpack.c.h.b16 %v10012
    %v10692 = vunpack.c.l.b16 %v10013
    %v10693 = vunpack.c.h.b16 %v10013
    %v10694 = vunpack.c.l.b16 %v10014
    %v10695 = vunpack.c.h.b16 %v10014
    %v10696 = vunpack.c.l.b16 %v10015
    %v10697 = vunpack.c.h.b16 %v10015
    %v10698 = vunpack.c.l.b16 %v10016
    %v10699 = vunpack.c.h.b16 %v10016
    %v10700 = vunpack.c.l.b16 %v10017
    %v10701 = vunpack.c.h.b16 %v10017
    %v10702 = vunpack.c.l.b16 %v10018
    %v10703 = vunpack.c.h.b16 %v10018
    %v10704 = vunpack.c.l.b16 %v10019
    %v10705 = vunpack.c.h.b16 %v10019
    %v10706 = vunpack.c.l.b16 %v10020
    %v10707 = vunpack.c.h.b16 %v10020
    %v10708 = vunpack.c.l.b16 %v10021
    %v10709 = vunpack.c.h.b16 %v10021
    %v10710 = vunpack.c.l.b16 %v10022
    %v10711 = vunpack.c.h.b16 %v10022
    %v10712 = vunpack.c.l.b16 %v10023
    %v10713 = vunpack.c.h.b16 %v10023
    %v10714 = vunpack.c.l.b16 %v10024
    %v10715 = vunpack.c.h.b16 %v10024
    %v10716 = vunpack.c.l.b16 %v10025
    %v10717 = vunpack.c.h.b16 %v10025
    %v10718 = vunpack.c.l.b16 %v10026
    %v10719 = vunpack.c.h.b16 %v10026
    %v10720 = vunpack.c.l.b16 %v10027
    %v10721 = vunpack.c.h.b16 %v10027
    %v10722 = vunpack.c.l.b16 %v10028
    %v10723 = vunpack.c.h.b16 %v10028
    %v10724 = vunpack.c.l.b16 %v10029
    %v10725 = vunpack.c.h.b16 %v10029
    %v10726 = vunpack.c.l.b16 %v10030
    %v10727 = vunpack.c.h.b16 %v10030
    %v10728 = vunpack.c.l.b16 %v10031
    %v10729 = vunpack.c.h.b16 %v10031
    %v10730 = vunpack.c.l.b16 %v10032
    %v10731 = vunpack.c.h.b16 %v10032
    %v10732 = vunpack.c.l.b16 %v10033
    %v10733 = vunpack.c.h.b16 %v10033
    %v10734 = vunpack.c.l.b16 %v10034
    %v10735 = vunpack.c.h.b16 %v10034
    %v10736 = vunpack.c.l.b16 %v10035
    %v10737 = vunpack.c.h.b16 %v10035
    %v10738 = vunpack.c.l.b16 %v10036
    %v10739 = vunpack.c.h.b16 %v10036
    %v10740 = vunpack.c.l.b16 %v10037
    %v10741 = vunpack.c.h.b16 %v10037
    %v10742 = vunpack.c.l.b16 %v10038
    %v10743 = vunpack.c.h.b16 %v10038
    %v10744 = vunpack.c.l.b16 %v10039
    %v10745 = vunpack.c.h.b16 %v10039
    %v10746 = vunpack.c.l.b16 %v10040
    %v10747 = vunpack.c.h.b16 %v10040
    %v10748 = vunpack.c.l.b16 %v10041
    %v10749 = vunpack.c.h.b16 %v10041
    %v10750 = vunpack.c.l.b16 %v10042
    %v10751 = vunpack.c.h.b16 %v10042
    %v10752 = vunpack.c.l.b16 %v10043
    %v10753 = vunpack.c.h.b16 %v10043
    %v10754 = vunpack.c.l.b16 %v10044
    %v10755 = vunpack.c.h.b16 %v10044
    %v10756 = vunpack.c.l.b16 %v10045
    %v10757 = vunpack.c.h.b16 %v10045
    %v10758 = vunpack.c.l.b16 %v10046
    %v10759 = vunpack.c.h.b16 %v10046
    %v10760 = vunpack.c.l.b16 %v10047
    %v10761 = vunpack.c.h.b16 %v10047
    %v10762 = vunpack.c.l.b16 %v10048
    %v10763 = vunpack.c.h.b16 %v10048
    %v10764 = vunpack.c.l.b16 %v10049
    %v10765 = vunpack.c.h.b16 %v10049
    %v10766 = vunpack.c.l.b16 %v10050
    %v10767 = vunpack.c.h.b16 %v10050
    %v10768 = vunpack.c.l.b16 %v10051
    %v10769 = vunpack.c.h.b16 %v10051
    %v10770 = vunpack.c.l.b16 %v10052
    %v10771 = vunpack.c.h.b16 %v10052
    %v10772 = vunpack.c.l.b16 %v10053
    %v10773 = vunpack.c.h.b16 %v10053
    %v10774 = vunpack.c.l.b16 %v10054
    %v10775 = vunpack.c.h.b16 %v10054
    %v10776 = vunpack.c.l.b16 %v10055
    %v10777 = vunpack.c.h.b16 %v10055
    %v10778 = vunpack.c.l.b16 %v10056
    %v10779 = vunpack.c.h.b16 %v10056
    %v10780 = vunpack.c.l.b16 %v10057
    %v10781 = vunpack.c.h.b16 %v10057
    %v10782 = vunpack.c.l.b16 %v10058
    %v10783 = vunpack.c.h.b16 %v10058
    %v10784 = vunpack.c.l.b16 %v10059
    %v10785 = vunpack.c.h.b16 %v10059
    %v10786 = vunpack.c.l.b16 %v10060
    %v10787 = vunpack.c.h.b16 %v10060
    %v10788 = vunpack.c.l.b16 %v10061
    %v10789 = vunpack.c.h.b16 %v10061
    %v10790 = vunpack.c.l.b16 %v10062
    %v10791 = vunpack.c.h.b16 %v10062
    %v10792 = vunpack.c.l.b16 %v10063
    %v10793 = vunpack.c.h.b16 %v10063
    %v10794 = vunpack.c.l.b16 %v10064
    %v10795 = vunpack.c.h.b16 %v10064
    %v10796 = vunpack.c.l.b16 %v10065
    %v10797 = vunpack.c.h.b16 %v10065
    %v10798 = vunpack.c.l.b16 %v10066
    %v10799 = vunpack.c.h.b16 %v10066
    %v10800 = vunpack.c.l.b16 %v10067
    %v10801 = vunpack.c.h.b16 %v10067
    %v10802 = vunpack.c.l.b16 %v10068
    %v10803 = vunpack.c.h.b16 %v10068
    %v10804 = vunpack.c.l.b16 %v10069
    %v10805 = vunpack.c.h.b16 %v10069
    %v10806 = vunpack.c.l.b16 %v10070
    %v10807 = vunpack.c.h.b16 %v10070
    %v10808 = vunpack.c.l.b16 %v10071
    %v10809 = vunpack.c.h.b16 %v10071
    %v10810 = vunpack.c.l.b16 %v10072
    %v10811 = vunpack.c.h.b16 %v10072
    %v10812 = vunpack.c.l.b16 %v10073
    %v10813 = vunpack.c.h.b16 %v10073
    %v10814 = vunpack.c.l.b16 %v10074
    %v10815 = vunpack.c.h.b16 %v10074
    %v10816 = vunpack.c.l.b16 %v10075
    %v10817 = vunpack.c.h.b16 %v10075
    %v10818 = vunpack.c.l.b16 %v10076
    %v10819 = vunpack.c.h.b16 %v10076
    %v10820 = vunpack.c.l.b16 %v10077
    %v10821 = vunpack.c.h.b16 %v10077
    %v10822 = vunpack.c.l.b16 %v10078
    %v10823 = vunpack.c.h.b16 %v10078
    %v10824 = vunpack.c.l.b16 %v10079
    %v10825 = vunpack.c.h.b16 %v10079
    %v10826 = vunpack.c.l.b16 %v10080
    %v10827 = vunpack.c.h.b16 %v10080
    %v10828 = vunpack.c.l.b16 %v10081
    %v10829 = vunpack.c.h.b16 %v10081
    %v10830 = vunpack.c.l.b16 %v10082
    %v10831 = vunpack.c.h.b16 %v10082
    %v10832 = vunpack.c.l.b16 %v10083
    %v10833 = vunpack.c.h.b16 %v10083
    %v10834 = vunpack.c.l.b16 %v10084
    %v10835 = vunpack.c.h.b16 %v10084
    %v10836 = vunpack.c.l.b16 %v10085
    %v10837 = vunpack.c.h.b16 %v10085
    %v10838 = vunpack.c.l.b16 %v10086
    %v10839 = vunpack.c.h.b16 %v10086
    %v10840 = vunpack.c.l.b16 %v10087
    %v10841 = vunpack.c.h.b16 %v10087
    %v10842 = vunpack.c.l.b16 %v10088
    %v10843 = vunpack.c.h.b16 %v10088
    %v10844 = vunpack.c.l.b16 %v10089
    %v10845 = vunpack.c.h.b16 %v10089
    %v10846 = vunpack.c.l.b16 %v10090
    %v10847 = vunpack.c.h.b16 %v10090
    %v10848 = vunpack.c.l.b16 %v10091
    %v10849 = vunpack.c.h.b16 %v10091
    %v10850 = vunpack.c.l.b16 %v10092
    %v10851 = vunpack.c.h.b16 %v10092
    %v10852 = vunpack.c.l.b16 %v10093
    %v10853 = vunpack.c.h.b16 %v10093
    %v10854 = vunpack.c.l.b16 %v10094
    %v10855 = vunpack.c.h.b16 %v10094
    %v10856 = vunpack.c.l.b16 %v10095
    %v10857 = vunpack.c.h.b16 %v10095
    %v10858 = vunpack.c.l.b16 %v10096
    %v10859 = vunpack.c.h.b16 %v10096
    %v10860 = vunpack.c.l.b16 %v10097
    %v10861 = vunpack.c.h.b16 %v10097
    %v10862 = vunpack.c.l.b16 %v10098
    %v10863 = vunpack.c.h.b16 %v10098
    %v10864 = vunpack.c.l.b16 %v10099
    %v10865 = vunpack.c.h.b16 %v10099
    %v10866 = vunpack.c.l.b16 %v10100
    %v10867 = vunpack.c.h.b16 %v10100
    %v10868 = vunpack.c.l.b16 %v10101
    %v10869 = vunpack.c.h.b16 %v10101
    %v10870 = vunpack.c.l.b16 %v10102
    %v10871 = vunpack.c.h.b16 %v10102
    %v10872 = vunpack.c.l.b16 %v10103
    %v10873 = vunpack.c.h.b16 %v10103
    %v10874 = vunpack.c.l.b16 %v10104
    %v10875 = vunpack.c.h.b16 %v10104
    %v10876 = vunpack.c.l.b16 %v10105
    %v10877 = vunpack.c.h.b16 %v10105
    %v10878 = vunpack.c.l.b16 %v10106
    %v10879 = vunpack.c.h.b16 %v10106
    %v10880 = vunpack.c.l.b16 %v10107
    %v10881 = vunpack.c.h.b16 %v10107
    %v10882 = vunpack.c.l.b16 %v10108
    %v10883 = vunpack.c.h.b16 %v10108
    %v10884 = vunpack.c.l.b16 %v10109
    %v10885 = vunpack.c.h.b16 %v10109
    %v10886 = vunpack.c.l.b16 %v10110
    %v10887 = vunpack.c.h.b16 %v10110
    %v10888 = vunpack.c.l.b16 %v10111
    %v10889 = vunpack.c.h.b16 %v10111
    %v10890 = vunpack.c.l.b16 %v10112
    %v10891 = vunpack.c.h.b16 %v10112
    %v10892 = vunpack.c.l.b16 %v10113
    %v10893 = vunpack.c.h.b16 %v10113
    %v10894 = vunpack.c.l.b16 %v10114
    %v10895 = vunpack.c.h.b16 %v10114
    %v10896 = vunpack.c.l.b16 %v10115
    %v10897 = vunpack.c.h.b16 %v10115
    %v10898 = vunpack.c.l.b16 %v10116
    %v10899 = vunpack.c.h.b16 %v10116
    %v10900 = vunpack.c.l.b16 %v10117
    %v10901 = vunpack.c.h.b16 %v10117
    %v10902 = vunpack.c.l.b16 %v10118
    %v10903 = vunpack.c.h.b16 %v10118
    %v10904 = vunpack.c.l.b16 %v10119
    %v10905 = vunpack.c.h.b16 %v10119
    %v10906 = vunpack.c.l.b16 %v10120
    %v10907 = vunpack.c.h.b16 %v10120
    %v10908 = vunpack.c.l.b16 %v10121
    %v10909 = vunpack.c.h.b16 %v10121
    %v10910 = vunpack.c.l.b16 %v10122
    %v10911 = vunpack.c.h.b16 %v10122
    %v10912 = vunpack.c.l.b16 %v10123
    %v10913 = vunpack.c.h.b16 %v10123
    %v10914 = vpack.c.b16 %v10406, %v10402
    %v10915 = vpack.c.b16 %v10407, %v10403
    %v10916 = vpack.c.b16 %v10408, %v10404
    %v10917 = vpack.c.b16 %v10409, %v10405
    %v10918 = vpack.c.b16 %v10414, %v10410
    %v10919 = vpack.c.b16 %v10415, %v10411
    %v10920 = vpack.c.b16 %v10416, %v10412
    %v10921 = vpack.c.b16 %v10417, %v10413
    %v10922 = vpack.c.b16 %v10422, %v10418
    %v10923 = vpack.c.b16 %v10423, %v10419
    %v10924 = vpack.c.b16 %v10424, %v10420
    %v10925 = vpack.c.b16 %v10425, %v10421
    %v10926 = vpack.c.b16 %v10430, %v10426
    %v10927 = vpack.c.b16 %v10431, %v10427
    %v10928 = vpack.c.b16 %v10432, %v10428
    %v10929 = vpack.c.b16 %v10433, %v10429
    %v10930 = vpack.c.b16 %v10438, %v10434
    %v10931 = vpack.c.b16 %v10439, %v10435
    %v10932 = vpack.c.b16 %v10440, %v10436
    %v10933 = vpack.c.b16 %v10441, %v10437
    %v10934 = vpack.c.b16 %v10446, %v10442
    %v10935 = vpack.c.b16 %v10447, %v10443
    %v10936 = vpack.c.b16 %v10448, %v10444
    %v10937 = vpack.c.b16 %v10449, %v10445
    %v10938 = vpack.c.b16 %v10454, %v10450
    %v10939 = vpack.c.b16 %v10455, %v10451
    %v10940 = vpack.c.b16 %v10456, %v10452
    %v10941 = vpack.c.b16 %v10457, %v10453
    %v10942 = vpack.c.b16 %v10462, %v10458
    %v10943 = vpack.c.b16 %v10463, %v10459
    %v10944 = vpack.c.b16 %v10464, %v10460
    %v10945 = vpack.c.b16 %v10465, %v10461
    %v10946 = vpack.c.b16 %v10470, %v10466
    %v10947 = vpack.c.b16 %v10471, %v10467
    %v10948 = vpack.c.b16 %v10472, %v10468
    %v10949 = vpack.c.b16 %v10473, %v10469
    %v10950 = vpack.c.b16 %v10478, %v10474
    %v10951 = vpack.c.b16 %v10479, %v10475
    %v10952 = vpack.c.b16 %v10480, %v10476
    %v10953 = vpack.c.b16 %v10481, %v10477
    %v10954 = vpack.c.b16 %v10486, %v10482
    %v10955 = vpack.c.b16 %v10487, %v10483
    %v10956 = vpack.c.b16 %v10488, %v10484
    %v10957 = vpack.c.b16 %v10489, %v10485
    %v10958 = vpack.c.b16 %v10494, %v10490
    %v10959 = vpack.c.b16 %v10495, %v10491
    %v10960 = vpack.c.b16 %v10496, %v10492
    %v10961 = vpack.c.b16 %v10497, %v10493
    %v10962 = vpack.c.b16 %v10502, %v10498
    %v10963 = vpack.c.b16 %v10503, %v10499
    %v10964 = vpack.c.b16 %v10504, %v10500
    %v10965 = vpack.c.b16 %v10505, %v10501
    %v10966 = vpack.c.b16 %v10510, %v10506
    %v10967 = vpack.c.b16 %v10511, %v10507
    %v10968 = vpack.c.b16 %v10512, %v10508
    %v10969 = vpack.c.b16 %v10513, %v10509
    %v10970 = vpack.c.b16 %v10518, %v10514
    %v10971 = vpack.c.b16 %v10519, %v10515
    %v10972 = vpack.c.b16 %v10520, %v10516
    %v10973 = vpack.c.b16 %v10521, %v10517
    %v10974 = vpack.c.b16 %v10526, %v10522
    %v10975 = vpack.c.b16 %v10527, %v10523
    %v10976 = vpack.c.b16 %v10528, %v10524
    %v10977 = vpack.c.b16 %v10529, %v10525
    %v10978 = vpack.c.b16 %v10534, %v10530
    %v10979 = vpack.c.b16 %v10535, %v10531
    %v10980 = vpack.c.b16 %v10536, %v10532
    %v10981 = vpack.c.b16 %v10537, %v10533
    %v10982 = vpack.c.b16 %v10542, %v10538
    %v10983 = vpack.c.b16 %v10543, %v10539
    %v10984 = vpack.c.b16 %v10544, %v10540
    %v10985 = vpack.c.b16 %v10545, %v10541
    %v10986 = vpack.c.b16 %v10550, %v10546
    %v10987 = vpack.c.b16 %v10551, %v10547
    %v10988 = vpack.c.b16 %v10552, %v10548
    %v10989 = vpack.c.b16 %v10553, %v10549
    %v10990 = vpack.c.b16 %v10558, %v10554
    %v10991 = vpack.c.b16 %v10559, %v10555
    %v10992 = vpack.c.b16 %v10560, %v10556
    %v10993 = vpack.c.b16 %v10561, %v10557
    %v10994 = vpack.c.b16 %v10566, %v10562
    %v10995 = vpack.c.b16 %v10567, %v10563
    %v10996 = vpack.c.b16 %v10568, %v10564
    %v10997 = vpack.c.b16 %v10569, %v10565
    %v10998 = vpack.c.b16 %v10574, %v10570
    %v10999 = vpack.c.b16 %v10575, %v10571
    %v11000 = vpack.c.b16 %v10576, %v10572
    %v11001 = vpack.c.b16 %v10577, %v10573
    %v11002 = vpack.c.b16 %v10582, %v10578
    %v11003 = vpack.c.b16 %v10583, %v10579
    %v11004 = vpack.c.b16 %v10584, %v10580
    %v11005 = vpack.c.b16 %v10585, %v10581
    %v11006 = vpack.c.b16 %v10590, %v10586
    %v11007 = vpack.c.b16 %v10591, %v10587
    %v11008 = vpack.c.b16 %v10592, %v10588
    %v11009 = vpack.c.b16 %v10593, %v10589
    %v11010 = vpack.c.b16 %v10598, %v10594
    %v11011 = vpack.c.b16 %v10599, %v10595
    %v11012 = vpack.c.b16 %v10600, %v10596
    %v11013 = vpack.c.b16 %v10601, %v10597
    %v11014 = vpack.c.b16 %v10606, %v10602
    %v11015 = vpack.c.b16 %v10607, %v10603
    %v11016 = vpack.c.b16 %v10608, %v10604
    %v11017 = vpack.c.b16 %v10609, %v10605
    %v11018 = vpack.c.b16 %v10614, %v10610
    %v11019 = vpack.c.b16 %v10615, %v10611
    %v11020 = vpack.c.b16 %v10616, %v10612
    %v11021 = vpack.c.b16 %v10617, %v10613
    %v11022 = vpack.c.b16 %v10622, %v10618
    %v11023 = vpack.c.b16 %v10623, %v10619
    %v11024 = vpack.c.b16 %v10624, %v10620
    %v11025 = vpack.c.b16 %v10625, %v10621
    %v11026 = vpack.c.b16 %v10630, %v10626
    %v11027 = vpack.c.b16 %v10631, %v10627
    %v11028 = vpack.c.b16 %v10632, %v10628
    %v11029 = vpack.c.b16 %v10633, %v10629
    %v11030 = vpack.c.b16 %v10638, %v10634
    %v11031 = vpack.c.b16 %v10639, %v10635
    %v11032 = vpack.c.b16 %v10640, %v10636
    %v11033 = vpack.c.b16 %v10641, %v10637
    %v11034 = vpack.c.b16 %v10646, %v10642
    %v11035 = vpack.c.b16 %v10647, %v10643
    %v11036 = vpack.c.b16 %v10648, %v10644
    %v11037 = vpack.c.b16 %v10649, %v10645
    %v11038 = vpack.c.b16 %v10654, %v10650
    %v11039 = vpack.c.b16 %v10655, %v10651
    %v11040 = vpack.c.b16 %v10656, %v10652
    %v11041 = vpack.c.b16 %v10657, %v10653
    %v11042 = vpack.c.b16 %v10662, %v10658
    %v11043 = vpack.c.b16 %v10663, %v10659
    %v11044 = vpack.c.b16 %v10664, %v10660
    %v11045 = vpack.c.b16 %v10665, %v10661
    %v11046 = vpack.c.b16 %v10670, %v10666
    %v11047 = vpack.c.b16 %v10671, %v10667
    %v11048 = vpack.c.b16 %v10672, %v10668
    %v11049 = vpack.c.b16 %v10673, %v10669
    %v11050 = vpack.c.b16 %v10678, %v10674
    %v11051 = vpack.c.b16 %v10679, %v10675
    %v11052 = vpack.c.b16 %v10680, %v10676
    %v11053 = vpack.c.b16 %v10681, %v10677
    %v11054 = vpack.c.b16 %v10686, %v10682
    %v11055 = vpack.c.b16 %v10687, %v10683
    %v11056 = vpack.c.b16 %v10688, %v10684
    %v11057 = vpack.c.b16 %v10689, %v10685
    %v11058 = vpack.c.b16 %v10694, %v10690
    %v11059 = vpack.c.b16 %v10695, %v10691
    %v11060 = vpack.c.b16 %v10696, %v10692
    %v11061 = vpack.c.b16 %v10697, %v10693
    %v11062 = vpack.c.b16 %v10702, %v10698
    %v11063 = vpack.c.b16 %v10703, %v10699
    %v11064 = vpack.c.b16 %v10704, %v10700
    %v11065 = vpack.c.b16 %v10705, %v10701
    %v11066 = vpack.c.b16 %v10710, %v10706
    %v11067 = vpack.c.b16 %v10711, %v10707
    %v11068 = vpack.c.b16 %v10712, %v10708
    %v11069 = vpack.c.b16 %v10713, %v10709
    %v11070 = vpack.c.b16 %v10718, %v10714
    %v11071 = vpack.c.b16 %v10719, %v10715
    %v11072 = vpack.c.b16 %v10720, %v10716
    %v11073 = vpack.c.b16 %v10721, %v10717
    %v11074 = vpack.c.b16 %v10726, %v10722
    %v11075 = vpack.c.b16 %v10727, %v10723
    %v11076 = vpack.c.b16 %v10728, %v10724
    %v11077 = vpack.c.b16 %v10729, %v10725
    %v11078 = vpack.c.b16 %v10734, %v10730
    %v11079 = vpack.c.b16 %v10735, %v10731
    %v11080 = vpack.c.b16 %v10736, %v10732
    %v11081 = vpack.c.b16 %v10737, %v10733
    %v11082 = vpack.c.b16 %v10742, %v10738
    %v11083 = vpack.c.b16 %v10743, %v10739
    %v11084 = vpack.c.b16 %v10744, %v10740
    %v11085 = vpack.c.b16 %v10745, %v10741
    %v11086 = vpack.c.b16 %v10750, %v10746
    %v11087 = vpack.c.b16 %v10751, %v10747
    %v11088 = vpack.c.b16 %v10752, %v10748
    %v11089 = vpack.c.b16 %v10753, %v10749
    %v11090 = vpack.c.b16 %v10758, %v10754
    %v11091 = vpack.c.b16 %v10759, %v10755
    %v11092 = vpack.c.b16 %v10760, %v10756
    %v11093 = vpack.c.b16 %v10761, %v10757
    %v11094 = vpack.c.b16 %v10766, %v10762
    %v11095 = vpack.c.b16 %v10767, %v10763
    %v11096 = vpack.c.b16 %v10768, %v10764
    %v11097 = vpack.c.b16 %v10769, %v10765
    %v11098 = vpack.c.b16 %v10774, %v10770
    %v11099 = vpack.c.b16 %v10775, %v10771
    %v11100 = vpack.c.b16 %v10776, %v10772
    %v11101 = vpack.c.b16 %v10777, %v10773
    %v11102 = vpack.c.b16 %v10782, %v10778
    %v11103 = vpack.c.b16 %v10783, %v10779
    %v11104 = vpack.c.b16 %v10784, %v10780
    %v11105 = vpack.c.b16 %v10785, %v10781
    %v11106 = vpack.c.b16 %v10790, %v10786
    %v11107 = vpack.c.b16 %v10791, %v10787
    %v11108 = vpack.c.b16 %v10792, %v10788
    %v11109 = vpack.c.b16 %v10793, %v10789
    %v11110 = vpack.c.b16 %v10798, %v10794
    %v11111 = vpack.c.b16 %v10799, %v10795
    %v11112 = vpack.c.b16 %v10800, %v10796
    %v11113 = vpack.c.b16 %v10801, %v10797
    %v11114 = vpack.c.b16 %v10806, %v10802
    %v11115 = vpack.c.b16 %v10807, %v10803
    %v11116 = vpack.c.b16 %v10808, %v10804
    %v11117 = vpack.c.b16 %v10809, %v10805
    %v11118 = vpack.c.b16 %v10814, %v10810
    %v11119 = vpack.c.b16 %v10815, %v10811
    %v11120 = vpack.c.b16 %v10816, %v10812
    %v11121 = vpack.c.b16 %v10817, %v10813
    %v11122 = vpack.c.b16 %v10822, %v10818
    %v11123 = vpack.c.b16 %v10823, %v10819
    %v11124 = vpack.c.b16 %v10824, %v10820
    %v11125 = vpack.c.b16 %v10825, %v10821
    %v11126 = vpack.c.b16 %v10830, %v10826
    %v11127 = vpack.c.b16 %v10831, %v10827
    %v11128 = vpack.c.b16 %v10832, %v10828
    %v11129 = vpack.c.b16 %v10833, %v10829
    %v11130 = vpack.c.b16 %v10838, %v10834
    %v11131 = vpack.c.b16 %v10839, %v10835
    %v11132 = vpack.c.b16 %v10840, %v10836
    %v11133 = vpack.c.b16 %v10841, %v10837
    %v11134 = vpack.c.b16 %v10846, %v10842
    %v11135 = vpack.c.b16 %v10847, %v10843
    %v11136 = vpack.c.b16 %v10848, %v10844
    %v11137 = vpack.c.b16 %v10849, %v10845
    %v11138 = vpack.c.b16 %v10854, %v10850
    %v11139 = vpack.c.b16 %v10855, %v10851
    %v11140 = vpack.c.b16 %v10856, %v10852
    %v11141 = vpack.c.b16 %v10857, %v10853
    %v11142 = vpack.c.b16 %v10862, %v10858
    %v11143 = vpack.c.b16 %v10863, %v10859
    %v11144 = vpack.c.b16 %v10864, %v10860
    %v11145 = vpack.c.b16 %v10865, %v10861
    %v11146 = vpack.c.b16 %v10870, %v10866
    %v11147 = vpack.c.b16 %v10871, %v10867
    %v11148 = vpack.c.b16 %v10872, %v10868
    %v11149 = vpack.c.b16 %v10873, %v10869
    %v11150 = vpack.c.b16 %v10878, %v10874
    %v11151 = vpack.c.b16 %v10879, %v10875
    %v11152 = vpack.c.b16 %v10880, %v10876
    %v11153 = vpack.c.b16 %v10881, %v10877
    %v11154 = vpack.c.b16 %v10886, %v10882
    %v11155 = vpack.c.b16 %v10887, %v10883
    %v11156 = vpack.c.b16 %v10888, %v10884
    %v11157 = vpack.c.b16 %v10889, %v10885
    %v11158 = vpack.c.b16 %v10894, %v10890
    %v11159 = vpack.c.b16 %v10895, %v10891
    %v11160 = vpack.c.b16 %v10896, %v10892
    %v11161 = vpack.c.b16 %v10897, %v10893
    %v11162 = vpack.c.b16 %v10902, %v10898
    %v11163 = vpack.c.b16 %v10903, %v10899
    %v11164 = vpack.c.b16 %v10904, %v10900
    %v11165 = vpack.c.b16 %v10905, %v10901
    %v11166 = vpack.c.b16 %v10910, %v10906
    %v11167 = vpack.c.b16 %v10911, %v10907
    %v11168 = vpack.c.b16 %v10912, %v10908
    %v11169 = vpack.c.b16 %v10913, %v10909
    %11426 = vmatprep.subr.bf16.mxu0 %v10943
    %11427 = vmatpush1.bf16.msra.mxu0 %v10942
    %11428 = vmatprep.subr.bf16.mxu0 %v10939
    %11429 = vmatpush1.bf16.msra.mxu0 %v10938
    %11430 = vmatprep.subr.bf16.mxu0 %v10935
    %11431 = vmatpush1.bf16.msra.mxu0 %v10934
    %11432 = vmatprep.subr.bf16.mxu0 %v10931
    %11433 = vmatpush1.bf16.msra.mxu0 %v10930
    %11434 = vmatprep.subr.bf16.mxu0 %v10927
    %11435 = vmatpush1.bf16.msra.mxu0 %v10926
    %11436 = vmatprep.subr.bf16.mxu0 %v10923
    %11437 = vmatpush1.bf16.msra.mxu0 %v10922
    %11438 = vmatprep.subr.bf16.mxu0 %v10919
    %11439 = vmatpush1.bf16.msra.mxu0 %v10918
    %11440 = vmatprep.subr.bf16.mxu0 %v10915
    %11441 = vmatpush1.bf16.msra.mxu0 %v10914
    %11442 = vmatprep.subr.bf16.mxu0 %v10975
    %11443 = vmatpush2.bf16.msra.mxu0 %v10974
    %11444 = vmatprep.subr.bf16.mxu0 %v10971
    %11445 = vmatpush2.bf16.msra.mxu0 %v10970
    %11446 = vmatprep.subr.bf16.mxu0 %v10967
    %11447 = vmatpush2.bf16.msra.mxu0 %v10966
    %11448 = vmatprep.subr.bf16.mxu0 %v10963
    %11449 = vmatpush2.bf16.msra.mxu0 %v10962
    %11450 = vmatprep.subr.bf16.mxu0 %v10959
    %11451 = vmatpush2.bf16.msra.mxu0 %v10958
    %11452 = vmatprep.subr.bf16.mxu0 %v10955
    %11453 = vmatpush2.bf16.msra.mxu0 %v10954
    %11454 = vmatprep.subr.bf16.mxu0 %v10951
    %11455 = vmatpush2.bf16.msra.mxu0 %v10950
    %11456 = vmatprep.subr.bf16.mxu0 %v10947
    %11457 = vmatpush2.bf16.msra.mxu0 %v10946
    %11458 = vmatprep.mubr.bf16.mxu0 %v9861
    %11459 = vmatmul.mubr.bf16.gmra.mxu0 %v9860
    %v11460 = vpop.f32.mrf.mxu0
    %v11461 = vadd.f32 %v10129, %v11460
    %v11462 = vpop.f32.mrf.mxu0
    %v11463 = vadd.f32 %v10133, %v11462
    %v11464 = vpop.f32.mrf.mxu0
    %v11465 = vpop.f32.mrf.mxu0
    %11466 = vdwg.mxu0
    %11467 = vmatprep.subr.bf16.mxu0 %v11007
    %11468 = vmatpush1.bf16.msra.mxu0 %v11006
    %11469 = vmatprep.subr.bf16.mxu0 %v11003
    %11470 = vmatpush1.bf16.msra.mxu0 %v11002
    %11471 = vmatprep.subr.bf16.mxu0 %v10999
    %11472 = vmatpush1.bf16.msra.mxu0 %v10998
    %11473 = vmatprep.subr.bf16.mxu0 %v10995
    %11474 = vmatpush1.bf16.msra.mxu0 %v10994
    %11475 = vmatprep.subr.bf16.mxu0 %v10991
    %11476 = vmatpush1.bf16.msra.mxu0 %v10990
    %11477 = vmatprep.subr.bf16.mxu0 %v10987
    %11478 = vmatpush1.bf16.msra.mxu0 %v10986
    %11479 = vmatprep.subr.bf16.mxu0 %v10983
    %11480 = vmatpush1.bf16.msra.mxu0 %v10982
    %11481 = vmatprep.subr.bf16.mxu0 %v10979
    %11482 = vmatpush1.bf16.msra.mxu0 %v10978
    %11483 = vmatprep.subr.bf16.mxu0 %v11039
    %11484 = vmatpush2.bf16.msra.mxu0 %v11038
    %11485 = vmatprep.subr.bf16.mxu0 %v11035
    %11486 = vmatpush2.bf16.msra.mxu0 %v11034
    %11487 = vmatprep.subr.bf16.mxu0 %v11031
    %11488 = vmatpush2.bf16.msra.mxu0 %v11030
    %11489 = vmatprep.subr.bf16.mxu0 %v11027
    %11490 = vmatpush2.bf16.msra.mxu0 %v11026
    %11491 = vmatprep.subr.bf16.mxu0 %v11023
    %11492 = vmatpush2.bf16.msra.mxu0 %v11022
    %11493 = vmatprep.subr.bf16.mxu0 %v11019
    %11494 = vmatpush2.bf16.msra.mxu0 %v11018
    %11495 = vmatprep.subr.bf16.mxu0 %v11015
    %11496 = vmatpush2.bf16.msra.mxu0 %v11014
    %11497 = vmatprep.subr.bf16.mxu0 %v11011
    %11498 = vmatpush2.bf16.msra.mxu0 %v11010
    %11499 = vmatprep.mubr.bf16.mxu0 %v9863
    %11500 = vmatmul.mubr.bf16.gmra.mxu0 %v9862
    %v11501 = vpop.f32.mrf.mxu0
    %v11502 = vadd.f32 %v11461, %v11501
    %v11503 = vpop.f32.mrf.mxu0
    %v11504 = vadd.f32 %v11463, %v11503
    %v11505 = vpop.f32.mrf.mxu0
    %v11506 = vpop.f32.mrf.mxu0
    %11507 = vdwg.mxu0
    %11508 = vmatprep.subr.bf16.mxu0 %v11071
    %11509 = vmatpush1.bf16.msra.mxu0 %v11070
    %11510 = vmatprep.subr.bf16.mxu0 %v11067
    %11511 = vmatpush1.bf16.msra.mxu0 %v11066
    %11512 = vmatprep.subr.bf16.mxu0 %v11063
    %11513 = vmatpush1.bf16.msra.mxu0 %v11062
    %11514 = vmatprep.subr.bf16.mxu0 %v11059
    %11515 = vmatpush1.bf16.msra.mxu0 %v11058
    %11516 = vmatprep.subr.bf16.mxu0 %v11055
    %11517 = vmatpush1.bf16.msra.mxu0 %v11054
    %11518 = vmatprep.subr.bf16.mxu0 %v11051
    %11519 = vmatpush1.bf16.msra.mxu0 %v11050
    %11520 = vmatprep.subr.bf16.mxu0 %v11047
    %11521 = vmatpush1.bf16.msra.mxu0 %v11046
    %11522 = vmatprep.subr.bf16.mxu0 %v11043
    %11523 = vmatpush1.bf16.msra.mxu0 %v11042
    %11524 = vmatprep.subr.bf16.mxu0 %v11103
    %11525 = vmatpush2.bf16.msra.mxu0 %v11102
    %11526 = vmatprep.subr.bf16.mxu0 %v11099
    %11527 = vmatpush2.bf16.msra.mxu0 %v11098
    %11528 = vmatprep.subr.bf16.mxu0 %v11095
    %11529 = vmatpush2.bf16.msra.mxu0 %v11094
    %11530 = vmatprep.subr.bf16.mxu0 %v11091
    %11531 = vmatpush2.bf16.msra.mxu0 %v11090
    %11532 = vmatprep.subr.bf16.mxu0 %v11087
    %11533 = vmatpush2.bf16.msra.mxu0 %v11086
    %11534 = vmatprep.subr.bf16.mxu0 %v11083
    %11535 = vmatpush2.bf16.msra.mxu0 %v11082
    %11536 = vmatprep.subr.bf16.mxu0 %v11079
    %11537 = vmatpush2.bf16.msra.mxu0 %v11078
    %11538 = vmatprep.subr.bf16.mxu0 %v11075
    %11539 = vmatpush2.bf16.msra.mxu0 %v11074
    %11540 = vmatprep.mubr.bf16.mxu0 %v9865
    %11541 = vmatmul.mubr.bf16.gmra.mxu0 %v9864
    %v11542 = vpop.f32.mrf.mxu0
    %v11543 = vadd.f32 %v11502, %v11542
    %v11544 = vpop.f32.mrf.mxu0
    %v11545 = vadd.f32 %v11504, %v11544
    %v11546 = vpop.f32.mrf.mxu0
    %v11547 = vpop.f32.mrf.mxu0
    %11548 = vdwg.mxu0
    %11549 = vmatprep.subr.bf16.mxu0 %v11135
    %11550 = vmatpush1.bf16.msra.mxu0 %v11134
    %11551 = vmatprep.subr.bf16.mxu0 %v11131
    %11552 = vmatpush1.bf16.msra.mxu0 %v11130
    %11553 = vmatprep.subr.bf16.mxu0 %v11127
    %11554 = vmatpush1.bf16.msra.mxu0 %v11126
    %11555 = vmatprep.subr.bf16.mxu0 %v11123
    %11556 = vmatpush1.bf16.msra.mxu0 %v11122
    %11557 = vmatprep.subr.bf16.mxu0 %v11119
    %11558 = vmatpush1.bf16.msra.mxu0 %v11118
    %11559 = vmatprep.subr.bf16.mxu0 %v11115
    %11560 = vmatpush1.bf16.msra.mxu0 %v11114
    %11561 = vmatprep.subr.bf16.mxu0 %v11111
    %11562 = vmatpush1.bf16.msra.mxu0 %v11110
    %11563 = vmatprep.subr.bf16.mxu0 %v11107
    %11564 = vmatpush1.bf16.msra.mxu0 %v11106
    %11565 = vmatprep.subr.bf16.mxu0 %v11167
    %11566 = vmatpush2.bf16.msra.mxu0 %v11166
    %11567 = vmatprep.subr.bf16.mxu0 %v11163
    %11568 = vmatpush2.bf16.msra.mxu0 %v11162
    %11569 = vmatprep.subr.bf16.mxu0 %v11159
    %11570 = vmatpush2.bf16.msra.mxu0 %v11158
    %11571 = vmatprep.subr.bf16.mxu0 %v11155
    %11572 = vmatpush2.bf16.msra.mxu0 %v11154
    %11573 = vmatprep.subr.bf16.mxu0 %v11151
    %11574 = vmatpush2.bf16.msra.mxu0 %v11150
    %11575 = vmatprep.subr.bf16.mxu0 %v11147
    %11576 = vmatpush2.bf16.msra.mxu0 %v11146
    %11577 = vmatprep.subr.bf16.mxu0 %v11143
    %11578 = vmatpush2.bf16.msra.mxu0 %v11142
    %11579 = vmatprep.subr.bf16.mxu0 %v11139
    %11580 = vmatpush2.bf16.msra.mxu0 %v11138
    %11581 = vmatprep.mubr.bf16.mxu0 %v9867
    %11582 = vmatmul.mubr.bf16.gmra.mxu0 %v9866
    %v11583 = vpop.f32.mrf.mxu0
    %v11584 = vadd.f32 %v11543, %v11583
    %v11585 = vpop.f32.mrf.mxu0
    %v11586 = vadd.f32 %v11545, %v11585
    %v11587 = vpop.f32.mrf.mxu0
    %v11588 = vpop.f32.mrf.mxu0
    %11589 = vdwg.mxu0
    %11590 = vmatprep.subr.bf16.mxu0 %v10945
    %11591 = vmatpush1.bf16.msra.mxu0 %v10944
    %11592 = vmatprep.subr.bf16.mxu0 %v10941
    %11593 = vmatpush1.bf16.msra.mxu0 %v10940
    %11594 = vmatprep.subr.bf16.mxu0 %v10937
    %11595 = vmatpush1.bf16.msra.mxu0 %v10936
    %11596 = vmatprep.subr.bf16.mxu0 %v10933
    %11597 = vmatpush1.bf16.msra.mxu0 %v10932
    %11598 = vmatprep.subr.bf16.mxu0 %v10929
    %11599 = vmatpush1.bf16.msra.mxu0 %v10928
    %11600 = vmatprep.subr.bf16.mxu0 %v10925
    %11601 = vmatpush1.bf16.msra.mxu0 %v10924
    %11602 = vmatprep.subr.bf16.mxu0 %v10921
    %11603 = vmatpush1.bf16.msra.mxu0 %v10920
    %11604 = vmatprep.subr.bf16.mxu0 %v10917
    %11605 = vmatpush1.bf16.msra.mxu0 %v10916
    %11606 = vmatprep.subr.bf16.mxu0 %v10977
    %11607 = vmatpush2.bf16.msra.mxu0 %v10976
    %11608 = vmatprep.subr.bf16.mxu0 %v10973
    %11609 = vmatpush2.bf16.msra.mxu0 %v10972
    %11610 = vmatprep.subr.bf16.mxu0 %v10969
    %11611 = vmatpush2.bf16.msra.mxu0 %v10968
    %11612 = vmatprep.subr.bf16.mxu0 %v10965
    %11613 = vmatpush2.bf16.msra.mxu0 %v10964
    %11614 = vmatprep.subr.bf16.mxu0 %v10961
    %11615 = vmatpush2.bf16.msra.mxu0 %v10960
    %11616 = vmatprep.subr.bf16.mxu0 %v10957
    %11617 = vmatpush2.bf16.msra.mxu0 %v10956
    %11618 = vmatprep.subr.bf16.mxu0 %v10953
    %11619 = vmatpush2.bf16.msra.mxu0 %v10952
    %11620 = vmatprep.subr.bf16.mxu0 %v10949
    %11621 = vmatpush2.bf16.msra.mxu0 %v10948
    %11622 = vmatprep.mubr.bf16.mxu0 %v9861
    %11623 = vmatmul.mubr.bf16.gmra.mxu0 %v9860
    %v11624 = vpop.f32.mrf.mxu0
    %v11625 = vadd.f32 %v10137, %v11624
    %v11626 = vpop.f32.mrf.mxu0
    %v11627 = vadd.f32 %v10141, %v11626
    %v11628 = vpop.f32.mrf.mxu0
    %v11629 = vpop.f32.mrf.mxu0
    %11630 = vdwg.mxu0
    %11631 = vmatprep.subr.bf16.mxu0 %v11009
    %11632 = vmatpush1.bf16.msra.mxu0 %v11008
    %11633 = vmatprep.subr.bf16.mxu0 %v11005
    %11634 = vmatpush1.bf16.msra.mxu0 %v11004
    %11635 = vmatprep.subr.bf16.mxu0 %v11001
    %11636 = vmatpush1.bf16.msra.mxu0 %v11000
    %11637 = vmatprep.subr.bf16.mxu0 %v10997
    %11638 = vmatpush1.bf16.msra.mxu0 %v10996
    %11639 = vmatprep.subr.bf16.mxu0 %v10993
    %11640 = vmatpush1.bf16.msra.mxu0 %v10992
    %11641 = vmatprep.subr.bf16.mxu0 %v10989
    %11642 = vmatpush1.bf16.msra.mxu0 %v10988
    %11643 = vmatprep.subr.bf16.mxu0 %v10985
    %11644 = vmatpush1.bf16.msra.mxu0 %v10984
    %11645 = vmatprep.subr.bf16.mxu0 %v10981
    %11646 = vmatpush1.bf16.msra.mxu0 %v10980
    %11647 = vmatprep.subr.bf16.mxu0 %v11041
    %11648 = vmatpush2.bf16.msra.mxu0 %v11040
    %11649 = vmatprep.subr.bf16.mxu0 %v11037
    %11650 = vmatpush2.bf16.msra.mxu0 %v11036
    %11651 = vmatprep.subr.bf16.mxu0 %v11033
    %11652 = vmatpush2.bf16.msra.mxu0 %v11032
    %11653 = vmatprep.subr.bf16.mxu0 %v11029
    %11654 = vmatpush2.bf16.msra.mxu0 %v11028
    %11655 = vmatprep.subr.bf16.mxu0 %v11025
    %11656 = vmatpush2.bf16.msra.mxu0 %v11024
    %11657 = vmatprep.subr.bf16.mxu0 %v11021
    %11658 = vmatpush2.bf16.msra.mxu0 %v11020
    %11659 = vmatprep.subr.bf16.mxu0 %v11017
    %11660 = vmatpush2.bf16.msra.mxu0 %v11016
    %11661 = vmatprep.subr.bf16.mxu0 %v11013
    %11662 = vmatpush2.bf16.msra.mxu0 %v11012
    %11663 = vmatprep.mubr.bf16.mxu0 %v9863
    %11664 = vmatmul.mubr.bf16.gmra.mxu0 %v9862
    %v11665 = vpop.f32.mrf.mxu0
    %v11666 = vadd.f32 %v11625, %v11665
    %v11667 = vpop.f32.mrf.mxu0
    %v11668 = vadd.f32 %v11627, %v11667
    %v11669 = vpop.f32.mrf.mxu0
    %v11670 = vpop.f32.mrf.mxu0
    %11671 = vdwg.mxu0
    %11672 = vmatprep.subr.bf16.mxu0 %v11073
    %11673 = vmatpush1.bf16.msra.mxu0 %v11072
    %11674 = vmatprep.subr.bf16.mxu0 %v11069
    %11675 = vmatpush1.bf16.msra.mxu0 %v11068
    %11676 = vmatprep.subr.bf16.mxu0 %v11065
    %11677 = vmatpush1.bf16.msra.mxu0 %v11064
    %11678 = vmatprep.subr.bf16.mxu0 %v11061
    %11679 = vmatpush1.bf16.msra.mxu0 %v11060
    %11680 = vmatprep.subr.bf16.mxu0 %v11057
    %11681 = vmatpush1.bf16.msra.mxu0 %v11056
    %11682 = vmatprep.subr.bf16.mxu0 %v11053
    %11683 = vmatpush1.bf16.msra.mxu0 %v11052
    %11684 = vmatprep.subr.bf16.mxu0 %v11049
    %11685 = vmatpush1.bf16.msra.mxu0 %v11048
    %11686 = vmatprep.subr.bf16.mxu0 %v11045
    %11687 = vmatpush1.bf16.msra.mxu0 %v11044
    %11688 = vmatprep.subr.bf16.mxu0 %v11105
    %11689 = vmatpush2.bf16.msra.mxu0 %v11104
    %11690 = vmatprep.subr.bf16.mxu0 %v11101
    %11691 = vmatpush2.bf16.msra.mxu0 %v11100
    %11692 = vmatprep.subr.bf16.mxu0 %v11097
    %11693 = vmatpush2.bf16.msra.mxu0 %v11096
    %11694 = vmatprep.subr.bf16.mxu0 %v11093
    %11695 = vmatpush2.bf16.msra.mxu0 %v11092
    %11696 = vmatprep.subr.bf16.mxu0 %v11089
    %11697 = vmatpush2.bf16.msra.mxu0 %v11088
    %11698 = vmatprep.subr.bf16.mxu0 %v11085
    %11699 = vmatpush2.bf16.msra.mxu0 %v11084
    %11700 = vmatprep.subr.bf16.mxu0 %v11081
    %11701 = vmatpush2.bf16.msra.mxu0 %v11080
    %11702 = vmatprep.subr.bf16.mxu0 %v11077
    %11703 = vmatpush2.bf16.msra.mxu0 %v11076
    %11704 = vmatprep.mubr.bf16.mxu0 %v9865
    %11705 = vmatmul.mubr.bf16.gmra.mxu0 %v9864
    %v11706 = vpop.f32.mrf.mxu0
    %v11707 = vadd.f32 %v11666, %v11706
    %v11708 = vpop.f32.mrf.mxu0
    %v11709 = vadd.f32 %v11668, %v11708
    %v11710 = vpop.f32.mrf.mxu0
    %v11711 = vpop.f32.mrf.mxu0
    %11712 = vdwg.mxu0
    %11713 = vmatprep.subr.bf16.mxu0 %v11137
    %11714 = vmatpush1.bf16.msra.mxu0 %v11136
    %11715 = vmatprep.subr.bf16.mxu0 %v11133
    %11716 = vmatpush1.bf16.msra.mxu0 %v11132
    %11717 = vmatprep.subr.bf16.mxu0 %v11129
    %11718 = vmatpush1.bf16.msra.mxu0 %v11128
    %11719 = vmatprep.subr.bf16.mxu0 %v11125
    %11720 = vmatpush1.bf16.msra.mxu0 %v11124
    %11721 = vmatprep.subr.bf16.mxu0 %v11121
    %11722 = vmatpush1.bf16.msra.mxu0 %v11120
    %11723 = vmatprep.subr.bf16.mxu0 %v11117
    %11724 = vmatpush1.bf16.msra.mxu0 %v11116
    %11725 = vmatprep.subr.bf16.mxu0 %v11113
    %11726 = vmatpush1.bf16.msra.mxu0 %v11112
    %11727 = vmatprep.subr.bf16.mxu0 %v11109
    %11728 = vmatpush1.bf16.msra.mxu0 %v11108
    %11729 = vmatprep.subr.bf16.mxu0 %v11169
    %11730 = vmatpush2.bf16.msra.mxu0 %v11168
    %11731 = vmatprep.subr.bf16.mxu0 %v11165
    %11732 = vmatpush2.bf16.msra.mxu0 %v11164
    %11733 = vmatprep.subr.bf16.mxu0 %v11161
    %11734 = vmatpush2.bf16.msra.mxu0 %v11160
    %11735 = vmatprep.subr.bf16.mxu0 %v11157
    %11736 = vmatpush2.bf16.msra.mxu0 %v11156
    %11737 = vmatprep.subr.bf16.mxu0 %v11153
    %11738 = vmatpush2.bf16.msra.mxu0 %v11152
    %11739 = vmatprep.subr.bf16.mxu0 %v11149
    %11740 = vmatpush2.bf16.msra.mxu0 %v11148
    %11741 = vmatprep.subr.bf16.mxu0 %v11145
    %11742 = vmatpush2.bf16.msra.mxu0 %v11144
    %11743 = vmatprep.subr.bf16.mxu0 %v11141
    %11744 = vmatpush2.bf16.msra.mxu0 %v11140
    %11745 = vmatprep.mubr.bf16.mxu0 %v9867
    %11746 = vmatmul.mubr.bf16.gmra.mxu0 %v9866
    %v11747 = vpop.f32.mrf.mxu0
    %v11748 = vadd.f32 %v11707, %v11747
    %v11749 = vpop.f32.mrf.mxu0
    %v11750 = vadd.f32 %v11709, %v11749
    %v11751 = vpop.f32.mrf.mxu0
    %v11752 = vpop.f32.mrf.mxu0
    %11753 = vdwg.mxu0
    %v11754 = vmax.f32 %v11584, 0.0
    %v11755 = vmax.f32 %v11586, 0.0
    %v11756 = vmax.f32 %v11748, 0.0
    %v11757 = vmax.f32 %v11750, 0.0
    %v11758 = vpack.c.bf16 %v11754, %v11754
    %v11759 = vpack.c.bf16 %v11755, %v11755
    %v11760 = vpack.c.bf16 %v11756, %v11756
    %v11761 = vpack.c.bf16 %v11757, %v11757
    %v11762 = vld [vmem:[#allocation19] sm:$0xff]
    %v11763 = vld [vmem:[#allocation19 + $0x8] sm:$0xff]
    %v11764 = vld [vmem:[#allocation19 + $0x10] sm:$0xff]
    %v11765 = vld [vmem:[#allocation19 + $0x18] sm:$0xff]
    %v11766 = vld [vmem:[#allocation19 + $0x20] sm:$0xff]
    %v11767 = vld [vmem:[#allocation19 + $0x28] sm:$0xff]
    %v11768 = vld [vmem:[#allocation19 + $0x30] sm:$0xff]
    %v11769 = vld [vmem:[#allocation19 + $0x38] sm:$0xff]
    %v11770 = vld [vmem:[#allocation19 + $0x40] sm:$0xff]
    %v11771 = vld [vmem:[#allocation19 + $0x48] sm:$0xff]
    %v11772 = vld [vmem:[#allocation19 + $0x50] sm:$0xff]
    %v11773 = vld [vmem:[#allocation19 + $0x58] sm:$0xff]
    %v11774 = vld [vmem:[#allocation19 + $0x60] sm:$0xff]
    %v11775 = vld [vmem:[#allocation19 + $0x68] sm:$0xff]
    %v11776 = vld [vmem:[#allocation19 + $0x70] sm:$0xff]
    %v11777 = vld [vmem:[#allocation19 + $0x78] sm:$0xff]
    %v11778 = vld [vmem:[#allocation19 + $0x80] sm:$0xff]
    %v11779 = vld [vmem:[#allocation19 + $0x88] sm:$0xff]
    %v11780 = vld [vmem:[#allocation19 + $0x90] sm:$0xff]
    %v11781 = vld [vmem:[#allocation19 + $0x98] sm:$0xff]
    %v11782 = vld [vmem:[#allocation19 + $0xa0] sm:$0xff]
    %v11783 = vld [vmem:[#allocation19 + $0xa8] sm:$0xff]
    %v11784 = vld [vmem:[#allocation19 + $0xb0] sm:$0xff]
    %v11785 = vld [vmem:[#allocation19 + $0xb8] sm:$0xff]
    %v11786 = vld [vmem:[#allocation19 + $0xc0] sm:$0xff]
    %v11787 = vld [vmem:[#allocation19 + $0xc8] sm:$0xff]
    %v11788 = vld [vmem:[#allocation19 + $0xd0] sm:$0xff]
    %v11789 = vld [vmem:[#allocation19 + $0xd8] sm:$0xff]
    %v11790 = vld [vmem:[#allocation19 + $0xe0] sm:$0xff]
    %v11791 = vld [vmem:[#allocation19 + $0xe8] sm:$0xff]
    %v11792 = vld [vmem:[#allocation19 + $0xf0] sm:$0xff]
    %v11793 = vld [vmem:[#allocation19 + $0xf8] sm:$0xff]
    %v11794 = vld [vmem:[#allocation19 + $0x100] sm:$0xff]
    %v11795 = vld [vmem:[#allocation19 + $0x108] sm:$0xff]
    %v11796 = vld [vmem:[#allocation19 + $0x110] sm:$0xff]
    %v11797 = vld [vmem:[#allocation19 + $0x118] sm:$0xff]
    %v11798 = vld [vmem:[#allocation19 + $0x120] sm:$0xff]
    %v11799 = vld [vmem:[#allocation19 + $0x128] sm:$0xff]
    %v11800 = vld [vmem:[#allocation19 + $0x130] sm:$0xff]
    %v11801 = vld [vmem:[#allocation19 + $0x138] sm:$0xff]
    %v11802 = vld [vmem:[#allocation19 + $0x140] sm:$0xff]
    %v11803 = vld [vmem:[#allocation19 + $0x148] sm:$0xff]
    %v11804 = vld [vmem:[#allocation19 + $0x150] sm:$0xff]
    %v11805 = vld [vmem:[#allocation19 + $0x158] sm:$0xff]
    %v11806 = vld [vmem:[#allocation19 + $0x160] sm:$0xff]
    %v11807 = vld [vmem:[#allocation19 + $0x168] sm:$0xff]
    %v11808 = vld [vmem:[#allocation19 + $0x170] sm:$0xff]
    %v11809 = vld [vmem:[#allocation19 + $0x178] sm:$0xff]
    %v11810 = vld [vmem:[#allocation19 + $0x180] sm:$0xff]
    %v11811 = vld [vmem:[#allocation19 + $0x188] sm:$0xff]
    %v11812 = vld [vmem:[#allocation19 + $0x190] sm:$0xff]
    %v11813 = vld [vmem:[#allocation19 + $0x198] sm:$0xff]
    %v11814 = vld [vmem:[#allocation19 + $0x1a0] sm:$0xff]
    %v11815 = vld [vmem:[#allocation19 + $0x1a8] sm:$0xff]
    %v11816 = vld [vmem:[#allocation19 + $0x1b0] sm:$0xff]
    %v11817 = vld [vmem:[#allocation19 + $0x1b8] sm:$0xff]
    %v11818 = vld [vmem:[#allocation19 + $0x1c0] sm:$0xff]
    %v11819 = vld [vmem:[#allocation19 + $0x1c8] sm:$0xff]
    %v11820 = vld [vmem:[#allocation19 + $0x1d0] sm:$0xff]
    %v11821 = vld [vmem:[#allocation19 + $0x1d8] sm:$0xff]
    %v11822 = vld [vmem:[#allocation19 + $0x1e0] sm:$0xff]
    %v11823 = vld [vmem:[#allocation19 + $0x1e8] sm:$0xff]
    %v11824 = vld [vmem:[#allocation19 + $0x1f0] sm:$0xff]
    %v11825 = vld [vmem:[#allocation19 + $0x1f8] sm:$0xff]
    %v11826 = vld [vmem:[#allocation19 + $0x200] sm:$0xff]
    %v11827 = vld [vmem:[#allocation19 + $0x208] sm:$0xff]
    %v11828 = vld [vmem:[#allocation19 + $0x210] sm:$0xff]
    %v11829 = vld [vmem:[#allocation19 + $0x218] sm:$0xff]
    %v11830 = vld [vmem:[#allocation19 + $0x220] sm:$0xff]
    %v11831 = vld [vmem:[#allocation19 + $0x228] sm:$0xff]
    %v11832 = vld [vmem:[#allocation19 + $0x230] sm:$0xff]
    %v11833 = vld [vmem:[#allocation19 + $0x238] sm:$0xff]
    %v11834 = vld [vmem:[#allocation19 + $0x240] sm:$0xff]
    %v11835 = vld [vmem:[#allocation19 + $0x248] sm:$0xff]
    %v11836 = vld [vmem:[#allocation19 + $0x250] sm:$0xff]
    %v11837 = vld [vmem:[#allocation19 + $0x258] sm:$0xff]
    %v11838 = vld [vmem:[#allocation19 + $0x260] sm:$0xff]
    %v11839 = vld [vmem:[#allocation19 + $0x268] sm:$0xff]
    %v11840 = vld [vmem:[#allocation19 + $0x270] sm:$0xff]
    %v11841 = vld [vmem:[#allocation19 + $0x278] sm:$0xff]
    %v11842 = vld [vmem:[#allocation19 + $0x280] sm:$0xff]
    %v11843 = vld [vmem:[#allocation19 + $0x288] sm:$0xff]
    %v11844 = vld [vmem:[#allocation19 + $0x290] sm:$0xff]
    %v11845 = vld [vmem:[#allocation19 + $0x298] sm:$0xff]
    %v11846 = vld [vmem:[#allocation19 + $0x2a0] sm:$0xff]
    %v11847 = vld [vmem:[#allocation19 + $0x2a8] sm:$0xff]
    %v11848 = vld [vmem:[#allocation19 + $0x2b0] sm:$0xff]
    %v11849 = vld [vmem:[#allocation19 + $0x2b8] sm:$0xff]
    %v11850 = vld [vmem:[#allocation19 + $0x2c0] sm:$0xff]
    %v11851 = vld [vmem:[#allocation19 + $0x2c8] sm:$0xff]
    %v11852 = vld [vmem:[#allocation19 + $0x2d0] sm:$0xff]
    %v11853 = vld [vmem:[#allocation19 + $0x2d8] sm:$0xff]
    %v11854 = vld [vmem:[#allocation19 + $0x2e0] sm:$0xff]
    %v11855 = vld [vmem:[#allocation19 + $0x2e8] sm:$0xff]
    %v11856 = vld [vmem:[#allocation19 + $0x2f0] sm:$0xff]
    %v11857 = vld [vmem:[#allocation19 + $0x2f8] sm:$0xff]
    %v11858 = vld [vmem:[#allocation19 + $0x300] sm:$0xff]
    %v11859 = vld [vmem:[#allocation19 + $0x308] sm:$0xff]
    %v11860 = vld [vmem:[#allocation19 + $0x310] sm:$0xff]
    %v11861 = vld [vmem:[#allocation19 + $0x318] sm:$0xff]
    %v11862 = vld [vmem:[#allocation19 + $0x320] sm:$0xff]
    %v11863 = vld [vmem:[#allocation19 + $0x328] sm:$0xff]
    %v11864 = vld [vmem:[#allocation19 + $0x330] sm:$0xff]
    %v11865 = vld [vmem:[#allocation19 + $0x338] sm:$0xff]
    %v11866 = vld [vmem:[#allocation19 + $0x340] sm:$0xff]
    %v11867 = vld [vmem:[#allocation19 + $0x348] sm:$0xff]
    %v11868 = vld [vmem:[#allocation19 + $0x350] sm:$0xff]
    %v11869 = vld [vmem:[#allocation19 + $0x358] sm:$0xff]
    %v11870 = vld [vmem:[#allocation19 + $0x360] sm:$0xff]
    %v11871 = vld [vmem:[#allocation19 + $0x368] sm:$0xff]
    %v11872 = vld [vmem:[#allocation19 + $0x370] sm:$0xff]
    %v11873 = vld [vmem:[#allocation19 + $0x378] sm:$0xff]
    %v11874 = vld [vmem:[#allocation19 + $0x380] sm:$0xff]
    %v11875 = vld [vmem:[#allocation19 + $0x388] sm:$0xff]
    %v11876 = vld [vmem:[#allocation19 + $0x390] sm:$0xff]
    %v11877 = vld [vmem:[#allocation19 + $0x398] sm:$0xff]
    %v11878 = vld [vmem:[#allocation19 + $0x3a0] sm:$0xff]
    %v11879 = vld [vmem:[#allocation19 + $0x3a8] sm:$0xff]
    %v11880 = vld [vmem:[#allocation19 + $0x3b0] sm:$0xff]
    %v11881 = vld [vmem:[#allocation19 + $0x3b8] sm:$0xff]
    %v11882 = vld [vmem:[#allocation19 + $0x3c0] sm:$0xff]
    %v11883 = vld [vmem:[#allocation19 + $0x3c8] sm:$0xff]
    %v11884 = vld [vmem:[#allocation19 + $0x3d0] sm:$0xff]
    %v11885 = vld [vmem:[#allocation19 + $0x3d8] sm:$0xff]
    %v11886 = vld [vmem:[#allocation19 + $0x3e0] sm:$0xff]
    %v11887 = vld [vmem:[#allocation19 + $0x3e8] sm:$0xff]
    %v11888 = vld [vmem:[#allocation19 + $0x3f0] sm:$0xff]
    %v11889 = vld [vmem:[#allocation19 + $0x3f8] sm:$0xff]
    %v11890 = vld [vmem:[#allocation21] sm:$0xf]
    %v11892 = vlaneseq
    %v11893 = vshrl.u32 %v11892, 7
    %v11894 = vsub.s32 0, %v11893
    %v11895 = vrot.slane %v11890, %v11894
    %v11896 = vlaneseq
    %v11897 = vshrl.u32 %v11896, 7
    %v11898 = vsub.s32 1, %v11897
    %v11899 = vrot.slane %v11890, %v11898
    %v11900 = vlaneseq
    %v11901 = vshrl.u32 %v11900, 7
    %v11902 = vsub.s32 2, %v11901
    %v11903 = vrot.slane %v11890, %v11902
    %v11904 = vlaneseq
    %v11905 = vshrl.u32 %v11904, 7
    %v11906 = vsub.s32 3, %v11905
    %v11907 = vrot.slane %v11890, %v11906
    %v12040 = vunpack.c.l.b16 %v11762
    %v12041 = vunpack.c.h.b16 %v11762
    %v12042 = vunpack.c.l.b16 %v11763
    %v12043 = vunpack.c.h.b16 %v11763
    %v12044 = vunpack.c.l.b16 %v11764
    %v12045 = vunpack.c.h.b16 %v11764
    %v12046 = vunpack.c.l.b16 %v11765
    %v12047 = vunpack.c.h.b16 %v11765
    %v12048 = vunpack.c.l.b16 %v11766
    %v12049 = vunpack.c.h.b16 %v11766
    %v12050 = vunpack.c.l.b16 %v11767
    %v12051 = vunpack.c.h.b16 %v11767
    %v12052 = vunpack.c.l.b16 %v11768
    %v12053 = vunpack.c.h.b16 %v11768
    %v12054 = vunpack.c.l.b16 %v11769
    %v12055 = vunpack.c.h.b16 %v11769
    %v12056 = vunpack.c.l.b16 %v11770
    %v12057 = vunpack.c.h.b16 %v11770
    %v12058 = vunpack.c.l.b16 %v11771
    %v12059 = vunpack.c.h.b16 %v11771
    %v12060 = vunpack.c.l.b16 %v11772
    %v12061 = vunpack.c.h.b16 %v11772
    %v12062 = vunpack.c.l.b16 %v11773
    %v12063 = vunpack.c.h.b16 %v11773
    %v12064 = vunpack.c.l.b16 %v11774
    %v12065 = vunpack.c.h.b16 %v11774
    %v12066 = vunpack.c.l.b16 %v11775
    %v12067 = vunpack.c.h.b16 %v11775
    %v12068 = vunpack.c.l.b16 %v11776
    %v12069 = vunpack.c.h.b16 %v11776
    %v12070 = vunpack.c.l.b16 %v11777
    %v12071 = vunpack.c.h.b16 %v11777
    %v12072 = vunpack.c.l.b16 %v11778
    %v12073 = vunpack.c.h.b16 %v11778
    %v12074 = vunpack.c.l.b16 %v11779
    %v12075 = vunpack.c.h.b16 %v11779
    %v12076 = vunpack.c.l.b16 %v11780
    %v12077 = vunpack.c.h.b16 %v11780
    %v12078 = vunpack.c.l.b16 %v11781
    %v12079 = vunpack.c.h.b16 %v11781
    %v12080 = vunpack.c.l.b16 %v11782
    %v12081 = vunpack.c.h.b16 %v11782
    %v12082 = vunpack.c.l.b16 %v11783
    %v12083 = vunpack.c.h.b16 %v11783
    %v12084 = vunpack.c.l.b16 %v11784
    %v12085 = vunpack.c.h.b16 %v11784
    %v12086 = vunpack.c.l.b16 %v11785
    %v12087 = vunpack.c.h.b16 %v11785
    %v12088 = vunpack.c.l.b16 %v11786
    %v12089 = vunpack.c.h.b16 %v11786
    %v12090 = vunpack.c.l.b16 %v11787
    %v12091 = vunpack.c.h.b16 %v11787
    %v12092 = vunpack.c.l.b16 %v11788
    %v12093 = vunpack.c.h.b16 %v11788
    %v12094 = vunpack.c.l.b16 %v11789
    %v12095 = vunpack.c.h.b16 %v11789
    %v12096 = vunpack.c.l.b16 %v11790
    %v12097 = vunpack.c.h.b16 %v11790
    %v12098 = vunpack.c.l.b16 %v11791
    %v12099 = vunpack.c.h.b16 %v11791
    %v12100 = vunpack.c.l.b16 %v11792
    %v12101 = vunpack.c.h.b16 %v11792
    %v12102 = vunpack.c.l.b16 %v11793
    %v12103 = vunpack.c.h.b16 %v11793
    %v12104 = vunpack.c.l.b16 %v11794
    %v12105 = vunpack.c.h.b16 %v11794
    %v12106 = vunpack.c.l.b16 %v11795
    %v12107 = vunpack.c.h.b16 %v11795
    %v12108 = vunpack.c.l.b16 %v11796
    %v12109 = vunpack.c.h.b16 %v11796
    %v12110 = vunpack.c.l.b16 %v11797
    %v12111 = vunpack.c.h.b16 %v11797
    %v12112 = vunpack.c.l.b16 %v11798
    %v12113 = vunpack.c.h.b16 %v11798
    %v12114 = vunpack.c.l.b16 %v11799
    %v12115 = vunpack.c.h.b16 %v11799
    %v12116 = vunpack.c.l.b16 %v11800
    %v12117 = vunpack.c.h.b16 %v11800
    %v12118 = vunpack.c.l.b16 %v11801
    %v12119 = vunpack.c.h.b16 %v11801
    %v12120 = vunpack.c.l.b16 %v11802
    %v12121 = vunpack.c.h.b16 %v11802
    %v12122 = vunpack.c.l.b16 %v11803
    %v12123 = vunpack.c.h.b16 %v11803
    %v12124 = vunpack.c.l.b16 %v11804
    %v12125 = vunpack.c.h.b16 %v11804
    %v12126 = vunpack.c.l.b16 %v11805
    %v12127 = vunpack.c.h.b16 %v11805
    %v12128 = vunpack.c.l.b16 %v11806
    %v12129 = vunpack.c.h.b16 %v11806
    %v12130 = vunpack.c.l.b16 %v11807
    %v12131 = vunpack.c.h.b16 %v11807
    %v12132 = vunpack.c.l.b16 %v11808
    %v12133 = vunpack.c.h.b16 %v11808
    %v12134 = vunpack.c.l.b16 %v11809
    %v12135 = vunpack.c.h.b16 %v11809
    %v12136 = vunpack.c.l.b16 %v11810
    %v12137 = vunpack.c.h.b16 %v11810
    %v12138 = vunpack.c.l.b16 %v11811
    %v12139 = vunpack.c.h.b16 %v11811
    %v12140 = vunpack.c.l.b16 %v11812
    %v12141 = vunpack.c.h.b16 %v11812
    %v12142 = vunpack.c.l.b16 %v11813
    %v12143 = vunpack.c.h.b16 %v11813
    %v12144 = vunpack.c.l.b16 %v11814
    %v12145 = vunpack.c.h.b16 %v11814
    %v12146 = vunpack.c.l.b16 %v11815
    %v12147 = vunpack.c.h.b16 %v11815
    %v12148 = vunpack.c.l.b16 %v11816
    %v12149 = vunpack.c.h.b16 %v11816
    %v12150 = vunpack.c.l.b16 %v11817
    %v12151 = vunpack.c.h.b16 %v11817
    %v12152 = vunpack.c.l.b16 %v11818
    %v12153 = vunpack.c.h.b16 %v11818
    %v12154 = vunpack.c.l.b16 %v11819
    %v12155 = vunpack.c.h.b16 %v11819
    %v12156 = vunpack.c.l.b16 %v11820
    %v12157 = vunpack.c.h.b16 %v11820
    %v12158 = vunpack.c.l.b16 %v11821
    %v12159 = vunpack.c.h.b16 %v11821
    %v12160 = vunpack.c.l.b16 %v11822
    %v12161 = vunpack.c.h.b16 %v11822
    %v12162 = vunpack.c.l.b16 %v11823
    %v12163 = vunpack.c.h.b16 %v11823
    %v12164 = vunpack.c.l.b16 %v11824
    %v12165 = vunpack.c.h.b16 %v11824
    %v12166 = vunpack.c.l.b16 %v11825
    %v12167 = vunpack.c.h.b16 %v11825
    %v12168 = vunpack.c.l.b16 %v11826
    %v12169 = vunpack.c.h.b16 %v11826
    %v12170 = vunpack.c.l.b16 %v11827
    %v12171 = vunpack.c.h.b16 %v11827
    %v12172 = vunpack.c.l.b16 %v11828
    %v12173 = vunpack.c.h.b16 %v11828
    %v12174 = vunpack.c.l.b16 %v11829
    %v12175 = vunpack.c.h.b16 %v11829
    %v12176 = vunpack.c.l.b16 %v11830
    %v12177 = vunpack.c.h.b16 %v11830
    %v12178 = vunpack.c.l.b16 %v11831
    %v12179 = vunpack.c.h.b16 %v11831
    %v12180 = vunpack.c.l.b16 %v11832
    %v12181 = vunpack.c.h.b16 %v11832
    %v12182 = vunpack.c.l.b16 %v11833
    %v12183 = vunpack.c.h.b16 %v11833
    %v12184 = vunpack.c.l.b16 %v11834
    %v12185 = vunpack.c.h.b16 %v11834
    %v12186 = vunpack.c.l.b16 %v11835
    %v12187 = vunpack.c.h.b16 %v11835
    %v12188 = vunpack.c.l.b16 %v11836
    %v12189 = vunpack.c.h.b16 %v11836
    %v12190 = vunpack.c.l.b16 %v11837
    %v12191 = vunpack.c.h.b16 %v11837
    %v12192 = vunpack.c.l.b16 %v11838
    %v12193 = vunpack.c.h.b16 %v11838
    %v12194 = vunpack.c.l.b16 %v11839
    %v12195 = vunpack.c.h.b16 %v11839
    %v12196 = vunpack.c.l.b16 %v11840
    %v12197 = vunpack.c.h.b16 %v11840
    %v12198 = vunpack.c.l.b16 %v11841
    %v12199 = vunpack.c.h.b16 %v11841
    %v12200 = vunpack.c.l.b16 %v11842
    %v12201 = vunpack.c.h.b16 %v11842
    %v12202 = vunpack.c.l.b16 %v11843
    %v12203 = vunpack.c.h.b16 %v11843
    %v12204 = vunpack.c.l.b16 %v11844
    %v12205 = vunpack.c.h.b16 %v11844
    %v12206 = vunpack.c.l.b16 %v11845
    %v12207 = vunpack.c.h.b16 %v11845
    %v12208 = vunpack.c.l.b16 %v11846
    %v12209 = vunpack.c.h.b16 %v11846
    %v12210 = vunpack.c.l.b16 %v11847
    %v12211 = vunpack.c.h.b16 %v11847
    %v12212 = vunpack.c.l.b16 %v11848
    %v12213 = vunpack.c.h.b16 %v11848
    %v12214 = vunpack.c.l.b16 %v11849
    %v12215 = vunpack.c.h.b16 %v11849
    %v12216 = vunpack.c.l.b16 %v11850
    %v12217 = vunpack.c.h.b16 %v11850
    %v12218 = vunpack.c.l.b16 %v11851
    %v12219 = vunpack.c.h.b16 %v11851
    %v12220 = vunpack.c.l.b16 %v11852
    %v12221 = vunpack.c.h.b16 %v11852
    %v12222 = vunpack.c.l.b16 %v11853
    %v12223 = vunpack.c.h.b16 %v11853
    %v12224 = vunpack.c.l.b16 %v11854
    %v12225 = vunpack.c.h.b16 %v11854
    %v12226 = vunpack.c.l.b16 %v11855
    %v12227 = vunpack.c.h.b16 %v11855
    %v12228 = vunpack.c.l.b16 %v11856
    %v12229 = vunpack.c.h.b16 %v11856
    %v12230 = vunpack.c.l.b16 %v11857
    %v12231 = vunpack.c.h.b16 %v11857
    %v12232 = vunpack.c.l.b16 %v11858
    %v12233 = vunpack.c.h.b16 %v11858
    %v12234 = vunpack.c.l.b16 %v11859
    %v12235 = vunpack.c.h.b16 %v11859
    %v12236 = vunpack.c.l.b16 %v11860
    %v12237 = vunpack.c.h.b16 %v11860
    %v12238 = vunpack.c.l.b16 %v11861
    %v12239 = vunpack.c.h.b16 %v11861
    %v12240 = vunpack.c.l.b16 %v11862
    %v12241 = vunpack.c.h.b16 %v11862
    %v12242 = vunpack.c.l.b16 %v11863
    %v12243 = vunpack.c.h.b16 %v11863
    %v12244 = vunpack.c.l.b16 %v11864
    %v12245 = vunpack.c.h.b16 %v11864
    %v12246 = vunpack.c.l.b16 %v11865
    %v12247 = vunpack.c.h.b16 %v11865
    %v12248 = vunpack.c.l.b16 %v11866
    %v12249 = vunpack.c.h.b16 %v11866
    %v12250 = vunpack.c.l.b16 %v11867
    %v12251 = vunpack.c.h.b16 %v11867
    %v12252 = vunpack.c.l.b16 %v11868
    %v12253 = vunpack.c.h.b16 %v11868
    %v12254 = vunpack.c.l.b16 %v11869
    %v12255 = vunpack.c.h.b16 %v11869
    %v12256 = vunpack.c.l.b16 %v11870
    %v12257 = vunpack.c.h.b16 %v11870
    %v12258 = vunpack.c.l.b16 %v11871
    %v12259 = vunpack.c.h.b16 %v11871
    %v12260 = vunpack.c.l.b16 %v11872
    %v12261 = vunpack.c.h.b16 %v11872
    %v12262 = vunpack.c.l.b16 %v11873
    %v12263 = vunpack.c.h.b16 %v11873
    %v12264 = vunpack.c.l.b16 %v11874
    %v12265 = vunpack.c.h.b16 %v11874
    %v12266 = vunpack.c.l.b16 %v11875
    %v12267 = vunpack.c.h.b16 %v11875
    %v12268 = vunpack.c.l.b16 %v11876
    %v12269 = vunpack.c.h.b16 %v11876
    %v12270 = vunpack.c.l.b16 %v11877
    %v12271 = vunpack.c.h.b16 %v11877
    %v12272 = vunpack.c.l.b16 %v11878
    %v12273 = vunpack.c.h.b16 %v11878
    %v12274 = vunpack.c.l.b16 %v11879
    %v12275 = vunpack.c.h.b16 %v11879
    %v12276 = vunpack.c.l.b16 %v11880
    %v12277 = vunpack.c.h.b16 %v11880
    %v12278 = vunpack.c.l.b16 %v11881
    %v12279 = vunpack.c.h.b16 %v11881
    %v12280 = vunpack.c.l.b16 %v11882
    %v12281 = vunpack.c.h.b16 %v11882
    %v12282 = vunpack.c.l.b16 %v11883
    %v12283 = vunpack.c.h.b16 %v11883
    %v12284 = vunpack.c.l.b16 %v11884
    %v12285 = vunpack.c.h.b16 %v11884
    %v12286 = vunpack.c.l.b16 %v11885
    %v12287 = vunpack.c.h.b16 %v11885
    %v12288 = vunpack.c.l.b16 %v11886
    %v12289 = vunpack.c.h.b16 %v11886
    %v12290 = vunpack.c.l.b16 %v11887
    %v12291 = vunpack.c.h.b16 %v11887
    %v12292 = vunpack.c.l.b16 %v11888
    %v12293 = vunpack.c.h.b16 %v11888
    %v12294 = vunpack.c.l.b16 %v11889
    %v12295 = vunpack.c.h.b16 %v11889
    %v12296 = vpack.c.b16 %v12044, %v12040
    %v12297 = vpack.c.b16 %v12045, %v12041
    %v12298 = vpack.c.b16 %v12046, %v12042
    %v12299 = vpack.c.b16 %v12047, %v12043
    %v12300 = vpack.c.b16 %v12052, %v12048
    %v12301 = vpack.c.b16 %v12053, %v12049
    %v12302 = vpack.c.b16 %v12054, %v12050
    %v12303 = vpack.c.b16 %v12055, %v12051
    %v12304 = vpack.c.b16 %v12060, %v12056
    %v12305 = vpack.c.b16 %v12061, %v12057
    %v12306 = vpack.c.b16 %v12062, %v12058
    %v12307 = vpack.c.b16 %v12063, %v12059
    %v12308 = vpack.c.b16 %v12068, %v12064
    %v12309 = vpack.c.b16 %v12069, %v12065
    %v12310 = vpack.c.b16 %v12070, %v12066
    %v12311 = vpack.c.b16 %v12071, %v12067
    %v12312 = vpack.c.b16 %v12076, %v12072
    %v12313 = vpack.c.b16 %v12077, %v12073
    %v12314 = vpack.c.b16 %v12078, %v12074
    %v12315 = vpack.c.b16 %v12079, %v12075
    %v12316 = vpack.c.b16 %v12084, %v12080
    %v12317 = vpack.c.b16 %v12085, %v12081
    %v12318 = vpack.c.b16 %v12086, %v12082
    %v12319 = vpack.c.b16 %v12087, %v12083
    %v12320 = vpack.c.b16 %v12092, %v12088
    %v12321 = vpack.c.b16 %v12093, %v12089
    %v12322 = vpack.c.b16 %v12094, %v12090
    %v12323 = vpack.c.b16 %v12095, %v12091
    %v12324 = vpack.c.b16 %v12100, %v12096
    %v12325 = vpack.c.b16 %v12101, %v12097
    %v12326 = vpack.c.b16 %v12102, %v12098
    %v12327 = vpack.c.b16 %v12103, %v12099
    %v12328 = vpack.c.b16 %v12108, %v12104
    %v12329 = vpack.c.b16 %v12109, %v12105
    %v12330 = vpack.c.b16 %v12110, %v12106
    %v12331 = vpack.c.b16 %v12111, %v12107
    %v12332 = vpack.c.b16 %v12116, %v12112
    %v12333 = vpack.c.b16 %v12117, %v12113
    %v12334 = vpack.c.b16 %v12118, %v12114
    %v12335 = vpack.c.b16 %v12119, %v12115
    %v12336 = vpack.c.b16 %v12124, %v12120
    %v12337 = vpack.c.b16 %v12125, %v12121
    %v12338 = vpack.c.b16 %v12126, %v12122
    %v12339 = vpack.c.b16 %v12127, %v12123
    %v12340 = vpack.c.b16 %v12132, %v12128
    %v12341 = vpack.c.b16 %v12133, %v12129
    %v12342 = vpack.c.b16 %v12134, %v12130
    %v12343 = vpack.c.b16 %v12135, %v12131
    %v12344 = vpack.c.b16 %v12140, %v12136
    %v12345 = vpack.c.b16 %v12141, %v12137
    %v12346 = vpack.c.b16 %v12142, %v12138
    %v12347 = vpack.c.b16 %v12143, %v12139
    %v12348 = vpack.c.b16 %v12148, %v12144
    %v12349 = vpack.c.b16 %v12149, %v12145
    %v12350 = vpack.c.b16 %v12150, %v12146
    %v12351 = vpack.c.b16 %v12151, %v12147
    %v12352 = vpack.c.b16 %v12156, %v12152
    %v12353 = vpack.c.b16 %v12157, %v12153
    %v12354 = vpack.c.b16 %v12158, %v12154
    %v12355 = vpack.c.b16 %v12159, %v12155
    %v12356 = vpack.c.b16 %v12164, %v12160
    %v12357 = vpack.c.b16 %v12165, %v12161
    %v12358 = vpack.c.b16 %v12166, %v12162
    %v12359 = vpack.c.b16 %v12167, %v12163
    %v12360 = vpack.c.b16 %v12172, %v12168
    %v12361 = vpack.c.b16 %v12173, %v12169
    %v12362 = vpack.c.b16 %v12174, %v12170
    %v12363 = vpack.c.b16 %v12175, %v12171
    %v12364 = vpack.c.b16 %v12180, %v12176
    %v12365 = vpack.c.b16 %v12181, %v12177
    %v12366 = vpack.c.b16 %v12182, %v12178
    %v12367 = vpack.c.b16 %v12183, %v12179
    %v12368 = vpack.c.b16 %v12188, %v12184
    %v12369 = vpack.c.b16 %v12189, %v12185
    %v12370 = vpack.c.b16 %v12190, %v12186
    %v12371 = vpack.c.b16 %v12191, %v12187
    %v12372 = vpack.c.b16 %v12196, %v12192
    %v12373 = vpack.c.b16 %v12197, %v12193
    %v12374 = vpack.c.b16 %v12198, %v12194
    %v12375 = vpack.c.b16 %v12199, %v12195
    %v12376 = vpack.c.b16 %v12204, %v12200
    %v12377 = vpack.c.b16 %v12205, %v12201
    %v12378 = vpack.c.b16 %v12206, %v12202
    %v12379 = vpack.c.b16 %v12207, %v12203
    %v12380 = vpack.c.b16 %v12212, %v12208
    %v12381 = vpack.c.b16 %v12213, %v12209
    %v12382 = vpack.c.b16 %v12214, %v12210
    %v12383 = vpack.c.b16 %v12215, %v12211
    %v12384 = vpack.c.b16 %v12220, %v12216
    %v12385 = vpack.c.b16 %v12221, %v12217
    %v12386 = vpack.c.b16 %v12222, %v12218
    %v12387 = vpack.c.b16 %v12223, %v12219
    %v12388 = vpack.c.b16 %v12228, %v12224
    %v12389 = vpack.c.b16 %v12229, %v12225
    %v12390 = vpack.c.b16 %v12230, %v12226
    %v12391 = vpack.c.b16 %v12231, %v12227
    %v12392 = vpack.c.b16 %v12236, %v12232
    %v12393 = vpack.c.b16 %v12237, %v12233
    %v12394 = vpack.c.b16 %v12238, %v12234
    %v12395 = vpack.c.b16 %v12239, %v12235
    %v12396 = vpack.c.b16 %v12244, %v12240
    %v12397 = vpack.c.b16 %v12245, %v12241
    %v12398 = vpack.c.b16 %v12246, %v12242
    %v12399 = vpack.c.b16 %v12247, %v12243
    %v12400 = vpack.c.b16 %v12252, %v12248
    %v12401 = vpack.c.b16 %v12253, %v12249
    %v12402 = vpack.c.b16 %v12254, %v12250
    %v12403 = vpack.c.b16 %v12255, %v12251
    %v12404 = vpack.c.b16 %v12260, %v12256
    %v12405 = vpack.c.b16 %v12261, %v12257
    %v12406 = vpack.c.b16 %v12262, %v12258
    %v12407 = vpack.c.b16 %v12263, %v12259
    %v12408 = vpack.c.b16 %v12268, %v12264
    %v12409 = vpack.c.b16 %v12269, %v12265
    %v12410 = vpack.c.b16 %v12270, %v12266
    %v12411 = vpack.c.b16 %v12271, %v12267
    %v12412 = vpack.c.b16 %v12276, %v12272
    %v12413 = vpack.c.b16 %v12277, %v12273
    %v12414 = vpack.c.b16 %v12278, %v12274
    %v12415 = vpack.c.b16 %v12279, %v12275
    %v12416 = vpack.c.b16 %v12284, %v12280
    %v12417 = vpack.c.b16 %v12285, %v12281
    %v12418 = vpack.c.b16 %v12286, %v12282
    %v12419 = vpack.c.b16 %v12287, %v12283
    %v12420 = vpack.c.b16 %v12292, %v12288
    %v12421 = vpack.c.b16 %v12293, %v12289
    %v12422 = vpack.c.b16 %v12294, %v12290
    %v12423 = vpack.c.b16 %v12295, %v12291
    %12552 = vmatprep.subr.bf16.mxu0 %v12325
    %12553 = vmatpush1.bf16.msra.mxu0 %v12324
    %12554 = vmatprep.subr.bf16.mxu0 %v12321
    %12555 = vmatpush1.bf16.msra.mxu0 %v12320
    %12556 = vmatprep.subr.bf16.mxu0 %v12317
    %12557 = vmatpush1.bf16.msra.mxu0 %v12316
    %12558 = vmatprep.subr.bf16.mxu0 %v12313
    %12559 = vmatpush1.bf16.msra.mxu0 %v12312
    %12560 = vmatprep.subr.bf16.mxu0 %v12309
    %12561 = vmatpush1.bf16.msra.mxu0 %v12308
    %12562 = vmatprep.subr.bf16.mxu0 %v12305
    %12563 = vmatpush1.bf16.msra.mxu0 %v12304
    %12564 = vmatprep.subr.bf16.mxu0 %v12301
    %12565 = vmatpush1.bf16.msra.mxu0 %v12300
    %12566 = vmatprep.subr.bf16.mxu0 %v12297
    %12567 = vmatpush1.bf16.msra.mxu0 %v12296
    %12568 = vmatprep.subr.bf16.mxu0 %v12357
    %12569 = vmatpush2.bf16.msra.mxu0 %v12356
    %12570 = vmatprep.subr.bf16.mxu0 %v12353
    %12571 = vmatpush2.bf16.msra.mxu0 %v12352
    %12572 = vmatprep.subr.bf16.mxu0 %v12349
    %12573 = vmatpush2.bf16.msra.mxu0 %v12348
    %12574 = vmatprep.subr.bf16.mxu0 %v12345
    %12575 = vmatpush2.bf16.msra.mxu0 %v12344
    %12576 = vmatprep.subr.bf16.mxu0 %v12341
    %12577 = vmatpush2.bf16.msra.mxu0 %v12340
    %12578 = vmatprep.subr.bf16.mxu0 %v12337
    %12579 = vmatpush2.bf16.msra.mxu0 %v12336
    %12580 = vmatprep.subr.bf16.mxu0 %v12333
    %12581 = vmatpush2.bf16.msra.mxu0 %v12332
    %12582 = vmatprep.subr.bf16.mxu0 %v12329
    %12583 = vmatpush2.bf16.msra.mxu0 %v12328
    %12584 = vmatprep.mubr.bf16.mxu0 %v11759
    %12585 = vmatmul.mubr.bf16.gmra.mxu0 %v11758
    %v12586 = vpop.f32.mrf.mxu0
    %v12587 = vadd.f32 %v11895, %v12586
    %v12588 = vpop.f32.mrf.mxu0
    %v12589 = vadd.f32 %v11899, %v12588
    %v12590 = vpop.f32.mrf.mxu0
    %v12591 = vpop.f32.mrf.mxu0
    %12592 = vdwg.mxu0
    %12593 = vmatprep.subr.bf16.mxu0 %v12389
    %12594 = vmatpush1.bf16.msra.mxu0 %v12388
    %12595 = vmatprep.subr.bf16.mxu0 %v12385
    %12596 = vmatpush1.bf16.msra.mxu0 %v12384
    %12597 = vmatprep.subr.bf16.mxu0 %v12381
    %12598 = vmatpush1.bf16.msra.mxu0 %v12380
    %12599 = vmatprep.subr.bf16.mxu0 %v12377
    %12600 = vmatpush1.bf16.msra.mxu0 %v12376
    %12601 = vmatprep.subr.bf16.mxu0 %v12373
    %12602 = vmatpush1.bf16.msra.mxu0 %v12372
    %12603 = vmatprep.subr.bf16.mxu0 %v12369
    %12604 = vmatpush1.bf16.msra.mxu0 %v12368
    %12605 = vmatprep.subr.bf16.mxu0 %v12365
    %12606 = vmatpush1.bf16.msra.mxu0 %v12364
    %12607 = vmatprep.subr.bf16.mxu0 %v12361
    %12608 = vmatpush1.bf16.msra.mxu0 %v12360
    %12609 = vmatprep.subr.bf16.mxu0 %v12421
    %12610 = vmatpush2.bf16.msra.mxu0 %v12420
    %12611 = vmatprep.subr.bf16.mxu0 %v12417
    %12612 = vmatpush2.bf16.msra.mxu0 %v12416
    %12613 = vmatprep.subr.bf16.mxu0 %v12413
    %12614 = vmatpush2.bf16.msra.mxu0 %v12412
    %12615 = vmatprep.subr.bf16.mxu0 %v12409
    %12616 = vmatpush2.bf16.msra.mxu0 %v12408
    %12617 = vmatprep.subr.bf16.mxu0 %v12405
    %12618 = vmatpush2.bf16.msra.mxu0 %v12404
    %12619 = vmatprep.subr.bf16.mxu0 %v12401
    %12620 = vmatpush2.bf16.msra.mxu0 %v12400
    %12621 = vmatprep.subr.bf16.mxu0 %v12397
    %12622 = vmatpush2.bf16.msra.mxu0 %v12396
    %12623 = vmatprep.subr.bf16.mxu0 %v12393
    %12624 = vmatpush2.bf16.msra.mxu0 %v12392
    %12625 = vmatprep.mubr.bf16.mxu0 %v11761
    %12626 = vmatmul.mubr.bf16.gmra.mxu0 %v11760
    %v12627 = vpop.f32.mrf.mxu0
    %v12628 = vadd.f32 %v12587, %v12627
    %v12629 = vpop.f32.mrf.mxu0
    %v12630 = vadd.f32 %v12589, %v12629
    %v12631 = vpop.f32.mrf.mxu0
    %v12632 = vpop.f32.mrf.mxu0
    %12633 = vdwg.mxu0
    %12634 = vmatprep.subr.bf16.mxu0 %v12327
    %12635 = vmatpush1.bf16.msra.mxu0 %v12326
    %12636 = vmatprep.subr.bf16.mxu0 %v12323
    %12637 = vmatpush1.bf16.msra.mxu0 %v12322
    %12638 = vmatprep.subr.bf16.mxu0 %v12319
    %12639 = vmatpush1.bf16.msra.mxu0 %v12318
    %12640 = vmatprep.subr.bf16.mxu0 %v12315
    %12641 = vmatpush1.bf16.msra.mxu0 %v12314
    %12642 = vmatprep.subr.bf16.mxu0 %v12311
    %12643 = vmatpush1.bf16.msra.mxu0 %v12310
    %12644 = vmatprep.subr.bf16.mxu0 %v12307
    %12645 = vmatpush1.bf16.msra.mxu0 %v12306
    %12646 = vmatprep.subr.bf16.mxu0 %v12303
    %12647 = vmatpush1.bf16.msra.mxu0 %v12302
    %12648 = vmatprep.subr.bf16.mxu0 %v12299
    %12649 = vmatpush1.bf16.msra.mxu0 %v12298
    %12650 = vmatprep.subr.bf16.mxu0 %v12359
    %12651 = vmatpush2.bf16.msra.mxu0 %v12358
    %12652 = vmatprep.subr.bf16.mxu0 %v12355
    %12653 = vmatpush2.bf16.msra.mxu0 %v12354
    %12654 = vmatprep.subr.bf16.mxu0 %v12351
    %12655 = vmatpush2.bf16.msra.mxu0 %v12350
    %12656 = vmatprep.subr.bf16.mxu0 %v12347
    %12657 = vmatpush2.bf16.msra.mxu0 %v12346
    %12658 = vmatprep.subr.bf16.mxu0 %v12343
    %12659 = vmatpush2.bf16.msra.mxu0 %v12342
    %12660 = vmatprep.subr.bf16.mxu0 %v12339
    %12661 = vmatpush2.bf16.msra.mxu0 %v12338
    %12662 = vmatprep.subr.bf16.mxu0 %v12335
    %12663 = vmatpush2.bf16.msra.mxu0 %v12334
    %12664 = vmatprep.subr.bf16.mxu0 %v12331
    %12665 = vmatpush2.bf16.msra.mxu0 %v12330
    %12666 = vmatprep.mubr.bf16.mxu0 %v11759
    %12667 = vmatmul.mubr.bf16.gmra.mxu0 %v11758
    %v12668 = vpop.f32.mrf.mxu0
    %v12669 = vadd.f32 %v11903, %v12668
    %v12670 = vpop.f32.mrf.mxu0
    %v12671 = vadd.f32 %v11907, %v12670
    %v12672 = vpop.f32.mrf.mxu0
    %v12673 = vpop.f32.mrf.mxu0
    %12674 = vdwg.mxu0
    %12675 = vmatprep.subr.bf16.mxu0 %v12391
    %12676 = vmatpush1.bf16.msra.mxu0 %v12390
    %12677 = vmatprep.subr.bf16.mxu0 %v12387
    %12678 = vmatpush1.bf16.msra.mxu0 %v12386
    %12679 = vmatprep.subr.bf16.mxu0 %v12383
    %12680 = vmatpush1.bf16.msra.mxu0 %v12382
    %12681 = vmatprep.subr.bf16.mxu0 %v12379
    %12682 = vmatpush1.bf16.msra.mxu0 %v12378
    %12683 = vmatprep.subr.bf16.mxu0 %v12375
    %12684 = vmatpush1.bf16.msra.mxu0 %v12374
    %12685 = vmatprep.subr.bf16.mxu0 %v12371
    %12686 = vmatpush1.bf16.msra.mxu0 %v12370
    %12687 = vmatprep.subr.bf16.mxu0 %v12367
    %12688 = vmatpush1.bf16.msra.mxu0 %v12366
    %12689 = vmatprep.subr.bf16.mxu0 %v12363
    %12690 = vmatpush1.bf16.msra.mxu0 %v12362
    %12691 = vmatprep.subr.bf16.mxu0 %v12423
    %12692 = vmatpush2.bf16.msra.mxu0 %v12422
    %12693 = vmatprep.subr.bf16.mxu0 %v12419
    %12694 = vmatpush2.bf16.msra.mxu0 %v12418
    %12695 = vmatprep.subr.bf16.mxu0 %v12415
    %12696 = vmatpush2.bf16.msra.mxu0 %v12414
    %12697 = vmatprep.subr.bf16.mxu0 %v12411
    %12698 = vmatpush2.bf16.msra.mxu0 %v12410
    %12699 = vmatprep.subr.bf16.mxu0 %v12407
    %12700 = vmatpush2.bf16.msra.mxu0 %v12406
    %12701 = vmatprep.subr.bf16.mxu0 %v12403
    %12702 = vmatpush2.bf16.msra.mxu0 %v12402
    %12703 = vmatprep.subr.bf16.mxu0 %v12399
    %12704 = vmatpush2.bf16.msra.mxu0 %v12398
    %12705 = vmatprep.subr.bf16.mxu0 %v12395
    %12706 = vmatpush2.bf16.msra.mxu0 %v12394
    %12707 = vmatprep.mubr.bf16.mxu0 %v11761
    %12708 = vmatmul.mubr.bf16.gmra.mxu0 %v11760
    %v12709 = vpop.f32.mrf.mxu0
    %v12710 = vadd.f32 %v12669, %v12709
    %v12711 = vpop.f32.mrf.mxu0
    %v12712 = vadd.f32 %v12671, %v12711
    %v12713 = vpop.f32.mrf.mxu0
    %v12714 = vpop.f32.mrf.mxu0
    %12715 = vdwg.mxu0
    %v12716 = vmax.f32 %v12628, 0.0
    %v12717 = vmax.f32 %v12630, 0.0
    %v12718 = vmax.f32 %v12710, 0.0
    %v12719 = vmax.f32 %v12712, 0.0
    %v12720 = vpack.c.bf16 %v12716, %v12716
    %v12721 = vpack.c.bf16 %v12717, %v12717
    %v12722 = vpack.c.bf16 %v12718, %v12718
    %v12723 = vpack.c.bf16 %v12719, %v12719
    %v12724 = vld [vmem:[#allocation22] sm:$0xf]
    %v12725 = vld [vmem:[#allocation22 + $0x4] sm:$0xf]
    %v12726 = vld [vmem:[#allocation22 + $0x8] sm:$0xf]
    %v12727 = vld [vmem:[#allocation22 + $0xc] sm:$0xf]
    %v12728 = vld [vmem:[#allocation22 + $0x10] sm:$0xf]
    %v12729 = vld [vmem:[#allocation22 + $0x14] sm:$0xf]
    %v12730 = vld [vmem:[#allocation22 + $0x18] sm:$0xf]
    %v12731 = vld [vmem:[#allocation22 + $0x1c] sm:$0xf]
    %v12732 = vld [vmem:[#allocation22 + $0x20] sm:$0xf]
    %v12733 = vld [vmem:[#allocation22 + $0x24] sm:$0xf]
    %v12734 = vld [vmem:[#allocation22 + $0x28] sm:$0xf]
    %v12735 = vld [vmem:[#allocation22 + $0x2c] sm:$0xf]
    %v12736 = vld [vmem:[#allocation22 + $0x30] sm:$0xf]
    %v12737 = vld [vmem:[#allocation22 + $0x34] sm:$0xf]
    %v12738 = vld [vmem:[#allocation22 + $0x38] sm:$0xf]
    %v12739 = vld [vmem:[#allocation22 + $0x3c] sm:$0xf]
    %v12740 = vld [vmem:[#allocation22 + $0x40] sm:$0xf]
    %v12741 = vld [vmem:[#allocation22 + $0x44] sm:$0xf]
    %v12742 = vld [vmem:[#allocation22 + $0x48] sm:$0xf]
    %v12743 = vld [vmem:[#allocation22 + $0x4c] sm:$0xf]
    %v12744 = vld [vmem:[#allocation22 + $0x50] sm:$0xf]
    %v12745 = vld [vmem:[#allocation22 + $0x54] sm:$0xf]
    %v12746 = vld [vmem:[#allocation22 + $0x58] sm:$0xf]
    %v12747 = vld [vmem:[#allocation22 + $0x5c] sm:$0xf]
    %v12748 = vld [vmem:[#allocation22 + $0x60] sm:$0xf]
    %v12749 = vld [vmem:[#allocation22 + $0x64] sm:$0xf]
    %v12750 = vld [vmem:[#allocation22 + $0x68] sm:$0xf]
    %v12751 = vld [vmem:[#allocation22 + $0x6c] sm:$0xf]
    %v12752 = vld [vmem:[#allocation22 + $0x70] sm:$0xf]
    %v12753 = vld [vmem:[#allocation22 + $0x74] sm:$0xf]
    %v12754 = vld [vmem:[#allocation22 + $0x78] sm:$0xf]
    %v12755 = vld [vmem:[#allocation22 + $0x7c] sm:$0xf]
    %v12756 = vld [vmem:[#allocation22 + $0x80] sm:$0xf]
    %v12757 = vld [vmem:[#allocation22 + $0x84] sm:$0xf]
    %v12758 = vld [vmem:[#allocation22 + $0x88] sm:$0xf]
    %v12759 = vld [vmem:[#allocation22 + $0x8c] sm:$0xf]
    %v12760 = vld [vmem:[#allocation22 + $0x90] sm:$0xf]
    %v12761 = vld [vmem:[#allocation22 + $0x94] sm:$0xf]
    %v12762 = vld [vmem:[#allocation22 + $0x98] sm:$0xf]
    %v12763 = vld [vmem:[#allocation22 + $0x9c] sm:$0xf]
    %v12764 = vld [vmem:[#allocation22 + $0xa0] sm:$0xf]
    %v12765 = vld [vmem:[#allocation22 + $0xa4] sm:$0xf]
    %v12766 = vld [vmem:[#allocation22 + $0xa8] sm:$0xf]
    %v12767 = vld [vmem:[#allocation22 + $0xac] sm:$0xf]
    %v12768 = vld [vmem:[#allocation22 + $0xb0] sm:$0xf]
    %v12769 = vld [vmem:[#allocation22 + $0xb4] sm:$0xf]
    %v12770 = vld [vmem:[#allocation22 + $0xb8] sm:$0xf]
    %v12771 = vld [vmem:[#allocation22 + $0xbc] sm:$0xf]
    %v12772 = vld [vmem:[#allocation22 + $0xc0] sm:$0xf]
    %v12773 = vld [vmem:[#allocation22 + $0xc4] sm:$0xf]
    %v12774 = vld [vmem:[#allocation22 + $0xc8] sm:$0xf]
    %v12775 = vld [vmem:[#allocation22 + $0xcc] sm:$0xf]
    %v12776 = vld [vmem:[#allocation22 + $0xd0] sm:$0xf]
    %v12777 = vld [vmem:[#allocation22 + $0xd4] sm:$0xf]
    %v12778 = vld [vmem:[#allocation22 + $0xd8] sm:$0xf]
    %v12779 = vld [vmem:[#allocation22 + $0xdc] sm:$0xf]
    %v12780 = vld [vmem:[#allocation22 + $0xe0] sm:$0xf]
    %v12781 = vld [vmem:[#allocation22 + $0xe4] sm:$0xf]
    %v12782 = vld [vmem:[#allocation22 + $0xe8] sm:$0xf]
    %v12783 = vld [vmem:[#allocation22 + $0xec] sm:$0xf]
    %v12784 = vld [vmem:[#allocation22 + $0xf0] sm:$0xf]
    %v12785 = vld [vmem:[#allocation22 + $0xf4] sm:$0xf]
    %v12786 = vld [vmem:[#allocation22 + $0xf8] sm:$0xf]
    %v12787 = vld [vmem:[#allocation22 + $0xfc] sm:$0xf]
    %v12788 = vld [vmem:[#allocation24] sm:$0x1]
    %v12790 = vlaneseq
    %v12791 = vshrl.u32 %v12790, 7
    %v12792 = vsub.s32 0, %v12791
    %v12793 = vrot.slane %v12788, %v12792
    %v12859 = vunpack.c.l.b16 %v12724
    %v12860 = vunpack.c.l.b16 %v12725
    %v12861 = vunpack.c.l.b16 %v12726
    %v12862 = vunpack.c.l.b16 %v12727
    %v12863 = vunpack.c.l.b16 %v12728
    %v12864 = vunpack.c.l.b16 %v12729
    %v12865 = vunpack.c.l.b16 %v12730
    %v12866 = vunpack.c.l.b16 %v12731
    %v12867 = vunpack.c.l.b16 %v12732
    %v12868 = vunpack.c.l.b16 %v12733
    %v12869 = vunpack.c.l.b16 %v12734
    %v12870 = vunpack.c.l.b16 %v12735
    %v12871 = vunpack.c.l.b16 %v12736
    %v12872 = vunpack.c.l.b16 %v12737
    %v12873 = vunpack.c.l.b16 %v12738
    %v12874 = vunpack.c.l.b16 %v12739
    %v12875 = vunpack.c.l.b16 %v12740
    %v12876 = vunpack.c.l.b16 %v12741
    %v12877 = vunpack.c.l.b16 %v12742
    %v12878 = vunpack.c.l.b16 %v12743
    %v12879 = vunpack.c.l.b16 %v12744
    %v12880 = vunpack.c.l.b16 %v12745
    %v12881 = vunpack.c.l.b16 %v12746
    %v12882 = vunpack.c.l.b16 %v12747
    %v12883 = vunpack.c.l.b16 %v12748
    %v12884 = vunpack.c.l.b16 %v12749
    %v12885 = vunpack.c.l.b16 %v12750
    %v12886 = vunpack.c.l.b16 %v12751
    %v12887 = vunpack.c.l.b16 %v12752
    %v12888 = vunpack.c.l.b16 %v12753
    %v12889 = vunpack.c.l.b16 %v12754
    %v12890 = vunpack.c.l.b16 %v12755
    %v12891 = vunpack.c.l.b16 %v12756
    %v12892 = vunpack.c.l.b16 %v12757
    %v12893 = vunpack.c.l.b16 %v12758
    %v12894 = vunpack.c.l.b16 %v12759
    %v12895 = vunpack.c.l.b16 %v12760
    %v12896 = vunpack.c.l.b16 %v12761
    %v12897 = vunpack.c.l.b16 %v12762
    %v12898 = vunpack.c.l.b16 %v12763
    %v12899 = vunpack.c.l.b16 %v12764
    %v12900 = vunpack.c.l.b16 %v12765
    %v12901 = vunpack.c.l.b16 %v12766
    %v12902 = vunpack.c.l.b16 %v12767
    %v12903 = vunpack.c.l.b16 %v12768
    %v12904 = vunpack.c.l.b16 %v12769
    %v12905 = vunpack.c.l.b16 %v12770
    %v12906 = vunpack.c.l.b16 %v12771
    %v12907 = vunpack.c.l.b16 %v12772
    %v12908 = vunpack.c.l.b16 %v12773
    %v12909 = vunpack.c.l.b16 %v12774
    %v12910 = vunpack.c.l.b16 %v12775
    %v12911 = vunpack.c.l.b16 %v12776
    %v12912 = vunpack.c.l.b16 %v12777
    %v12913 = vunpack.c.l.b16 %v12778
    %v12914 = vunpack.c.l.b16 %v12779
    %v12915 = vunpack.c.l.b16 %v12780
    %v12916 = vunpack.c.l.b16 %v12781
    %v12917 = vunpack.c.l.b16 %v12782
    %v12918 = vunpack.c.l.b16 %v12783
    %v12919 = vunpack.c.l.b16 %v12784
    %v12920 = vunpack.c.l.b16 %v12785
    %v12921 = vunpack.c.l.b16 %v12786
    %v12922 = vunpack.c.l.b16 %v12787
    %v12923 = vpack.c.b16 %v12860, %v12859
    %v12924 = vpack.c.b16 %v12862, %v12861
    %v12925 = vpack.c.b16 %v12864, %v12863
    %v12926 = vpack.c.b16 %v12866, %v12865
    %v12927 = vpack.c.b16 %v12868, %v12867
    %v12928 = vpack.c.b16 %v12870, %v12869
    %v12929 = vpack.c.b16 %v12872, %v12871
    %v12930 = vpack.c.b16 %v12874, %v12873
    %v12931 = vpack.c.b16 %v12876, %v12875
    %v12932 = vpack.c.b16 %v12878, %v12877
    %v12933 = vpack.c.b16 %v12880, %v12879
    %v12934 = vpack.c.b16 %v12882, %v12881
    %v12935 = vpack.c.b16 %v12884, %v12883
    %v12936 = vpack.c.b16 %v12886, %v12885
    %v12937 = vpack.c.b16 %v12888, %v12887
    %v12938 = vpack.c.b16 %v12890, %v12889
    %v12939 = vpack.c.b16 %v12892, %v12891
    %v12940 = vpack.c.b16 %v12894, %v12893
    %v12941 = vpack.c.b16 %v12896, %v12895
    %v12942 = vpack.c.b16 %v12898, %v12897
    %v12943 = vpack.c.b16 %v12900, %v12899
    %v12944 = vpack.c.b16 %v12902, %v12901
    %v12945 = vpack.c.b16 %v12904, %v12903
    %v12946 = vpack.c.b16 %v12906, %v12905
    %v12947 = vpack.c.b16 %v12908, %v12907
    %v12948 = vpack.c.b16 %v12910, %v12909
    %v12949 = vpack.c.b16 %v12912, %v12911
    %v12950 = vpack.c.b16 %v12914, %v12913
    %v12951 = vpack.c.b16 %v12916, %v12915
    %v12952 = vpack.c.b16 %v12918, %v12917
    %v12953 = vpack.c.b16 %v12920, %v12919
    %v12954 = vpack.c.b16 %v12922, %v12921
    %12987 = vmatprep.subr.bf16.mxu0 0
    %12988 = vmatpush1.bf16.msra.mxu0 %v12930
    %12989 = vmatprep.subr.bf16.mxu0 0
    %12990 = vmatpush1.bf16.msra.mxu0 %v12929
    %12991 = vmatprep.subr.bf16.mxu0 0
    %12992 = vmatpush1.bf16.msra.mxu0 %v12928
    %12993 = vmatprep.subr.bf16.mxu0 0
    %12994 = vmatpush1.bf16.msra.mxu0 %v12927
    %12995 = vmatprep.subr.bf16.mxu0 0
    %12996 = vmatpush1.bf16.msra.mxu0 %v12926
    %12997 = vmatprep.subr.bf16.mxu0 0
    %12998 = vmatpush1.bf16.msra.mxu0 %v12925
    %12999 = vmatprep.subr.bf16.mxu0 0
    %13000 = vmatpush1.bf16.msra.mxu0 %v12924
    %13001 = vmatprep.subr.bf16.mxu0 0
    %13002 = vmatpush1.bf16.msra.mxu0 %v12923
    %13003 = vmatprep.subr.bf16.mxu0 0
    %13004 = vmatpush2.bf16.msra.mxu0 %v12938
    %13005 = vmatprep.subr.bf16.mxu0 0
    %13006 = vmatpush2.bf16.msra.mxu0 %v12937
    %13007 = vmatprep.subr.bf16.mxu0 0
    %13008 = vmatpush2.bf16.msra.mxu0 %v12936
    %13009 = vmatprep.subr.bf16.mxu0 0
    %13010 = vmatpush2.bf16.msra.mxu0 %v12935
    %13011 = vmatprep.subr.bf16.mxu0 0
    %13012 = vmatpush2.bf16.msra.mxu0 %v12934
    %13013 = vmatprep.subr.bf16.mxu0 0
    %13014 = vmatpush2.bf16.msra.mxu0 %v12933
    %13015 = vmatprep.subr.bf16.mxu0 0
    %13016 = vmatpush2.bf16.msra.mxu0 %v12932
    %13017 = vmatprep.subr.bf16.mxu0 0
    %13018 = vmatpush2.bf16.msra.mxu0 %v12931
    %13019 = vmatprep.mubr.bf16.mxu0 %v12721
    %13020 = vmatmul.mubr.bf16.gmra.mxu0 %v12720
    %v13021 = vpop.f32.mrf.mxu0
    %v13022 = vadd.f32 %v12793, %v13021
    %v13023 = vpop.f32.mrf.mxu0
    %v13024 = vpop.f32.mrf.mxu0
    %v13025 = vpop.f32.mrf.mxu0
    %13026 = vdwg.mxu0
    %13027 = vmatprep.subr.bf16.mxu0 0
    %13028 = vmatpush1.bf16.msra.mxu0 %v12946
    %13029 = vmatprep.subr.bf16.mxu0 0
    %13030 = vmatpush1.bf16.msra.mxu0 %v12945
    %13031 = vmatprep.subr.bf16.mxu0 0
    %13032 = vmatpush1.bf16.msra.mxu0 %v12944
    %13033 = vmatprep.subr.bf16.mxu0 0
    %13034 = vmatpush1.bf16.msra.mxu0 %v12943
    %13035 = vmatprep.subr.bf16.mxu0 0
    %13036 = vmatpush1.bf16.msra.mxu0 %v12942
    %13037 = vmatprep.subr.bf16.mxu0 0
    %13038 = vmatpush1.bf16.msra.mxu0 %v12941
    %13039 = vmatprep.subr.bf16.mxu0 0
    %13040 = vmatpush1.bf16.msra.mxu0 %v12940
    %13041 = vmatprep.subr.bf16.mxu0 0
    %13042 = vmatpush1.bf16.msra.mxu0 %v12939
    %13043 = vmatprep.subr.bf16.mxu0 0
    %13044 = vmatpush2.bf16.msra.mxu0 %v12954
    %13045 = vmatprep.subr.bf16.mxu0 0
    %13046 = vmatpush2.bf16.msra.mxu0 %v12953
    %13047 = vmatprep.subr.bf16.mxu0 0
    %13048 = vmatpush2.bf16.msra.mxu0 %v12952
    %13049 = vmatprep.subr.bf16.mxu0 0
    %13050 = vmatpush2.bf16.msra.mxu0 %v12951
    %13051 = vmatprep.subr.bf16.mxu0 0
    %13052 = vmatpush2.bf16.msra.mxu0 %v12950
    %13053 = vmatprep.subr.bf16.mxu0 0
    %13054 = vmatpush2.bf16.msra.mxu0 %v12949
    %13055 = vmatprep.subr.bf16.mxu0 0
    %13056 = vmatpush2.bf16.msra.mxu0 %v12948
    %13057 = vmatprep.subr.bf16.mxu0 0
    %13058 = vmatpush2.bf16.msra.mxu0 %v12947
    %13059 = vmatprep.mubr.bf16.mxu0 %v12723
    %13060 = vmatmul.mubr.bf16.gmra.mxu0 %v12722
    %v13061 = vpop.f32.mrf.mxu0
    %v13062 = vadd.f32 %v13022, %v13061
    %v13063 = vpop.f32.mrf.mxu0
    %v13064 = vpop.f32.mrf.mxu0
    %v13065 = vpop.f32.mrf.mxu0
    %13066 = vdwg.mxu0
    %13067 = vst [vmem:[%s22] sm:$0xff] %v13062
    // Predicated region
    $region142: #{character_recognition_forward.1} parent=1 // pred_check
      _
    $region143: #{character_recognition_forward.1} parent=1 // pred_check_branch
      %13069 = sbr.rel (0) target = $region145
    $region144: #{character_recognition_forward.1} parent=1 // pred_region
      _
    $region145: #{character_recognition_forward.1} parent=1 // pred_fallthru
      _
    // Predicated region
    $region146: #{character_recognition_forward.1} parent=1 // pred_check
      _
    $region147: #{character_recognition_forward.1} parent=1 // pred_check_branch
      %13071 = sbr.rel (0) target = $region149
    $region148: #{character_recognition_forward.1} parent=1 // pred_region
      _
    $region149: #{character_recognition_forward.1} parent=1 // pred_fallthru
      _
    %13072 = vsyncpa [#allocation6], 1
    %13073 = vsyncpa [#allocation8], 1
    %13074 = vsyncpa [#allocation11], 1
    %13075 = vsyncpa [#allocation14], 1
    %13076 = vsyncpa [#allocation17], 1
    %13077 = vsyncpa [#allocation20], 1
    %13078 = vsyncpa [#allocation23], 1
  %13079 = vsyncmov [#allocation4]
  %s13080 = vpop.sfrf %13079
  %p13081 = scmp.eq.s32.totalorder %s13080, 0
  %p13082 = pneg %p13081
  %13084 = shalt.err (%p13082)
  %s13085 = scalar_lea.sflag [#allocation4], 1
  %13086 = vsyncmov %s13085
  %s13087 = vpop.sfrf %13086
  %p13088 = scmp.eq.s32.totalorder %s13087, 0
  %p13089 = pneg %p13088
  %13091 = shalt.err (%p13089)

</llo_original>
